<compile_context>
chip_gen: v6e
topology: v6e:2x2x1
jax: 0.10.0
libtpu: 0.0.40
codegen_flags: <defaults>
</compile_context>

<pallas_src>
import functools

import jax
import jax.numpy as jnp
from jax import lax
from jax.experimental import pallas as pl
from jax.experimental.pallas import tpu as pltpu

# (kernel-tap index, input shift) pairs contributing to each output parity,
# for stride=2, kernel=4, padding=1 (identical for rows and columns):
#   oh = 2*ih - 1 + kh  =>  even oh: kh=1 (x[i]),   kh=3 (x[i-1])
#                           odd  oh: kh=0 (x[i+1]), kh=2 (x[i])
_TAPS = (
    ((1, 0), (3, -1)),   # even output index
    ((0, +1), (2, 0)),   # odd output index
)


def _deconv_kernel(x_ref, wt_ref, b_ref, o_ref, *, cout, h, w):
    # x_ref : (1, cin, (h+3)*(w+2))  zero-padded input, spatial flattened
    # wt_ref: (4, 4, cout, cin)      wt[kh, kw] is a ready (cout, cin) matmul op
    # b_ref : (cout, 1)
    # o_ref : (1, 4, cout, h*(w+2))  4 = output parities (2*p + q)
    wp = w + 2
    l = h * wp
    bias = b_ref[...]                                    # (cout, 1)
    for p in range(2):
        for q in range(2):
            # bias fused into accumulator init (junk pad columns are dropped
            # in the wrapper, so adding bias there is harmless).
            acc = jnp.broadcast_to(bias, (cout, l)).astype(jnp.float32)
            for kh, rs in _TAPS[p]:
                for kw, cs in _TAPS[q]:
                    start = (1 + rs) * wp + (1 + cs)     # static offset
                    xs = x_ref[0, :, start:start + l]    # (cin, l), contiguous
                    acc = acc + jnp.dot(
                        wt_ref[kh, kw], xs,
                        preferred_element_type=jnp.float32)
            o_ref[0, 2 * p + q] = acc.astype(o_ref.dtype)


def _deconv_transpose_2x(x, weight, bias):
    """ConvTranspose2d(Cin->Cout, kernel=4, stride=2, padding=1) on NCHW x."""
    B, cin, h, w = x.shape
    cout = weight.shape[1]
    hp, wp = h + 3, w + 2
    l = h * wp

    # Zero-pad spatially (1 top/left/right, 2 bottom: the extra bottom row
    # keeps every shifted flat slice statically in bounds), flatten (H,W)
    # into one lane-dense axis.  The reshape is free (row-major).
    xpad = jnp.pad(x, ((0, 0), (0, 0), (1, 2), (1, 1)))
    xflat = xpad.reshape(B, cin, hp * wp)

    # torch layout (Cin, Cout, kh, kw) -> (kh, kw, Cout, Cin).
    wt = jnp.transpose(weight, (2, 3, 1, 0)).astype(jnp.float32)
    b2 = bias.reshape(cout, 1).astype(jnp.float32)

    kernel = functools.partial(_deconv_kernel, cout=cout, h=h, w=w)
    out = pl.pallas_call(
        kernel,
        out_shape=jax.ShapeDtypeStruct((B, 4, cout, l), jnp.float32),
        grid_spec=pltpu.PrefetchScalarGridSpec(
            num_scalar_prefetch=0,
            grid=(B,),
            in_specs=[
                pl.BlockSpec((1, cin, hp * wp), lambda b: (b, 0, 0)),
                pl.BlockSpec((4, 4, cout, cin), lambda b: (0, 0, 0, 0)),
                pl.BlockSpec((cout, 1), lambda b: (0, 0)),
            ],
            out_specs=pl.BlockSpec((1, 4, cout, l), lambda b: (b, 0, 0, 0)),
        ),
        compiler_params=pltpu.CompilerParams(
            dimension_semantics=("parallel",)),
    )(xflat, wt, b2)

    # (B, 2*p+q, Cout, H*(W+2)) -> drop pad columns, pixel-shuffle parities.
    out = out.reshape(B, 2, 2, cout, h, wp)[..., :w]     # (B,p,q,Co,H,W)
    out = out.transpose(0, 3, 4, 1, 5, 2)                # (B,Co,H,p,W,q)
    return out.reshape(B, cout, 2 * h, 2 * w)


@jax.jit
def img_decoder_fwd(x, w1, b1, w2, b2):
    # "x = 6 * x" folded exactly into the first deconv's weights.
    y = _deconv_transpose_2x(x, 6.0 * w1, b1)
    return _deconv_transpose_2x(y, w2, b2)


# ---------------- pure-JAX reference (PyTorch semantics) ----------------
def _convT_ref(x, weight, bias):
    # conv_transpose(x, W, s=2, p=1) == conv(dilate(x, 2), rot180(W^T), pad=2)
    w_oihw = jnp.flip(weight, axis=(2, 3)).transpose(1, 0, 2, 3)
    y = lax.conv_general_dilated(
        x, w_oihw, window_strides=(1, 1), padding=((2, 2), (2, 2)),
        lhs_dilation=(2, 2), rhs_dilation=(1, 1),
        dimension_numbers=("NCHW", "OIHW", "NCHW"),
        precision=lax.Precision.HIGHEST)
    return y + bias[None, :, None, None]


def img_decoder_ref(x, w1, b1, w2, b2):
    x = 6.0 * x
    x = _convT_ref(x, w1, b1)
    return _convT_ref(x, w2, b2)


if __name__ == "__main__":
    key = jax.random.PRNGKey(0)
    kx, kw1, kb1, kw2, kb2 = jax.random.split(key, 5)

    B, H, W = 2, 16, 16
    C_IN, C_MID, C_OUT = 24, 12, 3

    x = jax.random.normal(kx, (B, C_IN, H, W), jnp.float32)

    def uinit(k, shape, fan_in):
        bound = 1.0 / (fan_in ** 0.5)
        return jax.random.uniform(k, shape, jnp.float32,
                                  minval=-bound, maxval=bound)

    # torch ConvTranspose2d weight layout: (in_channels, out_channels, kH, kW)
    w1 = uinit(kw1, (C_IN, C_MID, 4, 4), C_IN * 16)
    b1 = uinit(kb1, (C_MID,), C_IN * 16)
    w2 = uinit(kw2, (C_MID, C_OUT, 4, 4), C_MID * 16)
    b2 = uinit(kb2, (C_OUT,), C_MID * 16)

    out = img_decoder_fwd(x, w1, b1, w2, b2)
    out = jax.block_until_ready(out)
    assert out.shape == (B, C_OUT, 4 * H, 4 * W), out.shape

    ref = img_decoder_ref(x, w1, b1, w2, b2)
    err = float(jnp.max(jnp.abs(out - ref)))
    assert jnp.allclose(out, ref, atol=1e-3, rtol=1e-3), err

    print("KERNEL_OK")
</pallas_src>

<mosaic_0001>
module attributes {stable_mosaic.version = 11 : i64} {
  func.func @_deconv_kernel(%arg0: i32, %arg1: memref<1x24x342xf32, #tpu.memory_space<vmem>>, %arg2: memref<4x4x12x24xf32, #tpu.memory_space<vmem>>, %arg3: memref<12x1xf32, #tpu.memory_space<vmem>>, %arg4: memref<1x4x12x288xf32, #tpu.memory_space<vmem>>) attributes {dimension_semantics = [#tpu.dimension_semantics<parallel>], iteration_bounds = array<i64: 2>, scalar_prefetch = 0 : i64, scratch_operands = 0 : i64, tpu.core_type = #tpu.core_type<tc>, window_params = [{transform_indices = @transform_0, window_bounds = array<i64: 1, 24, 342>}, {pipeline_mode = #tpu.pipeline_mode<synchronous>, transform_indices = @transform_1, window_bounds = array<i64: 4, 4, 12, 24>}, {pipeline_mode = #tpu.pipeline_mode<synchronous>, transform_indices = @transform_2, window_bounds = array<i64: 12, 1>}, {transform_indices = @transform_3, window_bounds = array<i64: 1, 4, 12, 288>}]} {
    %c0 = arith.constant 0 : index
    %c0_0 = arith.constant 0 : index
    %0 = vector.load %arg3[%c0, %c0_0] : memref<12x1xf32, #tpu.memory_space<vmem>>, vector<12x1xf32>
    %1 = vector.shape_cast %0 : vector<12x1xf32> to vector<12x1xf32>
    %2 = vector.broadcast %1 : vector<12x1xf32> to vector<12x288xf32>
    %c0_1 = arith.constant 0 : index
    %c0_2 = arith.constant 0 : index
    %c19 = arith.constant 19 : index
    %3 = vector.load %arg1[%c0_1, %c0_2, %c19] : memref<1x24x342xf32, #tpu.memory_space<vmem>>, vector<1x24x288xf32>
    %4 = vector.shape_cast %3 : vector<1x24x288xf32> to vector<24x288xf32>
    %c1 = arith.constant 1 : index
    %c1_3 = arith.constant 1 : index
    %c0_4 = arith.constant 0 : index
    %c0_5 = arith.constant 0 : index
    %5 = vector.load %arg2[%c1, %c1_3, %c0_4, %c0_5] : memref<4x4x12x24xf32, #tpu.memory_space<vmem>>, vector<1x1x12x24xf32>
    %6 = vector.shape_cast %5 : vector<1x1x12x24xf32> to vector<12x24xf32>
    %cst = arith.constant dense<0.000000e+00> : vector<12x288xf32>
    %7 = tpu.matmul %6, %4, %cst {dimension_numbers = #tpu.dot_dimension_numbers<[1], [0], [0], [1], [0, 0, 1, 1], [], []>} : vector<12x24xf32>, vector<24x288xf32>, vector<12x288xf32> -> vector<12x288xf32>
    %8 = arith.addf %2, %7 : vector<12x288xf32>
    %c0_6 = arith.constant 0 : index
    %c0_7 = arith.constant 0 : index
    %c18 = arith.constant 18 : index
    %9 = vector.load %arg1[%c0_6, %c0_7, %c18] : memref<1x24x342xf32, #tpu.memory_space<vmem>>, vector<1x24x288xf32>
    %10 = vector.shape_cast %9 : vector<1x24x288xf32> to vector<24x288xf32>
    %c1_8 = arith.constant 1 : index
    %c3 = arith.constant 3 : index
    %c0_9 = arith.constant 0 : index
    %c0_10 = arith.constant 0 : index
    %11 = vector.load %arg2[%c1_8, %c3, %c0_9, %c0_10] : memref<4x4x12x24xf32, #tpu.memory_space<vmem>>, vector<1x1x12x24xf32>
    %12 = vector.shape_cast %11 : vector<1x1x12x24xf32> to vector<12x24xf32>
    %cst_11 = arith.constant dense<0.000000e+00> : vector<12x288xf32>
    %13 = tpu.matmul %12, %10, %cst_11 {dimension_numbers = #tpu.dot_dimension_numbers<[1], [0], [0], [1], [0, 0, 1, 1], [], []>} : vector<12x24xf32>, vector<24x288xf32>, vector<12x288xf32> -> vector<12x288xf32>
    %14 = arith.addf %8, %13 : vector<12x288xf32>
    %c0_12 = arith.constant 0 : index
    %c0_13 = arith.constant 0 : index
    %c1_14 = arith.constant 1 : index
    %15 = vector.load %arg1[%c0_12, %c0_13, %c1_14] : memref<1x24x342xf32, #tpu.memory_space<vmem>>, vector<1x24x288xf32>
    %16 = vector.shape_cast %15 : vector<1x24x288xf32> to vector<24x288xf32>
    %c3_15 = arith.constant 3 : index
    %c1_16 = arith.constant 1 : index
    %c0_17 = arith.constant 0 : index
    %c0_18 = arith.constant 0 : index
    %17 = vector.load %arg2[%c3_15, %c1_16, %c0_17, %c0_18] : memref<4x4x12x24xf32, #tpu.memory_space<vmem>>, vector<1x1x12x24xf32>
    %18 = vector.shape_cast %17 : vector<1x1x12x24xf32> to vector<12x24xf32>
    %cst_19 = arith.constant dense<0.000000e+00> : vector<12x288xf32>
    %19 = tpu.matmul %18, %16, %cst_19 {dimension_numbers = #tpu.dot_dimension_numbers<[1], [0], [0], [1], [0, 0, 1, 1], [], []>} : vector<12x24xf32>, vector<24x288xf32>, vector<12x288xf32> -> vector<12x288xf32>
    %20 = arith.addf %14, %19 : vector<12x288xf32>
    %c0_20 = arith.constant 0 : index
    %c0_21 = arith.constant 0 : index
    %c0_22 = arith.constant 0 : index
    %21 = vector.load %arg1[%c0_20, %c0_21, %c0_22] : memref<1x24x342xf32, #tpu.memory_space<vmem>>, vector<1x24x288xf32>
    %22 = vector.shape_cast %21 : vector<1x24x288xf32> to vector<24x288xf32>
    %c3_23 = arith.constant 3 : index
    %c3_24 = arith.constant 3 : index
    %c0_25 = arith.constant 0 : index
    %c0_26 = arith.constant 0 : index
    %23 = vector.load %arg2[%c3_23, %c3_24, %c0_25, %c0_26] : memref<4x4x12x24xf32, #tpu.memory_space<vmem>>, vector<1x1x12x24xf32>
    %24 = vector.shape_cast %23 : vector<1x1x12x24xf32> to vector<12x24xf32>
    %cst_27 = arith.constant dense<0.000000e+00> : vector<12x288xf32>
    %25 = tpu.matmul %24, %22, %cst_27 {dimension_numbers = #tpu.dot_dimension_numbers<[1], [0], [0], [1], [0, 0, 1, 1], [], []>} : vector<12x24xf32>, vector<24x288xf32>, vector<12x288xf32> -> vector<12x288xf32>
    %26 = arith.addf %20, %25 : vector<12x288xf32>
    %c0_28 = arith.constant 0 : index
    %c0_29 = arith.constant 0 : index
    %c0_30 = arith.constant 0 : index
    %c0_31 = arith.constant 0 : index
    %27 = vector.load %arg4[%c0_28, %c0_29, %c0_30, %c0_31] : memref<1x4x12x288xf32, #tpu.memory_space<vmem>>, vector<1x1x12x288xf32>
    %28 = vector.shape_cast %27 : vector<1x1x12x288xf32> to vector<12x288xf32>
    %29 = vector.shape_cast %26 : vector<12x288xf32> to vector<1x1x12x288xf32>
    tpu.vector_store %arg4[%c0_28, %c0_29, %c0_30, %c0_31], %29 {strides = array<i32>} : memref<1x4x12x288xf32, #tpu.memory_space<vmem>>, vector<1x1x12x288xf32>,
    %30 = vector.shape_cast %0 : vector<12x1xf32> to vector<12x1xf32>
    %31 = vector.broadcast %30 : vector<12x1xf32> to vector<12x288xf32>
    %c0_32 = arith.constant 0 : index
    %c0_33 = arith.constant 0 : index
    %c20 = arith.constant 20 : index
    %32 = vector.load %arg1[%c0_32, %c0_33, %c20] : memref<1x24x342xf32, #tpu.memory_space<vmem>>, vector<1x24x288xf32>
    %33 = vector.shape_cast %32 : vector<1x24x288xf32> to vector<24x288xf32>
    %c1_34 = arith.constant 1 : index
    %c0_35 = arith.constant 0 : index
    %c0_36 = arith.constant 0 : index
    %c0_37 = arith.constant 0 : index
    %34 = vector.load %arg2[%c1_34, %c0_35, %c0_36, %c0_37] : memref<4x4x12x24xf32, #tpu.memory_space<vmem>>, vector<1x1x12x24xf32>
    %35 = vector.shape_cast %34 : vector<1x1x12x24xf32> to vector<12x24xf32>
    %cst_38 = arith.constant dense<0.000000e+00> : vector<12x288xf32>
    %36 = tpu.matmul %35, %33, %cst_38 {dimension_numbers = #tpu.dot_dimension_numbers<[1], [0], [0], [1], [0, 0, 1, 1], [], []>} : vector<12x24xf32>, vector<24x288xf32>, vector<12x288xf32> -> vector<12x288xf32>
    %37 = arith.addf %31, %36 : vector<12x288xf32>
    %c0_39 = arith.constant 0 : index
    %c0_40 = arith.constant 0 : index
    %c19_41 = arith.constant 19 : index
    %38 = vector.load %arg1[%c0_39, %c0_40, %c19_41] : memref<1x24x342xf32, #tpu.memory_space<vmem>>, vector<1x24x288xf32>
    %39 = vector.shape_cast %38 : vector<1x24x288xf32> to vector<24x288xf32>
    %c1_42 = arith.constant 1 : index
    %c2 = arith.constant 2 : index
    %c0_43 = arith.constant 0 : index
    %c0_44 = arith.constant 0 : index
    %40 = vector.load %arg2[%c1_42, %c2, %c0_43, %c0_44] : memref<4x4x12x24xf32, #tpu.memory_space<vmem>>, vector<1x1x12x24xf32>
    %41 = vector.shape_cast %40 : vector<1x1x12x24xf32> to vector<12x24xf32>
    %cst_45 = arith.constant dense<0.000000e+00> : vector<12x288xf32>
    %42 = tpu.matmul %41, %39, %cst_45 {dimension_numbers = #tpu.dot_dimension_numbers<[1], [0], [0], [1], [0, 0, 1, 1], [], []>} : vector<12x24xf32>, vector<24x288xf32>, vector<12x288xf32> -> vector<12x288xf32>
    %43 = arith.addf %37, %42 : vector<12x288xf32>
    %c0_46 = arith.constant 0 : index
    %c0_47 = arith.constant 0 : index
    %c2_48 = arith.constant 2 : index
    %44 = vector.load %arg1[%c0_46, %c0_47, %c2_48] : memref<1x24x342xf32, #tpu.memory_space<vmem>>, vector<1x24x288xf32>
    %45 = vector.shape_cast %44 : vector<1x24x288xf32> to vector<24x288xf32>
    %c3_49 = arith.constant 3 : index
    %c0_50 = arith.constant 0 : index
    %c0_51 = arith.constant 0 : index
    %c0_52 = arith.constant 0 : index
    %46 = vector.load %arg2[%c3_49, %c0_50, %c0_51, %c0_52] : memref<4x4x12x24xf32, #tpu.memory_space<vmem>>, vector<1x1x12x24xf32>
    %47 = vector.shape_cast %46 : vector<1x1x12x24xf32> to vector<12x24xf32>
    %cst_53 = arith.constant dense<0.000000e+00> : vector<12x288xf32>
    %48 = tpu.matmul %47, %45, %cst_53 {dimension_numbers = #tpu.dot_dimension_numbers<[1], [0], [0], [1], [0, 0, 1, 1], [], []>} : vector<12x24xf32>, vector<24x288xf32>, vector<12x288xf32> -> vector<12x288xf32>
    %49 = arith.addf %43, %48 : vector<12x288xf32>
    %c0_54 = arith.constant 0 : index
    %c0_55 = arith.constant 0 : index
    %c1_56 = arith.constant 1 : index
    %50 = vector.load %arg1[%c0_54, %c0_55, %c1_56] : memref<1x24x342xf32, #tpu.memory_space<vmem>>, vector<1x24x288xf32>
    %51 = vector.shape_cast %50 : vector<1x24x288xf32> to vector<24x288xf32>
    %c3_57 = arith.constant 3 : index
    %c2_58 = arith.constant 2 : index
    %c0_59 = arith.constant 0 : index
    %c0_60 = arith.constant 0 : index
    %52 = vector.load %arg2[%c3_57, %c2_58, %c0_59, %c0_60] : memref<4x4x12x24xf32, #tpu.memory_space<vmem>>, vector<1x1x12x24xf32>
    %53 = vector.shape_cast %52 : vector<1x1x12x24xf32> to vector<12x24xf32>
    %cst_61 = arith.constant dense<0.000000e+00> : vector<12x288xf32>
    %54 = tpu.matmul %53, %51, %cst_61 {dimension_numbers = #tpu.dot_dimension_numbers<[1], [0], [0], [1], [0, 0, 1, 1], [], []>} : vector<12x24xf32>, vector<24x288xf32>, vector<12x288xf32> -> vector<12x288xf32>
    %55 = arith.addf %49, %54 : vector<12x288xf32>
    %c0_62 = arith.constant 0 : index
    %c1_63 = arith.constant 1 : index
    %c0_64 = arith.constant 0 : index
    %c0_65 = arith.constant 0 : index
    %56 = vector.load %arg4[%c0_62, %c1_63, %c0_64, %c0_65] : memref<1x4x12x288xf32, #tpu.memory_space<vmem>>, vector<1x1x12x288xf32>
    %57 = vector.shape_cast %56 : vector<1x1x12x288xf32> to vector<12x288xf32>
    %58 = vector.shape_cast %55 : vector<12x288xf32> to vector<1x1x12x288xf32>
    tpu.vector_store %arg4[%c0_62, %c1_63, %c0_64, %c0_65], %58 {strides = array<i32>} : memref<1x4x12x288xf32, #tpu.memory_space<vmem>>, vector<1x1x12x288xf32>,
    %59 = vector.shape_cast %0 : vector<12x1xf32> to vector<12x1xf32>
    %60 = vector.broadcast %59 : vector<12x1xf32> to vector<12x288xf32>
    %c0_66 = arith.constant 0 : index
    %c0_67 = arith.constant 0 : index
    %c37 = arith.constant 37 : index
    %61 = vector.load %arg1[%c0_66, %c0_67, %c37] : memref<1x24x342xf32, #tpu.memory_space<vmem>>, vector<1x24x288xf32>
    %62 = vector.shape_cast %61 : vector<1x24x288xf32> to vector<24x288xf32>
    %c0_68 = arith.constant 0 : index
    %c1_69 = arith.constant 1 : index
    %c0_70 = arith.constant 0 : index
    %c0_71 = arith.constant 0 : index
    %63 = vector.load %arg2[%c0_68, %c1_69, %c0_70, %c0_71] : memref<4x4x12x24xf32, #tpu.memory_space<vmem>>, vector<1x1x12x24xf32>
    %64 = vector.shape_cast %63 : vector<1x1x12x24xf32> to vector<12x24xf32>
    %cst_72 = arith.constant dense<0.000000e+00> : vector<12x288xf32>
    %65 = tpu.matmul %64, %62, %cst_72 {dimension_numbers = #tpu.dot_dimension_numbers<[1], [0], [0], [1], [0, 0, 1, 1], [], []>} : vector<12x24xf32>, vector<24x288xf32>, vector<12x288xf32> -> vector<12x288xf32>
    %66 = arith.addf %60, %65 : vector<12x288xf32>
    %c0_73 = arith.constant 0 : index
    %c0_74 = arith.constant 0 : index
    %c36 = arith.constant 36 : index
    %67 = vector.load %arg1[%c0_73, %c0_74, %c36] : memref<1x24x342xf32, #tpu.memory_space<vmem>>, vector<1x24x288xf32>
    %68 = vector.shape_cast %67 : vector<1x24x288xf32> to vector<24x288xf32>
    %c0_75 = arith.constant 0 : index
    %c3_76 = arith.constant 3 : index
    %c0_77 = arith.constant 0 : index
    %c0_78 = arith.constant 0 : index
    %69 = vector.load %arg2[%c0_75, %c3_76, %c0_77, %c0_78] : memref<4x4x12x24xf32, #tpu.memory_space<vmem>>, vector<1x1x12x24xf32>
    %70 = vector.shape_cast %69 : vector<1x1x12x24xf32> to vector<12x24xf32>
    %cst_79 = arith.constant dense<0.000000e+00> : vector<12x288xf32>
    %71 = tpu.matmul %70, %68, %cst_79 {dimension_numbers = #tpu.dot_dimension_numbers<[1], [0], [0], [1], [0, 0, 1, 1], [], []>} : vector<12x24xf32>, vector<24x288xf32>, vector<12x288xf32> -> vector<12x288xf32>
    %72 = arith.addf %66, %71 : vector<12x288xf32>
    %c0_80 = arith.constant 0 : index
    %c0_81 = arith.constant 0 : index
    %c19_82 = arith.constant 19 : index
    %73 = vector.load %arg1[%c0_80, %c0_81, %c19_82] : memref<1x24x342xf32, #tpu.memory_space<vmem>>, vector<1x24x288xf32>
    %74 = vector.shape_cast %73 : vector<1x24x288xf32> to vector<24x288xf32>
    %c2_83 = arith.constant 2 : index
    %c1_84 = arith.constant 1 : index
    %c0_85 = arith.constant 0 : index
    %c0_86 = arith.constant 0 : index
    %75 = vector.load %arg2[%c2_83, %c1_84, %c0_85, %c0_86] : memref<4x4x12x24xf32, #tpu.memory_space<vmem>>, vector<1x1x12x24xf32>
    %76 = vector.shape_cast %75 : vector<1x1x12x24xf32> to vector<12x24xf32>
    %cst_87 = arith.constant dense<0.000000e+00> : vector<12x288xf32>
    %77 = tpu.matmul %76, %74, %cst_87 {dimension_numbers = #tpu.dot_dimension_numbers<[1], [0], [0], [1], [0, 0, 1, 1], [], []>} : vector<12x24xf32>, vector<24x288xf32>, vector<12x288xf32> -> vector<12x288xf32>
    %78 = arith.addf %72, %77 : vector<12x288xf32>
    %c0_88 = arith.constant 0 : index
    %c0_89 = arith.constant 0 : index
    %c18_90 = arith.constant 18 : index
    %79 = vector.load %arg1[%c0_88, %c0_89, %c18_90] : memref<1x24x342xf32, #tpu.memory_space<vmem>>, vector<1x24x288xf32>
    %80 = vector.shape_cast %79 : vector<1x24x288xf32> to vector<24x288xf32>
    %c2_91 = arith.constant 2 : index
    %c3_92 = arith.constant 3 : index
    %c0_93 = arith.constant 0 : index
    %c0_94 = arith.constant 0 : index
    %81 = vector.load %arg2[%c2_91, %c3_92, %c0_93, %c0_94] : memref<4x4x12x24xf32, #tpu.memory_space<vmem>>, vector<1x1x12x24xf32>
    %82 = vector.shape_cast %81 : vector<1x1x12x24xf32> to vector<12x24xf32>
    %cst_95 = arith.constant dense<0.000000e+00> : vector<12x288xf32>
    %83 = tpu.matmul %82, %80, %cst_95 {dimension_numbers = #tpu.dot_dimension_numbers<[1], [0], [0], [1], [0, 0, 1, 1], [], []>} : vector<12x24xf32>, vector<24x288xf32>, vector<12x288xf32> -> vector<12x288xf32>
    %84 = arith.addf %78, %83 : vector<12x288xf32>
    %c0_96 = arith.constant 0 : index
    %c2_97 = arith.constant 2 : index
    %c0_98 = arith.constant 0 : index
    %c0_99 = arith.constant 0 : index
    %85 = vector.load %arg4[%c0_96, %c2_97, %c0_98, %c0_99] : memref<1x4x12x288xf32, #tpu.memory_space<vmem>>, vector<1x1x12x288xf32>
    %86 = vector.shape_cast %85 : vector<1x1x12x288xf32> to vector<12x288xf32>
    %87 = vector.shape_cast %84 : vector<12x288xf32> to vector<1x1x12x288xf32>
    tpu.vector_store %arg4[%c0_96, %c2_97, %c0_98, %c0_99], %87 {strides = array<i32>} : memref<1x4x12x288xf32, #tpu.memory_space<vmem>>, vector<1x1x12x288xf32>,
    %88 = vector.shape_cast %0 : vector<12x1xf32> to vector<12x1xf32>
    %89 = vector.broadcast %88 : vector<12x1xf32> to vector<12x288xf32>
    %c0_100 = arith.constant 0 : index
    %c0_101 = arith.constant 0 : index
    %c38 = arith.constant 38 : index
    %90 = vector.load %arg1[%c0_100, %c0_101, %c38] : memref<1x24x342xf32, #tpu.memory_space<vmem>>, vector<1x24x288xf32>
    %91 = vector.shape_cast %90 : vector<1x24x288xf32> to vector<24x288xf32>
    %c0_102 = arith.constant 0 : index
    %c0_103 = arith.constant 0 : index
    %c0_104 = arith.constant 0 : index
    %c0_105 = arith.constant 0 : index
    %92 = vector.load %arg2[%c0_102, %c0_103, %c0_104, %c0_105] : memref<4x4x12x24xf32, #tpu.memory_space<vmem>>, vector<1x1x12x24xf32>
    %93 = vector.shape_cast %92 : vector<1x1x12x24xf32> to vector<12x24xf32>
    %cst_106 = arith.constant dense<0.000000e+00> : vector<12x288xf32>
    %94 = tpu.matmul %93, %91, %cst_106 {dimension_numbers = #tpu.dot_dimension_numbers<[1], [0], [0], [1], [0, 0, 1, 1], [], []>} : vector<12x24xf32>, vector<24x288xf32>, vector<12x288xf32> -> vector<12x288xf32>
    %95 = arith.addf %89, %94 : vector<12x288xf32>
    %c0_107 = arith.constant 0 : index
    %c0_108 = arith.constant 0 : index
    %c37_109 = arith.constant 37 : index
    %96 = vector.load %arg1[%c0_107, %c0_108, %c37_109] : memref<1x24x342xf32, #tpu.memory_space<vmem>>, vector<1x24x288xf32>
    %97 = vector.shape_cast %96 : vector<1x24x288xf32> to vector<24x288xf32>
    %c0_110 = arith.constant 0 : index
    %c2_111 = arith.constant 2 : index
    %c0_112 = arith.constant 0 : index
    %c0_113 = arith.constant 0 : index
    %98 = vector.load %arg2[%c0_110, %c2_111, %c0_112, %c0_113] : memref<4x4x12x24xf32, #tpu.memory_space<vmem>>, vector<1x1x12x24xf32>
    %99 = vector.shape_cast %98 : vector<1x1x12x24xf32> to vector<12x24xf32>
    %cst_114 = arith.constant dense<0.000000e+00> : vector<12x288xf32>
    %100 = tpu.matmul %99, %97, %cst_114 {dimension_numbers = #tpu.dot_dimension_numbers<[1], [0], [0], [1], [0, 0, 1, 1], [], []>} : vector<12x24xf32>, vector<24x288xf32>, vector<12x288xf32> -> vector<12x288xf32>
    %101 = arith.addf %95, %100 : vector<12x288xf32>
    %c0_115 = arith.constant 0 : index
    %c0_116 = arith.constant 0 : index
    %c20_117 = arith.constant 20 : index
    %102 = vector.load %arg1[%c0_115, %c0_116, %c20_117] : memref<1x24x342xf32, #tpu.memory_space<vmem>>, vector<1x24x288xf32>
    %103 = vector.shape_cast %102 : vector<1x24x288xf32> to vector<24x288xf32>
    %c2_118 = arith.constant 2 : index
    %c0_119 = arith.constant 0 : index
    %c0_120 = arith.constant 0 : index
    %c0_121 = arith.constant 0 : index
    %104 = vector.load %arg2[%c2_118, %c0_119, %c0_120, %c0_121] : memref<4x4x12x24xf32, #tpu.memory_space<vmem>>, vector<1x1x12x24xf32>
    %105 = vector.shape_cast %104 : vector<1x1x12x24xf32> to vector<12x24xf32>
    %cst_122 = arith.constant dense<0.000000e+00> : vector<12x288xf32>
    %106 = tpu.matmul %105, %103, %cst_122 {dimension_numbers = #tpu.dot_dimension_numbers<[1], [0], [0], [1], [0, 0, 1, 1], [], []>} : vector<12x24xf32>, vector<24x288xf32>, vector<12x288xf32> -> vector<12x288xf32>
    %107 = arith.addf %101, %106 : vector<12x288xf32>
    %c0_123 = arith.constant 0 : index
    %c0_124 = arith.constant 0 : index
    %c19_125 = arith.constant 19 : index
    %108 = vector.load %arg1[%c0_123, %c0_124, %c19_125] : memref<1x24x342xf32, #tpu.memory_space<vmem>>, vector<1x24x288xf32>
    %109 = vector.shape_cast %108 : vector<1x24x288xf32> to vector<24x288xf32>
    %c2_126 = arith.constant 2 : index
    %c2_127 = arith.constant 2 : index
    %c0_128 = arith.constant 0 : index
    %c0_129 = arith.constant 0 : index
    %110 = vector.load %arg2[%c2_126, %c2_127, %c0_128, %c0_129] : memref<4x4x12x24xf32, #tpu.memory_space<vmem>>, vector<1x1x12x24xf32>
    %111 = vector.shape_cast %110 : vector<1x1x12x24xf32> to vector<12x24xf32>
    %cst_130 = arith.constant dense<0.000000e+00> : vector<12x288xf32>
    %112 = tpu.matmul %111, %109, %cst_130 {dimension_numbers = #tpu.dot_dimension_numbers<[1], [0], [0], [1], [0, 0, 1, 1], [], []>} : vector<12x24xf32>, vector<24x288xf32>, vector<12x288xf32> -> vector<12x288xf32>
    %113 = arith.addf %107, %112 : vector<12x288xf32>
    %c0_131 = arith.constant 0 : index
    %c3_132 = arith.constant 3 : index
    %c0_133 = arith.constant 0 : index
    %c0_134 = arith.constant 0 : index
    %114 = vector.load %arg4[%c0_131, %c3_132, %c0_133, %c0_134] : memref<1x4x12x288xf32, #tpu.memory_space<vmem>>, vector<1x1x12x288xf32>
    %115 = vector.shape_cast %114 : vector<1x1x12x288xf32> to vector<12x288xf32>
    %116 = vector.shape_cast %113 : vector<12x288xf32> to vector<1x1x12x288xf32>
    tpu.vector_store %arg4[%c0_131, %c3_132, %c0_133, %c0_134], %116 {strides = array<i32>} : memref<1x4x12x288xf32, #tpu.memory_space<vmem>>, vector<1x1x12x288xf32>,
    return
  }
  func.func @transform_0(%arg0: i32) -> (i32, i32, i32) {
    %c0_i32 = arith.constant 0 : i32
    %c0_i32_0 = arith.constant 0 : i32
    %c0_i32_1 = arith.constant 0 : i32
    return %arg0, %c0_i32, %c0_i32_0 : i32, i32, i32
  }
  func.func @transform_1(%arg0: i32) -> (i32, i32, i32, i32) {
    %c0_i32 = arith.constant 0 : i32
    %c0_i32_0 = arith.constant 0 : i32
    %c0_i32_1 = arith.constant 0 : i32
    %c0_i32_2 = arith.constant 0 : i32
    %c0_i32_3 = arith.constant 0 : i32
    return %c0_i32, %c0_i32_0, %c0_i32_1, %c0_i32_2 : i32, i32, i32, i32
  }
  func.func @transform_2(%arg0: i32) -> (i32, i32) {
    %c0_i32 = arith.constant 0 : i32
    %c0_i32_0 = arith.constant 0 : i32
    %c0_i32_1 = arith.constant 0 : i32
    return %c0_i32, %c0_i32_0 : i32, i32
  }
  func.func @transform_3(%arg0: i32) -> (i32, i32, i32, i32) {
    %c0_i32 = arith.constant 0 : i32
    %c0_i32_0 = arith.constant 0 : i32
    %c0_i32_1 = arith.constant 0 : i32
    %c0_i32_2 = arith.constant 0 : i32
    return %arg0, %c0_i32, %c0_i32_0, %c0_i32_1 : i32, i32, i32, i32
  }
}

module attributes {stable_mosaic.version = 11 : i64} {
  func.func @_deconv_kernel(%arg0: i32, %arg1: memref<1x12x1190xf32, #tpu.memory_space<vmem>>, %arg2: memref<4x4x3x12xf32, #tpu.memory_space<vmem>>, %arg3: memref<3x1xf32, #tpu.memory_space<vmem>>, %arg4: memref<1x4x3x1088xf32, #tpu.memory_space<vmem>>) attributes {dimension_semantics = [#tpu.dimension_semantics<parallel>], iteration_bounds = array<i64: 2>, scalar_prefetch = 0 : i64, scratch_operands = 0 : i64, tpu.core_type = #tpu.core_type<tc>, window_params = [{transform_indices = @transform_0, window_bounds = array<i64: 1, 12, 1190>}, {pipeline_mode = #tpu.pipeline_mode<synchronous>, transform_indices = @transform_1, window_bounds = array<i64: 4, 4, 3, 12>}, {pipeline_mode = #tpu.pipeline_mode<synchronous>, transform_indices = @transform_2, window_bounds = array<i64: 3, 1>}, {transform_indices = @transform_3, window_bounds = array<i64: 1, 4, 3, 1088>}]} {
    %c0 = arith.constant 0 : index
    %c0_0 = arith.constant 0 : index
    %0 = vector.load %arg3[%c0, %c0_0] : memref<3x1xf32, #tpu.memory_space<vmem>>, vector<3x1xf32>
    %1 = vector.shape_cast %0 : vector<3x1xf32> to vector<3x1xf32>
    %2 = vector.broadcast %1 : vector<3x1xf32> to vector<3x1088xf32>
    %c0_1 = arith.constant 0 : index
    %c0_2 = arith.constant 0 : index
    %c35 = arith.constant 35 : index
    %3 = vector.load %arg1[%c0_1, %c0_2, %c35] : memref<1x12x1190xf32, #tpu.memory_space<vmem>>, vector<1x12x1088xf32>
    %4 = vector.shape_cast %3 : vector<1x12x1088xf32> to vector<12x1088xf32>
    %c1 = arith.constant 1 : index
    %c1_3 = arith.constant 1 : index
    %c0_4 = arith.constant 0 : index
    %c0_5 = arith.constant 0 : index
    %5 = vector.load %arg2[%c1, %c1_3, %c0_4, %c0_5] : memref<4x4x3x12xf32, #tpu.memory_space<vmem>>, vector<1x1x3x12xf32>
    %6 = vector.shape_cast %5 : vector<1x1x3x12xf32> to vector<3x12xf32>
    %cst = arith.constant dense<0.000000e+00> : vector<3x1088xf32>
    %7 = tpu.matmul %6, %4, %cst {dimension_numbers = #tpu.dot_dimension_numbers<[1], [0], [0], [1], [0, 0, 1, 1], [], []>} : vector<3x12xf32>, vector<12x1088xf32>, vector<3x1088xf32> -> vector<3x1088xf32>
    %8 = arith.addf %2, %7 : vector<3x1088xf32>
    %c0_6 = arith.constant 0 : index
    %c0_7 = arith.constant 0 : index
    %c34 = arith.constant 34 : index
    %9 = vector.load %arg1[%c0_6, %c0_7, %c34] : memref<1x12x1190xf32, #tpu.memory_space<vmem>>, vector<1x12x1088xf32>
    %10 = vector.shape_cast %9 : vector<1x12x1088xf32> to vector<12x1088xf32>
    %c1_8 = arith.constant 1 : index
    %c3 = arith.constant 3 : index
    %c0_9 = arith.constant 0 : index
    %c0_10 = arith.constant 0 : index
    %11 = vector.load %arg2[%c1_8, %c3, %c0_9, %c0_10] : memref<4x4x3x12xf32, #tpu.memory_space<vmem>>, vector<1x1x3x12xf32>
    %12 = vector.shape_cast %11 : vector<1x1x3x12xf32> to vector<3x12xf32>
    %cst_11 = arith.constant dense<0.000000e+00> : vector<3x1088xf32>
    %13 = tpu.matmul %12, %10, %cst_11 {dimension_numbers = #tpu.dot_dimension_numbers<[1], [0], [0], [1], [0, 0, 1, 1], [], []>} : vector<3x12xf32>, vector<12x1088xf32>, vector<3x1088xf32> -> vector<3x1088xf32>
    %14 = arith.addf %8, %13 : vector<3x1088xf32>
    %c0_12 = arith.constant 0 : index
    %c0_13 = arith.constant 0 : index
    %c1_14 = arith.constant 1 : index
    %15 = vector.load %arg1[%c0_12, %c0_13, %c1_14] : memref<1x12x1190xf32, #tpu.memory_space<vmem>>, vector<1x12x1088xf32>
    %16 = vector.shape_cast %15 : vector<1x12x1088xf32> to vector<12x1088xf32>
    %c3_15 = arith.constant 3 : index
    %c1_16 = arith.constant 1 : index
    %c0_17 = arith.constant 0 : index
    %c0_18 = arith.constant 0 : index
    %17 = vector.load %arg2[%c3_15, %c1_16, %c0_17, %c0_18] : memref<4x4x3x12xf32, #tpu.memory_space<vmem>>, vector<1x1x3x12xf32>
    %18 = vector.shape_cast %17 : vector<1x1x3x12xf32> to vector<3x12xf32>
    %cst_19 = arith.constant dense<0.000000e+00> : vector<3x1088xf32>
    %19 = tpu.matmul %18, %16, %cst_19 {dimension_numbers = #tpu.dot_dimension_numbers<[1], [0], [0], [1], [0, 0, 1, 1], [], []>} : vector<3x12xf32>, vector<12x1088xf32>, vector<3x1088xf32> -> vector<3x1088xf32>
    %20 = arith.addf %14, %19 : vector<3x1088xf32>
    %c0_20 = arith.constant 0 : index
    %c0_21 = arith.constant 0 : index
    %c0_22 = arith.constant 0 : index
    %21 = vector.load %arg1[%c0_20, %c0_21, %c0_22] : memref<1x12x1190xf32, #tpu.memory_space<vmem>>, vector<1x12x1088xf32>
    %22 = vector.shape_cast %21 : vector<1x12x1088xf32> to vector<12x1088xf32>
    %c3_23 = arith.constant 3 : index
    %c3_24 = arith.constant 3 : index
    %c0_25 = arith.constant 0 : index
    %c0_26 = arith.constant 0 : index
    %23 = vector.load %arg2[%c3_23, %c3_24, %c0_25, %c0_26] : memref<4x4x3x12xf32, #tpu.memory_space<vmem>>, vector<1x1x3x12xf32>
    %24 = vector.shape_cast %23 : vector<1x1x3x12xf32> to vector<3x12xf32>
    %cst_27 = arith.constant dense<0.000000e+00> : vector<3x1088xf32>
    %25 = tpu.matmul %24, %22, %cst_27 {dimension_numbers = #tpu.dot_dimension_numbers<[1], [0], [0], [1], [0, 0, 1, 1], [], []>} : vector<3x12xf32>, vector<12x1088xf32>, vector<3x1088xf32> -> vector<3x1088xf32>
    %26 = arith.addf %20, %25 : vector<3x1088xf32>
    %c0_28 = arith.constant 0 : index
    %c0_29 = arith.constant 0 : index
    %c0_30 = arith.constant 0 : index
    %c0_31 = arith.constant 0 : index
    %27 = vector.load %arg4[%c0_28, %c0_29, %c0_30, %c0_31] : memref<1x4x3x1088xf32, #tpu.memory_space<vmem>>, vector<1x1x3x1088xf32>
    %28 = vector.shape_cast %27 : vector<1x1x3x1088xf32> to vector<3x1088xf32>
    %29 = vector.shape_cast %26 : vector<3x1088xf32> to vector<1x1x3x1088xf32>
    tpu.vector_store %arg4[%c0_28, %c0_29, %c0_30, %c0_31], %29 {strides = array<i32>} : memref<1x4x3x1088xf32, #tpu.memory_space<vmem>>, vector<1x1x3x1088xf32>,
    %30 = vector.shape_cast %0 : vector<3x1xf32> to vector<3x1xf32>
    %31 = vector.broadcast %30 : vector<3x1xf32> to vector<3x1088xf32>
    %c0_32 = arith.constant 0 : index
    %c0_33 = arith.constant 0 : index
    %c36 = arith.constant 36 : index
    %32 = vector.load %arg1[%c0_32, %c0_33, %c36] : memref<1x12x1190xf32, #tpu.memory_space<vmem>>, vector<1x12x1088xf32>
    %33 = vector.shape_cast %32 : vector<1x12x1088xf32> to vector<12x1088xf32>
    %c1_34 = arith.constant 1 : index
    %c0_35 = arith.constant 0 : index
    %c0_36 = arith.constant 0 : index
    %c0_37 = arith.constant 0 : index
    %34 = vector.load %arg2[%c1_34, %c0_35, %c0_36, %c0_37] : memref<4x4x3x12xf32, #tpu.memory_space<vmem>>, vector<1x1x3x12xf32>
    %35 = vector.shape_cast %34 : vector<1x1x3x12xf32> to vector<3x12xf32>
    %cst_38 = arith.constant dense<0.000000e+00> : vector<3x1088xf32>
    %36 = tpu.matmul %35, %33, %cst_38 {dimension_numbers = #tpu.dot_dimension_numbers<[1], [0], [0], [1], [0, 0, 1, 1], [], []>} : vector<3x12xf32>, vector<12x1088xf32>, vector<3x1088xf32> -> vector<3x1088xf32>
    %37 = arith.addf %31, %36 : vector<3x1088xf32>
    %c0_39 = arith.constant 0 : index
    %c0_40 = arith.constant 0 : index
    %c35_41 = arith.constant 35 : index
    %38 = vector.load %arg1[%c0_39, %c0_40, %c35_41] : memref<1x12x1190xf32, #tpu.memory_space<vmem>>, vector<1x12x1088xf32>
    %39 = vector.shape_cast %38 : vector<1x12x1088xf32> to vector<12x1088xf32>
    %c1_42 = arith.constant 1 : index
    %c2 = arith.constant 2 : index
    %c0_43 = arith.constant 0 : index
    %c0_44 = arith.constant 0 : index
    %40 = vector.load %arg2[%c1_42, %c2, %c0_43, %c0_44] : memref<4x4x3x12xf32, #tpu.memory_space<vmem>>, vector<1x1x3x12xf32>
    %41 = vector.shape_cast %40 : vector<1x1x3x12xf32> to vector<3x12xf32>
    %cst_45 = arith.constant dense<0.000000e+00> : vector<3x1088xf32>
    %42 = tpu.matmul %41, %39, %cst_45 {dimension_numbers = #tpu.dot_dimension_numbers<[1], [0], [0], [1], [0, 0, 1, 1], [], []>} : vector<3x12xf32>, vector<12x1088xf32>, vector<3x1088xf32> -> vector<3x1088xf32>
    %43 = arith.addf %37, %42 : vector<3x1088xf32>
    %c0_46 = arith.constant 0 : index
    %c0_47 = arith.constant 0 : index
    %c2_48 = arith.constant 2 : index
    %44 = vector.load %arg1[%c0_46, %c0_47, %c2_48] : memref<1x12x1190xf32, #tpu.memory_space<vmem>>, vector<1x12x1088xf32>
    %45 = vector.shape_cast %44 : vector<1x12x1088xf32> to vector<12x1088xf32>
    %c3_49 = arith.constant 3 : index
    %c0_50 = arith.constant 0 : index
    %c0_51 = arith.constant 0 : index
    %c0_52 = arith.constant 0 : index
    %46 = vector.load %arg2[%c3_49, %c0_50, %c0_51, %c0_52] : memref<4x4x3x12xf32, #tpu.memory_space<vmem>>, vector<1x1x3x12xf32>
    %47 = vector.shape_cast %46 : vector<1x1x3x12xf32> to vector<3x12xf32>
    %cst_53 = arith.constant dense<0.000000e+00> : vector<3x1088xf32>
    %48 = tpu.matmul %47, %45, %cst_53 {dimension_numbers = #tpu.dot_dimension_numbers<[1], [0], [0], [1], [0, 0, 1, 1], [], []>} : vector<3x12xf32>, vector<12x1088xf32>, vector<3x1088xf32> -> vector<3x1088xf32>
    %49 = arith.addf %43, %48 : vector<3x1088xf32>
    %c0_54 = arith.constant 0 : index
    %c0_55 = arith.constant 0 : index
    %c1_56 = arith.constant 1 : index
    %50 = vector.load %arg1[%c0_54, %c0_55, %c1_56] : memref<1x12x1190xf32, #tpu.memory_space<vmem>>, vector<1x12x1088xf32>
    %51 = vector.shape_cast %50 : vector<1x12x1088xf32> to vector<12x1088xf32>
    %c3_57 = arith.constant 3 : index
    %c2_58 = arith.constant 2 : index
    %c0_59 = arith.constant 0 : index
    %c0_60 = arith.constant 0 : index
    %52 = vector.load %arg2[%c3_57, %c2_58, %c0_59, %c0_60] : memref<4x4x3x12xf32, #tpu.memory_space<vmem>>, vector<1x1x3x12xf32>
    %53 = vector.shape_cast %52 : vector<1x1x3x12xf32> to vector<3x12xf32>
    %cst_61 = arith.constant dense<0.000000e+00> : vector<3x1088xf32>
    %54 = tpu.matmul %53, %51, %cst_61 {dimension_numbers = #tpu.dot_dimension_numbers<[1], [0], [0], [1], [0, 0, 1, 1], [], []>} : vector<3x12xf32>, vector<12x1088xf32>, vector<3x1088xf32> -> vector<3x1088xf32>
    %55 = arith.addf %49, %54 : vector<3x1088xf32>
    %c0_62 = arith.constant 0 : index
    %c1_63 = arith.constant 1 : index
    %c0_64 = arith.constant 0 : index
    %c0_65 = arith.constant 0 : index
    %56 = vector.load %arg4[%c0_62, %c1_63, %c0_64, %c0_65] : memref<1x4x3x1088xf32, #tpu.memory_space<vmem>>, vector<1x1x3x1088xf32>
    %57 = vector.shape_cast %56 : vector<1x1x3x1088xf32> to vector<3x1088xf32>
    %58 = vector.shape_cast %55 : vector<3x1088xf32> to vector<1x1x3x1088xf32>
    tpu.vector_store %arg4[%c0_62, %c1_63, %c0_64, %c0_65], %58 {strides = array<i32>} : memref<1x4x3x1088xf32, #tpu.memory_space<vmem>>, vector<1x1x3x1088xf32>,
    %59 = vector.shape_cast %0 : vector<3x1xf32> to vector<3x1xf32>
    %60 = vector.broadcast %59 : vector<3x1xf32> to vector<3x1088xf32>
    %c0_66 = arith.constant 0 : index
    %c0_67 = arith.constant 0 : index
    %c69 = arith.constant 69 : index
    %61 = vector.load %arg1[%c0_66, %c0_67, %c69] : memref<1x12x1190xf32, #tpu.memory_space<vmem>>, vector<1x12x1088xf32>
    %62 = vector.shape_cast %61 : vector<1x12x1088xf32> to vector<12x1088xf32>
    %c0_68 = arith.constant 0 : index
    %c1_69 = arith.constant 1 : index
    %c0_70 = arith.constant 0 : index
    %c0_71 = arith.constant 0 : index
    %63 = vector.load %arg2[%c0_68, %c1_69, %c0_70, %c0_71] : memref<4x4x3x12xf32, #tpu.memory_space<vmem>>, vector<1x1x3x12xf32>
    %64 = vector.shape_cast %63 : vector<1x1x3x12xf32> to vector<3x12xf32>
    %cst_72 = arith.constant dense<0.000000e+00> : vector<3x1088xf32>
    %65 = tpu.matmul %64, %62, %cst_72 {dimension_numbers = #tpu.dot_dimension_numbers<[1], [0], [0], [1], [0, 0, 1, 1], [], []>} : vector<3x12xf32>, vector<12x1088xf32>, vector<3x1088xf32> -> vector<3x1088xf32>
    %66 = arith.addf %60, %65 : vector<3x1088xf32>
    %c0_73 = arith.constant 0 : index
    %c0_74 = arith.constant 0 : index
    %c68 = arith.constant 68 : index
    %67 = vector.load %arg1[%c0_73, %c0_74, %c68] : memref<1x12x1190xf32, #tpu.memory_space<vmem>>, vector<1x12x1088xf32>
    %68 = vector.shape_cast %67 : vector<1x12x1088xf32> to vector<12x1088xf32>
    %c0_75 = arith.constant 0 : index
    %c3_76 = arith.constant 3 : index
    %c0_77 = arith.constant 0 : index
    %c0_78 = arith.constant 0 : index
    %69 = vector.load %arg2[%c0_75, %c3_76, %c0_77, %c0_78] : memref<4x4x3x12xf32, #tpu.memory_space<vmem>>, vector<1x1x3x12xf32>
    %70 = vector.shape_cast %69 : vector<1x1x3x12xf32> to vector<3x12xf32>
    %cst_79 = arith.constant dense<0.000000e+00> : vector<3x1088xf32>
    %71 = tpu.matmul %70, %68, %cst_79 {dimension_numbers = #tpu.dot_dimension_numbers<[1], [0], [0], [1], [0, 0, 1, 1], [], []>} : vector<3x12xf32>, vector<12x1088xf32>, vector<3x1088xf32> -> vector<3x1088xf32>
    %72 = arith.addf %66, %71 : vector<3x1088xf32>
    %c0_80 = arith.constant 0 : index
    %c0_81 = arith.constant 0 : index
    %c35_82 = arith.constant 35 : index
    %73 = vector.load %arg1[%c0_80, %c0_81, %c35_82] : memref<1x12x1190xf32, #tpu.memory_space<vmem>>, vector<1x12x1088xf32>
    %74 = vector.shape_cast %73 : vector<1x12x1088xf32> to vector<12x1088xf32>
    %c2_83 = arith.constant 2 : index
    %c1_84 = arith.constant 1 : index
    %c0_85 = arith.constant 0 : index
    %c0_86 = arith.constant 0 : index
    %75 = vector.load %arg2[%c2_83, %c1_84, %c0_85, %c0_86] : memref<4x4x3x12xf32, #tpu.memory_space<vmem>>, vector<1x1x3x12xf32>
    %76 = vector.shape_cast %75 : vector<1x1x3x12xf32> to vector<3x12xf32>
    %cst_87 = arith.constant dense<0.000000e+00> : vector<3x1088xf32>
    %77 = tpu.matmul %76, %74, %cst_87 {dimension_numbers = #tpu.dot_dimension_numbers<[1], [0], [0], [1], [0, 0, 1, 1], [], []>} : vector<3x12xf32>, vector<12x1088xf32>, vector<3x1088xf32> -> vector<3x1088xf32>
    %78 = arith.addf %72, %77 : vector<3x1088xf32>
    %c0_88 = arith.constant 0 : index
    %c0_89 = arith.constant 0 : index
    %c34_90 = arith.constant 34 : index
    %79 = vector.load %arg1[%c0_88, %c0_89, %c34_90] : memref<1x12x1190xf32, #tpu.memory_space<vmem>>, vector<1x12x1088xf32>
    %80 = vector.shape_cast %79 : vector<1x12x1088xf32> to vector<12x1088xf32>
    %c2_91 = arith.constant 2 : index
    %c3_92 = arith.constant 3 : index
    %c0_93 = arith.constant 0 : index
    %c0_94 = arith.constant 0 : index
    %81 = vector.load %arg2[%c2_91, %c3_92, %c0_93, %c0_94] : memref<4x4x3x12xf32, #tpu.memory_space<vmem>>, vector<1x1x3x12xf32>
    %82 = vector.shape_cast %81 : vector<1x1x3x12xf32> to vector<3x12xf32>
    %cst_95 = arith.constant dense<0.000000e+00> : vector<3x1088xf32>
    %83 = tpu.matmul %82, %80, %cst_95 {dimension_numbers = #tpu.dot_dimension_numbers<[1], [0], [0], [1], [0, 0, 1, 1], [], []>} : vector<3x12xf32>, vector<12x1088xf32>, vector<3x1088xf32> -> vector<3x1088xf32>
    %84 = arith.addf %78, %83 : vector<3x1088xf32>
    %c0_96 = arith.constant 0 : index
    %c2_97 = arith.constant 2 : index
    %c0_98 = arith.constant 0 : index
    %c0_99 = arith.constant 0 : index
    %85 = vector.load %arg4[%c0_96, %c2_97, %c0_98, %c0_99] : memref<1x4x3x1088xf32, #tpu.memory_space<vmem>>, vector<1x1x3x1088xf32>
    %86 = vector.shape_cast %85 : vector<1x1x3x1088xf32> to vector<3x1088xf32>
    %87 = vector.shape_cast %84 : vector<3x1088xf32> to vector<1x1x3x1088xf32>
    tpu.vector_store %arg4[%c0_96, %c2_97, %c0_98, %c0_99], %87 {strides = array<i32>} : memref<1x4x3x1088xf32, #tpu.memory_space<vmem>>, vector<1x1x3x1088xf32>,
    %88 = vector.shape_cast %0 : vector<3x1xf32> to vector<3x1xf32>
    %89 = vector.broadcast %88 : vector<3x1xf32> to vector<3x1088xf32>
    %c0_100 = arith.constant 0 : index
    %c0_101 = arith.constant 0 : index
    %c70 = arith.constant 70 : index
    %90 = vector.load %arg1[%c0_100, %c0_101, %c70] : memref<1x12x1190xf32, #tpu.memory_space<vmem>>, vector<1x12x1088xf32>
    %91 = vector.shape_cast %90 : vector<1x12x1088xf32> to vector<12x1088xf32>
    %c0_102 = arith.constant 0 : index
    %c0_103 = arith.constant 0 : index
    %c0_104 = arith.constant 0 : index
    %c0_105 = arith.constant 0 : index
    %92 = vector.load %arg2[%c0_102, %c0_103, %c0_104, %c0_105] : memref<4x4x3x12xf32, #tpu.memory_space<vmem>>, vector<1x1x3x12xf32>
    %93 = vector.shape_cast %92 : vector<1x1x3x12xf32> to vector<3x12xf32>
    %cst_106 = arith.constant dense<0.000000e+00> : vector<3x1088xf32>
    %94 = tpu.matmul %93, %91, %cst_106 {dimension_numbers = #tpu.dot_dimension_numbers<[1], [0], [0], [1], [0, 0, 1, 1], [], []>} : vector<3x12xf32>, vector<12x1088xf32>, vector<3x1088xf32> -> vector<3x1088xf32>
    %95 = arith.addf %89, %94 : vector<3x1088xf32>
    %c0_107 = arith.constant 0 : index
    %c0_108 = arith.constant 0 : index
    %c69_109 = arith.constant 69 : index
    %96 = vector.load %arg1[%c0_107, %c0_108, %c69_109] : memref<1x12x1190xf32, #tpu.memory_space<vmem>>, vector<1x12x1088xf32>
    %97 = vector.shape_cast %96 : vector<1x12x1088xf32> to vector<12x1088xf32>
    %c0_110 = arith.constant 0 : index
    %c2_111 = arith.constant 2 : index
    %c0_112 = arith.constant 0 : index
    %c0_113 = arith.constant 0 : index
    %98 = vector.load %arg2[%c0_110, %c2_111, %c0_112, %c0_113] : memref<4x4x3x12xf32, #tpu.memory_space<vmem>>, vector<1x1x3x12xf32>
    %99 = vector.shape_cast %98 : vector<1x1x3x12xf32> to vector<3x12xf32>
    %cst_114 = arith.constant dense<0.000000e+00> : vector<3x1088xf32>
    %100 = tpu.matmul %99, %97, %cst_114 {dimension_numbers = #tpu.dot_dimension_numbers<[1], [0], [0], [1], [0, 0, 1, 1], [], []>} : vector<3x12xf32>, vector<12x1088xf32>, vector<3x1088xf32> -> vector<3x1088xf32>
    %101 = arith.addf %95, %100 : vector<3x1088xf32>
    %c0_115 = arith.constant 0 : index
    %c0_116 = arith.constant 0 : index
    %c36_117 = arith.constant 36 : index
    %102 = vector.load %arg1[%c0_115, %c0_116, %c36_117] : memref<1x12x1190xf32, #tpu.memory_space<vmem>>, vector<1x12x1088xf32>
    %103 = vector.shape_cast %102 : vector<1x12x1088xf32> to vector<12x1088xf32>
    %c2_118 = arith.constant 2 : index
    %c0_119 = arith.constant 0 : index
    %c0_120 = arith.constant 0 : index
    %c0_121 = arith.constant 0 : index
    %104 = vector.load %arg2[%c2_118, %c0_119, %c0_120, %c0_121] : memref<4x4x3x12xf32, #tpu.memory_space<vmem>>, vector<1x1x3x12xf32>
    %105 = vector.shape_cast %104 : vector<1x1x3x12xf32> to vector<3x12xf32>
    %cst_122 = arith.constant dense<0.000000e+00> : vector<3x1088xf32>
    %106 = tpu.matmul %105, %103, %cst_122 {dimension_numbers = #tpu.dot_dimension_numbers<[1], [0], [0], [1], [0, 0, 1, 1], [], []>} : vector<3x12xf32>, vector<12x1088xf32>, vector<3x1088xf32> -> vector<3x1088xf32>
    %107 = arith.addf %101, %106 : vector<3x1088xf32>
    %c0_123 = arith.constant 0 : index
    %c0_124 = arith.constant 0 : index
    %c35_125 = arith.constant 35 : index
    %108 = vector.load %arg1[%c0_123, %c0_124, %c35_125] : memref<1x12x1190xf32, #tpu.memory_space<vmem>>, vector<1x12x1088xf32>
    %109 = vector.shape_cast %108 : vector<1x12x1088xf32> to vector<12x1088xf32>
    %c2_126 = arith.constant 2 : index
    %c2_127 = arith.constant 2 : index
    %c0_128 = arith.constant 0 : index
    %c0_129 = arith.constant 0 : index
    %110 = vector.load %arg2[%c2_126, %c2_127, %c0_128, %c0_129] : memref<4x4x3x12xf32, #tpu.memory_space<vmem>>, vector<1x1x3x12xf32>
    %111 = vector.shape_cast %110 : vector<1x1x3x12xf32> to vector<3x12xf32>
    %cst_130 = arith.constant dense<0.000000e+00> : vector<3x1088xf32>
    %112 = tpu.matmul %111, %109, %cst_130 {dimension_numbers = #tpu.dot_dimension_numbers<[1], [0], [0], [1], [0, 0, 1, 1], [], []>} : vector<3x12xf32>, vector<12x1088xf32>, vector<3x1088xf32> -> vector<3x1088xf32>
    %113 = arith.addf %107, %112 : vector<3x1088xf32>
    %c0_131 = arith.constant 0 : index
    %c3_132 = arith.constant 3 : index
    %c0_133 = arith.constant 0 : index
    %c0_134 = arith.constant 0 : index
    %114 = vector.load %arg4[%c0_131, %c3_132, %c0_133, %c0_134] : memref<1x4x3x1088xf32, #tpu.memory_space<vmem>>, vector<1x1x3x1088xf32>
    %115 = vector.shape_cast %114 : vector<1x1x3x1088xf32> to vector<3x1088xf32>
    %116 = vector.shape_cast %113 : vector<3x1088xf32> to vector<1x1x3x1088xf32>
    tpu.vector_store %arg4[%c0_131, %c3_132, %c0_133, %c0_134], %116 {strides = array<i32>} : memref<1x4x3x1088xf32, #tpu.memory_space<vmem>>, vector<1x1x3x1088xf32>,
    return
  }
  func.func @transform_0(%arg0: i32) -> (i32, i32, i32) {
    %c0_i32 = arith.constant 0 : i32
    %c0_i32_0 = arith.constant 0 : i32
    %c0_i32_1 = arith.constant 0 : i32
    return %arg0, %c0_i32, %c0_i32_0 : i32, i32, i32
  }
  func.func @transform_1(%arg0: i32) -> (i32, i32, i32, i32) {
    %c0_i32 = arith.constant 0 : i32
    %c0_i32_0 = arith.constant 0 : i32
    %c0_i32_1 = arith.constant 0 : i32
    %c0_i32_2 = arith.constant 0 : i32
    %c0_i32_3 = arith.constant 0 : i32
    return %c0_i32, %c0_i32_0, %c0_i32_1, %c0_i32_2 : i32, i32, i32, i32
  }
  func.func @transform_2(%arg0: i32) -> (i32, i32) {
    %c0_i32 = arith.constant 0 : i32
    %c0_i32_0 = arith.constant 0 : i32
    %c0_i32_1 = arith.constant 0 : i32
    return %c0_i32, %c0_i32_0 : i32, i32
  }
  func.func @transform_3(%arg0: i32) -> (i32, i32, i32, i32) {
    %c0_i32 = arith.constant 0 : i32
    %c0_i32_0 = arith.constant 0 : i32
    %c0_i32_1 = arith.constant 0 : i32
    %c0_i32_2 = arith.constant 0 : i32
    return %arg0, %c0_i32, %c0_i32_0, %c0_i32_1 : i32, i32, i32, i32
  }
}

</mosaic_0001>

<llo_original>
// kernel: img_decoder_fwd.2
$region0: #{img_decoder_fwd.2}
  #allocation0 [shape = 'u32[]', space=smem, size = 0x4, offset = 0x4, fixed_abs, tag = 'smem constant byte address 0x4 - core index']
  #allocation1 [shape = 'u32[144,128]{1,0:T(1,128)}', space=vmem, size = 0x12000, scoped, tag = 'internal scratch']
  %s0 = inlined_call_operand.vmem [shape: f32[2,24,342], index: 0, kind: input, shape index: {}]
  %s1 = inlined_call_operand.vmem [shape: f32[4,4,12,24], index: 1, kind: input, shape index: {}]
  %s2 = inlined_call_operand.vmem [shape: f32[12,1], index: 2, kind: input, shape index: {}]
  %s3 = inlined_call_operand.vmem [shape: f32[2,4,12,288], index: 3, kind: output, shape index: {}]
  %s4 = sld [smem:[#allocation0]]
  $region45: #{img_decoder_fwd.2} parent=0
    _
  %s6 = ssub.s32 1, %s4
  %s7 = scalar_select 0, %s6, %s4
  loop: start=0, step=1, limit=4
  $region2: #{img_decoder_fwd.2} parent=0 // loop_pre_header
    _
  $region3: #{img_decoder_fwd.2} parent=0 // loop_header
    %s9 = sphi 0, %s13
    %p10 = scmp.ge.s32.totalorder %s9, 4
    %s19 = sphi 0, %s21
    %s22 = sphi 0, %s19
    %s23 = sphi 0, %s22
    %s39 = sphi 0, %s23
    %s43 = sphi 0, %s43
    %s45 = sphi 0, %s43
    %s46 = sphi 0, %s45
    %s60 = sphi 0, %s46
    %s64 = sphi 0, %s64
    %s66 = sphi 0, %s64
    %s67 = sphi 0, %s66
    %s81 = sphi 0, %s67
    %s87 = sphi 0, %s89
    %s90 = sphi 0, %s87
    %s91 = sphi 0, %s90
    %s107 = sphi 0, %s91
  $region4: #{img_decoder_fwd.2} parent=0 // loop_header_branch
    %12 = sbr.rel (%p10) target = $region8
  $region5: #{img_decoder_fwd.2} parent=0 // loop_body
    %s14 = ssub.s32 %s9, 1
    %s15 = ssub.s32 %s9, 2
    %s16 = sadd.s32 %s9, 1
    %s17 = ssub.s32 %s9, %s16
    %p18 = scmp.eq.s32.totalorder %s17, 0
    %s20 = sadd.s32 %s19, 1
    %s21 = scalar_select %p18, %s19, %s20
    %p24 = pneg %p18
    %p25 = scmp.eq.s32.totalorder %s9, 1
    %p26 = por %p24, %p25
    %p27 = scmp.ne.s32.totalorder %s19, %s22
    %p28 = scmp.eq.s32.totalorder %s9, 0
    %p29 = por %p27, %p28
    %p30 = scmp.ne.s32.totalorder %s19, %s22
    %p31 = scmp.eq.s32.totalorder %s14, 1
    %p32 = por %p30, %p31
    %p33 = scmp.ne.s32.totalorder %s22, %s23
    %p34 = scmp.eq.s32.totalorder %s14, 0
    %p35 = por %p33, %p34
    %p36 = scmp.ne.s32.totalorder %s22, %s23
    %p37 = scmp.eq.s32.totalorder %s15, 1
    %p38 = por %p36, %p37
    %p40 = scmp.ne.s32.totalorder %s23, %s39
    %p41 = scmp.eq.s32.totalorder %s15, 0
    %p42 = por %p40, %p41
    %s44 = sadd.s32 %s43, 1
    %p47 = scmp.eq.s32.totalorder %s9, 1
    %p48 = scmp.ne.s32.totalorder %s43, %s45
    %p49 = scmp.eq.s32.totalorder %s9, 0
    %p50 = por %p48, %p49
    %p51 = scmp.ne.s32.totalorder %s43, %s45
    %p52 = scmp.eq.s32.totalorder %s14, 1
    %p53 = por %p51, %p52
    %p54 = scmp.ne.s32.totalorder %s45, %s46
    %p55 = scmp.eq.s32.totalorder %s14, 0
    %p56 = por %p54, %p55
    %p57 = scmp.ne.s32.totalorder %s45, %s46
    %p58 = scmp.eq.s32.totalorder %s15, 1
    %p59 = por %p57, %p58
    %p61 = scmp.ne.s32.totalorder %s46, %s60
    %p62 = scmp.eq.s32.totalorder %s15, 0
    %p63 = por %p61, %p62
    %s65 = sadd.s32 %s64, 1
    %p68 = scmp.eq.s32.totalorder %s9, 1
    %p69 = scmp.ne.s32.totalorder %s64, %s66
    %p70 = scmp.eq.s32.totalorder %s9, 0
    %p71 = por %p69, %p70
    %p72 = scmp.ne.s32.totalorder %s64, %s66
    %p73 = scmp.eq.s32.totalorder %s14, 1
    %p74 = por %p72, %p73
    %p75 = scmp.ne.s32.totalorder %s66, %s67
    %p76 = scmp.eq.s32.totalorder %s14, 0
    %p77 = por %p75, %p76
    %p78 = scmp.ne.s32.totalorder %s66, %s67
    %p79 = scmp.eq.s32.totalorder %s15, 1
    %p80 = por %p78, %p79
    %p82 = scmp.ne.s32.totalorder %s67, %s81
    %p83 = scmp.eq.s32.totalorder %s15, 0
    %p84 = por %p82, %p83
    %s85 = ssub.s32 %s9, %s16
    %p86 = scmp.eq.s32.totalorder %s85, 0
    %s88 = sadd.s32 %s87, 1
    %s89 = scalar_select %p86, %s87, %s88
    %p92 = pneg %p86
    %p93 = scmp.eq.s32.totalorder %s9, 1
    %p94 = por %p92, %p93
    %p95 = scmp.ne.s32.totalorder %s87, %s90
    %p96 = scmp.eq.s32.totalorder %s9, 0
    %p97 = por %p95, %p96
    %p98 = scmp.ne.s32.totalorder %s87, %s90
    %p99 = scmp.eq.s32.totalorder %s14, 1
    %p100 = por %p98, %p99
    %p101 = scmp.ne.s32.totalorder %s90, %s91
    %p102 = scmp.eq.s32.totalorder %s14, 0
    %p103 = por %p101, %p102
    %p104 = scmp.ne.s32.totalorder %s90, %s91
    %p105 = scmp.eq.s32.totalorder %s15, 1
    %p106 = por %p104, %p105
    %p108 = scmp.ne.s32.totalorder %s91, %s107
    %p109 = scmp.eq.s32.totalorder %s15, 0
    %p110 = por %p108, %p109
    %p111 = scmp.le.s32.totalorder 1, %s9
    %p112 = scmp.lt.s32.totalorder %s9, 3
    %p113 = pnand %p111, %p112
    %p114 = pneg %p113
    // Predicated region
    $region9: #{img_decoder_fwd.2} parent=5 // pred_check
      _
    $region10: #{img_decoder_fwd.2} parent=5 // pred_check_branch
      %116 = sbr.rel (%p113) target = $region12
    $region11: #{img_decoder_fwd.2} parent=5 // pred_region
      %s117 = ssub.s32 %s9, 1
      // Predicated region
      $region13: #{img_decoder_fwd.2} parent=11 // pred_check
        %p118 = pneg %p56
      $region14: #{img_decoder_fwd.2} parent=11 // pred_check_branch
        %120 = sbr.rel (%p118) target = $region16
      $region15: #{img_decoder_fwd.2} parent=11 // pred_region
        _
      $region16: #{img_decoder_fwd.2} parent=11 // pred_fallthru
        _
      // Predicated region
      $region17: #{img_decoder_fwd.2} parent=11 // pred_check
        %p121 = pneg %p77
      $region18: #{img_decoder_fwd.2} parent=11 // pred_check_branch
        %123 = sbr.rel (%p121) target = $region20
      $region19: #{img_decoder_fwd.2} parent=11 // pred_region
        _
      $region20: #{img_decoder_fwd.2} parent=11 // pred_fallthru
        _
    $region12: #{img_decoder_fwd.2} parent=5 // pred_fallthru
      _
    %p124 = scmp.lt.s32.totalorder %s9, 2
    // Predicated region
    $region21: #{img_decoder_fwd.2} parent=5 // pred_check
      %p125 = pneg %p124
    $region22: #{img_decoder_fwd.2} parent=5 // pred_check_branch
      %127 = sbr.rel (%p125) target = $region24
    $region23: #{img_decoder_fwd.2} parent=5 // pred_region
      // Predicated region
      $region25: #{img_decoder_fwd.2} parent=23 // pred_check
        %p128 = pneg %p29
      $region26: #{img_decoder_fwd.2} parent=23 // pred_check_branch
        %130 = sbr.rel (%p128) target = $region28
      $region27: #{img_decoder_fwd.2} parent=23 // pred_region
        %p131 = scmp.lt.s32.totalorder %s9, 1
        %s132 = scalar_select %p131, %s9, 1
        %s133 = smul.addr %s132, 9
        %s134 = smul.addr %s133, 8
        %s135 = scalar_lea.vmem %s0, %s134
      $region28: #{img_decoder_fwd.2} parent=23 // pred_fallthru
        _
    $region24: #{img_decoder_fwd.2} parent=5 // pred_fallthru
      _
    %p136 = scmp.le.s32.totalorder 1, %s9
    %p137 = scmp.lt.s32.totalorder %s9, 3
    %p138 = pnand %p136, %p137
    %p139 = pneg %p138
    // Predicated region
    $region29: #{img_decoder_fwd.2} parent=5 // pred_check
      _
    $region30: #{img_decoder_fwd.2} parent=5 // pred_check_branch
      %141 = sbr.rel (%p138) target = $region32
    $region31: #{img_decoder_fwd.2} parent=5 // pred_region
      %s142 = ssub.s32 %s9, 1
      %p143 = scmp.lt.s32.totalorder %s14, 1
      %s144 = scalar_select %p143, %s14, 1
      %s145 = smul.addr %s144, 9
      %s146 = smul.addr %s145, 8
      %s147 = scalar_lea.vmem %s0, %s146
      %p148 = pneg %p35
      %p149 = pneg %p32
      %p150 = pneg %p56
      %p151 = pneg %p53
      %p152 = pneg %p77
      %p153 = pneg %p74
      %p154 = pneg %p103
      %p155 = pneg %p100
      %p156 = scmp.lt.s32.totalorder %s14, 1
      %s157 = scalar_select %p156, %s14, 1
      %s158 = smul.addr %s157, 24
      %s159 = smul.addr %s158, 8
      %s160 = scalar_lea.vmem %s3, %s159
      %p161 = scmp.lt.s32.totalorder %s14, 1
      %s162 = scalar_select %p161, %s14, 1
      %s163 = smul.addr %s162, 9
      %s164 = smul.addr %s163, 8
      %s165 = scalar_lea.vmem %s0, %s164
      %p166 = scmp.lt.s32.totalorder %s14, 1
      %s167 = scalar_select %p166, %s14, 1
      %s168 = smul.addr %s167, 24
      %s169 = smul.addr %s168, 8
      %s170 = scalar_lea.vmem %s3, %s169
      %v171 = vld [vmem:[%s2] sm:$0xff]
      %v172 = vld [vmem:[%s2 + $0x8] sm:$0xf]
      %174 = vset.pattern.permute.xlu0 0
      %175 = vperm.xlu0 %174, %v171
      %v176 = vpop.permute.xlu0 %175
      %179 = vset.pattern.permute.xlu0 0
      %180 = vperm.xlu0 %179, %v172
      %v181 = vpop.permute.xlu0 %180
      %v183 = vld [vmem:[%s165] sm:$0xff]
      %v184 = vld [vmem:[%s165 + $0x8] sm:$0xff]
      %v185 = vld [vmem:[%s165 + $0x10] sm:$0xff]
      %v186 = vld [vmem:[%s165 + $0x18] sm:$0xff]
      %v187 = vld [vmem:[%s165 + $0x20] sm:$0xff]
      %v188 = vld [vmem:[%s165 + $0x28] sm:$0xff]
      %v189 = vld [vmem:[%s165 + $0x30] sm:$0xff]
      %v190 = vld [vmem:[%s165 + $0x38] sm:$0xff]
      %v191 = vld [vmem:[%s165 + $0x40] sm:$0xff]
      %s192 = scalar_lea.vmem %s1, 80
      %v193 = vld [vmem:[%s192] sm:$0xff]
      %v194 = vld [vmem:[%s192 + $0x8] sm:$0xf]
      %204 = vrot.lane.b32.xlu0 %v183, 109
      %v205 = vpop.permute.xlu0 %204
      %206 = vrot.lane.b32.xlu0 %v184, 109
      %v207 = vpop.permute.xlu0 %206
      %208 = vrot.lane.b32.xlu0 %v185, 109
      %v209 = vpop.permute.xlu0 %208
      %210 = vrot.lane.b32.xlu0 %v186, 109
      %v211 = vpop.permute.xlu0 %210
      %212 = vrot.lane.b32.xlu0 %v187, 109
      %v213 = vpop.permute.xlu0 %212
      %214 = vrot.lane.b32.xlu0 %v188, 109
      %v215 = vpop.permute.xlu0 %214
      %216 = vrot.lane.b32.xlu0 %v189, 109
      %v217 = vpop.permute.xlu0 %216
      %218 = vrot.lane.b32.xlu0 %v190, 109
      %v219 = vpop.permute.xlu0 %218
      %220 = vrot.lane.b32.xlu0 %v191, 109
      %v221 = vpop.permute.xlu0 %220
      %vm222 = vcmask 891904
      %v223 = vsel %vm222, %v205, %v207
      %v224 = vsel %vm222, %v207, %v209
      %v225 = vsel %vm222, %v211, %v213
      %v226 = vsel %vm222, %v213, %v215
      %v227 = vsel %vm222, %v217, %v219
      %v228 = vsel %vm222, %v219, %v221
      %vm238 = vcmask 195584
      %v240 = vsel %vm238, %v193, 0
      %v243 = vsel %vm238, %v194, 0
      %245 = vmatprep.subr.mxu0 0.0
      %246 = vmatpush1.msra.mxu0 0.0
      %247 = vmatprep.subr.mxu0 0.0
      %248 = vmatpush1.msra.mxu0 0.0
      %249 = vmatprep.subr.mxu0 0.0
      %250 = vmatpush1.msra.mxu0 0.0
      %251 = vmatprep.subr.mxu0 0.0
      %252 = vmatpush1.msra.mxu0 0.0
      %253 = vmatprep.subr.mxu0 0.0
      %254 = vmatpush1.msra.mxu0 0.0
      %255 = vmatprep.subr.mxu0 0.0
      %256 = vmatpush1.msra.mxu0 0.0
      %257 = vmatprep.subr.mxu0 0.0
      %258 = vmatpush1.msra.mxu0 0.0
      %259 = vmatprep.subr.mxu0 0.0
      %260 = vmatpush1.msra.mxu0 0.0
      %261 = vmatprep.subr.mxu0 0.0
      %262 = vmatpush1.msra.mxu0 0.0
      %263 = vmatprep.subr.mxu0 0.0
      %264 = vmatpush1.msra.mxu0 0.0
      %265 = vmatprep.subr.mxu0 0.0
      %266 = vmatpush1.msra.mxu0 0.0
      %267 = vmatprep.subr.mxu0 0.0
      %268 = vmatpush1.msra.mxu0 0.0
      %269 = vmatprep.subr.mxu0 0.0
      %270 = vmatpush1.msra.mxu0 0.0
      %271 = vmatprep.subr.mxu0 %v228
      %272 = vmatpush1.msra.mxu0 %v227
      %273 = vmatprep.subr.mxu0 %v226
      %274 = vmatpush1.msra.mxu0 %v225
      %275 = vmatprep.subr.mxu0 %v224
      %276 = vmatpush1.msra.mxu0 %v223
      %277 = vmatprep.subr.mxu0 0.0
      %278 = vmatpush2.msra.mxu0 0.0
      %279 = vmatprep.subr.mxu0 0.0
      %280 = vmatpush2.msra.mxu0 0.0
      %281 = vmatprep.subr.mxu0 0.0
      %282 = vmatpush2.msra.mxu0 0.0
      %283 = vmatprep.subr.mxu0 0.0
      %284 = vmatpush2.msra.mxu0 0.0
      %285 = vmatprep.subr.mxu0 0.0
      %286 = vmatpush2.msra.mxu0 0.0
      %287 = vmatprep.subr.mxu0 0.0
      %288 = vmatpush2.msra.mxu0 0.0
      %289 = vmatprep.subr.mxu0 0.0
      %290 = vmatpush2.msra.mxu0 0.0
      %291 = vmatprep.subr.mxu0 0.0
      %292 = vmatpush2.msra.mxu0 0.0
      %293 = vmatprep.subr.mxu0 0.0
      %294 = vmatpush2.msra.mxu0 0.0
      %295 = vmatprep.subr.mxu0 0.0
      %296 = vmatpush2.msra.mxu0 0.0
      %297 = vmatprep.subr.mxu0 0.0
      %298 = vmatpush2.msra.mxu0 0.0
      %299 = vmatprep.subr.mxu0 0.0
      %300 = vmatpush2.msra.mxu0 0.0
      %301 = vmatprep.subr.mxu0 0.0
      %302 = vmatpush2.msra.mxu0 0.0
      %303 = vmatprep.subr.mxu0 0.0
      %304 = vmatpush2.msra.mxu0 0.0
      %305 = vmatprep.subr.mxu0 0.0
      %306 = vmatpush2.msra.mxu0 0.0
      %307 = vmatprep.subr.mxu0 0.0
      %308 = vmatpush2.msra.mxu0 0.0
      %309 = vmatprep.mubr.f32.mxu0 0.0
      %310 = vmatmul.mubr.f32.gmra.mxu0 %v240
      %v311 = vpop.f32.mrf.mxu0
      %v312 = vadd.f32 0.0, %v311
      %v313 = vpop.f32.mrf.mxu0
      %v314 = vadd.f32 0.0, %v313
      %315 = vmatprep.mubr.f32.mxu0 0.0
      %316 = vmatmul.mubr.f32.gmra.mxu0 %v243
      %v317 = vpop.f32.mrf.mxu0
      %v318 = vadd.f32 0.0, %v317
      %v319 = vpop.f32.mrf.mxu0
      %v320 = vadd.f32 0.0, %v319
      %321 = vdwg.mxu0
      %322 = vmatprep.subr.mxu0 0.0
      %323 = vmatpush1.msra.mxu0 0.0
      %324 = vmatprep.subr.mxu0 0.0
      %325 = vmatpush1.msra.mxu0 0.0
      %326 = vmatprep.subr.mxu0 0.0
      %327 = vmatpush1.msra.mxu0 0.0
      %328 = vmatprep.subr.mxu0 0.0
      %329 = vmatpush1.msra.mxu0 0.0
      %330 = vmatprep.subr.mxu0 0.0
      %331 = vmatpush1.msra.mxu0 0.0
      %332 = vmatprep.subr.mxu0 0.0
      %333 = vmatpush1.msra.mxu0 0.0
      %334 = vmatprep.subr.mxu0 0.0
      %335 = vmatpush1.msra.mxu0 0.0
      %336 = vmatprep.subr.mxu0 0.0
      %337 = vmatpush1.msra.mxu0 0.0
      %338 = vmatprep.subr.mxu0 0.0
      %339 = vmatpush1.msra.mxu0 0.0
      %340 = vmatprep.subr.mxu0 0.0
      %341 = vmatpush1.msra.mxu0 0.0
      %342 = vmatprep.subr.mxu0 0.0
      %343 = vmatpush1.msra.mxu0 0.0
      %344 = vmatprep.subr.mxu0 0.0
      %345 = vmatpush1.msra.mxu0 0.0
      %346 = vmatprep.subr.mxu0 0.0
      %347 = vmatpush1.msra.mxu0 0.0
      %348 = vmatprep.subr.mxu0 0.0
      %349 = vmatpush1.msra.mxu0 %v221
      %350 = vmatprep.subr.mxu0 0.0
      %351 = vmatpush1.msra.mxu0 %v215
      %352 = vmatprep.subr.mxu0 0.0
      %353 = vmatpush1.msra.mxu0 %v209
      %354 = vmatprep.subr.mxu0 0.0
      %355 = vmatpush2.msra.mxu0 0.0
      %356 = vmatprep.subr.mxu0 0.0
      %357 = vmatpush2.msra.mxu0 0.0
      %358 = vmatprep.subr.mxu0 0.0
      %359 = vmatpush2.msra.mxu0 0.0
      %360 = vmatprep.subr.mxu0 0.0
      %361 = vmatpush2.msra.mxu0 0.0
      %362 = vmatprep.subr.mxu0 0.0
      %363 = vmatpush2.msra.mxu0 0.0
      %364 = vmatprep.subr.mxu0 0.0
      %365 = vmatpush2.msra.mxu0 0.0
      %366 = vmatprep.subr.mxu0 0.0
      %367 = vmatpush2.msra.mxu0 0.0
      %368 = vmatprep.subr.mxu0 0.0
      %369 = vmatpush2.msra.mxu0 0.0
      %370 = vmatprep.subr.mxu0 0.0
      %371 = vmatpush2.msra.mxu0 0.0
      %372 = vmatprep.subr.mxu0 0.0
      %373 = vmatpush2.msra.mxu0 0.0
      %374 = vmatprep.subr.mxu0 0.0
      %375 = vmatpush2.msra.mxu0 0.0
      %376 = vmatprep.subr.mxu0 0.0
      %377 = vmatpush2.msra.mxu0 0.0
      %378 = vmatprep.subr.mxu0 0.0
      %379 = vmatpush2.msra.mxu0 0.0
      %380 = vmatprep.subr.mxu0 0.0
      %381 = vmatpush2.msra.mxu0 0.0
      %382 = vmatprep.subr.mxu0 0.0
      %383 = vmatpush2.msra.mxu0 0.0
      %384 = vmatprep.subr.mxu0 0.0
      %385 = vmatpush2.msra.mxu0 0.0
      %386 = vmatprep.mubr.f32.mxu0 0.0
      %387 = vmatmul.mubr.f32.gmra.mxu0 %v240
      %v388 = vpop.f32.mrf.mxu0
      %v389 = vadd.f32 0.0, %v388
      %v390 = vpop.f32.mrf.mxu0
      %391 = vmatprep.mubr.f32.mxu0 0.0
      %392 = vmatmul.mubr.f32.gmra.mxu0 %v243
      %v393 = vpop.f32.mrf.mxu0
      %v394 = vadd.f32 0.0, %v393
      %v395 = vpop.f32.mrf.mxu0
      %396 = vdwg.mxu0
      %v397 = vadd.f32 %v176, %v312
      %v398 = vadd.f32 %v176, %v314
      %v399 = vadd.f32 %v176, %v389
      %v400 = vadd.f32 %v181, %v318
      %v401 = vadd.f32 %v181, %v320
      %v402 = vadd.f32 %v181, %v394
      %s403 = scalar_lea.vmem %s1, 112
      %v404 = vld [vmem:[%s403] sm:$0xff]
      %v405 = vld [vmem:[%s403 + $0x8] sm:$0xf]
      %406 = vrot.lane.b32.xlu0 %v183, 110
      %v407 = vpop.permute.xlu0 %406
      %408 = vrot.lane.b32.xlu0 %v184, 110
      %v409 = vpop.permute.xlu0 %408
      %410 = vrot.lane.b32.xlu0 %v185, 110
      %v411 = vpop.permute.xlu0 %410
      %412 = vrot.lane.b32.xlu0 %v186, 110
      %v413 = vpop.permute.xlu0 %412
      %414 = vrot.lane.b32.xlu0 %v187, 110
      %v415 = vpop.permute.xlu0 %414
      %416 = vrot.lane.b32.xlu0 %v188, 110
      %v417 = vpop.permute.xlu0 %416
      %418 = vrot.lane.b32.xlu0 %v189, 110
      %v419 = vpop.permute.xlu0 %418
      %420 = vrot.lane.b32.xlu0 %v190, 110
      %v421 = vpop.permute.xlu0 %420
      %422 = vrot.lane.b32.xlu0 %v191, 110
      %v423 = vpop.permute.xlu0 %422
      %vm424 = vcmask 900096
      %v425 = vsel %vm424, %v407, %v409
      %v426 = vsel %vm424, %v409, %v411
      %v427 = vsel %vm424, %v413, %v415
      %v428 = vsel %vm424, %v415, %v417
      %v429 = vsel %vm424, %v419, %v421
      %v430 = vsel %vm424, %v421, %v423
      %v441 = vsel %vm238, %v404, 0
      %v444 = vsel %vm238, %v405, 0
      %446 = vmatprep.subr.mxu0 0.0
      %447 = vmatpush1.msra.mxu0 0.0
      %448 = vmatprep.subr.mxu0 0.0
      %449 = vmatpush1.msra.mxu0 0.0
      %450 = vmatprep.subr.mxu0 0.0
      %451 = vmatpush1.msra.mxu0 0.0
      %452 = vmatprep.subr.mxu0 0.0
      %453 = vmatpush1.msra.mxu0 0.0
      %454 = vmatprep.subr.mxu0 0.0
      %455 = vmatpush1.msra.mxu0 0.0
      %456 = vmatprep.subr.mxu0 0.0
      %457 = vmatpush1.msra.mxu0 0.0
      %458 = vmatprep.subr.mxu0 0.0
      %459 = vmatpush1.msra.mxu0 0.0
      %460 = vmatprep.subr.mxu0 0.0
      %461 = vmatpush1.msra.mxu0 0.0
      %462 = vmatprep.subr.mxu0 0.0
      %463 = vmatpush1.msra.mxu0 0.0
      %464 = vmatprep.subr.mxu0 0.0
      %465 = vmatpush1.msra.mxu0 0.0
      %466 = vmatprep.subr.mxu0 0.0
      %467 = vmatpush1.msra.mxu0 0.0
      %468 = vmatprep.subr.mxu0 0.0
      %469 = vmatpush1.msra.mxu0 0.0
      %470 = vmatprep.subr.mxu0 0.0
      %471 = vmatpush1.msra.mxu0 0.0
      %472 = vmatprep.subr.mxu0 %v430
      %473 = vmatpush1.msra.mxu0 %v429
      %474 = vmatprep.subr.mxu0 %v428
      %475 = vmatpush1.msra.mxu0 %v427
      %476 = vmatprep.subr.mxu0 %v426
      %477 = vmatpush1.msra.mxu0 %v425
      %478 = vmatprep.subr.mxu0 0.0
      %479 = vmatpush2.msra.mxu0 0.0
      %480 = vmatprep.subr.mxu0 0.0
      %481 = vmatpush2.msra.mxu0 0.0
      %482 = vmatprep.subr.mxu0 0.0
      %483 = vmatpush2.msra.mxu0 0.0
      %484 = vmatprep.subr.mxu0 0.0
      %485 = vmatpush2.msra.mxu0 0.0
      %486 = vmatprep.subr.mxu0 0.0
      %487 = vmatpush2.msra.mxu0 0.0
      %488 = vmatprep.subr.mxu0 0.0
      %489 = vmatpush2.msra.mxu0 0.0
      %490 = vmatprep.subr.mxu0 0.0
      %491 = vmatpush2.msra.mxu0 0.0
      %492 = vmatprep.subr.mxu0 0.0
      %493 = vmatpush2.msra.mxu0 0.0
      %494 = vmatprep.subr.mxu0 0.0
      %495 = vmatpush2.msra.mxu0 0.0
      %496 = vmatprep.subr.mxu0 0.0
      %497 = vmatpush2.msra.mxu0 0.0
      %498 = vmatprep.subr.mxu0 0.0
      %499 = vmatpush2.msra.mxu0 0.0
      %500 = vmatprep.subr.mxu0 0.0
      %501 = vmatpush2.msra.mxu0 0.0
      %502 = vmatprep.subr.mxu0 0.0
      %503 = vmatpush2.msra.mxu0 0.0
      %504 = vmatprep.subr.mxu0 0.0
      %505 = vmatpush2.msra.mxu0 0.0
      %506 = vmatprep.subr.mxu0 0.0
      %507 = vmatpush2.msra.mxu0 0.0
      %508 = vmatprep.subr.mxu0 0.0
      %509 = vmatpush2.msra.mxu0 0.0
      %510 = vmatprep.mubr.f32.mxu0 0.0
      %511 = vmatmul.mubr.f32.gmra.mxu0 %v441
      %v512 = vpop.f32.mrf.mxu0
      %v513 = vadd.f32 0.0, %v512
      %v514 = vpop.f32.mrf.mxu0
      %v515 = vadd.f32 0.0, %v514
      %516 = vmatprep.mubr.f32.mxu0 0.0
      %517 = vmatmul.mubr.f32.gmra.mxu0 %v444
      %v518 = vpop.f32.mrf.mxu0
      %v519 = vadd.f32 0.0, %v518
      %v520 = vpop.f32.mrf.mxu0
      %v521 = vadd.f32 0.0, %v520
      %522 = vdwg.mxu0
      %523 = vmatprep.subr.mxu0 0.0
      %524 = vmatpush1.msra.mxu0 0.0
      %525 = vmatprep.subr.mxu0 0.0
      %526 = vmatpush1.msra.mxu0 0.0
      %527 = vmatprep.subr.mxu0 0.0
      %528 = vmatpush1.msra.mxu0 0.0
      %529 = vmatprep.subr.mxu0 0.0
      %530 = vmatpush1.msra.mxu0 0.0
      %531 = vmatprep.subr.mxu0 0.0
      %532 = vmatpush1.msra.mxu0 0.0
      %533 = vmatprep.subr.mxu0 0.0
      %534 = vmatpush1.msra.mxu0 0.0
      %535 = vmatprep.subr.mxu0 0.0
      %536 = vmatpush1.msra.mxu0 0.0
      %537 = vmatprep.subr.mxu0 0.0
      %538 = vmatpush1.msra.mxu0 0.0
      %539 = vmatprep.subr.mxu0 0.0
      %540 = vmatpush1.msra.mxu0 0.0
      %541 = vmatprep.subr.mxu0 0.0
      %542 = vmatpush1.msra.mxu0 0.0
      %543 = vmatprep.subr.mxu0 0.0
      %544 = vmatpush1.msra.mxu0 0.0
      %545 = vmatprep.subr.mxu0 0.0
      %546 = vmatpush1.msra.mxu0 0.0
      %547 = vmatprep.subr.mxu0 0.0
      %548 = vmatpush1.msra.mxu0 0.0
      %549 = vmatprep.subr.mxu0 0.0
      %550 = vmatpush1.msra.mxu0 %v423
      %551 = vmatprep.subr.mxu0 0.0
      %552 = vmatpush1.msra.mxu0 %v417
      %553 = vmatprep.subr.mxu0 0.0
      %554 = vmatpush1.msra.mxu0 %v411
      %555 = vmatprep.subr.mxu0 0.0
      %556 = vmatpush2.msra.mxu0 0.0
      %557 = vmatprep.subr.mxu0 0.0
      %558 = vmatpush2.msra.mxu0 0.0
      %559 = vmatprep.subr.mxu0 0.0
      %560 = vmatpush2.msra.mxu0 0.0
      %561 = vmatprep.subr.mxu0 0.0
      %562 = vmatpush2.msra.mxu0 0.0
      %563 = vmatprep.subr.mxu0 0.0
      %564 = vmatpush2.msra.mxu0 0.0
      %565 = vmatprep.subr.mxu0 0.0
      %566 = vmatpush2.msra.mxu0 0.0
      %567 = vmatprep.subr.mxu0 0.0
      %568 = vmatpush2.msra.mxu0 0.0
      %569 = vmatprep.subr.mxu0 0.0
      %570 = vmatpush2.msra.mxu0 0.0
      %571 = vmatprep.subr.mxu0 0.0
      %572 = vmatpush2.msra.mxu0 0.0
      %573 = vmatprep.subr.mxu0 0.0
      %574 = vmatpush2.msra.mxu0 0.0
      %575 = vmatprep.subr.mxu0 0.0
      %576 = vmatpush2.msra.mxu0 0.0
      %577 = vmatprep.subr.mxu0 0.0
      %578 = vmatpush2.msra.mxu0 0.0
      %579 = vmatprep.subr.mxu0 0.0
      %580 = vmatpush2.msra.mxu0 0.0
      %581 = vmatprep.subr.mxu0 0.0
      %582 = vmatpush2.msra.mxu0 0.0
      %583 = vmatprep.subr.mxu0 0.0
      %584 = vmatpush2.msra.mxu0 0.0
      %585 = vmatprep.subr.mxu0 0.0
      %586 = vmatpush2.msra.mxu0 0.0
      %587 = vmatprep.mubr.f32.mxu0 0.0
      %588 = vmatmul.mubr.f32.gmra.mxu0 %v441
      %v589 = vpop.f32.mrf.mxu0
      %v590 = vadd.f32 0.0, %v589
      %v591 = vpop.f32.mrf.mxu0
      %592 = vmatprep.mubr.f32.mxu0 0.0
      %593 = vmatmul.mubr.f32.gmra.mxu0 %v444
      %v594 = vpop.f32.mrf.mxu0
      %v595 = vadd.f32 0.0, %v594
      %v596 = vpop.f32.mrf.mxu0
      %597 = vdwg.mxu0
      %v598 = vadd.f32 %v397, %v513
      %v599 = vadd.f32 %v398, %v515
      %v600 = vadd.f32 %v399, %v590
      %v601 = vadd.f32 %v400, %v519
      %v602 = vadd.f32 %v401, %v521
      %v603 = vadd.f32 %v402, %v595
      %s604 = scalar_lea.vmem %s1, 208
      %v605 = vld [vmem:[%s604] sm:$0xff]
      %v606 = vld [vmem:[%s604 + $0x8] sm:$0xf]
      %607 = vrot.lane.b32.xlu0 %v183, 127
      %v608 = vpop.permute.xlu0 %607
      %609 = vrot.lane.b32.xlu0 %v184, 127
      %v610 = vpop.permute.xlu0 %609
      %611 = vrot.lane.b32.xlu0 %v185, 127
      %v612 = vpop.permute.xlu0 %611
      %613 = vrot.lane.b32.xlu0 %v186, 127
      %v614 = vpop.permute.xlu0 %613
      %615 = vrot.lane.b32.xlu0 %v187, 127
      %v616 = vpop.permute.xlu0 %615
      %617 = vrot.lane.b32.xlu0 %v188, 127
      %v618 = vpop.permute.xlu0 %617
      %619 = vrot.lane.b32.xlu0 %v189, 127
      %v620 = vpop.permute.xlu0 %619
      %621 = vrot.lane.b32.xlu0 %v190, 127
      %v622 = vpop.permute.xlu0 %621
      %623 = vrot.lane.b32.xlu0 %v191, 127
      %v624 = vpop.permute.xlu0 %623
      %vm625 = vcmask 1039360
      %v626 = vsel %vm625, %v608, %v610
      %v627 = vsel %vm625, %v610, %v612
      %v628 = vsel %vm625, %v614, %v616
      %v629 = vsel %vm625, %v616, %v618
      %v630 = vsel %vm625, %v620, %v622
      %v631 = vsel %vm625, %v622, %v624
      %v642 = vsel %vm238, %v605, 0
      %v645 = vsel %vm238, %v606, 0
      %647 = vmatprep.subr.mxu0 0.0
      %648 = vmatpush1.msra.mxu0 0.0
      %649 = vmatprep.subr.mxu0 0.0
      %650 = vmatpush1.msra.mxu0 0.0
      %651 = vmatprep.subr.mxu0 0.0
      %652 = vmatpush1.msra.mxu0 0.0
      %653 = vmatprep.subr.mxu0 0.0
      %654 = vmatpush1.msra.mxu0 0.0
      %655 = vmatprep.subr.mxu0 0.0
      %656 = vmatpush1.msra.mxu0 0.0
      %657 = vmatprep.subr.mxu0 0.0
      %658 = vmatpush1.msra.mxu0 0.0
      %659 = vmatprep.subr.mxu0 0.0
      %660 = vmatpush1.msra.mxu0 0.0
      %661 = vmatprep.subr.mxu0 0.0
      %662 = vmatpush1.msra.mxu0 0.0
      %663 = vmatprep.subr.mxu0 0.0
      %664 = vmatpush1.msra.mxu0 0.0
      %665 = vmatprep.subr.mxu0 0.0
      %666 = vmatpush1.msra.mxu0 0.0
      %667 = vmatprep.subr.mxu0 0.0
      %668 = vmatpush1.msra.mxu0 0.0
      %669 = vmatprep.subr.mxu0 0.0
      %670 = vmatpush1.msra.mxu0 0.0
      %671 = vmatprep.subr.mxu0 0.0
      %672 = vmatpush1.msra.mxu0 0.0
      %673 = vmatprep.subr.mxu0 %v631
      %674 = vmatpush1.msra.mxu0 %v630
      %675 = vmatprep.subr.mxu0 %v629
      %676 = vmatpush1.msra.mxu0 %v628
      %677 = vmatprep.subr.mxu0 %v627
      %678 = vmatpush1.msra.mxu0 %v626
      %679 = vmatprep.subr.mxu0 0.0
      %680 = vmatpush2.msra.mxu0 0.0
      %681 = vmatprep.subr.mxu0 0.0
      %682 = vmatpush2.msra.mxu0 0.0
      %683 = vmatprep.subr.mxu0 0.0
      %684 = vmatpush2.msra.mxu0 0.0
      %685 = vmatprep.subr.mxu0 0.0
      %686 = vmatpush2.msra.mxu0 0.0
      %687 = vmatprep.subr.mxu0 0.0
      %688 = vmatpush2.msra.mxu0 0.0
      %689 = vmatprep.subr.mxu0 0.0
      %690 = vmatpush2.msra.mxu0 0.0
      %691 = vmatprep.subr.mxu0 0.0
      %692 = vmatpush2.msra.mxu0 0.0
      %693 = vmatprep.subr.mxu0 0.0
      %694 = vmatpush2.msra.mxu0 0.0
      %695 = vmatprep.subr.mxu0 0.0
      %696 = vmatpush2.msra.mxu0 0.0
      %697 = vmatprep.subr.mxu0 0.0
      %698 = vmatpush2.msra.mxu0 0.0
      %699 = vmatprep.subr.mxu0 0.0
      %700 = vmatpush2.msra.mxu0 0.0
      %701 = vmatprep.subr.mxu0 0.0
      %702 = vmatpush2.msra.mxu0 0.0
      %703 = vmatprep.subr.mxu0 0.0
      %704 = vmatpush2.msra.mxu0 0.0
      %705 = vmatprep.subr.mxu0 0.0
      %706 = vmatpush2.msra.mxu0 0.0
      %707 = vmatprep.subr.mxu0 0.0
      %708 = vmatpush2.msra.mxu0 0.0
      %709 = vmatprep.subr.mxu0 0.0
      %710 = vmatpush2.msra.mxu0 0.0
      %711 = vmatprep.mubr.f32.mxu0 0.0
      %712 = vmatmul.mubr.f32.gmra.mxu0 %v642
      %v713 = vpop.f32.mrf.mxu0
      %v714 = vadd.f32 0.0, %v713
      %v715 = vpop.f32.mrf.mxu0
      %v716 = vadd.f32 0.0, %v715
      %717 = vmatprep.mubr.f32.mxu0 0.0
      %718 = vmatmul.mubr.f32.gmra.mxu0 %v645
      %v719 = vpop.f32.mrf.mxu0
      %v720 = vadd.f32 0.0, %v719
      %v721 = vpop.f32.mrf.mxu0
      %v722 = vadd.f32 0.0, %v721
      %723 = vdwg.mxu0
      %724 = vmatprep.subr.mxu0 0.0
      %725 = vmatpush1.msra.mxu0 0.0
      %726 = vmatprep.subr.mxu0 0.0
      %727 = vmatpush1.msra.mxu0 0.0
      %728 = vmatprep.subr.mxu0 0.0
      %729 = vmatpush1.msra.mxu0 0.0
      %730 = vmatprep.subr.mxu0 0.0
      %731 = vmatpush1.msra.mxu0 0.0
      %732 = vmatprep.subr.mxu0 0.0
      %733 = vmatpush1.msra.mxu0 0.0
      %734 = vmatprep.subr.mxu0 0.0
      %735 = vmatpush1.msra.mxu0 0.0
      %736 = vmatprep.subr.mxu0 0.0
      %737 = vmatpush1.msra.mxu0 0.0
      %738 = vmatprep.subr.mxu0 0.0
      %739 = vmatpush1.msra.mxu0 0.0
      %740 = vmatprep.subr.mxu0 0.0
      %741 = vmatpush1.msra.mxu0 0.0
      %742 = vmatprep.subr.mxu0 0.0
      %743 = vmatpush1.msra.mxu0 0.0
      %744 = vmatprep.subr.mxu0 0.0
      %745 = vmatpush1.msra.mxu0 0.0
      %746 = vmatprep.subr.mxu0 0.0
      %747 = vmatpush1.msra.mxu0 0.0
      %748 = vmatprep.subr.mxu0 0.0
      %749 = vmatpush1.msra.mxu0 0.0
      %750 = vmatprep.subr.mxu0 0.0
      %751 = vmatpush1.msra.mxu0 %v624
      %752 = vmatprep.subr.mxu0 0.0
      %753 = vmatpush1.msra.mxu0 %v618
      %754 = vmatprep.subr.mxu0 0.0
      %755 = vmatpush1.msra.mxu0 %v612
      %756 = vmatprep.subr.mxu0 0.0
      %757 = vmatpush2.msra.mxu0 0.0
      %758 = vmatprep.subr.mxu0 0.0
      %759 = vmatpush2.msra.mxu0 0.0
      %760 = vmatprep.subr.mxu0 0.0
      %761 = vmatpush2.msra.mxu0 0.0
      %762 = vmatprep.subr.mxu0 0.0
      %763 = vmatpush2.msra.mxu0 0.0
      %764 = vmatprep.subr.mxu0 0.0
      %765 = vmatpush2.msra.mxu0 0.0
      %766 = vmatprep.subr.mxu0 0.0
      %767 = vmatpush2.msra.mxu0 0.0
      %768 = vmatprep.subr.mxu0 0.0
      %769 = vmatpush2.msra.mxu0 0.0
      %770 = vmatprep.subr.mxu0 0.0
      %771 = vmatpush2.msra.mxu0 0.0
      %772 = vmatprep.subr.mxu0 0.0
      %773 = vmatpush2.msra.mxu0 0.0
      %774 = vmatprep.subr.mxu0 0.0
      %775 = vmatpush2.msra.mxu0 0.0
      %776 = vmatprep.subr.mxu0 0.0
      %777 = vmatpush2.msra.mxu0 0.0
      %778 = vmatprep.subr.mxu0 0.0
      %779 = vmatpush2.msra.mxu0 0.0
      %780 = vmatprep.subr.mxu0 0.0
      %781 = vmatpush2.msra.mxu0 0.0
      %782 = vmatprep.subr.mxu0 0.0
      %783 = vmatpush2.msra.mxu0 0.0
      %784 = vmatprep.subr.mxu0 0.0
      %785 = vmatpush2.msra.mxu0 0.0
      %786 = vmatprep.subr.mxu0 0.0
      %787 = vmatpush2.msra.mxu0 0.0
      %788 = vmatprep.mubr.f32.mxu0 0.0
      %789 = vmatmul.mubr.f32.gmra.mxu0 %v642
      %v790 = vpop.f32.mrf.mxu0
      %v791 = vadd.f32 0.0, %v790
      %v792 = vpop.f32.mrf.mxu0
      %793 = vmatprep.mubr.f32.mxu0 0.0
      %794 = vmatmul.mubr.f32.gmra.mxu0 %v645
      %v795 = vpop.f32.mrf.mxu0
      %v796 = vadd.f32 0.0, %v795
      %v797 = vpop.f32.mrf.mxu0
      %798 = vdwg.mxu0
      %v799 = vadd.f32 %v598, %v714
      %v800 = vadd.f32 %v599, %v716
      %v801 = vadd.f32 %v600, %v791
      %v802 = vadd.f32 %v601, %v720
      %v803 = vadd.f32 %v602, %v722
      %v804 = vadd.f32 %v603, %v796
      %s805 = scalar_lea.vmem %s1, 240
      %v806 = vld [vmem:[%s805] sm:$0xff]
      %v807 = vld [vmem:[%s805 + $0x8] sm:$0xf]
      %v809 = vsel %vm238, %v806, 0
      %v812 = vsel %vm238, %v807, 0
      %814 = vmatprep.subr.mxu0 0.0
      %815 = vmatpush1.msra.mxu0 0.0
      %816 = vmatprep.subr.mxu0 0.0
      %817 = vmatpush1.msra.mxu0 0.0
      %818 = vmatprep.subr.mxu0 0.0
      %819 = vmatpush1.msra.mxu0 0.0
      %820 = vmatprep.subr.mxu0 0.0
      %821 = vmatpush1.msra.mxu0 0.0
      %822 = vmatprep.subr.mxu0 0.0
      %823 = vmatpush1.msra.mxu0 0.0
      %824 = vmatprep.subr.mxu0 0.0
      %825 = vmatpush1.msra.mxu0 0.0
      %826 = vmatprep.subr.mxu0 0.0
      %827 = vmatpush1.msra.mxu0 0.0
      %828 = vmatprep.subr.mxu0 0.0
      %829 = vmatpush1.msra.mxu0 0.0
      %830 = vmatprep.subr.mxu0 0.0
      %831 = vmatpush1.msra.mxu0 0.0
      %832 = vmatprep.subr.mxu0 0.0
      %833 = vmatpush1.msra.mxu0 0.0
      %834 = vmatprep.subr.mxu0 0.0
      %835 = vmatpush1.msra.mxu0 0.0
      %836 = vmatprep.subr.mxu0 0.0
      %837 = vmatpush1.msra.mxu0 0.0
      %838 = vmatprep.subr.mxu0 0.0
      %839 = vmatpush1.msra.mxu0 0.0
      %840 = vmatprep.subr.mxu0 %v190
      %841 = vmatpush1.msra.mxu0 %v189
      %842 = vmatprep.subr.mxu0 %v187
      %843 = vmatpush1.msra.mxu0 %v186
      %844 = vmatprep.subr.mxu0 %v184
      %845 = vmatpush1.msra.mxu0 %v183
      %846 = vmatprep.subr.mxu0 0.0
      %847 = vmatpush2.msra.mxu0 0.0
      %848 = vmatprep.subr.mxu0 0.0
      %849 = vmatpush2.msra.mxu0 0.0
      %850 = vmatprep.subr.mxu0 0.0
      %851 = vmatpush2.msra.mxu0 0.0
      %852 = vmatprep.subr.mxu0 0.0
      %853 = vmatpush2.msra.mxu0 0.0
      %854 = vmatprep.subr.mxu0 0.0
      %855 = vmatpush2.msra.mxu0 0.0
      %856 = vmatprep.subr.mxu0 0.0
      %857 = vmatpush2.msra.mxu0 0.0
      %858 = vmatprep.subr.mxu0 0.0
      %859 = vmatpush2.msra.mxu0 0.0
      %860 = vmatprep.subr.mxu0 0.0
      %861 = vmatpush2.msra.mxu0 0.0
      %862 = vmatprep.subr.mxu0 0.0
      %863 = vmatpush2.msra.mxu0 0.0
      %864 = vmatprep.subr.mxu0 0.0
      %865 = vmatpush2.msra.mxu0 0.0
      %866 = vmatprep.subr.mxu0 0.0
      %867 = vmatpush2.msra.mxu0 0.0
      %868 = vmatprep.subr.mxu0 0.0
      %869 = vmatpush2.msra.mxu0 0.0
      %870 = vmatprep.subr.mxu0 0.0
      %871 = vmatpush2.msra.mxu0 0.0
      %872 = vmatprep.subr.mxu0 0.0
      %873 = vmatpush2.msra.mxu0 0.0
      %874 = vmatprep.subr.mxu0 0.0
      %875 = vmatpush2.msra.mxu0 0.0
      %876 = vmatprep.subr.mxu0 0.0
      %877 = vmatpush2.msra.mxu0 0.0
      %878 = vmatprep.mubr.f32.mxu0 0.0
      %879 = vmatmul.mubr.f32.gmra.mxu0 %v809
      %v880 = vpop.f32.mrf.mxu0
      %v881 = vadd.f32 0.0, %v880
      %v882 = vpop.f32.mrf.mxu0
      %v883 = vadd.f32 0.0, %v882
      %884 = vmatprep.mubr.f32.mxu0 0.0
      %885 = vmatmul.mubr.f32.gmra.mxu0 %v812
      %v886 = vpop.f32.mrf.mxu0
      %v887 = vadd.f32 0.0, %v886
      %v888 = vpop.f32.mrf.mxu0
      %v889 = vadd.f32 0.0, %v888
      %890 = vdwg.mxu0
      %891 = vmatprep.subr.mxu0 0.0
      %892 = vmatpush1.msra.mxu0 0.0
      %893 = vmatprep.subr.mxu0 0.0
      %894 = vmatpush1.msra.mxu0 0.0
      %895 = vmatprep.subr.mxu0 0.0
      %896 = vmatpush1.msra.mxu0 0.0
      %897 = vmatprep.subr.mxu0 0.0
      %898 = vmatpush1.msra.mxu0 0.0
      %899 = vmatprep.subr.mxu0 0.0
      %900 = vmatpush1.msra.mxu0 0.0
      %901 = vmatprep.subr.mxu0 0.0
      %902 = vmatpush1.msra.mxu0 0.0
      %903 = vmatprep.subr.mxu0 0.0
      %904 = vmatpush1.msra.mxu0 0.0
      %905 = vmatprep.subr.mxu0 0.0
      %906 = vmatpush1.msra.mxu0 0.0
      %907 = vmatprep.subr.mxu0 0.0
      %908 = vmatpush1.msra.mxu0 0.0
      %909 = vmatprep.subr.mxu0 0.0
      %910 = vmatpush1.msra.mxu0 0.0
      %911 = vmatprep.subr.mxu0 0.0
      %912 = vmatpush1.msra.mxu0 0.0
      %913 = vmatprep.subr.mxu0 0.0
      %914 = vmatpush1.msra.mxu0 0.0
      %915 = vmatprep.subr.mxu0 0.0
      %916 = vmatpush1.msra.mxu0 0.0
      %917 = vmatprep.subr.mxu0 0.0
      %918 = vmatpush1.msra.mxu0 %v191
      %919 = vmatprep.subr.mxu0 0.0
      %920 = vmatpush1.msra.mxu0 %v188
      %921 = vmatprep.subr.mxu0 0.0
      %922 = vmatpush1.msra.mxu0 %v185
      %923 = vmatprep.subr.mxu0 0.0
      %924 = vmatpush2.msra.mxu0 0.0
      %925 = vmatprep.subr.mxu0 0.0
      %926 = vmatpush2.msra.mxu0 0.0
      %927 = vmatprep.subr.mxu0 0.0
      %928 = vmatpush2.msra.mxu0 0.0
      %929 = vmatprep.subr.mxu0 0.0
      %930 = vmatpush2.msra.mxu0 0.0
      %931 = vmatprep.subr.mxu0 0.0
      %932 = vmatpush2.msra.mxu0 0.0
      %933 = vmatprep.subr.mxu0 0.0
      %934 = vmatpush2.msra.mxu0 0.0
      %935 = vmatprep.subr.mxu0 0.0
      %936 = vmatpush2.msra.mxu0 0.0
      %937 = vmatprep.subr.mxu0 0.0
      %938 = vmatpush2.msra.mxu0 0.0
      %939 = vmatprep.subr.mxu0 0.0
      %940 = vmatpush2.msra.mxu0 0.0
      %941 = vmatprep.subr.mxu0 0.0
      %942 = vmatpush2.msra.mxu0 0.0
      %943 = vmatprep.subr.mxu0 0.0
      %944 = vmatpush2.msra.mxu0 0.0
      %945 = vmatprep.subr.mxu0 0.0
      %946 = vmatpush2.msra.mxu0 0.0
      %947 = vmatprep.subr.mxu0 0.0
      %948 = vmatpush2.msra.mxu0 0.0
      %949 = vmatprep.subr.mxu0 0.0
      %950 = vmatpush2.msra.mxu0 0.0
      %951 = vmatprep.subr.mxu0 0.0
      %952 = vmatpush2.msra.mxu0 0.0
      %953 = vmatprep.subr.mxu0 0.0
      %954 = vmatpush2.msra.mxu0 0.0
      %955 = vmatprep.mubr.f32.mxu0 0.0
      %956 = vmatmul.mubr.f32.gmra.mxu0 %v809
      %v957 = vpop.f32.mrf.mxu0
      %v958 = vadd.f32 0.0, %v957
      %v959 = vpop.f32.mrf.mxu0
      %960 = vmatprep.mubr.f32.mxu0 0.0
      %961 = vmatmul.mubr.f32.gmra.mxu0 %v812
      %v962 = vpop.f32.mrf.mxu0
      %v963 = vadd.f32 0.0, %v962
      %v964 = vpop.f32.mrf.mxu0
      %965 = vdwg.mxu0
      %v966 = vadd.f32 %v799, %v881
      %v967 = vadd.f32 %v800, %v883
      %v968 = vadd.f32 %v801, %v958
      %v969 = vadd.f32 %v802, %v887
      %v970 = vadd.f32 %v803, %v889
      %v971 = vadd.f32 %v804, %v963
      %972 = vst [vmem:[%s170] sm:$0xff] %v966
      %973 = vst [vmem:[%s170 + $0x8] sm:$0xff] %v967
      %vm974 = vcmask 261120
      %975 = vst.msk [vmem:[%s170 + $0x10] sm:$0xff] %vm974, %v968
      %976 = vst [vmem:[%s170 + $0x18] sm:$0xf] %v969
      %977 = vst [vmem:[%s170 + $0x20] sm:$0xf] %v970
      %vm978 = vcmask 257024
      %979 = vst.msk [vmem:[%s170 + $0x28] sm:$0xf] %vm978, %v971
      %v980 = vld [vmem:[%s165] sm:$0xff]
      %v981 = vld [vmem:[%s165 + $0x8] sm:$0xff]
      %v982 = vld [vmem:[%s165 + $0x10] sm:$0xff]
      %v983 = vld [vmem:[%s165 + $0x18] sm:$0xff]
      %v984 = vld [vmem:[%s165 + $0x20] sm:$0xff]
      %v985 = vld [vmem:[%s165 + $0x28] sm:$0xff]
      %v986 = vld [vmem:[%s165 + $0x30] sm:$0xff]
      %v987 = vld [vmem:[%s165 + $0x38] sm:$0xff]
      %v988 = vld [vmem:[%s165 + $0x40] sm:$0xff]
      %s989 = scalar_lea.vmem %s1, 64
      %v990 = vld [vmem:[%s989] sm:$0xff]
      %v991 = vld [vmem:[%s989 + $0x8] sm:$0xf]
      %1001 = vrot.lane.b32.xlu0 %v980, 108
      %v1002 = vpop.permute.xlu0 %1001
      %1003 = vrot.lane.b32.xlu0 %v981, 108
      %v1004 = vpop.permute.xlu0 %1003
      %1005 = vrot.lane.b32.xlu0 %v982, 108
      %v1006 = vpop.permute.xlu0 %1005
      %1007 = vrot.lane.b32.xlu0 %v983, 108
      %v1008 = vpop.permute.xlu0 %1007
      %1009 = vrot.lane.b32.xlu0 %v984, 108
      %v1010 = vpop.permute.xlu0 %1009
      %1011 = vrot.lane.b32.xlu0 %v985, 108
      %v1012 = vpop.permute.xlu0 %1011
      %1013 = vrot.lane.b32.xlu0 %v986, 108
      %v1014 = vpop.permute.xlu0 %1013
      %1015 = vrot.lane.b32.xlu0 %v987, 108
      %v1016 = vpop.permute.xlu0 %1015
      %1017 = vrot.lane.b32.xlu0 %v988, 108
      %v1018 = vpop.permute.xlu0 %1017
      %vm1019 = vcmask 883712
      %v1020 = vsel %vm1019, %v1002, %v1004
      %v1021 = vsel %vm1019, %v1004, %v1006
      %v1022 = vsel %vm1019, %v1008, %v1010
      %v1023 = vsel %vm1019, %v1010, %v1012
      %v1024 = vsel %vm1019, %v1014, %v1016
      %v1025 = vsel %vm1019, %v1016, %v1018
      %v1036 = vsel %vm238, %v990, 0
      %v1039 = vsel %vm238, %v991, 0
      %1041 = vmatprep.subr.mxu0 0.0
      %1042 = vmatpush1.msra.mxu0 0.0
      %1043 = vmatprep.subr.mxu0 0.0
      %1044 = vmatpush1.msra.mxu0 0.0
      %1045 = vmatprep.subr.mxu0 0.0
      %1046 = vmatpush1.msra.mxu0 0.0
      %1047 = vmatprep.subr.mxu0 0.0
      %1048 = vmatpush1.msra.mxu0 0.0
      %1049 = vmatprep.subr.mxu0 0.0
      %1050 = vmatpush1.msra.mxu0 0.0
      %1051 = vmatprep.subr.mxu0 0.0
      %1052 = vmatpush1.msra.mxu0 0.0
      %1053 = vmatprep.subr.mxu0 0.0
      %1054 = vmatpush1.msra.mxu0 0.0
      %1055 = vmatprep.subr.mxu0 0.0
      %1056 = vmatpush1.msra.mxu0 0.0
      %1057 = vmatprep.subr.mxu0 0.0
      %1058 = vmatpush1.msra.mxu0 0.0
      %1059 = vmatprep.subr.mxu0 0.0
      %1060 = vmatpush1.msra.mxu0 0.0
      %1061 = vmatprep.subr.mxu0 0.0
      %1062 = vmatpush1.msra.mxu0 0.0
      %1063 = vmatprep.subr.mxu0 0.0
      %1064 = vmatpush1.msra.mxu0 0.0
      %1065 = vmatprep.subr.mxu0 0.0
      %1066 = vmatpush1.msra.mxu0 0.0
      %1067 = vmatprep.subr.mxu0 %v1025
      %1068 = vmatpush1.msra.mxu0 %v1024
      %1069 = vmatprep.subr.mxu0 %v1023
      %1070 = vmatpush1.msra.mxu0 %v1022
      %1071 = vmatprep.subr.mxu0 %v1021
      %1072 = vmatpush1.msra.mxu0 %v1020
      %1073 = vmatprep.subr.mxu0 0.0
      %1074 = vmatpush2.msra.mxu0 0.0
      %1075 = vmatprep.subr.mxu0 0.0
      %1076 = vmatpush2.msra.mxu0 0.0
      %1077 = vmatprep.subr.mxu0 0.0
      %1078 = vmatpush2.msra.mxu0 0.0
      %1079 = vmatprep.subr.mxu0 0.0
      %1080 = vmatpush2.msra.mxu0 0.0
      %1081 = vmatprep.subr.mxu0 0.0
      %1082 = vmatpush2.msra.mxu0 0.0
      %1083 = vmatprep.subr.mxu0 0.0
      %1084 = vmatpush2.msra.mxu0 0.0
      %1085 = vmatprep.subr.mxu0 0.0
      %1086 = vmatpush2.msra.mxu0 0.0
      %1087 = vmatprep.subr.mxu0 0.0
      %1088 = vmatpush2.msra.mxu0 0.0
      %1089 = vmatprep.subr.mxu0 0.0
      %1090 = vmatpush2.msra.mxu0 0.0
      %1091 = vmatprep.subr.mxu0 0.0
      %1092 = vmatpush2.msra.mxu0 0.0
      %1093 = vmatprep.subr.mxu0 0.0
      %1094 = vmatpush2.msra.mxu0 0.0
      %1095 = vmatprep.subr.mxu0 0.0
      %1096 = vmatpush2.msra.mxu0 0.0
      %1097 = vmatprep.subr.mxu0 0.0
      %1098 = vmatpush2.msra.mxu0 0.0
      %1099 = vmatprep.subr.mxu0 0.0
      %1100 = vmatpush2.msra.mxu0 0.0
      %1101 = vmatprep.subr.mxu0 0.0
      %1102 = vmatpush2.msra.mxu0 0.0
      %1103 = vmatprep.subr.mxu0 0.0
      %1104 = vmatpush2.msra.mxu0 0.0
      %1105 = vmatprep.mubr.f32.mxu0 0.0
      %1106 = vmatmul.mubr.f32.gmra.mxu0 %v1036
      %v1107 = vpop.f32.mrf.mxu0
      %v1108 = vadd.f32 0.0, %v1107
      %v1109 = vpop.f32.mrf.mxu0
      %v1110 = vadd.f32 0.0, %v1109
      %1111 = vmatprep.mubr.f32.mxu0 0.0
      %1112 = vmatmul.mubr.f32.gmra.mxu0 %v1039
      %v1113 = vpop.f32.mrf.mxu0
      %v1114 = vadd.f32 0.0, %v1113
      %v1115 = vpop.f32.mrf.mxu0
      %v1116 = vadd.f32 0.0, %v1115
      %1117 = vdwg.mxu0
      %1118 = vmatprep.subr.mxu0 0.0
      %1119 = vmatpush1.msra.mxu0 0.0
      %1120 = vmatprep.subr.mxu0 0.0
      %1121 = vmatpush1.msra.mxu0 0.0
      %1122 = vmatprep.subr.mxu0 0.0
      %1123 = vmatpush1.msra.mxu0 0.0
      %1124 = vmatprep.subr.mxu0 0.0
      %1125 = vmatpush1.msra.mxu0 0.0
      %1126 = vmatprep.subr.mxu0 0.0
      %1127 = vmatpush1.msra.mxu0 0.0
      %1128 = vmatprep.subr.mxu0 0.0
      %1129 = vmatpush1.msra.mxu0 0.0
      %1130 = vmatprep.subr.mxu0 0.0
      %1131 = vmatpush1.msra.mxu0 0.0
      %1132 = vmatprep.subr.mxu0 0.0
      %1133 = vmatpush1.msra.mxu0 0.0
      %1134 = vmatprep.subr.mxu0 0.0
      %1135 = vmatpush1.msra.mxu0 0.0
      %1136 = vmatprep.subr.mxu0 0.0
      %1137 = vmatpush1.msra.mxu0 0.0
      %1138 = vmatprep.subr.mxu0 0.0
      %1139 = vmatpush1.msra.mxu0 0.0
      %1140 = vmatprep.subr.mxu0 0.0
      %1141 = vmatpush1.msra.mxu0 0.0
      %1142 = vmatprep.subr.mxu0 0.0
      %1143 = vmatpush1.msra.mxu0 0.0
      %1144 = vmatprep.subr.mxu0 0.0
      %1145 = vmatpush1.msra.mxu0 %v1018
      %1146 = vmatprep.subr.mxu0 0.0
      %1147 = vmatpush1.msra.mxu0 %v1012
      %1148 = vmatprep.subr.mxu0 0.0
      %1149 = vmatpush1.msra.mxu0 %v1006
      %1150 = vmatprep.subr.mxu0 0.0
      %1151 = vmatpush2.msra.mxu0 0.0
      %1152 = vmatprep.subr.mxu0 0.0
      %1153 = vmatpush2.msra.mxu0 0.0
      %1154 = vmatprep.subr.mxu0 0.0
      %1155 = vmatpush2.msra.mxu0 0.0
      %1156 = vmatprep.subr.mxu0 0.0
      %1157 = vmatpush2.msra.mxu0 0.0
      %1158 = vmatprep.subr.mxu0 0.0
      %1159 = vmatpush2.msra.mxu0 0.0
      %1160 = vmatprep.subr.mxu0 0.0
      %1161 = vmatpush2.msra.mxu0 0.0
      %1162 = vmatprep.subr.mxu0 0.0
      %1163 = vmatpush2.msra.mxu0 0.0
      %1164 = vmatprep.subr.mxu0 0.0
      %1165 = vmatpush2.msra.mxu0 0.0
      %1166 = vmatprep.subr.mxu0 0.0
      %1167 = vmatpush2.msra.mxu0 0.0
      %1168 = vmatprep.subr.mxu0 0.0
      %1169 = vmatpush2.msra.mxu0 0.0
      %1170 = vmatprep.subr.mxu0 0.0
      %1171 = vmatpush2.msra.mxu0 0.0
      %1172 = vmatprep.subr.mxu0 0.0
      %1173 = vmatpush2.msra.mxu0 0.0
      %1174 = vmatprep.subr.mxu0 0.0
      %1175 = vmatpush2.msra.mxu0 0.0
      %1176 = vmatprep.subr.mxu0 0.0
      %1177 = vmatpush2.msra.mxu0 0.0
      %1178 = vmatprep.subr.mxu0 0.0
      %1179 = vmatpush2.msra.mxu0 0.0
      %1180 = vmatprep.subr.mxu0 0.0
      %1181 = vmatpush2.msra.mxu0 0.0
      %1182 = vmatprep.mubr.f32.mxu0 0.0
      %1183 = vmatmul.mubr.f32.gmra.mxu0 %v1036
      %v1184 = vpop.f32.mrf.mxu0
      %v1185 = vadd.f32 0.0, %v1184
      %v1186 = vpop.f32.mrf.mxu0
      %1187 = vmatprep.mubr.f32.mxu0 0.0
      %1188 = vmatmul.mubr.f32.gmra.mxu0 %v1039
      %v1189 = vpop.f32.mrf.mxu0
      %v1190 = vadd.f32 0.0, %v1189
      %v1191 = vpop.f32.mrf.mxu0
      %1192 = vdwg.mxu0
      %v1193 = vadd.f32 %v176, %v1108
      %v1194 = vadd.f32 %v176, %v1110
      %v1195 = vadd.f32 %v176, %v1185
      %v1196 = vadd.f32 %v181, %v1114
      %v1197 = vadd.f32 %v181, %v1116
      %v1198 = vadd.f32 %v181, %v1190
      %s1199 = scalar_lea.vmem %s1, 96
      %v1200 = vld [vmem:[%s1199] sm:$0xff]
      %v1201 = vld [vmem:[%s1199 + $0x8] sm:$0xf]
      %1202 = vrot.lane.b32.xlu0 %v980, 109
      %v1203 = vpop.permute.xlu0 %1202
      %1204 = vrot.lane.b32.xlu0 %v981, 109
      %v1205 = vpop.permute.xlu0 %1204
      %1206 = vrot.lane.b32.xlu0 %v982, 109
      %v1207 = vpop.permute.xlu0 %1206
      %1208 = vrot.lane.b32.xlu0 %v983, 109
      %v1209 = vpop.permute.xlu0 %1208
      %1210 = vrot.lane.b32.xlu0 %v984, 109
      %v1211 = vpop.permute.xlu0 %1210
      %1212 = vrot.lane.b32.xlu0 %v985, 109
      %v1213 = vpop.permute.xlu0 %1212
      %1214 = vrot.lane.b32.xlu0 %v986, 109
      %v1215 = vpop.permute.xlu0 %1214
      %1216 = vrot.lane.b32.xlu0 %v987, 109
      %v1217 = vpop.permute.xlu0 %1216
      %1218 = vrot.lane.b32.xlu0 %v988, 109
      %v1219 = vpop.permute.xlu0 %1218
      %v1220 = vsel %vm222, %v1203, %v1205
      %v1221 = vsel %vm222, %v1205, %v1207
      %v1222 = vsel %vm222, %v1209, %v1211
      %v1223 = vsel %vm222, %v1211, %v1213
      %v1224 = vsel %vm222, %v1215, %v1217
      %v1225 = vsel %vm222, %v1217, %v1219
      %v1236 = vsel %vm238, %v1200, 0
      %v1239 = vsel %vm238, %v1201, 0
      %1241 = vmatprep.subr.mxu0 0.0
      %1242 = vmatpush1.msra.mxu0 0.0
      %1243 = vmatprep.subr.mxu0 0.0
      %1244 = vmatpush1.msra.mxu0 0.0
      %1245 = vmatprep.subr.mxu0 0.0
      %1246 = vmatpush1.msra.mxu0 0.0
      %1247 = vmatprep.subr.mxu0 0.0
      %1248 = vmatpush1.msra.mxu0 0.0
      %1249 = vmatprep.subr.mxu0 0.0
      %1250 = vmatpush1.msra.mxu0 0.0
      %1251 = vmatprep.subr.mxu0 0.0
      %1252 = vmatpush1.msra.mxu0 0.0
      %1253 = vmatprep.subr.mxu0 0.0
      %1254 = vmatpush1.msra.mxu0 0.0
      %1255 = vmatprep.subr.mxu0 0.0
      %1256 = vmatpush1.msra.mxu0 0.0
      %1257 = vmatprep.subr.mxu0 0.0
      %1258 = vmatpush1.msra.mxu0 0.0
      %1259 = vmatprep.subr.mxu0 0.0
      %1260 = vmatpush1.msra.mxu0 0.0
      %1261 = vmatprep.subr.mxu0 0.0
      %1262 = vmatpush1.msra.mxu0 0.0
      %1263 = vmatprep.subr.mxu0 0.0
      %1264 = vmatpush1.msra.mxu0 0.0
      %1265 = vmatprep.subr.mxu0 0.0
      %1266 = vmatpush1.msra.mxu0 0.0
      %1267 = vmatprep.subr.mxu0 %v1225
      %1268 = vmatpush1.msra.mxu0 %v1224
      %1269 = vmatprep.subr.mxu0 %v1223
      %1270 = vmatpush1.msra.mxu0 %v1222
      %1271 = vmatprep.subr.mxu0 %v1221
      %1272 = vmatpush1.msra.mxu0 %v1220
      %1273 = vmatprep.subr.mxu0 0.0
      %1274 = vmatpush2.msra.mxu0 0.0
      %1275 = vmatprep.subr.mxu0 0.0
      %1276 = vmatpush2.msra.mxu0 0.0
      %1277 = vmatprep.subr.mxu0 0.0
      %1278 = vmatpush2.msra.mxu0 0.0
      %1279 = vmatprep.subr.mxu0 0.0
      %1280 = vmatpush2.msra.mxu0 0.0
      %1281 = vmatprep.subr.mxu0 0.0
      %1282 = vmatpush2.msra.mxu0 0.0
      %1283 = vmatprep.subr.mxu0 0.0
      %1284 = vmatpush2.msra.mxu0 0.0
      %1285 = vmatprep.subr.mxu0 0.0
      %1286 = vmatpush2.msra.mxu0 0.0
      %1287 = vmatprep.subr.mxu0 0.0
      %1288 = vmatpush2.msra.mxu0 0.0
      %1289 = vmatprep.subr.mxu0 0.0
      %1290 = vmatpush2.msra.mxu0 0.0
      %1291 = vmatprep.subr.mxu0 0.0
      %1292 = vmatpush2.msra.mxu0 0.0
      %1293 = vmatprep.subr.mxu0 0.0
      %1294 = vmatpush2.msra.mxu0 0.0
      %1295 = vmatprep.subr.mxu0 0.0
      %1296 = vmatpush2.msra.mxu0 0.0
      %1297 = vmatprep.subr.mxu0 0.0
      %1298 = vmatpush2.msra.mxu0 0.0
      %1299 = vmatprep.subr.mxu0 0.0
      %1300 = vmatpush2.msra.mxu0 0.0
      %1301 = vmatprep.subr.mxu0 0.0
      %1302 = vmatpush2.msra.mxu0 0.0
      %1303 = vmatprep.subr.mxu0 0.0
      %1304 = vmatpush2.msra.mxu0 0.0
      %1305 = vmatprep.mubr.f32.mxu0 0.0
      %1306 = vmatmul.mubr.f32.gmra.mxu0 %v1236
      %v1307 = vpop.f32.mrf.mxu0
      %v1308 = vadd.f32 0.0, %v1307
      %v1309 = vpop.f32.mrf.mxu0
      %v1310 = vadd.f32 0.0, %v1309
      %1311 = vmatprep.mubr.f32.mxu0 0.0
      %1312 = vmatmul.mubr.f32.gmra.mxu0 %v1239
      %v1313 = vpop.f32.mrf.mxu0
      %v1314 = vadd.f32 0.0, %v1313
      %v1315 = vpop.f32.mrf.mxu0
      %v1316 = vadd.f32 0.0, %v1315
      %1317 = vdwg.mxu0
      %1318 = vmatprep.subr.mxu0 0.0
      %1319 = vmatpush1.msra.mxu0 0.0
      %1320 = vmatprep.subr.mxu0 0.0
      %1321 = vmatpush1.msra.mxu0 0.0
      %1322 = vmatprep.subr.mxu0 0.0
      %1323 = vmatpush1.msra.mxu0 0.0
      %1324 = vmatprep.subr.mxu0 0.0
      %1325 = vmatpush1.msra.mxu0 0.0
      %1326 = vmatprep.subr.mxu0 0.0
      %1327 = vmatpush1.msra.mxu0 0.0
      %1328 = vmatprep.subr.mxu0 0.0
      %1329 = vmatpush1.msra.mxu0 0.0
      %1330 = vmatprep.subr.mxu0 0.0
      %1331 = vmatpush1.msra.mxu0 0.0
      %1332 = vmatprep.subr.mxu0 0.0
      %1333 = vmatpush1.msra.mxu0 0.0
      %1334 = vmatprep.subr.mxu0 0.0
      %1335 = vmatpush1.msra.mxu0 0.0
      %1336 = vmatprep.subr.mxu0 0.0
      %1337 = vmatpush1.msra.mxu0 0.0
      %1338 = vmatprep.subr.mxu0 0.0
      %1339 = vmatpush1.msra.mxu0 0.0
      %1340 = vmatprep.subr.mxu0 0.0
      %1341 = vmatpush1.msra.mxu0 0.0
      %1342 = vmatprep.subr.mxu0 0.0
      %1343 = vmatpush1.msra.mxu0 0.0
      %1344 = vmatprep.subr.mxu0 0.0
      %1345 = vmatpush1.msra.mxu0 %v1219
      %1346 = vmatprep.subr.mxu0 0.0
      %1347 = vmatpush1.msra.mxu0 %v1213
      %1348 = vmatprep.subr.mxu0 0.0
      %1349 = vmatpush1.msra.mxu0 %v1207
      %1350 = vmatprep.subr.mxu0 0.0
      %1351 = vmatpush2.msra.mxu0 0.0
      %1352 = vmatprep.subr.mxu0 0.0
      %1353 = vmatpush2.msra.mxu0 0.0
      %1354 = vmatprep.subr.mxu0 0.0
      %1355 = vmatpush2.msra.mxu0 0.0
      %1356 = vmatprep.subr.mxu0 0.0
      %1357 = vmatpush2.msra.mxu0 0.0
      %1358 = vmatprep.subr.mxu0 0.0
      %1359 = vmatpush2.msra.mxu0 0.0
      %1360 = vmatprep.subr.mxu0 0.0
      %1361 = vmatpush2.msra.mxu0 0.0
      %1362 = vmatprep.subr.mxu0 0.0
      %1363 = vmatpush2.msra.mxu0 0.0
      %1364 = vmatprep.subr.mxu0 0.0
      %1365 = vmatpush2.msra.mxu0 0.0
      %1366 = vmatprep.subr.mxu0 0.0
      %1367 = vmatpush2.msra.mxu0 0.0
      %1368 = vmatprep.subr.mxu0 0.0
      %1369 = vmatpush2.msra.mxu0 0.0
      %1370 = vmatprep.subr.mxu0 0.0
      %1371 = vmatpush2.msra.mxu0 0.0
      %1372 = vmatprep.subr.mxu0 0.0
      %1373 = vmatpush2.msra.mxu0 0.0
      %1374 = vmatprep.subr.mxu0 0.0
      %1375 = vmatpush2.msra.mxu0 0.0
      %1376 = vmatprep.subr.mxu0 0.0
      %1377 = vmatpush2.msra.mxu0 0.0
      %1378 = vmatprep.subr.mxu0 0.0
      %1379 = vmatpush2.msra.mxu0 0.0
      %1380 = vmatprep.subr.mxu0 0.0
      %1381 = vmatpush2.msra.mxu0 0.0
      %1382 = vmatprep.mubr.f32.mxu0 0.0
      %1383 = vmatmul.mubr.f32.gmra.mxu0 %v1236
      %v1384 = vpop.f32.mrf.mxu0
      %v1385 = vadd.f32 0.0, %v1384
      %v1386 = vpop.f32.mrf.mxu0
      %1387 = vmatprep.mubr.f32.mxu0 0.0
      %1388 = vmatmul.mubr.f32.gmra.mxu0 %v1239
      %v1389 = vpop.f32.mrf.mxu0
      %v1390 = vadd.f32 0.0, %v1389
      %v1391 = vpop.f32.mrf.mxu0
      %1392 = vdwg.mxu0
      %v1393 = vadd.f32 %v1193, %v1308
      %v1394 = vadd.f32 %v1194, %v1310
      %v1395 = vadd.f32 %v1195, %v1385
      %v1396 = vadd.f32 %v1196, %v1314
      %v1397 = vadd.f32 %v1197, %v1316
      %v1398 = vadd.f32 %v1198, %v1390
      %s1399 = scalar_lea.vmem %s1, 192
      %v1400 = vld [vmem:[%s1399] sm:$0xff]
      %v1401 = vld [vmem:[%s1399 + $0x8] sm:$0xf]
      %1402 = vrot.lane.b32.xlu0 %v980, 126
      %v1403 = vpop.permute.xlu0 %1402
      %1404 = vrot.lane.b32.xlu0 %v981, 126
      %v1405 = vpop.permute.xlu0 %1404
      %1406 = vrot.lane.b32.xlu0 %v982, 126
      %v1407 = vpop.permute.xlu0 %1406
      %1408 = vrot.lane.b32.xlu0 %v983, 126
      %v1409 = vpop.permute.xlu0 %1408
      %1410 = vrot.lane.b32.xlu0 %v984, 126
      %v1411 = vpop.permute.xlu0 %1410
      %1412 = vrot.lane.b32.xlu0 %v985, 126
      %v1413 = vpop.permute.xlu0 %1412
      %1414 = vrot.lane.b32.xlu0 %v986, 126
      %v1415 = vpop.permute.xlu0 %1414
      %1416 = vrot.lane.b32.xlu0 %v987, 126
      %v1417 = vpop.permute.xlu0 %1416
      %1418 = vrot.lane.b32.xlu0 %v988, 126
      %v1419 = vpop.permute.xlu0 %1418
      %vm1420 = vcmask 1031168
      %v1421 = vsel %vm1420, %v1403, %v1405
      %v1422 = vsel %vm1420, %v1405, %v1407
      %v1423 = vsel %vm1420, %v1409, %v1411
      %v1424 = vsel %vm1420, %v1411, %v1413
      %v1425 = vsel %vm1420, %v1415, %v1417
      %v1426 = vsel %vm1420, %v1417, %v1419
      %v1437 = vsel %vm238, %v1400, 0
      %v1440 = vsel %vm238, %v1401, 0
      %1442 = vmatprep.subr.mxu0 0.0
      %1443 = vmatpush1.msra.mxu0 0.0
      %1444 = vmatprep.subr.mxu0 0.0
      %1445 = vmatpush1.msra.mxu0 0.0
      %1446 = vmatprep.subr.mxu0 0.0
      %1447 = vmatpush1.msra.mxu0 0.0
      %1448 = vmatprep.subr.mxu0 0.0
      %1449 = vmatpush1.msra.mxu0 0.0
      %1450 = vmatprep.subr.mxu0 0.0
      %1451 = vmatpush1.msra.mxu0 0.0
      %1452 = vmatprep.subr.mxu0 0.0
      %1453 = vmatpush1.msra.mxu0 0.0
      %1454 = vmatprep.subr.mxu0 0.0
      %1455 = vmatpush1.msra.mxu0 0.0
      %1456 = vmatprep.subr.mxu0 0.0
      %1457 = vmatpush1.msra.mxu0 0.0
      %1458 = vmatprep.subr.mxu0 0.0
      %1459 = vmatpush1.msra.mxu0 0.0
      %1460 = vmatprep.subr.mxu0 0.0
      %1461 = vmatpush1.msra.mxu0 0.0
      %1462 = vmatprep.subr.mxu0 0.0
      %1463 = vmatpush1.msra.mxu0 0.0
      %1464 = vmatprep.subr.mxu0 0.0
      %1465 = vmatpush1.msra.mxu0 0.0
      %1466 = vmatprep.subr.mxu0 0.0
      %1467 = vmatpush1.msra.mxu0 0.0
      %1468 = vmatprep.subr.mxu0 %v1426
      %1469 = vmatpush1.msra.mxu0 %v1425
      %1470 = vmatprep.subr.mxu0 %v1424
      %1471 = vmatpush1.msra.mxu0 %v1423
      %1472 = vmatprep.subr.mxu0 %v1422
      %1473 = vmatpush1.msra.mxu0 %v1421
      %1474 = vmatprep.subr.mxu0 0.0
      %1475 = vmatpush2.msra.mxu0 0.0
      %1476 = vmatprep.subr.mxu0 0.0
      %1477 = vmatpush2.msra.mxu0 0.0
      %1478 = vmatprep.subr.mxu0 0.0
      %1479 = vmatpush2.msra.mxu0 0.0
      %1480 = vmatprep.subr.mxu0 0.0
      %1481 = vmatpush2.msra.mxu0 0.0
      %1482 = vmatprep.subr.mxu0 0.0
      %1483 = vmatpush2.msra.mxu0 0.0
      %1484 = vmatprep.subr.mxu0 0.0
      %1485 = vmatpush2.msra.mxu0 0.0
      %1486 = vmatprep.subr.mxu0 0.0
      %1487 = vmatpush2.msra.mxu0 0.0
      %1488 = vmatprep.subr.mxu0 0.0
      %1489 = vmatpush2.msra.mxu0 0.0
      %1490 = vmatprep.subr.mxu0 0.0
      %1491 = vmatpush2.msra.mxu0 0.0
      %1492 = vmatprep.subr.mxu0 0.0
      %1493 = vmatpush2.msra.mxu0 0.0
      %1494 = vmatprep.subr.mxu0 0.0
      %1495 = vmatpush2.msra.mxu0 0.0
      %1496 = vmatprep.subr.mxu0 0.0
      %1497 = vmatpush2.msra.mxu0 0.0
      %1498 = vmatprep.subr.mxu0 0.0
      %1499 = vmatpush2.msra.mxu0 0.0
      %1500 = vmatprep.subr.mxu0 0.0
      %1501 = vmatpush2.msra.mxu0 0.0
      %1502 = vmatprep.subr.mxu0 0.0
      %1503 = vmatpush2.msra.mxu0 0.0
      %1504 = vmatprep.subr.mxu0 0.0
      %1505 = vmatpush2.msra.mxu0 0.0
      %1506 = vmatprep.mubr.f32.mxu0 0.0
      %1507 = vmatmul.mubr.f32.gmra.mxu0 %v1437
      %v1508 = vpop.f32.mrf.mxu0
      %v1509 = vadd.f32 0.0, %v1508
      %v1510 = vpop.f32.mrf.mxu0
      %v1511 = vadd.f32 0.0, %v1510
      %1512 = vmatprep.mubr.f32.mxu0 0.0
      %1513 = vmatmul.mubr.f32.gmra.mxu0 %v1440
      %v1514 = vpop.f32.mrf.mxu0
      %v1515 = vadd.f32 0.0, %v1514
      %v1516 = vpop.f32.mrf.mxu0
      %v1517 = vadd.f32 0.0, %v1516
      %1518 = vdwg.mxu0
      %1519 = vmatprep.subr.mxu0 0.0
      %1520 = vmatpush1.msra.mxu0 0.0
      %1521 = vmatprep.subr.mxu0 0.0
      %1522 = vmatpush1.msra.mxu0 0.0
      %1523 = vmatprep.subr.mxu0 0.0
      %1524 = vmatpush1.msra.mxu0 0.0
      %1525 = vmatprep.subr.mxu0 0.0
      %1526 = vmatpush1.msra.mxu0 0.0
      %1527 = vmatprep.subr.mxu0 0.0
      %1528 = vmatpush1.msra.mxu0 0.0
      %1529 = vmatprep.subr.mxu0 0.0
      %1530 = vmatpush1.msra.mxu0 0.0
      %1531 = vmatprep.subr.mxu0 0.0
      %1532 = vmatpush1.msra.mxu0 0.0
      %1533 = vmatprep.subr.mxu0 0.0
      %1534 = vmatpush1.msra.mxu0 0.0
      %1535 = vmatprep.subr.mxu0 0.0
      %1536 = vmatpush1.msra.mxu0 0.0
      %1537 = vmatprep.subr.mxu0 0.0
      %1538 = vmatpush1.msra.mxu0 0.0
      %1539 = vmatprep.subr.mxu0 0.0
      %1540 = vmatpush1.msra.mxu0 0.0
      %1541 = vmatprep.subr.mxu0 0.0
      %1542 = vmatpush1.msra.mxu0 0.0
      %1543 = vmatprep.subr.mxu0 0.0
      %1544 = vmatpush1.msra.mxu0 0.0
      %1545 = vmatprep.subr.mxu0 0.0
      %1546 = vmatpush1.msra.mxu0 %v1419
      %1547 = vmatprep.subr.mxu0 0.0
      %1548 = vmatpush1.msra.mxu0 %v1413
      %1549 = vmatprep.subr.mxu0 0.0
      %1550 = vmatpush1.msra.mxu0 %v1407
      %1551 = vmatprep.subr.mxu0 0.0
      %1552 = vmatpush2.msra.mxu0 0.0
      %1553 = vmatprep.subr.mxu0 0.0
      %1554 = vmatpush2.msra.mxu0 0.0
      %1555 = vmatprep.subr.mxu0 0.0
      %1556 = vmatpush2.msra.mxu0 0.0
      %1557 = vmatprep.subr.mxu0 0.0
      %1558 = vmatpush2.msra.mxu0 0.0
      %1559 = vmatprep.subr.mxu0 0.0
      %1560 = vmatpush2.msra.mxu0 0.0
      %1561 = vmatprep.subr.mxu0 0.0
      %1562 = vmatpush2.msra.mxu0 0.0
      %1563 = vmatprep.subr.mxu0 0.0
      %1564 = vmatpush2.msra.mxu0 0.0
      %1565 = vmatprep.subr.mxu0 0.0
      %1566 = vmatpush2.msra.mxu0 0.0
      %1567 = vmatprep.subr.mxu0 0.0
      %1568 = vmatpush2.msra.mxu0 0.0
      %1569 = vmatprep.subr.mxu0 0.0
      %1570 = vmatpush2.msra.mxu0 0.0
      %1571 = vmatprep.subr.mxu0 0.0
      %1572 = vmatpush2.msra.mxu0 0.0
      %1573 = vmatprep.subr.mxu0 0.0
      %1574 = vmatpush2.msra.mxu0 0.0
      %1575 = vmatprep.subr.mxu0 0.0
      %1576 = vmatpush2.msra.mxu0 0.0
      %1577 = vmatprep.subr.mxu0 0.0
      %1578 = vmatpush2.msra.mxu0 0.0
      %1579 = vmatprep.subr.mxu0 0.0
      %1580 = vmatpush2.msra.mxu0 0.0
      %1581 = vmatprep.subr.mxu0 0.0
      %1582 = vmatpush2.msra.mxu0 0.0
      %1583 = vmatprep.mubr.f32.mxu0 0.0
      %1584 = vmatmul.mubr.f32.gmra.mxu0 %v1437
      %v1585 = vpop.f32.mrf.mxu0
      %v1586 = vadd.f32 0.0, %v1585
      %v1587 = vpop.f32.mrf.mxu0
      %1588 = vmatprep.mubr.f32.mxu0 0.0
      %1589 = vmatmul.mubr.f32.gmra.mxu0 %v1440
      %v1590 = vpop.f32.mrf.mxu0
      %v1591 = vadd.f32 0.0, %v1590
      %v1592 = vpop.f32.mrf.mxu0
      %1593 = vdwg.mxu0
      %v1594 = vadd.f32 %v1393, %v1509
      %v1595 = vadd.f32 %v1394, %v1511
      %v1596 = vadd.f32 %v1395, %v1586
      %v1597 = vadd.f32 %v1396, %v1515
      %v1598 = vadd.f32 %v1397, %v1517
      %v1599 = vadd.f32 %v1398, %v1591
      %s1600 = scalar_lea.vmem %s1, 224
      %v1601 = vld [vmem:[%s1600] sm:$0xff]
      %v1602 = vld [vmem:[%s1600 + $0x8] sm:$0xf]
      %1603 = vrot.lane.b32.xlu0 %v980, 127
      %v1604 = vpop.permute.xlu0 %1603
      %1605 = vrot.lane.b32.xlu0 %v981, 127
      %v1606 = vpop.permute.xlu0 %1605
      %1607 = vrot.lane.b32.xlu0 %v982, 127
      %v1608 = vpop.permute.xlu0 %1607
      %1609 = vrot.lane.b32.xlu0 %v983, 127
      %v1610 = vpop.permute.xlu0 %1609
      %1611 = vrot.lane.b32.xlu0 %v984, 127
      %v1612 = vpop.permute.xlu0 %1611
      %1613 = vrot.lane.b32.xlu0 %v985, 127
      %v1614 = vpop.permute.xlu0 %1613
      %1615 = vrot.lane.b32.xlu0 %v986, 127
      %v1616 = vpop.permute.xlu0 %1615
      %1617 = vrot.lane.b32.xlu0 %v987, 127
      %v1618 = vpop.permute.xlu0 %1617
      %1619 = vrot.lane.b32.xlu0 %v988, 127
      %v1620 = vpop.permute.xlu0 %1619
      %v1621 = vsel %vm625, %v1604, %v1606
      %v1622 = vsel %vm625, %v1606, %v1608
      %v1623 = vsel %vm625, %v1610, %v1612
      %v1624 = vsel %vm625, %v1612, %v1614
      %v1625 = vsel %vm625, %v1616, %v1618
      %v1626 = vsel %vm625, %v1618, %v1620
      %v1637 = vsel %vm238, %v1601, 0
      %v1640 = vsel %vm238, %v1602, 0
      %1642 = vmatprep.subr.mxu0 0.0
      %1643 = vmatpush1.msra.mxu0 0.0
      %1644 = vmatprep.subr.mxu0 0.0
      %1645 = vmatpush1.msra.mxu0 0.0
      %1646 = vmatprep.subr.mxu0 0.0
      %1647 = vmatpush1.msra.mxu0 0.0
      %1648 = vmatprep.subr.mxu0 0.0
      %1649 = vmatpush1.msra.mxu0 0.0
      %1650 = vmatprep.subr.mxu0 0.0
      %1651 = vmatpush1.msra.mxu0 0.0
      %1652 = vmatprep.subr.mxu0 0.0
      %1653 = vmatpush1.msra.mxu0 0.0
      %1654 = vmatprep.subr.mxu0 0.0
      %1655 = vmatpush1.msra.mxu0 0.0
      %1656 = vmatprep.subr.mxu0 0.0
      %1657 = vmatpush1.msra.mxu0 0.0
      %1658 = vmatprep.subr.mxu0 0.0
      %1659 = vmatpush1.msra.mxu0 0.0
      %1660 = vmatprep.subr.mxu0 0.0
      %1661 = vmatpush1.msra.mxu0 0.0
      %1662 = vmatprep.subr.mxu0 0.0
      %1663 = vmatpush1.msra.mxu0 0.0
      %1664 = vmatprep.subr.mxu0 0.0
      %1665 = vmatpush1.msra.mxu0 0.0
      %1666 = vmatprep.subr.mxu0 0.0
      %1667 = vmatpush1.msra.mxu0 0.0
      %1668 = vmatprep.subr.mxu0 %v1626
      %1669 = vmatpush1.msra.mxu0 %v1625
      %1670 = vmatprep.subr.mxu0 %v1624
      %1671 = vmatpush1.msra.mxu0 %v1623
      %1672 = vmatprep.subr.mxu0 %v1622
      %1673 = vmatpush1.msra.mxu0 %v1621
      %1674 = vmatprep.subr.mxu0 0.0
      %1675 = vmatpush2.msra.mxu0 0.0
      %1676 = vmatprep.subr.mxu0 0.0
      %1677 = vmatpush2.msra.mxu0 0.0
      %1678 = vmatprep.subr.mxu0 0.0
      %1679 = vmatpush2.msra.mxu0 0.0
      %1680 = vmatprep.subr.mxu0 0.0
      %1681 = vmatpush2.msra.mxu0 0.0
      %1682 = vmatprep.subr.mxu0 0.0
      %1683 = vmatpush2.msra.mxu0 0.0
      %1684 = vmatprep.subr.mxu0 0.0
      %1685 = vmatpush2.msra.mxu0 0.0
      %1686 = vmatprep.subr.mxu0 0.0
      %1687 = vmatpush2.msra.mxu0 0.0
      %1688 = vmatprep.subr.mxu0 0.0
      %1689 = vmatpush2.msra.mxu0 0.0
      %1690 = vmatprep.subr.mxu0 0.0
      %1691 = vmatpush2.msra.mxu0 0.0
      %1692 = vmatprep.subr.mxu0 0.0
      %1693 = vmatpush2.msra.mxu0 0.0
      %1694 = vmatprep.subr.mxu0 0.0
      %1695 = vmatpush2.msra.mxu0 0.0
      %1696 = vmatprep.subr.mxu0 0.0
      %1697 = vmatpush2.msra.mxu0 0.0
      %1698 = vmatprep.subr.mxu0 0.0
      %1699 = vmatpush2.msra.mxu0 0.0
      %1700 = vmatprep.subr.mxu0 0.0
      %1701 = vmatpush2.msra.mxu0 0.0
      %1702 = vmatprep.subr.mxu0 0.0
      %1703 = vmatpush2.msra.mxu0 0.0
      %1704 = vmatprep.subr.mxu0 0.0
      %1705 = vmatpush2.msra.mxu0 0.0
      %1706 = vmatprep.mubr.f32.mxu0 0.0
      %1707 = vmatmul.mubr.f32.gmra.mxu0 %v1637
      %v1708 = vpop.f32.mrf.mxu0
      %v1709 = vadd.f32 0.0, %v1708
      %v1710 = vpop.f32.mrf.mxu0
      %v1711 = vadd.f32 0.0, %v1710
      %1712 = vmatprep.mubr.f32.mxu0 0.0
      %1713 = vmatmul.mubr.f32.gmra.mxu0 %v1640
      %v1714 = vpop.f32.mrf.mxu0
      %v1715 = vadd.f32 0.0, %v1714
      %v1716 = vpop.f32.mrf.mxu0
      %v1717 = vadd.f32 0.0, %v1716
      %1718 = vdwg.mxu0
      %1719 = vmatprep.subr.mxu0 0.0
      %1720 = vmatpush1.msra.mxu0 0.0
      %1721 = vmatprep.subr.mxu0 0.0
      %1722 = vmatpush1.msra.mxu0 0.0
      %1723 = vmatprep.subr.mxu0 0.0
      %1724 = vmatpush1.msra.mxu0 0.0
      %1725 = vmatprep.subr.mxu0 0.0
      %1726 = vmatpush1.msra.mxu0 0.0
      %1727 = vmatprep.subr.mxu0 0.0
      %1728 = vmatpush1.msra.mxu0 0.0
      %1729 = vmatprep.subr.mxu0 0.0
      %1730 = vmatpush1.msra.mxu0 0.0
      %1731 = vmatprep.subr.mxu0 0.0
      %1732 = vmatpush1.msra.mxu0 0.0
      %1733 = vmatprep.subr.mxu0 0.0
      %1734 = vmatpush1.msra.mxu0 0.0
      %1735 = vmatprep.subr.mxu0 0.0
      %1736 = vmatpush1.msra.mxu0 0.0
      %1737 = vmatprep.subr.mxu0 0.0
      %1738 = vmatpush1.msra.mxu0 0.0
      %1739 = vmatprep.subr.mxu0 0.0
      %1740 = vmatpush1.msra.mxu0 0.0
      %1741 = vmatprep.subr.mxu0 0.0
      %1742 = vmatpush1.msra.mxu0 0.0
      %1743 = vmatprep.subr.mxu0 0.0
      %1744 = vmatpush1.msra.mxu0 0.0
      %1745 = vmatprep.subr.mxu0 0.0
      %1746 = vmatpush1.msra.mxu0 %v1620
      %1747 = vmatprep.subr.mxu0 0.0
      %1748 = vmatpush1.msra.mxu0 %v1614
      %1749 = vmatprep.subr.mxu0 0.0
      %1750 = vmatpush1.msra.mxu0 %v1608
      %1751 = vmatprep.subr.mxu0 0.0
      %1752 = vmatpush2.msra.mxu0 0.0
      %1753 = vmatprep.subr.mxu0 0.0
      %1754 = vmatpush2.msra.mxu0 0.0
      %1755 = vmatprep.subr.mxu0 0.0
      %1756 = vmatpush2.msra.mxu0 0.0
      %1757 = vmatprep.subr.mxu0 0.0
      %1758 = vmatpush2.msra.mxu0 0.0
      %1759 = vmatprep.subr.mxu0 0.0
      %1760 = vmatpush2.msra.mxu0 0.0
      %1761 = vmatprep.subr.mxu0 0.0
      %1762 = vmatpush2.msra.mxu0 0.0
      %1763 = vmatprep.subr.mxu0 0.0
      %1764 = vmatpush2.msra.mxu0 0.0
      %1765 = vmatprep.subr.mxu0 0.0
      %1766 = vmatpush2.msra.mxu0 0.0
      %1767 = vmatprep.subr.mxu0 0.0
      %1768 = vmatpush2.msra.mxu0 0.0
      %1769 = vmatprep.subr.mxu0 0.0
      %1770 = vmatpush2.msra.mxu0 0.0
      %1771 = vmatprep.subr.mxu0 0.0
      %1772 = vmatpush2.msra.mxu0 0.0
      %1773 = vmatprep.subr.mxu0 0.0
      %1774 = vmatpush2.msra.mxu0 0.0
      %1775 = vmatprep.subr.mxu0 0.0
      %1776 = vmatpush2.msra.mxu0 0.0
      %1777 = vmatprep.subr.mxu0 0.0
      %1778 = vmatpush2.msra.mxu0 0.0
      %1779 = vmatprep.subr.mxu0 0.0
      %1780 = vmatpush2.msra.mxu0 0.0
      %1781 = vmatprep.subr.mxu0 0.0
      %1782 = vmatpush2.msra.mxu0 0.0
      %1783 = vmatprep.mubr.f32.mxu0 0.0
      %1784 = vmatmul.mubr.f32.gmra.mxu0 %v1637
      %v1785 = vpop.f32.mrf.mxu0
      %v1786 = vadd.f32 0.0, %v1785
      %v1787 = vpop.f32.mrf.mxu0
      %1788 = vmatprep.mubr.f32.mxu0 0.0
      %1789 = vmatmul.mubr.f32.gmra.mxu0 %v1640
      %v1790 = vpop.f32.mrf.mxu0
      %v1791 = vadd.f32 0.0, %v1790
      %v1792 = vpop.f32.mrf.mxu0
      %1793 = vdwg.mxu0
      %v1794 = vadd.f32 %v1594, %v1709
      %v1795 = vadd.f32 %v1595, %v1711
      %v1796 = vadd.f32 %v1596, %v1786
      %v1797 = vadd.f32 %v1597, %v1715
      %v1798 = vadd.f32 %v1598, %v1717
      %v1799 = vadd.f32 %v1599, %v1791
      %s1800 = scalar_lea.vmem %s170, 48
      %1801 = vst [vmem:[%s1800] sm:$0xff] %v1794
      %1802 = vst [vmem:[%s1800 + $0x8] sm:$0xff] %v1795
      %1803 = vst.msk [vmem:[%s1800 + $0x10] sm:$0xff] %vm974, %v1796
      %1804 = vst [vmem:[%s1800 + $0x18] sm:$0xf] %v1797
      %1805 = vst [vmem:[%s1800 + $0x20] sm:$0xf] %v1798
      %1806 = vst.msk [vmem:[%s1800 + $0x28] sm:$0xf] %vm978, %v1799
      %v1807 = vld [vmem:[%s165] sm:$0xff]
      %v1808 = vld [vmem:[%s165 + $0x8] sm:$0xff]
      %v1809 = vld [vmem:[%s165 + $0x10] sm:$0xff]
      %v1810 = vld [vmem:[%s165 + $0x18] sm:$0xff]
      %v1811 = vld [vmem:[%s165 + $0x20] sm:$0xff]
      %v1812 = vld [vmem:[%s165 + $0x28] sm:$0xff]
      %v1813 = vld [vmem:[%s165 + $0x30] sm:$0xff]
      %v1814 = vld [vmem:[%s165 + $0x38] sm:$0xff]
      %v1815 = vld [vmem:[%s165 + $0x40] sm:$0xff]
      %s1816 = scalar_lea.vmem %s1, 16
      %v1817 = vld [vmem:[%s1816] sm:$0xff]
      %v1818 = vld [vmem:[%s1816 + $0x8] sm:$0xf]
      %1828 = vrot.lane.b32.xlu0 %v1807, 91
      %v1829 = vpop.permute.xlu0 %1828
      %1830 = vrot.lane.b32.xlu0 %v1808, 91
      %v1831 = vpop.permute.xlu0 %1830
      %1832 = vrot.lane.b32.xlu0 %v1809, 91
      %v1833 = vpop.permute.xlu0 %1832
      %1834 = vrot.lane.b32.xlu0 %v1810, 91
      %v1835 = vpop.permute.xlu0 %1834
      %1836 = vrot.lane.b32.xlu0 %v1811, 91
      %v1837 = vpop.permute.xlu0 %1836
      %1838 = vrot.lane.b32.xlu0 %v1812, 91
      %v1839 = vpop.permute.xlu0 %1838
      %1840 = vrot.lane.b32.xlu0 %v1813, 91
      %v1841 = vpop.permute.xlu0 %1840
      %1842 = vrot.lane.b32.xlu0 %v1814, 91
      %v1843 = vpop.permute.xlu0 %1842
      %1844 = vrot.lane.b32.xlu0 %v1815, 91
      %v1845 = vpop.permute.xlu0 %1844
      %vm1846 = vcmask 744448
      %v1847 = vsel %vm1846, %v1829, %v1831
      %v1848 = vsel %vm1846, %v1831, %v1833
      %v1849 = vsel %vm1846, %v1835, %v1837
      %v1850 = vsel %vm1846, %v1837, %v1839
      %v1851 = vsel %vm1846, %v1841, %v1843
      %v1852 = vsel %vm1846, %v1843, %v1845
      %v1863 = vsel %vm238, %v1817, 0
      %v1866 = vsel %vm238, %v1818, 0
      %1868 = vmatprep.subr.mxu0 0.0
      %1869 = vmatpush1.msra.mxu0 0.0
      %1870 = vmatprep.subr.mxu0 0.0
      %1871 = vmatpush1.msra.mxu0 0.0
      %1872 = vmatprep.subr.mxu0 0.0
      %1873 = vmatpush1.msra.mxu0 0.0
      %1874 = vmatprep.subr.mxu0 0.0
      %1875 = vmatpush1.msra.mxu0 0.0
      %1876 = vmatprep.subr.mxu0 0.0
      %1877 = vmatpush1.msra.mxu0 0.0
      %1878 = vmatprep.subr.mxu0 0.0
      %1879 = vmatpush1.msra.mxu0 0.0
      %1880 = vmatprep.subr.mxu0 0.0
      %1881 = vmatpush1.msra.mxu0 0.0
      %1882 = vmatprep.subr.mxu0 0.0
      %1883 = vmatpush1.msra.mxu0 0.0
      %1884 = vmatprep.subr.mxu0 0.0
      %1885 = vmatpush1.msra.mxu0 0.0
      %1886 = vmatprep.subr.mxu0 0.0
      %1887 = vmatpush1.msra.mxu0 0.0
      %1888 = vmatprep.subr.mxu0 0.0
      %1889 = vmatpush1.msra.mxu0 0.0
      %1890 = vmatprep.subr.mxu0 0.0
      %1891 = vmatpush1.msra.mxu0 0.0
      %1892 = vmatprep.subr.mxu0 0.0
      %1893 = vmatpush1.msra.mxu0 0.0
      %1894 = vmatprep.subr.mxu0 %v1852
      %1895 = vmatpush1.msra.mxu0 %v1851
      %1896 = vmatprep.subr.mxu0 %v1850
      %1897 = vmatpush1.msra.mxu0 %v1849
      %1898 = vmatprep.subr.mxu0 %v1848
      %1899 = vmatpush1.msra.mxu0 %v1847
      %1900 = vmatprep.subr.mxu0 0.0
      %1901 = vmatpush2.msra.mxu0 0.0
      %1902 = vmatprep.subr.mxu0 0.0
      %1903 = vmatpush2.msra.mxu0 0.0
      %1904 = vmatprep.subr.mxu0 0.0
      %1905 = vmatpush2.msra.mxu0 0.0
      %1906 = vmatprep.subr.mxu0 0.0
      %1907 = vmatpush2.msra.mxu0 0.0
      %1908 = vmatprep.subr.mxu0 0.0
      %1909 = vmatpush2.msra.mxu0 0.0
      %1910 = vmatprep.subr.mxu0 0.0
      %1911 = vmatpush2.msra.mxu0 0.0
      %1912 = vmatprep.subr.mxu0 0.0
      %1913 = vmatpush2.msra.mxu0 0.0
      %1914 = vmatprep.subr.mxu0 0.0
      %1915 = vmatpush2.msra.mxu0 0.0
      %1916 = vmatprep.subr.mxu0 0.0
      %1917 = vmatpush2.msra.mxu0 0.0
      %1918 = vmatprep.subr.mxu0 0.0
      %1919 = vmatpush2.msra.mxu0 0.0
      %1920 = vmatprep.subr.mxu0 0.0
      %1921 = vmatpush2.msra.mxu0 0.0
      %1922 = vmatprep.subr.mxu0 0.0
      %1923 = vmatpush2.msra.mxu0 0.0
      %1924 = vmatprep.subr.mxu0 0.0
      %1925 = vmatpush2.msra.mxu0 0.0
      %1926 = vmatprep.subr.mxu0 0.0
      %1927 = vmatpush2.msra.mxu0 0.0
      %1928 = vmatprep.subr.mxu0 0.0
      %1929 = vmatpush2.msra.mxu0 0.0
      %1930 = vmatprep.subr.mxu0 0.0
      %1931 = vmatpush2.msra.mxu0 0.0
      %1932 = vmatprep.mubr.f32.mxu0 0.0
      %1933 = vmatmul.mubr.f32.gmra.mxu0 %v1863
      %v1934 = vpop.f32.mrf.mxu0
      %v1935 = vadd.f32 0.0, %v1934
      %v1936 = vpop.f32.mrf.mxu0
      %v1937 = vadd.f32 0.0, %v1936
      %1938 = vmatprep.mubr.f32.mxu0 0.0
      %1939 = vmatmul.mubr.f32.gmra.mxu0 %v1866
      %v1940 = vpop.f32.mrf.mxu0
      %v1941 = vadd.f32 0.0, %v1940
      %v1942 = vpop.f32.mrf.mxu0
      %v1943 = vadd.f32 0.0, %v1942
      %1944 = vdwg.mxu0
      %1945 = vmatprep.subr.mxu0 0.0
      %1946 = vmatpush1.msra.mxu0 0.0
      %1947 = vmatprep.subr.mxu0 0.0
      %1948 = vmatpush1.msra.mxu0 0.0
      %1949 = vmatprep.subr.mxu0 0.0
      %1950 = vmatpush1.msra.mxu0 0.0
      %1951 = vmatprep.subr.mxu0 0.0
      %1952 = vmatpush1.msra.mxu0 0.0
      %1953 = vmatprep.subr.mxu0 0.0
      %1954 = vmatpush1.msra.mxu0 0.0
      %1955 = vmatprep.subr.mxu0 0.0
      %1956 = vmatpush1.msra.mxu0 0.0
      %1957 = vmatprep.subr.mxu0 0.0
      %1958 = vmatpush1.msra.mxu0 0.0
      %1959 = vmatprep.subr.mxu0 0.0
      %1960 = vmatpush1.msra.mxu0 0.0
      %1961 = vmatprep.subr.mxu0 0.0
      %1962 = vmatpush1.msra.mxu0 0.0
      %1963 = vmatprep.subr.mxu0 0.0
      %1964 = vmatpush1.msra.mxu0 0.0
      %1965 = vmatprep.subr.mxu0 0.0
      %1966 = vmatpush1.msra.mxu0 0.0
      %1967 = vmatprep.subr.mxu0 0.0
      %1968 = vmatpush1.msra.mxu0 0.0
      %1969 = vmatprep.subr.mxu0 0.0
      %1970 = vmatpush1.msra.mxu0 0.0
      %1971 = vmatprep.subr.mxu0 0.0
      %1972 = vmatpush1.msra.mxu0 %v1845
      %1973 = vmatprep.subr.mxu0 0.0
      %1974 = vmatpush1.msra.mxu0 %v1839
      %1975 = vmatprep.subr.mxu0 0.0
      %1976 = vmatpush1.msra.mxu0 %v1833
      %1977 = vmatprep.subr.mxu0 0.0
      %1978 = vmatpush2.msra.mxu0 0.0
      %1979 = vmatprep.subr.mxu0 0.0
      %1980 = vmatpush2.msra.mxu0 0.0
      %1981 = vmatprep.subr.mxu0 0.0
      %1982 = vmatpush2.msra.mxu0 0.0
      %1983 = vmatprep.subr.mxu0 0.0
      %1984 = vmatpush2.msra.mxu0 0.0
      %1985 = vmatprep.subr.mxu0 0.0
      %1986 = vmatpush2.msra.mxu0 0.0
      %1987 = vmatprep.subr.mxu0 0.0
      %1988 = vmatpush2.msra.mxu0 0.0
      %1989 = vmatprep.subr.mxu0 0.0
      %1990 = vmatpush2.msra.mxu0 0.0
      %1991 = vmatprep.subr.mxu0 0.0
      %1992 = vmatpush2.msra.mxu0 0.0
      %1993 = vmatprep.subr.mxu0 0.0
      %1994 = vmatpush2.msra.mxu0 0.0
      %1995 = vmatprep.subr.mxu0 0.0
      %1996 = vmatpush2.msra.mxu0 0.0
      %1997 = vmatprep.subr.mxu0 0.0
      %1998 = vmatpush2.msra.mxu0 0.0
      %1999 = vmatprep.subr.mxu0 0.0
      %2000 = vmatpush2.msra.mxu0 0.0
      %2001 = vmatprep.subr.mxu0 0.0
      %2002 = vmatpush2.msra.mxu0 0.0
      %2003 = vmatprep.subr.mxu0 0.0
      %2004 = vmatpush2.msra.mxu0 0.0
      %2005 = vmatprep.subr.mxu0 0.0
      %2006 = vmatpush2.msra.mxu0 0.0
      %2007 = vmatprep.subr.mxu0 0.0
      %2008 = vmatpush2.msra.mxu0 0.0
      %2009 = vmatprep.mubr.f32.mxu0 0.0
      %2010 = vmatmul.mubr.f32.gmra.mxu0 %v1863
      %v2011 = vpop.f32.mrf.mxu0
      %v2012 = vadd.f32 0.0, %v2011
      %v2013 = vpop.f32.mrf.mxu0
      %2014 = vmatprep.mubr.f32.mxu0 0.0
      %2015 = vmatmul.mubr.f32.gmra.mxu0 %v1866
      %v2016 = vpop.f32.mrf.mxu0
      %v2017 = vadd.f32 0.0, %v2016
      %v2018 = vpop.f32.mrf.mxu0
      %2019 = vdwg.mxu0
      %v2020 = vadd.f32 %v176, %v1935
      %v2021 = vadd.f32 %v176, %v1937
      %v2022 = vadd.f32 %v176, %v2012
      %v2023 = vadd.f32 %v181, %v1941
      %v2024 = vadd.f32 %v181, %v1943
      %v2025 = vadd.f32 %v181, %v2017
      %s2026 = scalar_lea.vmem %s1, 48
      %v2027 = vld [vmem:[%s2026] sm:$0xff]
      %v2028 = vld [vmem:[%s2026 + $0x8] sm:$0xf]
      %2029 = vrot.lane.b32.xlu0 %v1807, 92
      %v2030 = vpop.permute.xlu0 %2029
      %2031 = vrot.lane.b32.xlu0 %v1808, 92
      %v2032 = vpop.permute.xlu0 %2031
      %2033 = vrot.lane.b32.xlu0 %v1809, 92
      %v2034 = vpop.permute.xlu0 %2033
      %2035 = vrot.lane.b32.xlu0 %v1810, 92
      %v2036 = vpop.permute.xlu0 %2035
      %2037 = vrot.lane.b32.xlu0 %v1811, 92
      %v2038 = vpop.permute.xlu0 %2037
      %2039 = vrot.lane.b32.xlu0 %v1812, 92
      %v2040 = vpop.permute.xlu0 %2039
      %2041 = vrot.lane.b32.xlu0 %v1813, 92
      %v2042 = vpop.permute.xlu0 %2041
      %2043 = vrot.lane.b32.xlu0 %v1814, 92
      %v2044 = vpop.permute.xlu0 %2043
      %2045 = vrot.lane.b32.xlu0 %v1815, 92
      %v2046 = vpop.permute.xlu0 %2045
      %vm2047 = vcmask 752640
      %v2048 = vsel %vm2047, %v2030, %v2032
      %v2049 = vsel %vm2047, %v2032, %v2034
      %v2050 = vsel %vm2047, %v2036, %v2038
      %v2051 = vsel %vm2047, %v2038, %v2040
      %v2052 = vsel %vm2047, %v2042, %v2044
      %v2053 = vsel %vm2047, %v2044, %v2046
      %v2064 = vsel %vm238, %v2027, 0
      %v2067 = vsel %vm238, %v2028, 0
      %2069 = vmatprep.subr.mxu0 0.0
      %2070 = vmatpush1.msra.mxu0 0.0
      %2071 = vmatprep.subr.mxu0 0.0
      %2072 = vmatpush1.msra.mxu0 0.0
      %2073 = vmatprep.subr.mxu0 0.0
      %2074 = vmatpush1.msra.mxu0 0.0
      %2075 = vmatprep.subr.mxu0 0.0
      %2076 = vmatpush1.msra.mxu0 0.0
      %2077 = vmatprep.subr.mxu0 0.0
      %2078 = vmatpush1.msra.mxu0 0.0
      %2079 = vmatprep.subr.mxu0 0.0
      %2080 = vmatpush1.msra.mxu0 0.0
      %2081 = vmatprep.subr.mxu0 0.0
      %2082 = vmatpush1.msra.mxu0 0.0
      %2083 = vmatprep.subr.mxu0 0.0
      %2084 = vmatpush1.msra.mxu0 0.0
      %2085 = vmatprep.subr.mxu0 0.0
      %2086 = vmatpush1.msra.mxu0 0.0
      %2087 = vmatprep.subr.mxu0 0.0
      %2088 = vmatpush1.msra.mxu0 0.0
      %2089 = vmatprep.subr.mxu0 0.0
      %2090 = vmatpush1.msra.mxu0 0.0
      %2091 = vmatprep.subr.mxu0 0.0
      %2092 = vmatpush1.msra.mxu0 0.0
      %2093 = vmatprep.subr.mxu0 0.0
      %2094 = vmatpush1.msra.mxu0 0.0
      %2095 = vmatprep.subr.mxu0 %v2053
      %2096 = vmatpush1.msra.mxu0 %v2052
      %2097 = vmatprep.subr.mxu0 %v2051
      %2098 = vmatpush1.msra.mxu0 %v2050
      %2099 = vmatprep.subr.mxu0 %v2049
      %2100 = vmatpush1.msra.mxu0 %v2048
      %2101 = vmatprep.subr.mxu0 0.0
      %2102 = vmatpush2.msra.mxu0 0.0
      %2103 = vmatprep.subr.mxu0 0.0
      %2104 = vmatpush2.msra.mxu0 0.0
      %2105 = vmatprep.subr.mxu0 0.0
      %2106 = vmatpush2.msra.mxu0 0.0
      %2107 = vmatprep.subr.mxu0 0.0
      %2108 = vmatpush2.msra.mxu0 0.0
      %2109 = vmatprep.subr.mxu0 0.0
      %2110 = vmatpush2.msra.mxu0 0.0
      %2111 = vmatprep.subr.mxu0 0.0
      %2112 = vmatpush2.msra.mxu0 0.0
      %2113 = vmatprep.subr.mxu0 0.0
      %2114 = vmatpush2.msra.mxu0 0.0
      %2115 = vmatprep.subr.mxu0 0.0
      %2116 = vmatpush2.msra.mxu0 0.0
      %2117 = vmatprep.subr.mxu0 0.0
      %2118 = vmatpush2.msra.mxu0 0.0
      %2119 = vmatprep.subr.mxu0 0.0
      %2120 = vmatpush2.msra.mxu0 0.0
      %2121 = vmatprep.subr.mxu0 0.0
      %2122 = vmatpush2.msra.mxu0 0.0
      %2123 = vmatprep.subr.mxu0 0.0
      %2124 = vmatpush2.msra.mxu0 0.0
      %2125 = vmatprep.subr.mxu0 0.0
      %2126 = vmatpush2.msra.mxu0 0.0
      %2127 = vmatprep.subr.mxu0 0.0
      %2128 = vmatpush2.msra.mxu0 0.0
      %2129 = vmatprep.subr.mxu0 0.0
      %2130 = vmatpush2.msra.mxu0 0.0
      %2131 = vmatprep.subr.mxu0 0.0
      %2132 = vmatpush2.msra.mxu0 0.0
      %2133 = vmatprep.mubr.f32.mxu0 0.0
      %2134 = vmatmul.mubr.f32.gmra.mxu0 %v2064
      %v2135 = vpop.f32.mrf.mxu0
      %v2136 = vadd.f32 0.0, %v2135
      %v2137 = vpop.f32.mrf.mxu0
      %v2138 = vadd.f32 0.0, %v2137
      %2139 = vmatprep.mubr.f32.mxu0 0.0
      %2140 = vmatmul.mubr.f32.gmra.mxu0 %v2067
      %v2141 = vpop.f32.mrf.mxu0
      %v2142 = vadd.f32 0.0, %v2141
      %v2143 = vpop.f32.mrf.mxu0
      %v2144 = vadd.f32 0.0, %v2143
      %2145 = vdwg.mxu0
      %2146 = vmatprep.subr.mxu0 0.0
      %2147 = vmatpush1.msra.mxu0 0.0
      %2148 = vmatprep.subr.mxu0 0.0
      %2149 = vmatpush1.msra.mxu0 0.0
      %2150 = vmatprep.subr.mxu0 0.0
      %2151 = vmatpush1.msra.mxu0 0.0
      %2152 = vmatprep.subr.mxu0 0.0
      %2153 = vmatpush1.msra.mxu0 0.0
      %2154 = vmatprep.subr.mxu0 0.0
      %2155 = vmatpush1.msra.mxu0 0.0
      %2156 = vmatprep.subr.mxu0 0.0
      %2157 = vmatpush1.msra.mxu0 0.0
      %2158 = vmatprep.subr.mxu0 0.0
      %2159 = vmatpush1.msra.mxu0 0.0
      %2160 = vmatprep.subr.mxu0 0.0
      %2161 = vmatpush1.msra.mxu0 0.0
      %2162 = vmatprep.subr.mxu0 0.0
      %2163 = vmatpush1.msra.mxu0 0.0
      %2164 = vmatprep.subr.mxu0 0.0
      %2165 = vmatpush1.msra.mxu0 0.0
      %2166 = vmatprep.subr.mxu0 0.0
      %2167 = vmatpush1.msra.mxu0 0.0
      %2168 = vmatprep.subr.mxu0 0.0
      %2169 = vmatpush1.msra.mxu0 0.0
      %2170 = vmatprep.subr.mxu0 0.0
      %2171 = vmatpush1.msra.mxu0 0.0
      %2172 = vmatprep.subr.mxu0 0.0
      %2173 = vmatpush1.msra.mxu0 %v2046
      %2174 = vmatprep.subr.mxu0 0.0
      %2175 = vmatpush1.msra.mxu0 %v2040
      %2176 = vmatprep.subr.mxu0 0.0
      %2177 = vmatpush1.msra.mxu0 %v2034
      %2178 = vmatprep.subr.mxu0 0.0
      %2179 = vmatpush2.msra.mxu0 0.0
      %2180 = vmatprep.subr.mxu0 0.0
      %2181 = vmatpush2.msra.mxu0 0.0
      %2182 = vmatprep.subr.mxu0 0.0
      %2183 = vmatpush2.msra.mxu0 0.0
      %2184 = vmatprep.subr.mxu0 0.0
      %2185 = vmatpush2.msra.mxu0 0.0
      %2186 = vmatprep.subr.mxu0 0.0
      %2187 = vmatpush2.msra.mxu0 0.0
      %2188 = vmatprep.subr.mxu0 0.0
      %2189 = vmatpush2.msra.mxu0 0.0
      %2190 = vmatprep.subr.mxu0 0.0
      %2191 = vmatpush2.msra.mxu0 0.0
      %2192 = vmatprep.subr.mxu0 0.0
      %2193 = vmatpush2.msra.mxu0 0.0
      %2194 = vmatprep.subr.mxu0 0.0
      %2195 = vmatpush2.msra.mxu0 0.0
      %2196 = vmatprep.subr.mxu0 0.0
      %2197 = vmatpush2.msra.mxu0 0.0
      %2198 = vmatprep.subr.mxu0 0.0
      %2199 = vmatpush2.msra.mxu0 0.0
      %2200 = vmatprep.subr.mxu0 0.0
      %2201 = vmatpush2.msra.mxu0 0.0
      %2202 = vmatprep.subr.mxu0 0.0
      %2203 = vmatpush2.msra.mxu0 0.0
      %2204 = vmatprep.subr.mxu0 0.0
      %2205 = vmatpush2.msra.mxu0 0.0
      %2206 = vmatprep.subr.mxu0 0.0
      %2207 = vmatpush2.msra.mxu0 0.0
      %2208 = vmatprep.subr.mxu0 0.0
      %2209 = vmatpush2.msra.mxu0 0.0
      %2210 = vmatprep.mubr.f32.mxu0 0.0
      %2211 = vmatmul.mubr.f32.gmra.mxu0 %v2064
      %v2212 = vpop.f32.mrf.mxu0
      %v2213 = vadd.f32 0.0, %v2212
      %v2214 = vpop.f32.mrf.mxu0
      %2215 = vmatprep.mubr.f32.mxu0 0.0
      %2216 = vmatmul.mubr.f32.gmra.mxu0 %v2067
      %v2217 = vpop.f32.mrf.mxu0
      %v2218 = vadd.f32 0.0, %v2217
      %v2219 = vpop.f32.mrf.mxu0
      %2220 = vdwg.mxu0
      %v2221 = vadd.f32 %v2020, %v2136
      %v2222 = vadd.f32 %v2021, %v2138
      %v2223 = vadd.f32 %v2022, %v2213
      %v2224 = vadd.f32 %v2023, %v2142
      %v2225 = vadd.f32 %v2024, %v2144
      %v2226 = vadd.f32 %v2025, %v2218
      %s2227 = scalar_lea.vmem %s1, 144
      %v2228 = vld [vmem:[%s2227] sm:$0xff]
      %v2229 = vld [vmem:[%s2227 + $0x8] sm:$0xf]
      %2230 = vrot.lane.b32.xlu0 %v1807, 109
      %v2231 = vpop.permute.xlu0 %2230
      %2232 = vrot.lane.b32.xlu0 %v1808, 109
      %v2233 = vpop.permute.xlu0 %2232
      %2234 = vrot.lane.b32.xlu0 %v1809, 109
      %v2235 = vpop.permute.xlu0 %2234
      %2236 = vrot.lane.b32.xlu0 %v1810, 109
      %v2237 = vpop.permute.xlu0 %2236
      %2238 = vrot.lane.b32.xlu0 %v1811, 109
      %v2239 = vpop.permute.xlu0 %2238
      %2240 = vrot.lane.b32.xlu0 %v1812, 109
      %v2241 = vpop.permute.xlu0 %2240
      %2242 = vrot.lane.b32.xlu0 %v1813, 109
      %v2243 = vpop.permute.xlu0 %2242
      %2244 = vrot.lane.b32.xlu0 %v1814, 109
      %v2245 = vpop.permute.xlu0 %2244
      %2246 = vrot.lane.b32.xlu0 %v1815, 109
      %v2247 = vpop.permute.xlu0 %2246
      %v2248 = vsel %vm222, %v2231, %v2233
      %v2249 = vsel %vm222, %v2233, %v2235
      %v2250 = vsel %vm222, %v2237, %v2239
      %v2251 = vsel %vm222, %v2239, %v2241
      %v2252 = vsel %vm222, %v2243, %v2245
      %v2253 = vsel %vm222, %v2245, %v2247
      %v2264 = vsel %vm238, %v2228, 0
      %v2267 = vsel %vm238, %v2229, 0
      %2269 = vmatprep.subr.mxu0 0.0
      %2270 = vmatpush1.msra.mxu0 0.0
      %2271 = vmatprep.subr.mxu0 0.0
      %2272 = vmatpush1.msra.mxu0 0.0
      %2273 = vmatprep.subr.mxu0 0.0
      %2274 = vmatpush1.msra.mxu0 0.0
      %2275 = vmatprep.subr.mxu0 0.0
      %2276 = vmatpush1.msra.mxu0 0.0
      %2277 = vmatprep.subr.mxu0 0.0
      %2278 = vmatpush1.msra.mxu0 0.0
      %2279 = vmatprep.subr.mxu0 0.0
      %2280 = vmatpush1.msra.mxu0 0.0
      %2281 = vmatprep.subr.mxu0 0.0
      %2282 = vmatpush1.msra.mxu0 0.0
      %2283 = vmatprep.subr.mxu0 0.0
      %2284 = vmatpush1.msra.mxu0 0.0
      %2285 = vmatprep.subr.mxu0 0.0
      %2286 = vmatpush1.msra.mxu0 0.0
      %2287 = vmatprep.subr.mxu0 0.0
      %2288 = vmatpush1.msra.mxu0 0.0
      %2289 = vmatprep.subr.mxu0 0.0
      %2290 = vmatpush1.msra.mxu0 0.0
      %2291 = vmatprep.subr.mxu0 0.0
      %2292 = vmatpush1.msra.mxu0 0.0
      %2293 = vmatprep.subr.mxu0 0.0
      %2294 = vmatpush1.msra.mxu0 0.0
      %2295 = vmatprep.subr.mxu0 %v2253
      %2296 = vmatpush1.msra.mxu0 %v2252
      %2297 = vmatprep.subr.mxu0 %v2251
      %2298 = vmatpush1.msra.mxu0 %v2250
      %2299 = vmatprep.subr.mxu0 %v2249
      %2300 = vmatpush1.msra.mxu0 %v2248
      %2301 = vmatprep.subr.mxu0 0.0
      %2302 = vmatpush2.msra.mxu0 0.0
      %2303 = vmatprep.subr.mxu0 0.0
      %2304 = vmatpush2.msra.mxu0 0.0
      %2305 = vmatprep.subr.mxu0 0.0
      %2306 = vmatpush2.msra.mxu0 0.0
      %2307 = vmatprep.subr.mxu0 0.0
      %2308 = vmatpush2.msra.mxu0 0.0
      %2309 = vmatprep.subr.mxu0 0.0
      %2310 = vmatpush2.msra.mxu0 0.0
      %2311 = vmatprep.subr.mxu0 0.0
      %2312 = vmatpush2.msra.mxu0 0.0
      %2313 = vmatprep.subr.mxu0 0.0
      %2314 = vmatpush2.msra.mxu0 0.0
      %2315 = vmatprep.subr.mxu0 0.0
      %2316 = vmatpush2.msra.mxu0 0.0
      %2317 = vmatprep.subr.mxu0 0.0
      %2318 = vmatpush2.msra.mxu0 0.0
      %2319 = vmatprep.subr.mxu0 0.0
      %2320 = vmatpush2.msra.mxu0 0.0
      %2321 = vmatprep.subr.mxu0 0.0
      %2322 = vmatpush2.msra.mxu0 0.0
      %2323 = vmatprep.subr.mxu0 0.0
      %2324 = vmatpush2.msra.mxu0 0.0
      %2325 = vmatprep.subr.mxu0 0.0
      %2326 = vmatpush2.msra.mxu0 0.0
      %2327 = vmatprep.subr.mxu0 0.0
      %2328 = vmatpush2.msra.mxu0 0.0
      %2329 = vmatprep.subr.mxu0 0.0
      %2330 = vmatpush2.msra.mxu0 0.0
      %2331 = vmatprep.subr.mxu0 0.0
      %2332 = vmatpush2.msra.mxu0 0.0
      %2333 = vmatprep.mubr.f32.mxu0 0.0
      %2334 = vmatmul.mubr.f32.gmra.mxu0 %v2264
      %v2335 = vpop.f32.mrf.mxu0
      %v2336 = vadd.f32 0.0, %v2335
      %v2337 = vpop.f32.mrf.mxu0
      %v2338 = vadd.f32 0.0, %v2337
      %2339 = vmatprep.mubr.f32.mxu0 0.0
      %2340 = vmatmul.mubr.f32.gmra.mxu0 %v2267
      %v2341 = vpop.f32.mrf.mxu0
      %v2342 = vadd.f32 0.0, %v2341
      %v2343 = vpop.f32.mrf.mxu0
      %v2344 = vadd.f32 0.0, %v2343
      %2345 = vdwg.mxu0
      %2346 = vmatprep.subr.mxu0 0.0
      %2347 = vmatpush1.msra.mxu0 0.0
      %2348 = vmatprep.subr.mxu0 0.0
      %2349 = vmatpush1.msra.mxu0 0.0
      %2350 = vmatprep.subr.mxu0 0.0
      %2351 = vmatpush1.msra.mxu0 0.0
      %2352 = vmatprep.subr.mxu0 0.0
      %2353 = vmatpush1.msra.mxu0 0.0
      %2354 = vmatprep.subr.mxu0 0.0
      %2355 = vmatpush1.msra.mxu0 0.0
      %2356 = vmatprep.subr.mxu0 0.0
      %2357 = vmatpush1.msra.mxu0 0.0
      %2358 = vmatprep.subr.mxu0 0.0
      %2359 = vmatpush1.msra.mxu0 0.0
      %2360 = vmatprep.subr.mxu0 0.0
      %2361 = vmatpush1.msra.mxu0 0.0
      %2362 = vmatprep.subr.mxu0 0.0
      %2363 = vmatpush1.msra.mxu0 0.0
      %2364 = vmatprep.subr.mxu0 0.0
      %2365 = vmatpush1.msra.mxu0 0.0
      %2366 = vmatprep.subr.mxu0 0.0
      %2367 = vmatpush1.msra.mxu0 0.0
      %2368 = vmatprep.subr.mxu0 0.0
      %2369 = vmatpush1.msra.mxu0 0.0
      %2370 = vmatprep.subr.mxu0 0.0
      %2371 = vmatpush1.msra.mxu0 0.0
      %2372 = vmatprep.subr.mxu0 0.0
      %2373 = vmatpush1.msra.mxu0 %v2247
      %2374 = vmatprep.subr.mxu0 0.0
      %2375 = vmatpush1.msra.mxu0 %v2241
      %2376 = vmatprep.subr.mxu0 0.0
      %2377 = vmatpush1.msra.mxu0 %v2235
      %2378 = vmatprep.subr.mxu0 0.0
      %2379 = vmatpush2.msra.mxu0 0.0
      %2380 = vmatprep.subr.mxu0 0.0
      %2381 = vmatpush2.msra.mxu0 0.0
      %2382 = vmatprep.subr.mxu0 0.0
      %2383 = vmatpush2.msra.mxu0 0.0
      %2384 = vmatprep.subr.mxu0 0.0
      %2385 = vmatpush2.msra.mxu0 0.0
      %2386 = vmatprep.subr.mxu0 0.0
      %2387 = vmatpush2.msra.mxu0 0.0
      %2388 = vmatprep.subr.mxu0 0.0
      %2389 = vmatpush2.msra.mxu0 0.0
      %2390 = vmatprep.subr.mxu0 0.0
      %2391 = vmatpush2.msra.mxu0 0.0
      %2392 = vmatprep.subr.mxu0 0.0
      %2393 = vmatpush2.msra.mxu0 0.0
      %2394 = vmatprep.subr.mxu0 0.0
      %2395 = vmatpush2.msra.mxu0 0.0
      %2396 = vmatprep.subr.mxu0 0.0
      %2397 = vmatpush2.msra.mxu0 0.0
      %2398 = vmatprep.subr.mxu0 0.0
      %2399 = vmatpush2.msra.mxu0 0.0
      %2400 = vmatprep.subr.mxu0 0.0
      %2401 = vmatpush2.msra.mxu0 0.0
      %2402 = vmatprep.subr.mxu0 0.0
      %2403 = vmatpush2.msra.mxu0 0.0
      %2404 = vmatprep.subr.mxu0 0.0
      %2405 = vmatpush2.msra.mxu0 0.0
      %2406 = vmatprep.subr.mxu0 0.0
      %2407 = vmatpush2.msra.mxu0 0.0
      %2408 = vmatprep.subr.mxu0 0.0
      %2409 = vmatpush2.msra.mxu0 0.0
      %2410 = vmatprep.mubr.f32.mxu0 0.0
      %2411 = vmatmul.mubr.f32.gmra.mxu0 %v2264
      %v2412 = vpop.f32.mrf.mxu0
      %v2413 = vadd.f32 0.0, %v2412
      %v2414 = vpop.f32.mrf.mxu0
      %2415 = vmatprep.mubr.f32.mxu0 0.0
      %2416 = vmatmul.mubr.f32.gmra.mxu0 %v2267
      %v2417 = vpop.f32.mrf.mxu0
      %v2418 = vadd.f32 0.0, %v2417
      %v2419 = vpop.f32.mrf.mxu0
      %2420 = vdwg.mxu0
      %v2421 = vadd.f32 %v2221, %v2336
      %v2422 = vadd.f32 %v2222, %v2338
      %v2423 = vadd.f32 %v2223, %v2413
      %v2424 = vadd.f32 %v2224, %v2342
      %v2425 = vadd.f32 %v2225, %v2344
      %v2426 = vadd.f32 %v2226, %v2418
      %s2427 = scalar_lea.vmem %s1, 176
      %v2428 = vld [vmem:[%s2427] sm:$0xff]
      %v2429 = vld [vmem:[%s2427 + $0x8] sm:$0xf]
      %2430 = vrot.lane.b32.xlu0 %v1807, 110
      %v2431 = vpop.permute.xlu0 %2430
      %2432 = vrot.lane.b32.xlu0 %v1808, 110
      %v2433 = vpop.permute.xlu0 %2432
      %2434 = vrot.lane.b32.xlu0 %v1809, 110
      %v2435 = vpop.permute.xlu0 %2434
      %2436 = vrot.lane.b32.xlu0 %v1810, 110
      %v2437 = vpop.permute.xlu0 %2436
      %2438 = vrot.lane.b32.xlu0 %v1811, 110
      %v2439 = vpop.permute.xlu0 %2438
      %2440 = vrot.lane.b32.xlu0 %v1812, 110
      %v2441 = vpop.permute.xlu0 %2440
      %2442 = vrot.lane.b32.xlu0 %v1813, 110
      %v2443 = vpop.permute.xlu0 %2442
      %2444 = vrot.lane.b32.xlu0 %v1814, 110
      %v2445 = vpop.permute.xlu0 %2444
      %2446 = vrot.lane.b32.xlu0 %v1815, 110
      %v2447 = vpop.permute.xlu0 %2446
      %v2448 = vsel %vm424, %v2431, %v2433
      %v2449 = vsel %vm424, %v2433, %v2435
      %v2450 = vsel %vm424, %v2437, %v2439
      %v2451 = vsel %vm424, %v2439, %v2441
      %v2452 = vsel %vm424, %v2443, %v2445
      %v2453 = vsel %vm424, %v2445, %v2447
      %v2464 = vsel %vm238, %v2428, 0
      %v2467 = vsel %vm238, %v2429, 0
      %2469 = vmatprep.subr.mxu0 0.0
      %2470 = vmatpush1.msra.mxu0 0.0
      %2471 = vmatprep.subr.mxu0 0.0
      %2472 = vmatpush1.msra.mxu0 0.0
      %2473 = vmatprep.subr.mxu0 0.0
      %2474 = vmatpush1.msra.mxu0 0.0
      %2475 = vmatprep.subr.mxu0 0.0
      %2476 = vmatpush1.msra.mxu0 0.0
      %2477 = vmatprep.subr.mxu0 0.0
      %2478 = vmatpush1.msra.mxu0 0.0
      %2479 = vmatprep.subr.mxu0 0.0
      %2480 = vmatpush1.msra.mxu0 0.0
      %2481 = vmatprep.subr.mxu0 0.0
      %2482 = vmatpush1.msra.mxu0 0.0
      %2483 = vmatprep.subr.mxu0 0.0
      %2484 = vmatpush1.msra.mxu0 0.0
      %2485 = vmatprep.subr.mxu0 0.0
      %2486 = vmatpush1.msra.mxu0 0.0
      %2487 = vmatprep.subr.mxu0 0.0
      %2488 = vmatpush1.msra.mxu0 0.0
      %2489 = vmatprep.subr.mxu0 0.0
      %2490 = vmatpush1.msra.mxu0 0.0
      %2491 = vmatprep.subr.mxu0 0.0
      %2492 = vmatpush1.msra.mxu0 0.0
      %2493 = vmatprep.subr.mxu0 0.0
      %2494 = vmatpush1.msra.mxu0 0.0
      %2495 = vmatprep.subr.mxu0 %v2453
      %2496 = vmatpush1.msra.mxu0 %v2452
      %2497 = vmatprep.subr.mxu0 %v2451
      %2498 = vmatpush1.msra.mxu0 %v2450
      %2499 = vmatprep.subr.mxu0 %v2449
      %2500 = vmatpush1.msra.mxu0 %v2448
      %2501 = vmatprep.subr.mxu0 0.0
      %2502 = vmatpush2.msra.mxu0 0.0
      %2503 = vmatprep.subr.mxu0 0.0
      %2504 = vmatpush2.msra.mxu0 0.0
      %2505 = vmatprep.subr.mxu0 0.0
      %2506 = vmatpush2.msra.mxu0 0.0
      %2507 = vmatprep.subr.mxu0 0.0
      %2508 = vmatpush2.msra.mxu0 0.0
      %2509 = vmatprep.subr.mxu0 0.0
      %2510 = vmatpush2.msra.mxu0 0.0
      %2511 = vmatprep.subr.mxu0 0.0
      %2512 = vmatpush2.msra.mxu0 0.0
      %2513 = vmatprep.subr.mxu0 0.0
      %2514 = vmatpush2.msra.mxu0 0.0
      %2515 = vmatprep.subr.mxu0 0.0
      %2516 = vmatpush2.msra.mxu0 0.0
      %2517 = vmatprep.subr.mxu0 0.0
      %2518 = vmatpush2.msra.mxu0 0.0
      %2519 = vmatprep.subr.mxu0 0.0
      %2520 = vmatpush2.msra.mxu0 0.0
      %2521 = vmatprep.subr.mxu0 0.0
      %2522 = vmatpush2.msra.mxu0 0.0
      %2523 = vmatprep.subr.mxu0 0.0
      %2524 = vmatpush2.msra.mxu0 0.0
      %2525 = vmatprep.subr.mxu0 0.0
      %2526 = vmatpush2.msra.mxu0 0.0
      %2527 = vmatprep.subr.mxu0 0.0
      %2528 = vmatpush2.msra.mxu0 0.0
      %2529 = vmatprep.subr.mxu0 0.0
      %2530 = vmatpush2.msra.mxu0 0.0
      %2531 = vmatprep.subr.mxu0 0.0
      %2532 = vmatpush2.msra.mxu0 0.0
      %2533 = vmatprep.mubr.f32.mxu0 0.0
      %2534 = vmatmul.mubr.f32.gmra.mxu0 %v2464
      %v2535 = vpop.f32.mrf.mxu0
      %v2536 = vadd.f32 0.0, %v2535
      %v2537 = vpop.f32.mrf.mxu0
      %v2538 = vadd.f32 0.0, %v2537
      %2539 = vmatprep.mubr.f32.mxu0 0.0
      %2540 = vmatmul.mubr.f32.gmra.mxu0 %v2467
      %v2541 = vpop.f32.mrf.mxu0
      %v2542 = vadd.f32 0.0, %v2541
      %v2543 = vpop.f32.mrf.mxu0
      %v2544 = vadd.f32 0.0, %v2543
      %2545 = vdwg.mxu0
      %2546 = vmatprep.subr.mxu0 0.0
      %2547 = vmatpush1.msra.mxu0 0.0
      %2548 = vmatprep.subr.mxu0 0.0
      %2549 = vmatpush1.msra.mxu0 0.0
      %2550 = vmatprep.subr.mxu0 0.0
      %2551 = vmatpush1.msra.mxu0 0.0
      %2552 = vmatprep.subr.mxu0 0.0
      %2553 = vmatpush1.msra.mxu0 0.0
      %2554 = vmatprep.subr.mxu0 0.0
      %2555 = vmatpush1.msra.mxu0 0.0
      %2556 = vmatprep.subr.mxu0 0.0
      %2557 = vmatpush1.msra.mxu0 0.0
      %2558 = vmatprep.subr.mxu0 0.0
      %2559 = vmatpush1.msra.mxu0 0.0
      %2560 = vmatprep.subr.mxu0 0.0
      %2561 = vmatpush1.msra.mxu0 0.0
      %2562 = vmatprep.subr.mxu0 0.0
      %2563 = vmatpush1.msra.mxu0 0.0
      %2564 = vmatprep.subr.mxu0 0.0
      %2565 = vmatpush1.msra.mxu0 0.0
      %2566 = vmatprep.subr.mxu0 0.0
      %2567 = vmatpush1.msra.mxu0 0.0
      %2568 = vmatprep.subr.mxu0 0.0
      %2569 = vmatpush1.msra.mxu0 0.0
      %2570 = vmatprep.subr.mxu0 0.0
      %2571 = vmatpush1.msra.mxu0 0.0
      %2572 = vmatprep.subr.mxu0 0.0
      %2573 = vmatpush1.msra.mxu0 %v2447
      %2574 = vmatprep.subr.mxu0 0.0
      %2575 = vmatpush1.msra.mxu0 %v2441
      %2576 = vmatprep.subr.mxu0 0.0
      %2577 = vmatpush1.msra.mxu0 %v2435
      %2578 = vmatprep.subr.mxu0 0.0
      %2579 = vmatpush2.msra.mxu0 0.0
      %2580 = vmatprep.subr.mxu0 0.0
      %2581 = vmatpush2.msra.mxu0 0.0
      %2582 = vmatprep.subr.mxu0 0.0
      %2583 = vmatpush2.msra.mxu0 0.0
      %2584 = vmatprep.subr.mxu0 0.0
      %2585 = vmatpush2.msra.mxu0 0.0
      %2586 = vmatprep.subr.mxu0 0.0
      %2587 = vmatpush2.msra.mxu0 0.0
      %2588 = vmatprep.subr.mxu0 0.0
      %2589 = vmatpush2.msra.mxu0 0.0
      %2590 = vmatprep.subr.mxu0 0.0
      %2591 = vmatpush2.msra.mxu0 0.0
      %2592 = vmatprep.subr.mxu0 0.0
      %2593 = vmatpush2.msra.mxu0 0.0
      %2594 = vmatprep.subr.mxu0 0.0
      %2595 = vmatpush2.msra.mxu0 0.0
      %2596 = vmatprep.subr.mxu0 0.0
      %2597 = vmatpush2.msra.mxu0 0.0
      %2598 = vmatprep.subr.mxu0 0.0
      %2599 = vmatpush2.msra.mxu0 0.0
      %2600 = vmatprep.subr.mxu0 0.0
      %2601 = vmatpush2.msra.mxu0 0.0
      %2602 = vmatprep.subr.mxu0 0.0
      %2603 = vmatpush2.msra.mxu0 0.0
      %2604 = vmatprep.subr.mxu0 0.0
      %2605 = vmatpush2.msra.mxu0 0.0
      %2606 = vmatprep.subr.mxu0 0.0
      %2607 = vmatpush2.msra.mxu0 0.0
      %2608 = vmatprep.subr.mxu0 0.0
      %2609 = vmatpush2.msra.mxu0 0.0
      %2610 = vmatprep.mubr.f32.mxu0 0.0
      %2611 = vmatmul.mubr.f32.gmra.mxu0 %v2464
      %v2612 = vpop.f32.mrf.mxu0
      %v2613 = vadd.f32 0.0, %v2612
      %v2614 = vpop.f32.mrf.mxu0
      %2615 = vmatprep.mubr.f32.mxu0 0.0
      %2616 = vmatmul.mubr.f32.gmra.mxu0 %v2467
      %v2617 = vpop.f32.mrf.mxu0
      %v2618 = vadd.f32 0.0, %v2617
      %v2619 = vpop.f32.mrf.mxu0
      %2620 = vdwg.mxu0
      %v2621 = vadd.f32 %v2421, %v2536
      %v2622 = vadd.f32 %v2422, %v2538
      %v2623 = vadd.f32 %v2423, %v2613
      %v2624 = vadd.f32 %v2424, %v2542
      %v2625 = vadd.f32 %v2425, %v2544
      %v2626 = vadd.f32 %v2426, %v2618
      %s2627 = scalar_lea.vmem %s170, 96
      %2628 = vst [vmem:[%s2627] sm:$0xff] %v2621
      %2629 = vst [vmem:[%s2627 + $0x8] sm:$0xff] %v2622
      %2630 = vst.msk [vmem:[%s2627 + $0x10] sm:$0xff] %vm974, %v2623
      %2631 = vst [vmem:[%s2627 + $0x18] sm:$0xf] %v2624
      %2632 = vst [vmem:[%s2627 + $0x20] sm:$0xf] %v2625
      %2633 = vst.msk [vmem:[%s2627 + $0x28] sm:$0xf] %vm978, %v2626
      %v2634 = vld [vmem:[%s165] sm:$0xff]
      %v2635 = vld [vmem:[%s165 + $0x8] sm:$0xff]
      %v2636 = vld [vmem:[%s165 + $0x10] sm:$0xff]
      %v2637 = vld [vmem:[%s165 + $0x18] sm:$0xff]
      %v2638 = vld [vmem:[%s165 + $0x20] sm:$0xff]
      %v2639 = vld [vmem:[%s165 + $0x28] sm:$0xff]
      %v2640 = vld [vmem:[%s165 + $0x30] sm:$0xff]
      %v2641 = vld [vmem:[%s165 + $0x38] sm:$0xff]
      %v2642 = vld [vmem:[%s165 + $0x40] sm:$0xff]
      %v2643 = vld [vmem:[%s1] sm:$0xff]
      %v2644 = vld [vmem:[%s1 + $0x8] sm:$0xf]
      %2654 = vrot.lane.b32.xlu0 %v2634, 90
      %v2655 = vpop.permute.xlu0 %2654
      %2656 = vrot.lane.b32.xlu0 %v2635, 90
      %v2657 = vpop.permute.xlu0 %2656
      %2658 = vrot.lane.b32.xlu0 %v2636, 90
      %v2659 = vpop.permute.xlu0 %2658
      %2660 = vrot.lane.b32.xlu0 %v2637, 90
      %v2661 = vpop.permute.xlu0 %2660
      %2662 = vrot.lane.b32.xlu0 %v2638, 90
      %v2663 = vpop.permute.xlu0 %2662
      %2664 = vrot.lane.b32.xlu0 %v2639, 90
      %v2665 = vpop.permute.xlu0 %2664
      %2666 = vrot.lane.b32.xlu0 %v2640, 90
      %v2667 = vpop.permute.xlu0 %2666
      %2668 = vrot.lane.b32.xlu0 %v2641, 90
      %v2669 = vpop.permute.xlu0 %2668
      %2670 = vrot.lane.b32.xlu0 %v2642, 90
      %v2671 = vpop.permute.xlu0 %2670
      %vm2672 = vcmask 736256
      %v2673 = vsel %vm2672, %v2655, %v2657
      %v2674 = vsel %vm2672, %v2657, %v2659
      %v2675 = vsel %vm2672, %v2661, %v2663
      %v2676 = vsel %vm2672, %v2663, %v2665
      %v2677 = vsel %vm2672, %v2667, %v2669
      %v2678 = vsel %vm2672, %v2669, %v2671
      %v2689 = vsel %vm238, %v2643, 0
      %v2692 = vsel %vm238, %v2644, 0
      %2694 = vmatprep.subr.mxu0 0.0
      %2695 = vmatpush1.msra.mxu0 0.0
      %2696 = vmatprep.subr.mxu0 0.0
      %2697 = vmatpush1.msra.mxu0 0.0
      %2698 = vmatprep.subr.mxu0 0.0
      %2699 = vmatpush1.msra.mxu0 0.0
      %2700 = vmatprep.subr.mxu0 0.0
      %2701 = vmatpush1.msra.mxu0 0.0
      %2702 = vmatprep.subr.mxu0 0.0
      %2703 = vmatpush1.msra.mxu0 0.0
      %2704 = vmatprep.subr.mxu0 0.0
      %2705 = vmatpush1.msra.mxu0 0.0
      %2706 = vmatprep.subr.mxu0 0.0
      %2707 = vmatpush1.msra.mxu0 0.0
      %2708 = vmatprep.subr.mxu0 0.0
      %2709 = vmatpush1.msra.mxu0 0.0
      %2710 = vmatprep.subr.mxu0 0.0
      %2711 = vmatpush1.msra.mxu0 0.0
      %2712 = vmatprep.subr.mxu0 0.0
      %2713 = vmatpush1.msra.mxu0 0.0
      %2714 = vmatprep.subr.mxu0 0.0
      %2715 = vmatpush1.msra.mxu0 0.0
      %2716 = vmatprep.subr.mxu0 0.0
      %2717 = vmatpush1.msra.mxu0 0.0
      %2718 = vmatprep.subr.mxu0 0.0
      %2719 = vmatpush1.msra.mxu0 0.0
      %2720 = vmatprep.subr.mxu0 %v2678
      %2721 = vmatpush1.msra.mxu0 %v2677
      %2722 = vmatprep.subr.mxu0 %v2676
      %2723 = vmatpush1.msra.mxu0 %v2675
      %2724 = vmatprep.subr.mxu0 %v2674
      %2725 = vmatpush1.msra.mxu0 %v2673
      %2726 = vmatprep.subr.mxu0 0.0
      %2727 = vmatpush2.msra.mxu0 0.0
      %2728 = vmatprep.subr.mxu0 0.0
      %2729 = vmatpush2.msra.mxu0 0.0
      %2730 = vmatprep.subr.mxu0 0.0
      %2731 = vmatpush2.msra.mxu0 0.0
      %2732 = vmatprep.subr.mxu0 0.0
      %2733 = vmatpush2.msra.mxu0 0.0
      %2734 = vmatprep.subr.mxu0 0.0
      %2735 = vmatpush2.msra.mxu0 0.0
      %2736 = vmatprep.subr.mxu0 0.0
      %2737 = vmatpush2.msra.mxu0 0.0
      %2738 = vmatprep.subr.mxu0 0.0
      %2739 = vmatpush2.msra.mxu0 0.0
      %2740 = vmatprep.subr.mxu0 0.0
      %2741 = vmatpush2.msra.mxu0 0.0
      %2742 = vmatprep.subr.mxu0 0.0
      %2743 = vmatpush2.msra.mxu0 0.0
      %2744 = vmatprep.subr.mxu0 0.0
      %2745 = vmatpush2.msra.mxu0 0.0
      %2746 = vmatprep.subr.mxu0 0.0
      %2747 = vmatpush2.msra.mxu0 0.0
      %2748 = vmatprep.subr.mxu0 0.0
      %2749 = vmatpush2.msra.mxu0 0.0
      %2750 = vmatprep.subr.mxu0 0.0
      %2751 = vmatpush2.msra.mxu0 0.0
      %2752 = vmatprep.subr.mxu0 0.0
      %2753 = vmatpush2.msra.mxu0 0.0
      %2754 = vmatprep.subr.mxu0 0.0
      %2755 = vmatpush2.msra.mxu0 0.0
      %2756 = vmatprep.subr.mxu0 0.0
      %2757 = vmatpush2.msra.mxu0 0.0
      %2758 = vmatprep.mubr.f32.mxu0 0.0
      %2759 = vmatmul.mubr.f32.gmra.mxu0 %v2689
      %v2760 = vpop.f32.mrf.mxu0
      %v2761 = vadd.f32 0.0, %v2760
      %v2762 = vpop.f32.mrf.mxu0
      %v2763 = vadd.f32 0.0, %v2762
      %2764 = vmatprep.mubr.f32.mxu0 0.0
      %2765 = vmatmul.mubr.f32.gmra.mxu0 %v2692
      %v2766 = vpop.f32.mrf.mxu0
      %v2767 = vadd.f32 0.0, %v2766
      %v2768 = vpop.f32.mrf.mxu0
      %v2769 = vadd.f32 0.0, %v2768
      %2770 = vdwg.mxu0
      %2771 = vmatprep.subr.mxu0 0.0
      %2772 = vmatpush1.msra.mxu0 0.0
      %2773 = vmatprep.subr.mxu0 0.0
      %2774 = vmatpush1.msra.mxu0 0.0
      %2775 = vmatprep.subr.mxu0 0.0
      %2776 = vmatpush1.msra.mxu0 0.0
      %2777 = vmatprep.subr.mxu0 0.0
      %2778 = vmatpush1.msra.mxu0 0.0
      %2779 = vmatprep.subr.mxu0 0.0
      %2780 = vmatpush1.msra.mxu0 0.0
      %2781 = vmatprep.subr.mxu0 0.0
      %2782 = vmatpush1.msra.mxu0 0.0
      %2783 = vmatprep.subr.mxu0 0.0
      %2784 = vmatpush1.msra.mxu0 0.0
      %2785 = vmatprep.subr.mxu0 0.0
      %2786 = vmatpush1.msra.mxu0 0.0
      %2787 = vmatprep.subr.mxu0 0.0
      %2788 = vmatpush1.msra.mxu0 0.0
      %2789 = vmatprep.subr.mxu0 0.0
      %2790 = vmatpush1.msra.mxu0 0.0
      %2791 = vmatprep.subr.mxu0 0.0
      %2792 = vmatpush1.msra.mxu0 0.0
      %2793 = vmatprep.subr.mxu0 0.0
      %2794 = vmatpush1.msra.mxu0 0.0
      %2795 = vmatprep.subr.mxu0 0.0
      %2796 = vmatpush1.msra.mxu0 0.0
      %2797 = vmatprep.subr.mxu0 0.0
      %2798 = vmatpush1.msra.mxu0 %v2671
      %2799 = vmatprep.subr.mxu0 0.0
      %2800 = vmatpush1.msra.mxu0 %v2665
      %2801 = vmatprep.subr.mxu0 0.0
      %2802 = vmatpush1.msra.mxu0 %v2659
      %2803 = vmatprep.subr.mxu0 0.0
      %2804 = vmatpush2.msra.mxu0 0.0
      %2805 = vmatprep.subr.mxu0 0.0
      %2806 = vmatpush2.msra.mxu0 0.0
      %2807 = vmatprep.subr.mxu0 0.0
      %2808 = vmatpush2.msra.mxu0 0.0
      %2809 = vmatprep.subr.mxu0 0.0
      %2810 = vmatpush2.msra.mxu0 0.0
      %2811 = vmatprep.subr.mxu0 0.0
      %2812 = vmatpush2.msra.mxu0 0.0
      %2813 = vmatprep.subr.mxu0 0.0
      %2814 = vmatpush2.msra.mxu0 0.0
      %2815 = vmatprep.subr.mxu0 0.0
      %2816 = vmatpush2.msra.mxu0 0.0
      %2817 = vmatprep.subr.mxu0 0.0
      %2818 = vmatpush2.msra.mxu0 0.0
      %2819 = vmatprep.subr.mxu0 0.0
      %2820 = vmatpush2.msra.mxu0 0.0
      %2821 = vmatprep.subr.mxu0 0.0
      %2822 = vmatpush2.msra.mxu0 0.0
      %2823 = vmatprep.subr.mxu0 0.0
      %2824 = vmatpush2.msra.mxu0 0.0
      %2825 = vmatprep.subr.mxu0 0.0
      %2826 = vmatpush2.msra.mxu0 0.0
      %2827 = vmatprep.subr.mxu0 0.0
      %2828 = vmatpush2.msra.mxu0 0.0
      %2829 = vmatprep.subr.mxu0 0.0
      %2830 = vmatpush2.msra.mxu0 0.0
      %2831 = vmatprep.subr.mxu0 0.0
      %2832 = vmatpush2.msra.mxu0 0.0
      %2833 = vmatprep.subr.mxu0 0.0
      %2834 = vmatpush2.msra.mxu0 0.0
      %2835 = vmatprep.mubr.f32.mxu0 0.0
      %2836 = vmatmul.mubr.f32.gmra.mxu0 %v2689
      %v2837 = vpop.f32.mrf.mxu0
      %v2838 = vadd.f32 0.0, %v2837
      %v2839 = vpop.f32.mrf.mxu0
      %2840 = vmatprep.mubr.f32.mxu0 0.0
      %2841 = vmatmul.mubr.f32.gmra.mxu0 %v2692
      %v2842 = vpop.f32.mrf.mxu0
      %v2843 = vadd.f32 0.0, %v2842
      %v2844 = vpop.f32.mrf.mxu0
      %2845 = vdwg.mxu0
      %v2846 = vadd.f32 %v176, %v2761
      %v2847 = vadd.f32 %v176, %v2763
      %v2848 = vadd.f32 %v176, %v2838
      %v2849 = vadd.f32 %v181, %v2767
      %v2850 = vadd.f32 %v181, %v2769
      %v2851 = vadd.f32 %v181, %v2843
      %s2852 = scalar_lea.vmem %s1, 32
      %v2853 = vld [vmem:[%s2852] sm:$0xff]
      %v2854 = vld [vmem:[%s2852 + $0x8] sm:$0xf]
      %2855 = vrot.lane.b32.xlu0 %v2634, 91
      %v2856 = vpop.permute.xlu0 %2855
      %2857 = vrot.lane.b32.xlu0 %v2635, 91
      %v2858 = vpop.permute.xlu0 %2857
      %2859 = vrot.lane.b32.xlu0 %v2636, 91
      %v2860 = vpop.permute.xlu0 %2859
      %2861 = vrot.lane.b32.xlu0 %v2637, 91
      %v2862 = vpop.permute.xlu0 %2861
      %2863 = vrot.lane.b32.xlu0 %v2638, 91
      %v2864 = vpop.permute.xlu0 %2863
      %2865 = vrot.lane.b32.xlu0 %v2639, 91
      %v2866 = vpop.permute.xlu0 %2865
      %2867 = vrot.lane.b32.xlu0 %v2640, 91
      %v2868 = vpop.permute.xlu0 %2867
      %2869 = vrot.lane.b32.xlu0 %v2641, 91
      %v2870 = vpop.permute.xlu0 %2869
      %2871 = vrot.lane.b32.xlu0 %v2642, 91
      %v2872 = vpop.permute.xlu0 %2871
      %v2873 = vsel %vm1846, %v2856, %v2858
      %v2874 = vsel %vm1846, %v2858, %v2860
      %v2875 = vsel %vm1846, %v2862, %v2864
      %v2876 = vsel %vm1846, %v2864, %v2866
      %v2877 = vsel %vm1846, %v2868, %v2870
      %v2878 = vsel %vm1846, %v2870, %v2872
      %v2889 = vsel %vm238, %v2853, 0
      %v2892 = vsel %vm238, %v2854, 0
      %2894 = vmatprep.subr.mxu0 0.0
      %2895 = vmatpush1.msra.mxu0 0.0
      %2896 = vmatprep.subr.mxu0 0.0
      %2897 = vmatpush1.msra.mxu0 0.0
      %2898 = vmatprep.subr.mxu0 0.0
      %2899 = vmatpush1.msra.mxu0 0.0
      %2900 = vmatprep.subr.mxu0 0.0
      %2901 = vmatpush1.msra.mxu0 0.0
      %2902 = vmatprep.subr.mxu0 0.0
      %2903 = vmatpush1.msra.mxu0 0.0
      %2904 = vmatprep.subr.mxu0 0.0
      %2905 = vmatpush1.msra.mxu0 0.0
      %2906 = vmatprep.subr.mxu0 0.0
      %2907 = vmatpush1.msra.mxu0 0.0
      %2908 = vmatprep.subr.mxu0 0.0
      %2909 = vmatpush1.msra.mxu0 0.0
      %2910 = vmatprep.subr.mxu0 0.0
      %2911 = vmatpush1.msra.mxu0 0.0
      %2912 = vmatprep.subr.mxu0 0.0
      %2913 = vmatpush1.msra.mxu0 0.0
      %2914 = vmatprep.subr.mxu0 0.0
      %2915 = vmatpush1.msra.mxu0 0.0
      %2916 = vmatprep.subr.mxu0 0.0
      %2917 = vmatpush1.msra.mxu0 0.0
      %2918 = vmatprep.subr.mxu0 0.0
      %2919 = vmatpush1.msra.mxu0 0.0
      %2920 = vmatprep.subr.mxu0 %v2878
      %2921 = vmatpush1.msra.mxu0 %v2877
      %2922 = vmatprep.subr.mxu0 %v2876
      %2923 = vmatpush1.msra.mxu0 %v2875
      %2924 = vmatprep.subr.mxu0 %v2874
      %2925 = vmatpush1.msra.mxu0 %v2873
      %2926 = vmatprep.subr.mxu0 0.0
      %2927 = vmatpush2.msra.mxu0 0.0
      %2928 = vmatprep.subr.mxu0 0.0
      %2929 = vmatpush2.msra.mxu0 0.0
      %2930 = vmatprep.subr.mxu0 0.0
      %2931 = vmatpush2.msra.mxu0 0.0
      %2932 = vmatprep.subr.mxu0 0.0
      %2933 = vmatpush2.msra.mxu0 0.0
      %2934 = vmatprep.subr.mxu0 0.0
      %2935 = vmatpush2.msra.mxu0 0.0
      %2936 = vmatprep.subr.mxu0 0.0
      %2937 = vmatpush2.msra.mxu0 0.0
      %2938 = vmatprep.subr.mxu0 0.0
      %2939 = vmatpush2.msra.mxu0 0.0
      %2940 = vmatprep.subr.mxu0 0.0
      %2941 = vmatpush2.msra.mxu0 0.0
      %2942 = vmatprep.subr.mxu0 0.0
      %2943 = vmatpush2.msra.mxu0 0.0
      %2944 = vmatprep.subr.mxu0 0.0
      %2945 = vmatpush2.msra.mxu0 0.0
      %2946 = vmatprep.subr.mxu0 0.0
      %2947 = vmatpush2.msra.mxu0 0.0
      %2948 = vmatprep.subr.mxu0 0.0
      %2949 = vmatpush2.msra.mxu0 0.0
      %2950 = vmatprep.subr.mxu0 0.0
      %2951 = vmatpush2.msra.mxu0 0.0
      %2952 = vmatprep.subr.mxu0 0.0
      %2953 = vmatpush2.msra.mxu0 0.0
      %2954 = vmatprep.subr.mxu0 0.0
      %2955 = vmatpush2.msra.mxu0 0.0
      %2956 = vmatprep.subr.mxu0 0.0
      %2957 = vmatpush2.msra.mxu0 0.0
      %2958 = vmatprep.mubr.f32.mxu0 0.0
      %2959 = vmatmul.mubr.f32.gmra.mxu0 %v2889
      %v2960 = vpop.f32.mrf.mxu0
      %v2961 = vadd.f32 0.0, %v2960
      %v2962 = vpop.f32.mrf.mxu0
      %v2963 = vadd.f32 0.0, %v2962
      %2964 = vmatprep.mubr.f32.mxu0 0.0
      %2965 = vmatmul.mubr.f32.gmra.mxu0 %v2892
      %v2966 = vpop.f32.mrf.mxu0
      %v2967 = vadd.f32 0.0, %v2966
      %v2968 = vpop.f32.mrf.mxu0
      %v2969 = vadd.f32 0.0, %v2968
      %2970 = vdwg.mxu0
      %2971 = vmatprep.subr.mxu0 0.0
      %2972 = vmatpush1.msra.mxu0 0.0
      %2973 = vmatprep.subr.mxu0 0.0
      %2974 = vmatpush1.msra.mxu0 0.0
      %2975 = vmatprep.subr.mxu0 0.0
      %2976 = vmatpush1.msra.mxu0 0.0
      %2977 = vmatprep.subr.mxu0 0.0
      %2978 = vmatpush1.msra.mxu0 0.0
      %2979 = vmatprep.subr.mxu0 0.0
      %2980 = vmatpush1.msra.mxu0 0.0
      %2981 = vmatprep.subr.mxu0 0.0
      %2982 = vmatpush1.msra.mxu0 0.0
      %2983 = vmatprep.subr.mxu0 0.0
      %2984 = vmatpush1.msra.mxu0 0.0
      %2985 = vmatprep.subr.mxu0 0.0
      %2986 = vmatpush1.msra.mxu0 0.0
      %2987 = vmatprep.subr.mxu0 0.0
      %2988 = vmatpush1.msra.mxu0 0.0
      %2989 = vmatprep.subr.mxu0 0.0
      %2990 = vmatpush1.msra.mxu0 0.0
      %2991 = vmatprep.subr.mxu0 0.0
      %2992 = vmatpush1.msra.mxu0 0.0
      %2993 = vmatprep.subr.mxu0 0.0
      %2994 = vmatpush1.msra.mxu0 0.0
      %2995 = vmatprep.subr.mxu0 0.0
      %2996 = vmatpush1.msra.mxu0 0.0
      %2997 = vmatprep.subr.mxu0 0.0
      %2998 = vmatpush1.msra.mxu0 %v2872
      %2999 = vmatprep.subr.mxu0 0.0
      %3000 = vmatpush1.msra.mxu0 %v2866
      %3001 = vmatprep.subr.mxu0 0.0
      %3002 = vmatpush1.msra.mxu0 %v2860
      %3003 = vmatprep.subr.mxu0 0.0
      %3004 = vmatpush2.msra.mxu0 0.0
      %3005 = vmatprep.subr.mxu0 0.0
      %3006 = vmatpush2.msra.mxu0 0.0
      %3007 = vmatprep.subr.mxu0 0.0
      %3008 = vmatpush2.msra.mxu0 0.0
      %3009 = vmatprep.subr.mxu0 0.0
      %3010 = vmatpush2.msra.mxu0 0.0
      %3011 = vmatprep.subr.mxu0 0.0
      %3012 = vmatpush2.msra.mxu0 0.0
      %3013 = vmatprep.subr.mxu0 0.0
      %3014 = vmatpush2.msra.mxu0 0.0
      %3015 = vmatprep.subr.mxu0 0.0
      %3016 = vmatpush2.msra.mxu0 0.0
      %3017 = vmatprep.subr.mxu0 0.0
      %3018 = vmatpush2.msra.mxu0 0.0
      %3019 = vmatprep.subr.mxu0 0.0
      %3020 = vmatpush2.msra.mxu0 0.0
      %3021 = vmatprep.subr.mxu0 0.0
      %3022 = vmatpush2.msra.mxu0 0.0
      %3023 = vmatprep.subr.mxu0 0.0
      %3024 = vmatpush2.msra.mxu0 0.0
      %3025 = vmatprep.subr.mxu0 0.0
      %3026 = vmatpush2.msra.mxu0 0.0
      %3027 = vmatprep.subr.mxu0 0.0
      %3028 = vmatpush2.msra.mxu0 0.0
      %3029 = vmatprep.subr.mxu0 0.0
      %3030 = vmatpush2.msra.mxu0 0.0
      %3031 = vmatprep.subr.mxu0 0.0
      %3032 = vmatpush2.msra.mxu0 0.0
      %3033 = vmatprep.subr.mxu0 0.0
      %3034 = vmatpush2.msra.mxu0 0.0
      %3035 = vmatprep.mubr.f32.mxu0 0.0
      %3036 = vmatmul.mubr.f32.gmra.mxu0 %v2889
      %v3037 = vpop.f32.mrf.mxu0
      %v3038 = vadd.f32 0.0, %v3037
      %v3039 = vpop.f32.mrf.mxu0
      %3040 = vmatprep.mubr.f32.mxu0 0.0
      %3041 = vmatmul.mubr.f32.gmra.mxu0 %v2892
      %v3042 = vpop.f32.mrf.mxu0
      %v3043 = vadd.f32 0.0, %v3042
      %v3044 = vpop.f32.mrf.mxu0
      %3045 = vdwg.mxu0
      %v3046 = vadd.f32 %v2846, %v2961
      %v3047 = vadd.f32 %v2847, %v2963
      %v3048 = vadd.f32 %v2848, %v3038
      %v3049 = vadd.f32 %v2849, %v2967
      %v3050 = vadd.f32 %v2850, %v2969
      %v3051 = vadd.f32 %v2851, %v3043
      %s3052 = scalar_lea.vmem %s1, 128
      %v3053 = vld [vmem:[%s3052] sm:$0xff]
      %v3054 = vld [vmem:[%s3052 + $0x8] sm:$0xf]
      %3055 = vrot.lane.b32.xlu0 %v2634, 108
      %v3056 = vpop.permute.xlu0 %3055
      %3057 = vrot.lane.b32.xlu0 %v2635, 108
      %v3058 = vpop.permute.xlu0 %3057
      %3059 = vrot.lane.b32.xlu0 %v2636, 108
      %v3060 = vpop.permute.xlu0 %3059
      %3061 = vrot.lane.b32.xlu0 %v2637, 108
      %v3062 = vpop.permute.xlu0 %3061
      %3063 = vrot.lane.b32.xlu0 %v2638, 108
      %v3064 = vpop.permute.xlu0 %3063
      %3065 = vrot.lane.b32.xlu0 %v2639, 108
      %v3066 = vpop.permute.xlu0 %3065
      %3067 = vrot.lane.b32.xlu0 %v2640, 108
      %v3068 = vpop.permute.xlu0 %3067
      %3069 = vrot.lane.b32.xlu0 %v2641, 108
      %v3070 = vpop.permute.xlu0 %3069
      %3071 = vrot.lane.b32.xlu0 %v2642, 108
      %v3072 = vpop.permute.xlu0 %3071
      %v3073 = vsel %vm1019, %v3056, %v3058
      %v3074 = vsel %vm1019, %v3058, %v3060
      %v3075 = vsel %vm1019, %v3062, %v3064
      %v3076 = vsel %vm1019, %v3064, %v3066
      %v3077 = vsel %vm1019, %v3068, %v3070
      %v3078 = vsel %vm1019, %v3070, %v3072
      %v3089 = vsel %vm238, %v3053, 0
      %v3092 = vsel %vm238, %v3054, 0
      %3094 = vmatprep.subr.mxu0 0.0
      %3095 = vmatpush1.msra.mxu0 0.0
      %3096 = vmatprep.subr.mxu0 0.0
      %3097 = vmatpush1.msra.mxu0 0.0
      %3098 = vmatprep.subr.mxu0 0.0
      %3099 = vmatpush1.msra.mxu0 0.0
      %3100 = vmatprep.subr.mxu0 0.0
      %3101 = vmatpush1.msra.mxu0 0.0
      %3102 = vmatprep.subr.mxu0 0.0
      %3103 = vmatpush1.msra.mxu0 0.0
      %3104 = vmatprep.subr.mxu0 0.0
      %3105 = vmatpush1.msra.mxu0 0.0
      %3106 = vmatprep.subr.mxu0 0.0
      %3107 = vmatpush1.msra.mxu0 0.0
      %3108 = vmatprep.subr.mxu0 0.0
      %3109 = vmatpush1.msra.mxu0 0.0
      %3110 = vmatprep.subr.mxu0 0.0
      %3111 = vmatpush1.msra.mxu0 0.0
      %3112 = vmatprep.subr.mxu0 0.0
      %3113 = vmatpush1.msra.mxu0 0.0
      %3114 = vmatprep.subr.mxu0 0.0
      %3115 = vmatpush1.msra.mxu0 0.0
      %3116 = vmatprep.subr.mxu0 0.0
      %3117 = vmatpush1.msra.mxu0 0.0
      %3118 = vmatprep.subr.mxu0 0.0
      %3119 = vmatpush1.msra.mxu0 0.0
      %3120 = vmatprep.subr.mxu0 %v3078
      %3121 = vmatpush1.msra.mxu0 %v3077
      %3122 = vmatprep.subr.mxu0 %v3076
      %3123 = vmatpush1.msra.mxu0 %v3075
      %3124 = vmatprep.subr.mxu0 %v3074
      %3125 = vmatpush1.msra.mxu0 %v3073
      %3126 = vmatprep.subr.mxu0 0.0
      %3127 = vmatpush2.msra.mxu0 0.0
      %3128 = vmatprep.subr.mxu0 0.0
      %3129 = vmatpush2.msra.mxu0 0.0
      %3130 = vmatprep.subr.mxu0 0.0
      %3131 = vmatpush2.msra.mxu0 0.0
      %3132 = vmatprep.subr.mxu0 0.0
      %3133 = vmatpush2.msra.mxu0 0.0
      %3134 = vmatprep.subr.mxu0 0.0
      %3135 = vmatpush2.msra.mxu0 0.0
      %3136 = vmatprep.subr.mxu0 0.0
      %3137 = vmatpush2.msra.mxu0 0.0
      %3138 = vmatprep.subr.mxu0 0.0
      %3139 = vmatpush2.msra.mxu0 0.0
      %3140 = vmatprep.subr.mxu0 0.0
      %3141 = vmatpush2.msra.mxu0 0.0
      %3142 = vmatprep.subr.mxu0 0.0
      %3143 = vmatpush2.msra.mxu0 0.0
      %3144 = vmatprep.subr.mxu0 0.0
      %3145 = vmatpush2.msra.mxu0 0.0
      %3146 = vmatprep.subr.mxu0 0.0
      %3147 = vmatpush2.msra.mxu0 0.0
      %3148 = vmatprep.subr.mxu0 0.0
      %3149 = vmatpush2.msra.mxu0 0.0
      %3150 = vmatprep.subr.mxu0 0.0
      %3151 = vmatpush2.msra.mxu0 0.0
      %3152 = vmatprep.subr.mxu0 0.0
      %3153 = vmatpush2.msra.mxu0 0.0
      %3154 = vmatprep.subr.mxu0 0.0
      %3155 = vmatpush2.msra.mxu0 0.0
      %3156 = vmatprep.subr.mxu0 0.0
      %3157 = vmatpush2.msra.mxu0 0.0
      %3158 = vmatprep.mubr.f32.mxu0 0.0
      %3159 = vmatmul.mubr.f32.gmra.mxu0 %v3089
      %v3160 = vpop.f32.mrf.mxu0
      %v3161 = vadd.f32 0.0, %v3160
      %v3162 = vpop.f32.mrf.mxu0
      %v3163 = vadd.f32 0.0, %v3162
      %3164 = vmatprep.mubr.f32.mxu0 0.0
      %3165 = vmatmul.mubr.f32.gmra.mxu0 %v3092
      %v3166 = vpop.f32.mrf.mxu0
      %v3167 = vadd.f32 0.0, %v3166
      %v3168 = vpop.f32.mrf.mxu0
      %v3169 = vadd.f32 0.0, %v3168
      %3170 = vdwg.mxu0
      %3171 = vmatprep.subr.mxu0 0.0
      %3172 = vmatpush1.msra.mxu0 0.0
      %3173 = vmatprep.subr.mxu0 0.0
      %3174 = vmatpush1.msra.mxu0 0.0
      %3175 = vmatprep.subr.mxu0 0.0
      %3176 = vmatpush1.msra.mxu0 0.0
      %3177 = vmatprep.subr.mxu0 0.0
      %3178 = vmatpush1.msra.mxu0 0.0
      %3179 = vmatprep.subr.mxu0 0.0
      %3180 = vmatpush1.msra.mxu0 0.0
      %3181 = vmatprep.subr.mxu0 0.0
      %3182 = vmatpush1.msra.mxu0 0.0
      %3183 = vmatprep.subr.mxu0 0.0
      %3184 = vmatpush1.msra.mxu0 0.0
      %3185 = vmatprep.subr.mxu0 0.0
      %3186 = vmatpush1.msra.mxu0 0.0
      %3187 = vmatprep.subr.mxu0 0.0
      %3188 = vmatpush1.msra.mxu0 0.0
      %3189 = vmatprep.subr.mxu0 0.0
      %3190 = vmatpush1.msra.mxu0 0.0
      %3191 = vmatprep.subr.mxu0 0.0
      %3192 = vmatpush1.msra.mxu0 0.0
      %3193 = vmatprep.subr.mxu0 0.0
      %3194 = vmatpush1.msra.mxu0 0.0
      %3195 = vmatprep.subr.mxu0 0.0
      %3196 = vmatpush1.msra.mxu0 0.0
      %3197 = vmatprep.subr.mxu0 0.0
      %3198 = vmatpush1.msra.mxu0 %v3072
      %3199 = vmatprep.subr.mxu0 0.0
      %3200 = vmatpush1.msra.mxu0 %v3066
      %3201 = vmatprep.subr.mxu0 0.0
      %3202 = vmatpush1.msra.mxu0 %v3060
      %3203 = vmatprep.subr.mxu0 0.0
      %3204 = vmatpush2.msra.mxu0 0.0
      %3205 = vmatprep.subr.mxu0 0.0
      %3206 = vmatpush2.msra.mxu0 0.0
      %3207 = vmatprep.subr.mxu0 0.0
      %3208 = vmatpush2.msra.mxu0 0.0
      %3209 = vmatprep.subr.mxu0 0.0
      %3210 = vmatpush2.msra.mxu0 0.0
      %3211 = vmatprep.subr.mxu0 0.0
      %3212 = vmatpush2.msra.mxu0 0.0
      %3213 = vmatprep.subr.mxu0 0.0
      %3214 = vmatpush2.msra.mxu0 0.0
      %3215 = vmatprep.subr.mxu0 0.0
      %3216 = vmatpush2.msra.mxu0 0.0
      %3217 = vmatprep.subr.mxu0 0.0
      %3218 = vmatpush2.msra.mxu0 0.0
      %3219 = vmatprep.subr.mxu0 0.0
      %3220 = vmatpush2.msra.mxu0 0.0
      %3221 = vmatprep.subr.mxu0 0.0
      %3222 = vmatpush2.msra.mxu0 0.0
      %3223 = vmatprep.subr.mxu0 0.0
      %3224 = vmatpush2.msra.mxu0 0.0
      %3225 = vmatprep.subr.mxu0 0.0
      %3226 = vmatpush2.msra.mxu0 0.0
      %3227 = vmatprep.subr.mxu0 0.0
      %3228 = vmatpush2.msra.mxu0 0.0
      %3229 = vmatprep.subr.mxu0 0.0
      %3230 = vmatpush2.msra.mxu0 0.0
      %3231 = vmatprep.subr.mxu0 0.0
      %3232 = vmatpush2.msra.mxu0 0.0
      %3233 = vmatprep.subr.mxu0 0.0
      %3234 = vmatpush2.msra.mxu0 0.0
      %3235 = vmatprep.mubr.f32.mxu0 0.0
      %3236 = vmatmul.mubr.f32.gmra.mxu0 %v3089
      %v3237 = vpop.f32.mrf.mxu0
      %v3238 = vadd.f32 0.0, %v3237
      %v3239 = vpop.f32.mrf.mxu0
      %3240 = vmatprep.mubr.f32.mxu0 0.0
      %3241 = vmatmul.mubr.f32.gmra.mxu0 %v3092
      %v3242 = vpop.f32.mrf.mxu0
      %v3243 = vadd.f32 0.0, %v3242
      %v3244 = vpop.f32.mrf.mxu0
      %3245 = vdwg.mxu0
      %v3246 = vadd.f32 %v3046, %v3161
      %v3247 = vadd.f32 %v3047, %v3163
      %v3248 = vadd.f32 %v3048, %v3238
      %v3249 = vadd.f32 %v3049, %v3167
      %v3250 = vadd.f32 %v3050, %v3169
      %v3251 = vadd.f32 %v3051, %v3243
      %s3252 = scalar_lea.vmem %s1, 160
      %v3253 = vld [vmem:[%s3252] sm:$0xff]
      %v3254 = vld [vmem:[%s3252 + $0x8] sm:$0xf]
      %3255 = vrot.lane.b32.xlu0 %v2634, 109
      %v3256 = vpop.permute.xlu0 %3255
      %3257 = vrot.lane.b32.xlu0 %v2635, 109
      %v3258 = vpop.permute.xlu0 %3257
      %3259 = vrot.lane.b32.xlu0 %v2636, 109
      %v3260 = vpop.permute.xlu0 %3259
      %3261 = vrot.lane.b32.xlu0 %v2637, 109
      %v3262 = vpop.permute.xlu0 %3261
      %3263 = vrot.lane.b32.xlu0 %v2638, 109
      %v3264 = vpop.permute.xlu0 %3263
      %3265 = vrot.lane.b32.xlu0 %v2639, 109
      %v3266 = vpop.permute.xlu0 %3265
      %3267 = vrot.lane.b32.xlu0 %v2640, 109
      %v3268 = vpop.permute.xlu0 %3267
      %3269 = vrot.lane.b32.xlu0 %v2641, 109
      %v3270 = vpop.permute.xlu0 %3269
      %3271 = vrot.lane.b32.xlu0 %v2642, 109
      %v3272 = vpop.permute.xlu0 %3271
      %v3273 = vsel %vm222, %v3256, %v3258
      %v3274 = vsel %vm222, %v3258, %v3260
      %v3275 = vsel %vm222, %v3262, %v3264
      %v3276 = vsel %vm222, %v3264, %v3266
      %v3277 = vsel %vm222, %v3268, %v3270
      %v3278 = vsel %vm222, %v3270, %v3272
      %v3289 = vsel %vm238, %v3253, 0
      %v3292 = vsel %vm238, %v3254, 0
      %3294 = vmatprep.subr.mxu0 0.0
      %3295 = vmatpush1.msra.mxu0 0.0
      %3296 = vmatprep.subr.mxu0 0.0
      %3297 = vmatpush1.msra.mxu0 0.0
      %3298 = vmatprep.subr.mxu0 0.0
      %3299 = vmatpush1.msra.mxu0 0.0
      %3300 = vmatprep.subr.mxu0 0.0
      %3301 = vmatpush1.msra.mxu0 0.0
      %3302 = vmatprep.subr.mxu0 0.0
      %3303 = vmatpush1.msra.mxu0 0.0
      %3304 = vmatprep.subr.mxu0 0.0
      %3305 = vmatpush1.msra.mxu0 0.0
      %3306 = vmatprep.subr.mxu0 0.0
      %3307 = vmatpush1.msra.mxu0 0.0
      %3308 = vmatprep.subr.mxu0 0.0
      %3309 = vmatpush1.msra.mxu0 0.0
      %3310 = vmatprep.subr.mxu0 0.0
      %3311 = vmatpush1.msra.mxu0 0.0
      %3312 = vmatprep.subr.mxu0 0.0
      %3313 = vmatpush1.msra.mxu0 0.0
      %3314 = vmatprep.subr.mxu0 0.0
      %3315 = vmatpush1.msra.mxu0 0.0
      %3316 = vmatprep.subr.mxu0 0.0
      %3317 = vmatpush1.msra.mxu0 0.0
      %3318 = vmatprep.subr.mxu0 0.0
      %3319 = vmatpush1.msra.mxu0 0.0
      %3320 = vmatprep.subr.mxu0 %v3278
      %3321 = vmatpush1.msra.mxu0 %v3277
      %3322 = vmatprep.subr.mxu0 %v3276
      %3323 = vmatpush1.msra.mxu0 %v3275
      %3324 = vmatprep.subr.mxu0 %v3274
      %3325 = vmatpush1.msra.mxu0 %v3273
      %3326 = vmatprep.subr.mxu0 0.0
      %3327 = vmatpush2.msra.mxu0 0.0
      %3328 = vmatprep.subr.mxu0 0.0
      %3329 = vmatpush2.msra.mxu0 0.0
      %3330 = vmatprep.subr.mxu0 0.0
      %3331 = vmatpush2.msra.mxu0 0.0
      %3332 = vmatprep.subr.mxu0 0.0
      %3333 = vmatpush2.msra.mxu0 0.0
      %3334 = vmatprep.subr.mxu0 0.0
      %3335 = vmatpush2.msra.mxu0 0.0
      %3336 = vmatprep.subr.mxu0 0.0
      %3337 = vmatpush2.msra.mxu0 0.0
      %3338 = vmatprep.subr.mxu0 0.0
      %3339 = vmatpush2.msra.mxu0 0.0
      %3340 = vmatprep.subr.mxu0 0.0
      %3341 = vmatpush2.msra.mxu0 0.0
      %3342 = vmatprep.subr.mxu0 0.0
      %3343 = vmatpush2.msra.mxu0 0.0
      %3344 = vmatprep.subr.mxu0 0.0
      %3345 = vmatpush2.msra.mxu0 0.0
      %3346 = vmatprep.subr.mxu0 0.0
      %3347 = vmatpush2.msra.mxu0 0.0
      %3348 = vmatprep.subr.mxu0 0.0
      %3349 = vmatpush2.msra.mxu0 0.0
      %3350 = vmatprep.subr.mxu0 0.0
      %3351 = vmatpush2.msra.mxu0 0.0
      %3352 = vmatprep.subr.mxu0 0.0
      %3353 = vmatpush2.msra.mxu0 0.0
      %3354 = vmatprep.subr.mxu0 0.0
      %3355 = vmatpush2.msra.mxu0 0.0
      %3356 = vmatprep.subr.mxu0 0.0
      %3357 = vmatpush2.msra.mxu0 0.0
      %3358 = vmatprep.mubr.f32.mxu0 0.0
      %3359 = vmatmul.mubr.f32.gmra.mxu0 %v3289
      %v3360 = vpop.f32.mrf.mxu0
      %v3361 = vadd.f32 0.0, %v3360
      %v3362 = vpop.f32.mrf.mxu0
      %v3363 = vadd.f32 0.0, %v3362
      %3364 = vmatprep.mubr.f32.mxu0 0.0
      %3365 = vmatmul.mubr.f32.gmra.mxu0 %v3292
      %v3366 = vpop.f32.mrf.mxu0
      %v3367 = vadd.f32 0.0, %v3366
      %v3368 = vpop.f32.mrf.mxu0
      %v3369 = vadd.f32 0.0, %v3368
      %3370 = vdwg.mxu0
      %3371 = vmatprep.subr.mxu0 0.0
      %3372 = vmatpush1.msra.mxu0 0.0
      %3373 = vmatprep.subr.mxu0 0.0
      %3374 = vmatpush1.msra.mxu0 0.0
      %3375 = vmatprep.subr.mxu0 0.0
      %3376 = vmatpush1.msra.mxu0 0.0
      %3377 = vmatprep.subr.mxu0 0.0
      %3378 = vmatpush1.msra.mxu0 0.0
      %3379 = vmatprep.subr.mxu0 0.0
      %3380 = vmatpush1.msra.mxu0 0.0
      %3381 = vmatprep.subr.mxu0 0.0
      %3382 = vmatpush1.msra.mxu0 0.0
      %3383 = vmatprep.subr.mxu0 0.0
      %3384 = vmatpush1.msra.mxu0 0.0
      %3385 = vmatprep.subr.mxu0 0.0
      %3386 = vmatpush1.msra.mxu0 0.0
      %3387 = vmatprep.subr.mxu0 0.0
      %3388 = vmatpush1.msra.mxu0 0.0
      %3389 = vmatprep.subr.mxu0 0.0
      %3390 = vmatpush1.msra.mxu0 0.0
      %3391 = vmatprep.subr.mxu0 0.0
      %3392 = vmatpush1.msra.mxu0 0.0
      %3393 = vmatprep.subr.mxu0 0.0
      %3394 = vmatpush1.msra.mxu0 0.0
      %3395 = vmatprep.subr.mxu0 0.0
      %3396 = vmatpush1.msra.mxu0 0.0
      %3397 = vmatprep.subr.mxu0 0.0
      %3398 = vmatpush1.msra.mxu0 %v3272
      %3399 = vmatprep.subr.mxu0 0.0
      %3400 = vmatpush1.msra.mxu0 %v3266
      %3401 = vmatprep.subr.mxu0 0.0
      %3402 = vmatpush1.msra.mxu0 %v3260
      %3403 = vmatprep.subr.mxu0 0.0
      %3404 = vmatpush2.msra.mxu0 0.0
      %3405 = vmatprep.subr.mxu0 0.0
      %3406 = vmatpush2.msra.mxu0 0.0
      %3407 = vmatprep.subr.mxu0 0.0
      %3408 = vmatpush2.msra.mxu0 0.0
      %3409 = vmatprep.subr.mxu0 0.0
      %3410 = vmatpush2.msra.mxu0 0.0
      %3411 = vmatprep.subr.mxu0 0.0
      %3412 = vmatpush2.msra.mxu0 0.0
      %3413 = vmatprep.subr.mxu0 0.0
      %3414 = vmatpush2.msra.mxu0 0.0
      %3415 = vmatprep.subr.mxu0 0.0
      %3416 = vmatpush2.msra.mxu0 0.0
      %3417 = vmatprep.subr.mxu0 0.0
      %3418 = vmatpush2.msra.mxu0 0.0
      %3419 = vmatprep.subr.mxu0 0.0
      %3420 = vmatpush2.msra.mxu0 0.0
      %3421 = vmatprep.subr.mxu0 0.0
      %3422 = vmatpush2.msra.mxu0 0.0
      %3423 = vmatprep.subr.mxu0 0.0
      %3424 = vmatpush2.msra.mxu0 0.0
      %3425 = vmatprep.subr.mxu0 0.0
      %3426 = vmatpush2.msra.mxu0 0.0
      %3427 = vmatprep.subr.mxu0 0.0
      %3428 = vmatpush2.msra.mxu0 0.0
      %3429 = vmatprep.subr.mxu0 0.0
      %3430 = vmatpush2.msra.mxu0 0.0
      %3431 = vmatprep.subr.mxu0 0.0
      %3432 = vmatpush2.msra.mxu0 0.0
      %3433 = vmatprep.subr.mxu0 0.0
      %3434 = vmatpush2.msra.mxu0 0.0
      %3435 = vmatprep.mubr.f32.mxu0 0.0
      %3436 = vmatmul.mubr.f32.gmra.mxu0 %v3289
      %v3437 = vpop.f32.mrf.mxu0
      %v3438 = vadd.f32 0.0, %v3437
      %v3439 = vpop.f32.mrf.mxu0
      %3440 = vmatprep.mubr.f32.mxu0 0.0
      %3441 = vmatmul.mubr.f32.gmra.mxu0 %v3292
      %v3442 = vpop.f32.mrf.mxu0
      %v3443 = vadd.f32 0.0, %v3442
      %v3444 = vpop.f32.mrf.mxu0
      %3445 = vdwg.mxu0
      %v3446 = vadd.f32 %v3246, %v3361
      %v3447 = vadd.f32 %v3247, %v3363
      %v3448 = vadd.f32 %v3248, %v3438
      %v3449 = vadd.f32 %v3249, %v3367
      %v3450 = vadd.f32 %v3250, %v3369
      %v3451 = vadd.f32 %v3251, %v3443
      %s3452 = scalar_lea.vmem %s170, 144
      %3453 = vst [vmem:[%s3452] sm:$0xff] %v3446
      %3454 = vst [vmem:[%s3452 + $0x8] sm:$0xff] %v3447
      %3455 = vst.msk [vmem:[%s3452 + $0x10] sm:$0xff] %vm974, %v3448
      %3456 = vst [vmem:[%s3452 + $0x18] sm:$0xf] %v3449
      %3457 = vst [vmem:[%s3452 + $0x20] sm:$0xf] %v3450
      %3458 = vst.msk [vmem:[%s3452 + $0x28] sm:$0xf] %vm978, %v3451
      %p3459 = scmp.lt.s32.totalorder %s14, 1
      %s3460 = scalar_select %p3459, %s14, 1
      %s3461 = smul.addr %s3460, 24
      %s3462 = smul.addr %s3461, 8
      %s3463 = scalar_lea.vmem %s3, %s3462
      // Predicated region
      $region33: #{img_decoder_fwd.2} parent=31 // pred_check
        %p3464 = pneg %p100
      $region34: #{img_decoder_fwd.2} parent=31 // pred_check_branch
        %3466 = sbr.rel (%p3464) target = $region36
      $region35: #{img_decoder_fwd.2} parent=31 // pred_region
        _
      $region36: #{img_decoder_fwd.2} parent=31 // pred_fallthru
        _
    $region32: #{img_decoder_fwd.2} parent=5 // pred_fallthru
      _
    %p3467 = scmp.le.s32.totalorder 2, %s9
    // Predicated region
    $region37: #{img_decoder_fwd.2} parent=5 // pred_check
      %p3468 = pneg %p3467
    $region38: #{img_decoder_fwd.2} parent=5 // pred_check_branch
      %3470 = sbr.rel (%p3468) target = $region40
    $region39: #{img_decoder_fwd.2} parent=5 // pred_region
      %s3471 = ssub.s32 %s9, 2
      // Predicated region
      $region41: #{img_decoder_fwd.2} parent=39 // pred_check
        %p3472 = pneg %p106
      $region42: #{img_decoder_fwd.2} parent=39 // pred_check_branch
        %3474 = sbr.rel (%p3472) target = $region44
      $region43: #{img_decoder_fwd.2} parent=39 // pred_region
        %p3475 = scmp.lt.s32.totalorder %s15, 1
        %s3476 = scalar_select %p3475, %s15, 1
        %s3477 = smul.addr %s3476, 24
        %s3478 = smul.addr %s3477, 8
        %s3479 = scalar_lea.vmem %s3, %s3478
      $region44: #{img_decoder_fwd.2} parent=39 // pred_fallthru
        _
    $region40: #{img_decoder_fwd.2} parent=5 // pred_fallthru
      _
  $region6: #{img_decoder_fwd.2} parent=0 // loop_footer
    %s13 = sadd.s32 1, %s9
  $region7: #{img_decoder_fwd.2} parent=0 // loop_footer_branch
    %8 = sbr.rel target = $region3
  $region8: #{img_decoder_fwd.2} parent=0 // loop_exit
    _

// kernel: img_decoder_fwd.3
$region0: #{img_decoder_fwd.3}
  #allocation0 [shape = 'u32[]', space=smem, size = 0x4, offset = 0x4, fixed_abs, tag = 'smem constant byte address 0x4 - core index']
  #allocation1 [shape = 'u32[144,128]{1,0:T(1,128)}', space=vmem, size = 0x12000, scoped, tag = 'internal scratch']
  %s0 = inlined_call_operand.vmem [shape: f32[2,12,1190], index: 0, kind: input, shape index: {}]
  %s1 = inlined_call_operand.vmem [shape: f32[4,4,3,12], index: 1, kind: input, shape index: {}]
  %s2 = inlined_call_operand.vmem [shape: f32[3,1], index: 2, kind: input, shape index: {}]
  %s3 = inlined_call_operand.vmem [shape: f32[2,4,3,1088], index: 3, kind: output, shape index: {}]
  %s4 = sld [smem:[#allocation0]]
  $region45: #{img_decoder_fwd.3} parent=0
    _
  %s6 = ssub.s32 1, %s4
  %s7 = scalar_select 0, %s6, %s4
  loop: start=0, step=1, limit=4
  $region2: #{img_decoder_fwd.3} parent=0 // loop_pre_header
    _
  $region3: #{img_decoder_fwd.3} parent=0 // loop_header
    %s9 = sphi 0, %s13
    %p10 = scmp.ge.s32.totalorder %s9, 4
    %s19 = sphi 0, %s21
    %s22 = sphi 0, %s19
    %s23 = sphi 0, %s22
    %s39 = sphi 0, %s23
    %s43 = sphi 0, %s43
    %s45 = sphi 0, %s43
    %s46 = sphi 0, %s45
    %s60 = sphi 0, %s46
    %s64 = sphi 0, %s64
    %s66 = sphi 0, %s64
    %s67 = sphi 0, %s66
    %s81 = sphi 0, %s67
    %s87 = sphi 0, %s89
    %s90 = sphi 0, %s87
    %s91 = sphi 0, %s90
    %s107 = sphi 0, %s91
  $region4: #{img_decoder_fwd.3} parent=0 // loop_header_branch
    %12 = sbr.rel (%p10) target = $region8
  $region5: #{img_decoder_fwd.3} parent=0 // loop_body
    %s14 = ssub.s32 %s9, 1
    %s15 = ssub.s32 %s9, 2
    %s16 = sadd.s32 %s9, 1
    %s17 = ssub.s32 %s9, %s16
    %p18 = scmp.eq.s32.totalorder %s17, 0
    %s20 = sadd.s32 %s19, 1
    %s21 = scalar_select %p18, %s19, %s20
    %p24 = pneg %p18
    %p25 = scmp.eq.s32.totalorder %s9, 1
    %p26 = por %p24, %p25
    %p27 = scmp.ne.s32.totalorder %s19, %s22
    %p28 = scmp.eq.s32.totalorder %s9, 0
    %p29 = por %p27, %p28
    %p30 = scmp.ne.s32.totalorder %s19, %s22
    %p31 = scmp.eq.s32.totalorder %s14, 1
    %p32 = por %p30, %p31
    %p33 = scmp.ne.s32.totalorder %s22, %s23
    %p34 = scmp.eq.s32.totalorder %s14, 0
    %p35 = por %p33, %p34
    %p36 = scmp.ne.s32.totalorder %s22, %s23
    %p37 = scmp.eq.s32.totalorder %s15, 1
    %p38 = por %p36, %p37
    %p40 = scmp.ne.s32.totalorder %s23, %s39
    %p41 = scmp.eq.s32.totalorder %s15, 0
    %p42 = por %p40, %p41
    %s44 = sadd.s32 %s43, 1
    %p47 = scmp.eq.s32.totalorder %s9, 1
    %p48 = scmp.ne.s32.totalorder %s43, %s45
    %p49 = scmp.eq.s32.totalorder %s9, 0
    %p50 = por %p48, %p49
    %p51 = scmp.ne.s32.totalorder %s43, %s45
    %p52 = scmp.eq.s32.totalorder %s14, 1
    %p53 = por %p51, %p52
    %p54 = scmp.ne.s32.totalorder %s45, %s46
    %p55 = scmp.eq.s32.totalorder %s14, 0
    %p56 = por %p54, %p55
    %p57 = scmp.ne.s32.totalorder %s45, %s46
    %p58 = scmp.eq.s32.totalorder %s15, 1
    %p59 = por %p57, %p58
    %p61 = scmp.ne.s32.totalorder %s46, %s60
    %p62 = scmp.eq.s32.totalorder %s15, 0
    %p63 = por %p61, %p62
    %s65 = sadd.s32 %s64, 1
    %p68 = scmp.eq.s32.totalorder %s9, 1
    %p69 = scmp.ne.s32.totalorder %s64, %s66
    %p70 = scmp.eq.s32.totalorder %s9, 0
    %p71 = por %p69, %p70
    %p72 = scmp.ne.s32.totalorder %s64, %s66
    %p73 = scmp.eq.s32.totalorder %s14, 1
    %p74 = por %p72, %p73
    %p75 = scmp.ne.s32.totalorder %s66, %s67
    %p76 = scmp.eq.s32.totalorder %s14, 0
    %p77 = por %p75, %p76
    %p78 = scmp.ne.s32.totalorder %s66, %s67
    %p79 = scmp.eq.s32.totalorder %s15, 1
    %p80 = por %p78, %p79
    %p82 = scmp.ne.s32.totalorder %s67, %s81
    %p83 = scmp.eq.s32.totalorder %s15, 0
    %p84 = por %p82, %p83
    %s85 = ssub.s32 %s9, %s16
    %p86 = scmp.eq.s32.totalorder %s85, 0
    %s88 = sadd.s32 %s87, 1
    %s89 = scalar_select %p86, %s87, %s88
    %p92 = pneg %p86
    %p93 = scmp.eq.s32.totalorder %s9, 1
    %p94 = por %p92, %p93
    %p95 = scmp.ne.s32.totalorder %s87, %s90
    %p96 = scmp.eq.s32.totalorder %s9, 0
    %p97 = por %p95, %p96
    %p98 = scmp.ne.s32.totalorder %s87, %s90
    %p99 = scmp.eq.s32.totalorder %s14, 1
    %p100 = por %p98, %p99
    %p101 = scmp.ne.s32.totalorder %s90, %s91
    %p102 = scmp.eq.s32.totalorder %s14, 0
    %p103 = por %p101, %p102
    %p104 = scmp.ne.s32.totalorder %s90, %s91
    %p105 = scmp.eq.s32.totalorder %s15, 1
    %p106 = por %p104, %p105
    %p108 = scmp.ne.s32.totalorder %s91, %s107
    %p109 = scmp.eq.s32.totalorder %s15, 0
    %p110 = por %p108, %p109
    %p111 = scmp.le.s32.totalorder 1, %s9
    %p112 = scmp.lt.s32.totalorder %s9, 3
    %p113 = pnand %p111, %p112
    %p114 = pneg %p113
    // Predicated region
    $region9: #{img_decoder_fwd.3} parent=5 // pred_check
      _
    $region10: #{img_decoder_fwd.3} parent=5 // pred_check_branch
      %116 = sbr.rel (%p113) target = $region12
    $region11: #{img_decoder_fwd.3} parent=5 // pred_region
      %s117 = ssub.s32 %s9, 1
      // Predicated region
      $region13: #{img_decoder_fwd.3} parent=11 // pred_check
        %p118 = pneg %p56
      $region14: #{img_decoder_fwd.3} parent=11 // pred_check_branch
        %120 = sbr.rel (%p118) target = $region16
      $region15: #{img_decoder_fwd.3} parent=11 // pred_region
        _
      $region16: #{img_decoder_fwd.3} parent=11 // pred_fallthru
        _
      // Predicated region
      $region17: #{img_decoder_fwd.3} parent=11 // pred_check
        %p121 = pneg %p77
      $region18: #{img_decoder_fwd.3} parent=11 // pred_check_branch
        %123 = sbr.rel (%p121) target = $region20
      $region19: #{img_decoder_fwd.3} parent=11 // pred_region
        _
      $region20: #{img_decoder_fwd.3} parent=11 // pred_fallthru
        _
    $region12: #{img_decoder_fwd.3} parent=5 // pred_fallthru
      _
    %p124 = scmp.lt.s32.totalorder %s9, 2
    // Predicated region
    $region21: #{img_decoder_fwd.3} parent=5 // pred_check
      %p125 = pneg %p124
    $region22: #{img_decoder_fwd.3} parent=5 // pred_check_branch
      %127 = sbr.rel (%p125) target = $region24
    $region23: #{img_decoder_fwd.3} parent=5 // pred_region
      // Predicated region
      $region25: #{img_decoder_fwd.3} parent=23 // pred_check
        %p128 = pneg %p29
      $region26: #{img_decoder_fwd.3} parent=23 // pred_check_branch
        %130 = sbr.rel (%p128) target = $region28
      $region27: #{img_decoder_fwd.3} parent=23 // pred_region
        %p131 = scmp.lt.s32.totalorder %s9, 1
        %s132 = scalar_select %p131, %s9, 1
        %s133 = smul.addr %s132, 20
        %s134 = smul.addr %s133, 8
        %s135 = scalar_lea.vmem %s0, %s134
      $region28: #{img_decoder_fwd.3} parent=23 // pred_fallthru
        _
    $region24: #{img_decoder_fwd.3} parent=5 // pred_fallthru
      _
    %p136 = scmp.le.s32.totalorder 1, %s9
    %p137 = scmp.lt.s32.totalorder %s9, 3
    %p138 = pnand %p136, %p137
    %p139 = pneg %p138
    // Predicated region
    $region29: #{img_decoder_fwd.3} parent=5 // pred_check
      _
    $region30: #{img_decoder_fwd.3} parent=5 // pred_check_branch
      %141 = sbr.rel (%p138) target = $region32
    $region31: #{img_decoder_fwd.3} parent=5 // pred_region
      %s142 = ssub.s32 %s9, 1
      %p143 = scmp.lt.s32.totalorder %s14, 1
      %s144 = scalar_select %p143, %s14, 1
      %s145 = smul.addr %s144, 20
      %s146 = smul.addr %s145, 8
      %s147 = scalar_lea.vmem %s0, %s146
      %p148 = pneg %p35
      %p149 = pneg %p32
      %p150 = pneg %p56
      %p151 = pneg %p53
      %p152 = pneg %p77
      %p153 = pneg %p74
      %p154 = pneg %p103
      %p155 = pneg %p100
      %p156 = scmp.lt.s32.totalorder %s14, 1
      %s157 = scalar_select %p156, %s14, 1
      %s158 = smul.addr %s157, 36
      %s159 = smul.addr %s158, 4
      %s160 = scalar_lea.vmem %s3, %s159
      %p161 = scmp.lt.s32.totalorder %s14, 1
      %s162 = scalar_select %p161, %s14, 1
      %s163 = smul.addr %s162, 20
      %s164 = smul.addr %s163, 8
      %s165 = scalar_lea.vmem %s0, %s164
      %p166 = scmp.lt.s32.totalorder %s14, 1
      %s167 = scalar_select %p166, %s14, 1
      %s168 = smul.addr %s167, 36
      %s169 = smul.addr %s168, 4
      %s170 = scalar_lea.vmem %s3, %s169
      %v171 = vld [vmem:[%s2] sm:$0x7]
      %173 = vset.pattern.permute.xlu0 0
      %174 = vperm.xlu0 %173, %v171
      %v175 = vpop.permute.xlu0 %174
      %v177 = vld [vmem:[%s165] sm:$0xff]
      %v178 = vld [vmem:[%s165 + $0x8] sm:$0xff]
      %v179 = vld [vmem:[%s165 + $0x10] sm:$0xff]
      %v180 = vld [vmem:[%s165 + $0x18] sm:$0xff]
      %v181 = vld [vmem:[%s165 + $0x20] sm:$0xff]
      %v182 = vld [vmem:[%s165 + $0x28] sm:$0xff]
      %v183 = vld [vmem:[%s165 + $0x30] sm:$0xff]
      %v184 = vld [vmem:[%s165 + $0x38] sm:$0xff]
      %v185 = vld [vmem:[%s165 + $0x40] sm:$0xff]
      %v186 = vld [vmem:[%s165 + $0x50] sm:$0xf]
      %v187 = vld [vmem:[%s165 + $0x58] sm:$0xf]
      %v188 = vld [vmem:[%s165 + $0x60] sm:$0xf]
      %v189 = vld [vmem:[%s165 + $0x68] sm:$0xf]
      %v190 = vld [vmem:[%s165 + $0x70] sm:$0xf]
      %v191 = vld [vmem:[%s165 + $0x78] sm:$0xf]
      %v192 = vld [vmem:[%s165 + $0x80] sm:$0xf]
      %v193 = vld [vmem:[%s165 + $0x88] sm:$0xf]
      %v194 = vld [vmem:[%s165 + $0x90] sm:$0xf]
      %s195 = scalar_lea.vmem %s1, 20
      %v196 = vld [vmem:[%s195] sm:$0x7]
      %215 = vrot.lane.b32.xlu0 %v177, 93
      %v216 = vpop.permute.xlu0 %215
      %217 = vrot.lane.b32.xlu0 %v178, 93
      %v218 = vpop.permute.xlu0 %217
      %219 = vrot.lane.b32.xlu0 %v179, 93
      %v220 = vpop.permute.xlu0 %219
      %221 = vrot.lane.b32.xlu0 %v180, 93
      %v222 = vpop.permute.xlu0 %221
      %223 = vrot.lane.b32.xlu0 %v181, 93
      %v224 = vpop.permute.xlu0 %223
      %225 = vrot.lane.b32.xlu0 %v182, 93
      %v226 = vpop.permute.xlu0 %225
      %227 = vrot.lane.b32.xlu0 %v183, 93
      %v228 = vpop.permute.xlu0 %227
      %229 = vrot.lane.b32.xlu0 %v184, 93
      %v230 = vpop.permute.xlu0 %229
      %231 = vrot.lane.b32.xlu0 %v185, 93
      %v232 = vpop.permute.xlu0 %231
      %233 = vrot.lane.b32.xlu0 %v186, 93
      %v234 = vpop.permute.xlu0 %233
      %235 = vrot.lane.b32.xlu0 %v187, 93
      %v236 = vpop.permute.xlu0 %235
      %237 = vrot.lane.b32.xlu0 %v188, 93
      %v238 = vpop.permute.xlu0 %237
      %239 = vrot.lane.b32.xlu0 %v189, 93
      %v240 = vpop.permute.xlu0 %239
      %241 = vrot.lane.b32.xlu0 %v190, 93
      %v242 = vpop.permute.xlu0 %241
      %243 = vrot.lane.b32.xlu0 %v191, 93
      %v244 = vpop.permute.xlu0 %243
      %245 = vrot.lane.b32.xlu0 %v192, 93
      %v246 = vpop.permute.xlu0 %245
      %247 = vrot.lane.b32.xlu0 %v193, 93
      %v248 = vpop.permute.xlu0 %247
      %249 = vrot.lane.b32.xlu0 %v194, 93
      %v250 = vpop.permute.xlu0 %249
      %vm251 = vcmask 760832
      %v252 = vsel %vm251, %v216, %v218
      %v253 = vsel %vm251, %v218, %v220
      %v254 = vsel %vm251, %v220, %v222
      %v255 = vsel %vm251, %v222, %v224
      %v256 = vsel %vm251, %v224, %v226
      %v257 = vsel %vm251, %v226, %v228
      %v258 = vsel %vm251, %v228, %v230
      %v259 = vsel %vm251, %v230, %v232
      %v260 = vsel %vm251, %v234, %v236
      %v261 = vsel %vm251, %v236, %v238
      %v262 = vsel %vm251, %v238, %v240
      %v263 = vsel %vm251, %v240, %v242
      %v264 = vsel %vm251, %v242, %v244
      %v265 = vsel %vm251, %v244, %v246
      %v266 = vsel %vm251, %v246, %v248
      %v267 = vsel %vm251, %v248, %v250
      %vm277 = vcmask 97280
      %v279 = vsel %vm277, %v196, 0
      %vm281 = vcmask 1043456
      %v282 = vsel %vm281, %v260, 0
      %v284 = vsel %vm281, %v261, 0
      %v286 = vsel %vm281, %v262, 0
      %v288 = vsel %vm281, %v263, 0
      %v290 = vsel %vm281, %v264, 0
      %v292 = vsel %vm281, %v265, 0
      %v294 = vsel %vm281, %v266, 0
      %v296 = vsel %vm281, %v267, 0
      %v298 = vsel %vm281, %v250, 0
      %300 = vmatprep.subr.mxu0 0.0
      %301 = vmatpush1.msra.mxu0 0.0
      %302 = vmatprep.subr.mxu0 0.0
      %303 = vmatpush1.msra.mxu0 0.0
      %304 = vmatprep.subr.mxu0 0.0
      %305 = vmatpush1.msra.mxu0 0.0
      %306 = vmatprep.subr.mxu0 0.0
      %307 = vmatpush1.msra.mxu0 0.0
      %308 = vmatprep.subr.mxu0 0.0
      %309 = vmatpush1.msra.mxu0 0.0
      %310 = vmatprep.subr.mxu0 0.0
      %311 = vmatpush1.msra.mxu0 0.0
      %312 = vmatprep.subr.mxu0 0.0
      %313 = vmatpush1.msra.mxu0 0.0
      %314 = vmatprep.subr.mxu0 0.0
      %315 = vmatpush1.msra.mxu0 0.0
      %316 = vmatprep.subr.mxu0 0.0
      %317 = vmatpush1.msra.mxu0 0.0
      %318 = vmatprep.subr.mxu0 0.0
      %319 = vmatpush1.msra.mxu0 0.0
      %320 = vmatprep.subr.mxu0 0.0
      %321 = vmatpush1.msra.mxu0 0.0
      %322 = vmatprep.subr.mxu0 0.0
      %323 = vmatpush1.msra.mxu0 0.0
      %324 = vmatprep.subr.mxu0 0.0
      %325 = vmatpush1.msra.mxu0 0.0
      %326 = vmatprep.subr.mxu0 0.0
      %327 = vmatpush1.msra.mxu0 0.0
      %328 = vmatprep.subr.mxu0 %v284
      %329 = vmatpush1.msra.mxu0 %v282
      %330 = vmatprep.subr.mxu0 %v253
      %331 = vmatpush1.msra.mxu0 %v252
      %332 = vmatprep.subr.mxu0 0.0
      %333 = vmatpush2.msra.mxu0 0.0
      %334 = vmatprep.subr.mxu0 0.0
      %335 = vmatpush2.msra.mxu0 0.0
      %336 = vmatprep.subr.mxu0 0.0
      %337 = vmatpush2.msra.mxu0 0.0
      %338 = vmatprep.subr.mxu0 0.0
      %339 = vmatpush2.msra.mxu0 0.0
      %340 = vmatprep.subr.mxu0 0.0
      %341 = vmatpush2.msra.mxu0 0.0
      %342 = vmatprep.subr.mxu0 0.0
      %343 = vmatpush2.msra.mxu0 0.0
      %344 = vmatprep.subr.mxu0 0.0
      %345 = vmatpush2.msra.mxu0 0.0
      %346 = vmatprep.subr.mxu0 0.0
      %347 = vmatpush2.msra.mxu0 0.0
      %348 = vmatprep.subr.mxu0 0.0
      %349 = vmatpush2.msra.mxu0 0.0
      %350 = vmatprep.subr.mxu0 0.0
      %351 = vmatpush2.msra.mxu0 0.0
      %352 = vmatprep.subr.mxu0 0.0
      %353 = vmatpush2.msra.mxu0 0.0
      %354 = vmatprep.subr.mxu0 0.0
      %355 = vmatpush2.msra.mxu0 0.0
      %356 = vmatprep.subr.mxu0 0.0
      %357 = vmatpush2.msra.mxu0 0.0
      %358 = vmatprep.subr.mxu0 0.0
      %359 = vmatpush2.msra.mxu0 0.0
      %360 = vmatprep.subr.mxu0 0.0
      %361 = vmatpush2.msra.mxu0 0.0
      %362 = vmatprep.subr.mxu0 0.0
      %363 = vmatpush2.msra.mxu0 0.0
      %364 = vmatprep.mubr.f32.mxu0 0.0
      %365 = vmatmul.mubr.f32.gmra.mxu0 %v279
      %v366 = vpop.f32.mrf.mxu0
      %v367 = vadd.f32 0.0, %v366
      %v368 = vpop.f32.mrf.mxu0
      %v369 = vadd.f32 0.0, %v368
      %370 = vdwg.mxu0
      %371 = vmatprep.subr.mxu0 0.0
      %372 = vmatpush1.msra.mxu0 0.0
      %373 = vmatprep.subr.mxu0 0.0
      %374 = vmatpush1.msra.mxu0 0.0
      %375 = vmatprep.subr.mxu0 0.0
      %376 = vmatpush1.msra.mxu0 0.0
      %377 = vmatprep.subr.mxu0 0.0
      %378 = vmatpush1.msra.mxu0 0.0
      %379 = vmatprep.subr.mxu0 0.0
      %380 = vmatpush1.msra.mxu0 0.0
      %381 = vmatprep.subr.mxu0 0.0
      %382 = vmatpush1.msra.mxu0 0.0
      %383 = vmatprep.subr.mxu0 0.0
      %384 = vmatpush1.msra.mxu0 0.0
      %385 = vmatprep.subr.mxu0 0.0
      %386 = vmatpush1.msra.mxu0 0.0
      %387 = vmatprep.subr.mxu0 0.0
      %388 = vmatpush1.msra.mxu0 0.0
      %389 = vmatprep.subr.mxu0 0.0
      %390 = vmatpush1.msra.mxu0 0.0
      %391 = vmatprep.subr.mxu0 0.0
      %392 = vmatpush1.msra.mxu0 0.0
      %393 = vmatprep.subr.mxu0 0.0
      %394 = vmatpush1.msra.mxu0 0.0
      %395 = vmatprep.subr.mxu0 0.0
      %396 = vmatpush1.msra.mxu0 0.0
      %397 = vmatprep.subr.mxu0 0.0
      %398 = vmatpush1.msra.mxu0 0.0
      %399 = vmatprep.subr.mxu0 %v288
      %400 = vmatpush1.msra.mxu0 %v286
      %401 = vmatprep.subr.mxu0 %v255
      %402 = vmatpush1.msra.mxu0 %v254
      %403 = vmatprep.subr.mxu0 0.0
      %404 = vmatpush2.msra.mxu0 0.0
      %405 = vmatprep.subr.mxu0 0.0
      %406 = vmatpush2.msra.mxu0 0.0
      %407 = vmatprep.subr.mxu0 0.0
      %408 = vmatpush2.msra.mxu0 0.0
      %409 = vmatprep.subr.mxu0 0.0
      %410 = vmatpush2.msra.mxu0 0.0
      %411 = vmatprep.subr.mxu0 0.0
      %412 = vmatpush2.msra.mxu0 0.0
      %413 = vmatprep.subr.mxu0 0.0
      %414 = vmatpush2.msra.mxu0 0.0
      %415 = vmatprep.subr.mxu0 0.0
      %416 = vmatpush2.msra.mxu0 0.0
      %417 = vmatprep.subr.mxu0 0.0
      %418 = vmatpush2.msra.mxu0 0.0
      %419 = vmatprep.subr.mxu0 0.0
      %420 = vmatpush2.msra.mxu0 0.0
      %421 = vmatprep.subr.mxu0 0.0
      %422 = vmatpush2.msra.mxu0 0.0
      %423 = vmatprep.subr.mxu0 0.0
      %424 = vmatpush2.msra.mxu0 0.0
      %425 = vmatprep.subr.mxu0 0.0
      %426 = vmatpush2.msra.mxu0 0.0
      %427 = vmatprep.subr.mxu0 0.0
      %428 = vmatpush2.msra.mxu0 0.0
      %429 = vmatprep.subr.mxu0 0.0
      %430 = vmatpush2.msra.mxu0 0.0
      %431 = vmatprep.subr.mxu0 0.0
      %432 = vmatpush2.msra.mxu0 0.0
      %433 = vmatprep.subr.mxu0 0.0
      %434 = vmatpush2.msra.mxu0 0.0
      %435 = vmatprep.mubr.f32.mxu0 0.0
      %436 = vmatmul.mubr.f32.gmra.mxu0 %v279
      %v437 = vpop.f32.mrf.mxu0
      %v438 = vadd.f32 0.0, %v437
      %v439 = vpop.f32.mrf.mxu0
      %v440 = vadd.f32 0.0, %v439
      %441 = vdwg.mxu0
      %442 = vmatprep.subr.mxu0 0.0
      %443 = vmatpush1.msra.mxu0 0.0
      %444 = vmatprep.subr.mxu0 0.0
      %445 = vmatpush1.msra.mxu0 0.0
      %446 = vmatprep.subr.mxu0 0.0
      %447 = vmatpush1.msra.mxu0 0.0
      %448 = vmatprep.subr.mxu0 0.0
      %449 = vmatpush1.msra.mxu0 0.0
      %450 = vmatprep.subr.mxu0 0.0
      %451 = vmatpush1.msra.mxu0 0.0
      %452 = vmatprep.subr.mxu0 0.0
      %453 = vmatpush1.msra.mxu0 0.0
      %454 = vmatprep.subr.mxu0 0.0
      %455 = vmatpush1.msra.mxu0 0.0
      %456 = vmatprep.subr.mxu0 0.0
      %457 = vmatpush1.msra.mxu0 0.0
      %458 = vmatprep.subr.mxu0 0.0
      %459 = vmatpush1.msra.mxu0 0.0
      %460 = vmatprep.subr.mxu0 0.0
      %461 = vmatpush1.msra.mxu0 0.0
      %462 = vmatprep.subr.mxu0 0.0
      %463 = vmatpush1.msra.mxu0 0.0
      %464 = vmatprep.subr.mxu0 0.0
      %465 = vmatpush1.msra.mxu0 0.0
      %466 = vmatprep.subr.mxu0 0.0
      %467 = vmatpush1.msra.mxu0 0.0
      %468 = vmatprep.subr.mxu0 0.0
      %469 = vmatpush1.msra.mxu0 0.0
      %470 = vmatprep.subr.mxu0 %v292
      %471 = vmatpush1.msra.mxu0 %v290
      %472 = vmatprep.subr.mxu0 %v257
      %473 = vmatpush1.msra.mxu0 %v256
      %474 = vmatprep.subr.mxu0 0.0
      %475 = vmatpush2.msra.mxu0 0.0
      %476 = vmatprep.subr.mxu0 0.0
      %477 = vmatpush2.msra.mxu0 0.0
      %478 = vmatprep.subr.mxu0 0.0
      %479 = vmatpush2.msra.mxu0 0.0
      %480 = vmatprep.subr.mxu0 0.0
      %481 = vmatpush2.msra.mxu0 0.0
      %482 = vmatprep.subr.mxu0 0.0
      %483 = vmatpush2.msra.mxu0 0.0
      %484 = vmatprep.subr.mxu0 0.0
      %485 = vmatpush2.msra.mxu0 0.0
      %486 = vmatprep.subr.mxu0 0.0
      %487 = vmatpush2.msra.mxu0 0.0
      %488 = vmatprep.subr.mxu0 0.0
      %489 = vmatpush2.msra.mxu0 0.0
      %490 = vmatprep.subr.mxu0 0.0
      %491 = vmatpush2.msra.mxu0 0.0
      %492 = vmatprep.subr.mxu0 0.0
      %493 = vmatpush2.msra.mxu0 0.0
      %494 = vmatprep.subr.mxu0 0.0
      %495 = vmatpush2.msra.mxu0 0.0
      %496 = vmatprep.subr.mxu0 0.0
      %497 = vmatpush2.msra.mxu0 0.0
      %498 = vmatprep.subr.mxu0 0.0
      %499 = vmatpush2.msra.mxu0 0.0
      %500 = vmatprep.subr.mxu0 0.0
      %501 = vmatpush2.msra.mxu0 0.0
      %502 = vmatprep.subr.mxu0 0.0
      %503 = vmatpush2.msra.mxu0 0.0
      %504 = vmatprep.subr.mxu0 0.0
      %505 = vmatpush2.msra.mxu0 0.0
      %506 = vmatprep.mubr.f32.mxu0 0.0
      %507 = vmatmul.mubr.f32.gmra.mxu0 %v279
      %v508 = vpop.f32.mrf.mxu0
      %v509 = vadd.f32 0.0, %v508
      %v510 = vpop.f32.mrf.mxu0
      %v511 = vadd.f32 0.0, %v510
      %512 = vdwg.mxu0
      %513 = vmatprep.subr.mxu0 0.0
      %514 = vmatpush1.msra.mxu0 0.0
      %515 = vmatprep.subr.mxu0 0.0
      %516 = vmatpush1.msra.mxu0 0.0
      %517 = vmatprep.subr.mxu0 0.0
      %518 = vmatpush1.msra.mxu0 0.0
      %519 = vmatprep.subr.mxu0 0.0
      %520 = vmatpush1.msra.mxu0 0.0
      %521 = vmatprep.subr.mxu0 0.0
      %522 = vmatpush1.msra.mxu0 0.0
      %523 = vmatprep.subr.mxu0 0.0
      %524 = vmatpush1.msra.mxu0 0.0
      %525 = vmatprep.subr.mxu0 0.0
      %526 = vmatpush1.msra.mxu0 0.0
      %527 = vmatprep.subr.mxu0 0.0
      %528 = vmatpush1.msra.mxu0 0.0
      %529 = vmatprep.subr.mxu0 0.0
      %530 = vmatpush1.msra.mxu0 0.0
      %531 = vmatprep.subr.mxu0 0.0
      %532 = vmatpush1.msra.mxu0 0.0
      %533 = vmatprep.subr.mxu0 0.0
      %534 = vmatpush1.msra.mxu0 0.0
      %535 = vmatprep.subr.mxu0 0.0
      %536 = vmatpush1.msra.mxu0 0.0
      %537 = vmatprep.subr.mxu0 0.0
      %538 = vmatpush1.msra.mxu0 0.0
      %539 = vmatprep.subr.mxu0 0.0
      %540 = vmatpush1.msra.mxu0 0.0
      %541 = vmatprep.subr.mxu0 %v296
      %542 = vmatpush1.msra.mxu0 %v294
      %543 = vmatprep.subr.mxu0 %v259
      %544 = vmatpush1.msra.mxu0 %v258
      %545 = vmatprep.subr.mxu0 0.0
      %546 = vmatpush2.msra.mxu0 0.0
      %547 = vmatprep.subr.mxu0 0.0
      %548 = vmatpush2.msra.mxu0 0.0
      %549 = vmatprep.subr.mxu0 0.0
      %550 = vmatpush2.msra.mxu0 0.0
      %551 = vmatprep.subr.mxu0 0.0
      %552 = vmatpush2.msra.mxu0 0.0
      %553 = vmatprep.subr.mxu0 0.0
      %554 = vmatpush2.msra.mxu0 0.0
      %555 = vmatprep.subr.mxu0 0.0
      %556 = vmatpush2.msra.mxu0 0.0
      %557 = vmatprep.subr.mxu0 0.0
      %558 = vmatpush2.msra.mxu0 0.0
      %559 = vmatprep.subr.mxu0 0.0
      %560 = vmatpush2.msra.mxu0 0.0
      %561 = vmatprep.subr.mxu0 0.0
      %562 = vmatpush2.msra.mxu0 0.0
      %563 = vmatprep.subr.mxu0 0.0
      %564 = vmatpush2.msra.mxu0 0.0
      %565 = vmatprep.subr.mxu0 0.0
      %566 = vmatpush2.msra.mxu0 0.0
      %567 = vmatprep.subr.mxu0 0.0
      %568 = vmatpush2.msra.mxu0 0.0
      %569 = vmatprep.subr.mxu0 0.0
      %570 = vmatpush2.msra.mxu0 0.0
      %571 = vmatprep.subr.mxu0 0.0
      %572 = vmatpush2.msra.mxu0 0.0
      %573 = vmatprep.subr.mxu0 0.0
      %574 = vmatpush2.msra.mxu0 0.0
      %575 = vmatprep.subr.mxu0 0.0
      %576 = vmatpush2.msra.mxu0 0.0
      %577 = vmatprep.mubr.f32.mxu0 0.0
      %578 = vmatmul.mubr.f32.gmra.mxu0 %v279
      %v579 = vpop.f32.mrf.mxu0
      %v580 = vadd.f32 0.0, %v579
      %v581 = vpop.f32.mrf.mxu0
      %v582 = vadd.f32 0.0, %v581
      %583 = vdwg.mxu0
      %584 = vmatprep.subr.mxu0 0.0
      %585 = vmatpush1.msra.mxu0 0.0
      %586 = vmatprep.subr.mxu0 0.0
      %587 = vmatpush1.msra.mxu0 0.0
      %588 = vmatprep.subr.mxu0 0.0
      %589 = vmatpush1.msra.mxu0 0.0
      %590 = vmatprep.subr.mxu0 0.0
      %591 = vmatpush1.msra.mxu0 0.0
      %592 = vmatprep.subr.mxu0 0.0
      %593 = vmatpush1.msra.mxu0 0.0
      %594 = vmatprep.subr.mxu0 0.0
      %595 = vmatpush1.msra.mxu0 0.0
      %596 = vmatprep.subr.mxu0 0.0
      %597 = vmatpush1.msra.mxu0 0.0
      %598 = vmatprep.subr.mxu0 0.0
      %599 = vmatpush1.msra.mxu0 0.0
      %600 = vmatprep.subr.mxu0 0.0
      %601 = vmatpush1.msra.mxu0 0.0
      %602 = vmatprep.subr.mxu0 0.0
      %603 = vmatpush1.msra.mxu0 0.0
      %604 = vmatprep.subr.mxu0 0.0
      %605 = vmatpush1.msra.mxu0 0.0
      %606 = vmatprep.subr.mxu0 0.0
      %607 = vmatpush1.msra.mxu0 0.0
      %608 = vmatprep.subr.mxu0 0.0
      %609 = vmatpush1.msra.mxu0 0.0
      %610 = vmatprep.subr.mxu0 0.0
      %611 = vmatpush1.msra.mxu0 0.0
      %612 = vmatprep.subr.mxu0 0.0
      %613 = vmatpush1.msra.mxu0 %v298
      %614 = vmatprep.subr.mxu0 0.0
      %615 = vmatpush1.msra.mxu0 %v232
      %616 = vmatprep.subr.mxu0 0.0
      %617 = vmatpush2.msra.mxu0 0.0
      %618 = vmatprep.subr.mxu0 0.0
      %619 = vmatpush2.msra.mxu0 0.0
      %620 = vmatprep.subr.mxu0 0.0
      %621 = vmatpush2.msra.mxu0 0.0
      %622 = vmatprep.subr.mxu0 0.0
      %623 = vmatpush2.msra.mxu0 0.0
      %624 = vmatprep.subr.mxu0 0.0
      %625 = vmatpush2.msra.mxu0 0.0
      %626 = vmatprep.subr.mxu0 0.0
      %627 = vmatpush2.msra.mxu0 0.0
      %628 = vmatprep.subr.mxu0 0.0
      %629 = vmatpush2.msra.mxu0 0.0
      %630 = vmatprep.subr.mxu0 0.0
      %631 = vmatpush2.msra.mxu0 0.0
      %632 = vmatprep.subr.mxu0 0.0
      %633 = vmatpush2.msra.mxu0 0.0
      %634 = vmatprep.subr.mxu0 0.0
      %635 = vmatpush2.msra.mxu0 0.0
      %636 = vmatprep.subr.mxu0 0.0
      %637 = vmatpush2.msra.mxu0 0.0
      %638 = vmatprep.subr.mxu0 0.0
      %639 = vmatpush2.msra.mxu0 0.0
      %640 = vmatprep.subr.mxu0 0.0
      %641 = vmatpush2.msra.mxu0 0.0
      %642 = vmatprep.subr.mxu0 0.0
      %643 = vmatpush2.msra.mxu0 0.0
      %644 = vmatprep.subr.mxu0 0.0
      %645 = vmatpush2.msra.mxu0 0.0
      %646 = vmatprep.subr.mxu0 0.0
      %647 = vmatpush2.msra.mxu0 0.0
      %648 = vmatprep.mubr.f32.mxu0 0.0
      %649 = vmatmul.mubr.f32.gmra.mxu0 %v279
      %v650 = vpop.f32.mrf.mxu0
      %v651 = vadd.f32 0.0, %v650
      %v652 = vpop.f32.mrf.mxu0
      %653 = vdwg.mxu0
      %v654 = vadd.f32 %v175, %v367
      %v655 = vadd.f32 %v175, %v369
      %v656 = vadd.f32 %v175, %v438
      %v657 = vadd.f32 %v175, %v440
      %v658 = vadd.f32 %v175, %v509
      %v659 = vadd.f32 %v175, %v511
      %v660 = vadd.f32 %v175, %v580
      %v661 = vadd.f32 %v175, %v582
      %v662 = vadd.f32 %v175, %v651
      %s663 = scalar_lea.vmem %s1, 28
      %v664 = vld [vmem:[%s663] sm:$0x7]
      %665 = vrot.lane.b32.xlu0 %v177, 94
      %v666 = vpop.permute.xlu0 %665
      %667 = vrot.lane.b32.xlu0 %v178, 94
      %v668 = vpop.permute.xlu0 %667
      %669 = vrot.lane.b32.xlu0 %v179, 94
      %v670 = vpop.permute.xlu0 %669
      %671 = vrot.lane.b32.xlu0 %v180, 94
      %v672 = vpop.permute.xlu0 %671
      %673 = vrot.lane.b32.xlu0 %v181, 94
      %v674 = vpop.permute.xlu0 %673
      %675 = vrot.lane.b32.xlu0 %v182, 94
      %v676 = vpop.permute.xlu0 %675
      %677 = vrot.lane.b32.xlu0 %v183, 94
      %v678 = vpop.permute.xlu0 %677
      %679 = vrot.lane.b32.xlu0 %v184, 94
      %v680 = vpop.permute.xlu0 %679
      %681 = vrot.lane.b32.xlu0 %v185, 94
      %v682 = vpop.permute.xlu0 %681
      %683 = vrot.lane.b32.xlu0 %v186, 94
      %v684 = vpop.permute.xlu0 %683
      %685 = vrot.lane.b32.xlu0 %v187, 94
      %v686 = vpop.permute.xlu0 %685
      %687 = vrot.lane.b32.xlu0 %v188, 94
      %v688 = vpop.permute.xlu0 %687
      %689 = vrot.lane.b32.xlu0 %v189, 94
      %v690 = vpop.permute.xlu0 %689
      %691 = vrot.lane.b32.xlu0 %v190, 94
      %v692 = vpop.permute.xlu0 %691
      %693 = vrot.lane.b32.xlu0 %v191, 94
      %v694 = vpop.permute.xlu0 %693
      %695 = vrot.lane.b32.xlu0 %v192, 94
      %v696 = vpop.permute.xlu0 %695
      %697 = vrot.lane.b32.xlu0 %v193, 94
      %v698 = vpop.permute.xlu0 %697
      %699 = vrot.lane.b32.xlu0 %v194, 94
      %v700 = vpop.permute.xlu0 %699
      %vm701 = vcmask 769024
      %v702 = vsel %vm701, %v666, %v668
      %v703 = vsel %vm701, %v668, %v670
      %v704 = vsel %vm701, %v670, %v672
      %v705 = vsel %vm701, %v672, %v674
      %v706 = vsel %vm701, %v674, %v676
      %v707 = vsel %vm701, %v676, %v678
      %v708 = vsel %vm701, %v678, %v680
      %v709 = vsel %vm701, %v680, %v682
      %v710 = vsel %vm701, %v684, %v686
      %v711 = vsel %vm701, %v686, %v688
      %v712 = vsel %vm701, %v688, %v690
      %v713 = vsel %vm701, %v690, %v692
      %v714 = vsel %vm701, %v692, %v694
      %v715 = vsel %vm701, %v694, %v696
      %v716 = vsel %vm701, %v696, %v698
      %v717 = vsel %vm701, %v698, %v700
      %v728 = vsel %vm277, %v664, 0
      %v730 = vsel %vm281, %v710, 0
      %v732 = vsel %vm281, %v711, 0
      %v734 = vsel %vm281, %v712, 0
      %v736 = vsel %vm281, %v713, 0
      %v738 = vsel %vm281, %v714, 0
      %v740 = vsel %vm281, %v715, 0
      %v742 = vsel %vm281, %v716, 0
      %v744 = vsel %vm281, %v717, 0
      %v746 = vsel %vm281, %v700, 0
      %748 = vmatprep.subr.mxu0 0.0
      %749 = vmatpush1.msra.mxu0 0.0
      %750 = vmatprep.subr.mxu0 0.0
      %751 = vmatpush1.msra.mxu0 0.0
      %752 = vmatprep.subr.mxu0 0.0
      %753 = vmatpush1.msra.mxu0 0.0
      %754 = vmatprep.subr.mxu0 0.0
      %755 = vmatpush1.msra.mxu0 0.0
      %756 = vmatprep.subr.mxu0 0.0
      %757 = vmatpush1.msra.mxu0 0.0
      %758 = vmatprep.subr.mxu0 0.0
      %759 = vmatpush1.msra.mxu0 0.0
      %760 = vmatprep.subr.mxu0 0.0
      %761 = vmatpush1.msra.mxu0 0.0
      %762 = vmatprep.subr.mxu0 0.0
      %763 = vmatpush1.msra.mxu0 0.0
      %764 = vmatprep.subr.mxu0 0.0
      %765 = vmatpush1.msra.mxu0 0.0
      %766 = vmatprep.subr.mxu0 0.0
      %767 = vmatpush1.msra.mxu0 0.0
      %768 = vmatprep.subr.mxu0 0.0
      %769 = vmatpush1.msra.mxu0 0.0
      %770 = vmatprep.subr.mxu0 0.0
      %771 = vmatpush1.msra.mxu0 0.0
      %772 = vmatprep.subr.mxu0 0.0
      %773 = vmatpush1.msra.mxu0 0.0
      %774 = vmatprep.subr.mxu0 0.0
      %775 = vmatpush1.msra.mxu0 0.0
      %776 = vmatprep.subr.mxu0 %v732
      %777 = vmatpush1.msra.mxu0 %v730
      %778 = vmatprep.subr.mxu0 %v703
      %779 = vmatpush1.msra.mxu0 %v702
      %780 = vmatprep.subr.mxu0 0.0
      %781 = vmatpush2.msra.mxu0 0.0
      %782 = vmatprep.subr.mxu0 0.0
      %783 = vmatpush2.msra.mxu0 0.0
      %784 = vmatprep.subr.mxu0 0.0
      %785 = vmatpush2.msra.mxu0 0.0
      %786 = vmatprep.subr.mxu0 0.0
      %787 = vmatpush2.msra.mxu0 0.0
      %788 = vmatprep.subr.mxu0 0.0
      %789 = vmatpush2.msra.mxu0 0.0
      %790 = vmatprep.subr.mxu0 0.0
      %791 = vmatpush2.msra.mxu0 0.0
      %792 = vmatprep.subr.mxu0 0.0
      %793 = vmatpush2.msra.mxu0 0.0
      %794 = vmatprep.subr.mxu0 0.0
      %795 = vmatpush2.msra.mxu0 0.0
      %796 = vmatprep.subr.mxu0 0.0
      %797 = vmatpush2.msra.mxu0 0.0
      %798 = vmatprep.subr.mxu0 0.0
      %799 = vmatpush2.msra.mxu0 0.0
      %800 = vmatprep.subr.mxu0 0.0
      %801 = vmatpush2.msra.mxu0 0.0
      %802 = vmatprep.subr.mxu0 0.0
      %803 = vmatpush2.msra.mxu0 0.0
      %804 = vmatprep.subr.mxu0 0.0
      %805 = vmatpush2.msra.mxu0 0.0
      %806 = vmatprep.subr.mxu0 0.0
      %807 = vmatpush2.msra.mxu0 0.0
      %808 = vmatprep.subr.mxu0 0.0
      %809 = vmatpush2.msra.mxu0 0.0
      %810 = vmatprep.subr.mxu0 0.0
      %811 = vmatpush2.msra.mxu0 0.0
      %812 = vmatprep.mubr.f32.mxu0 0.0
      %813 = vmatmul.mubr.f32.gmra.mxu0 %v728
      %v814 = vpop.f32.mrf.mxu0
      %v815 = vadd.f32 0.0, %v814
      %v816 = vpop.f32.mrf.mxu0
      %v817 = vadd.f32 0.0, %v816
      %818 = vdwg.mxu0
      %819 = vmatprep.subr.mxu0 0.0
      %820 = vmatpush1.msra.mxu0 0.0
      %821 = vmatprep.subr.mxu0 0.0
      %822 = vmatpush1.msra.mxu0 0.0
      %823 = vmatprep.subr.mxu0 0.0
      %824 = vmatpush1.msra.mxu0 0.0
      %825 = vmatprep.subr.mxu0 0.0
      %826 = vmatpush1.msra.mxu0 0.0
      %827 = vmatprep.subr.mxu0 0.0
      %828 = vmatpush1.msra.mxu0 0.0
      %829 = vmatprep.subr.mxu0 0.0
      %830 = vmatpush1.msra.mxu0 0.0
      %831 = vmatprep.subr.mxu0 0.0
      %832 = vmatpush1.msra.mxu0 0.0
      %833 = vmatprep.subr.mxu0 0.0
      %834 = vmatpush1.msra.mxu0 0.0
      %835 = vmatprep.subr.mxu0 0.0
      %836 = vmatpush1.msra.mxu0 0.0
      %837 = vmatprep.subr.mxu0 0.0
      %838 = vmatpush1.msra.mxu0 0.0
      %839 = vmatprep.subr.mxu0 0.0
      %840 = vmatpush1.msra.mxu0 0.0
      %841 = vmatprep.subr.mxu0 0.0
      %842 = vmatpush1.msra.mxu0 0.0
      %843 = vmatprep.subr.mxu0 0.0
      %844 = vmatpush1.msra.mxu0 0.0
      %845 = vmatprep.subr.mxu0 0.0
      %846 = vmatpush1.msra.mxu0 0.0
      %847 = vmatprep.subr.mxu0 %v736
      %848 = vmatpush1.msra.mxu0 %v734
      %849 = vmatprep.subr.mxu0 %v705
      %850 = vmatpush1.msra.mxu0 %v704
      %851 = vmatprep.subr.mxu0 0.0
      %852 = vmatpush2.msra.mxu0 0.0
      %853 = vmatprep.subr.mxu0 0.0
      %854 = vmatpush2.msra.mxu0 0.0
      %855 = vmatprep.subr.mxu0 0.0
      %856 = vmatpush2.msra.mxu0 0.0
      %857 = vmatprep.subr.mxu0 0.0
      %858 = vmatpush2.msra.mxu0 0.0
      %859 = vmatprep.subr.mxu0 0.0
      %860 = vmatpush2.msra.mxu0 0.0
      %861 = vmatprep.subr.mxu0 0.0
      %862 = vmatpush2.msra.mxu0 0.0
      %863 = vmatprep.subr.mxu0 0.0
      %864 = vmatpush2.msra.mxu0 0.0
      %865 = vmatprep.subr.mxu0 0.0
      %866 = vmatpush2.msra.mxu0 0.0
      %867 = vmatprep.subr.mxu0 0.0
      %868 = vmatpush2.msra.mxu0 0.0
      %869 = vmatprep.subr.mxu0 0.0
      %870 = vmatpush2.msra.mxu0 0.0
      %871 = vmatprep.subr.mxu0 0.0
      %872 = vmatpush2.msra.mxu0 0.0
      %873 = vmatprep.subr.mxu0 0.0
      %874 = vmatpush2.msra.mxu0 0.0
      %875 = vmatprep.subr.mxu0 0.0
      %876 = vmatpush2.msra.mxu0 0.0
      %877 = vmatprep.subr.mxu0 0.0
      %878 = vmatpush2.msra.mxu0 0.0
      %879 = vmatprep.subr.mxu0 0.0
      %880 = vmatpush2.msra.mxu0 0.0
      %881 = vmatprep.subr.mxu0 0.0
      %882 = vmatpush2.msra.mxu0 0.0
      %883 = vmatprep.mubr.f32.mxu0 0.0
      %884 = vmatmul.mubr.f32.gmra.mxu0 %v728
      %v885 = vpop.f32.mrf.mxu0
      %v886 = vadd.f32 0.0, %v885
      %v887 = vpop.f32.mrf.mxu0
      %v888 = vadd.f32 0.0, %v887
      %889 = vdwg.mxu0
      %890 = vmatprep.subr.mxu0 0.0
      %891 = vmatpush1.msra.mxu0 0.0
      %892 = vmatprep.subr.mxu0 0.0
      %893 = vmatpush1.msra.mxu0 0.0
      %894 = vmatprep.subr.mxu0 0.0
      %895 = vmatpush1.msra.mxu0 0.0
      %896 = vmatprep.subr.mxu0 0.0
      %897 = vmatpush1.msra.mxu0 0.0
      %898 = vmatprep.subr.mxu0 0.0
      %899 = vmatpush1.msra.mxu0 0.0
      %900 = vmatprep.subr.mxu0 0.0
      %901 = vmatpush1.msra.mxu0 0.0
      %902 = vmatprep.subr.mxu0 0.0
      %903 = vmatpush1.msra.mxu0 0.0
      %904 = vmatprep.subr.mxu0 0.0
      %905 = vmatpush1.msra.mxu0 0.0
      %906 = vmatprep.subr.mxu0 0.0
      %907 = vmatpush1.msra.mxu0 0.0
      %908 = vmatprep.subr.mxu0 0.0
      %909 = vmatpush1.msra.mxu0 0.0
      %910 = vmatprep.subr.mxu0 0.0
      %911 = vmatpush1.msra.mxu0 0.0
      %912 = vmatprep.subr.mxu0 0.0
      %913 = vmatpush1.msra.mxu0 0.0
      %914 = vmatprep.subr.mxu0 0.0
      %915 = vmatpush1.msra.mxu0 0.0
      %916 = vmatprep.subr.mxu0 0.0
      %917 = vmatpush1.msra.mxu0 0.0
      %918 = vmatprep.subr.mxu0 %v740
      %919 = vmatpush1.msra.mxu0 %v738
      %920 = vmatprep.subr.mxu0 %v707
      %921 = vmatpush1.msra.mxu0 %v706
      %922 = vmatprep.subr.mxu0 0.0
      %923 = vmatpush2.msra.mxu0 0.0
      %924 = vmatprep.subr.mxu0 0.0
      %925 = vmatpush2.msra.mxu0 0.0
      %926 = vmatprep.subr.mxu0 0.0
      %927 = vmatpush2.msra.mxu0 0.0
      %928 = vmatprep.subr.mxu0 0.0
      %929 = vmatpush2.msra.mxu0 0.0
      %930 = vmatprep.subr.mxu0 0.0
      %931 = vmatpush2.msra.mxu0 0.0
      %932 = vmatprep.subr.mxu0 0.0
      %933 = vmatpush2.msra.mxu0 0.0
      %934 = vmatprep.subr.mxu0 0.0
      %935 = vmatpush2.msra.mxu0 0.0
      %936 = vmatprep.subr.mxu0 0.0
      %937 = vmatpush2.msra.mxu0 0.0
      %938 = vmatprep.subr.mxu0 0.0
      %939 = vmatpush2.msra.mxu0 0.0
      %940 = vmatprep.subr.mxu0 0.0
      %941 = vmatpush2.msra.mxu0 0.0
      %942 = vmatprep.subr.mxu0 0.0
      %943 = vmatpush2.msra.mxu0 0.0
      %944 = vmatprep.subr.mxu0 0.0
      %945 = vmatpush2.msra.mxu0 0.0
      %946 = vmatprep.subr.mxu0 0.0
      %947 = vmatpush2.msra.mxu0 0.0
      %948 = vmatprep.subr.mxu0 0.0
      %949 = vmatpush2.msra.mxu0 0.0
      %950 = vmatprep.subr.mxu0 0.0
      %951 = vmatpush2.msra.mxu0 0.0
      %952 = vmatprep.subr.mxu0 0.0
      %953 = vmatpush2.msra.mxu0 0.0
      %954 = vmatprep.mubr.f32.mxu0 0.0
      %955 = vmatmul.mubr.f32.gmra.mxu0 %v728
      %v956 = vpop.f32.mrf.mxu0
      %v957 = vadd.f32 0.0, %v956
      %v958 = vpop.f32.mrf.mxu0
      %v959 = vadd.f32 0.0, %v958
      %960 = vdwg.mxu0
      %961 = vmatprep.subr.mxu0 0.0
      %962 = vmatpush1.msra.mxu0 0.0
      %963 = vmatprep.subr.mxu0 0.0
      %964 = vmatpush1.msra.mxu0 0.0
      %965 = vmatprep.subr.mxu0 0.0
      %966 = vmatpush1.msra.mxu0 0.0
      %967 = vmatprep.subr.mxu0 0.0
      %968 = vmatpush1.msra.mxu0 0.0
      %969 = vmatprep.subr.mxu0 0.0
      %970 = vmatpush1.msra.mxu0 0.0
      %971 = vmatprep.subr.mxu0 0.0
      %972 = vmatpush1.msra.mxu0 0.0
      %973 = vmatprep.subr.mxu0 0.0
      %974 = vmatpush1.msra.mxu0 0.0
      %975 = vmatprep.subr.mxu0 0.0
      %976 = vmatpush1.msra.mxu0 0.0
      %977 = vmatprep.subr.mxu0 0.0
      %978 = vmatpush1.msra.mxu0 0.0
      %979 = vmatprep.subr.mxu0 0.0
      %980 = vmatpush1.msra.mxu0 0.0
      %981 = vmatprep.subr.mxu0 0.0
      %982 = vmatpush1.msra.mxu0 0.0
      %983 = vmatprep.subr.mxu0 0.0
      %984 = vmatpush1.msra.mxu0 0.0
      %985 = vmatprep.subr.mxu0 0.0
      %986 = vmatpush1.msra.mxu0 0.0
      %987 = vmatprep.subr.mxu0 0.0
      %988 = vmatpush1.msra.mxu0 0.0
      %989 = vmatprep.subr.mxu0 %v744
      %990 = vmatpush1.msra.mxu0 %v742
      %991 = vmatprep.subr.mxu0 %v709
      %992 = vmatpush1.msra.mxu0 %v708
      %993 = vmatprep.subr.mxu0 0.0
      %994 = vmatpush2.msra.mxu0 0.0
      %995 = vmatprep.subr.mxu0 0.0
      %996 = vmatpush2.msra.mxu0 0.0
      %997 = vmatprep.subr.mxu0 0.0
      %998 = vmatpush2.msra.mxu0 0.0
      %999 = vmatprep.subr.mxu0 0.0
      %1000 = vmatpush2.msra.mxu0 0.0
      %1001 = vmatprep.subr.mxu0 0.0
      %1002 = vmatpush2.msra.mxu0 0.0
      %1003 = vmatprep.subr.mxu0 0.0
      %1004 = vmatpush2.msra.mxu0 0.0
      %1005 = vmatprep.subr.mxu0 0.0
      %1006 = vmatpush2.msra.mxu0 0.0
      %1007 = vmatprep.subr.mxu0 0.0
      %1008 = vmatpush2.msra.mxu0 0.0
      %1009 = vmatprep.subr.mxu0 0.0
      %1010 = vmatpush2.msra.mxu0 0.0
      %1011 = vmatprep.subr.mxu0 0.0
      %1012 = vmatpush2.msra.mxu0 0.0
      %1013 = vmatprep.subr.mxu0 0.0
      %1014 = vmatpush2.msra.mxu0 0.0
      %1015 = vmatprep.subr.mxu0 0.0
      %1016 = vmatpush2.msra.mxu0 0.0
      %1017 = vmatprep.subr.mxu0 0.0
      %1018 = vmatpush2.msra.mxu0 0.0
      %1019 = vmatprep.subr.mxu0 0.0
      %1020 = vmatpush2.msra.mxu0 0.0
      %1021 = vmatprep.subr.mxu0 0.0
      %1022 = vmatpush2.msra.mxu0 0.0
      %1023 = vmatprep.subr.mxu0 0.0
      %1024 = vmatpush2.msra.mxu0 0.0
      %1025 = vmatprep.mubr.f32.mxu0 0.0
      %1026 = vmatmul.mubr.f32.gmra.mxu0 %v728
      %v1027 = vpop.f32.mrf.mxu0
      %v1028 = vadd.f32 0.0, %v1027
      %v1029 = vpop.f32.mrf.mxu0
      %v1030 = vadd.f32 0.0, %v1029
      %1031 = vdwg.mxu0
      %1032 = vmatprep.subr.mxu0 0.0
      %1033 = vmatpush1.msra.mxu0 0.0
      %1034 = vmatprep.subr.mxu0 0.0
      %1035 = vmatpush1.msra.mxu0 0.0
      %1036 = vmatprep.subr.mxu0 0.0
      %1037 = vmatpush1.msra.mxu0 0.0
      %1038 = vmatprep.subr.mxu0 0.0
      %1039 = vmatpush1.msra.mxu0 0.0
      %1040 = vmatprep.subr.mxu0 0.0
      %1041 = vmatpush1.msra.mxu0 0.0
      %1042 = vmatprep.subr.mxu0 0.0
      %1043 = vmatpush1.msra.mxu0 0.0
      %1044 = vmatprep.subr.mxu0 0.0
      %1045 = vmatpush1.msra.mxu0 0.0
      %1046 = vmatprep.subr.mxu0 0.0
      %1047 = vmatpush1.msra.mxu0 0.0
      %1048 = vmatprep.subr.mxu0 0.0
      %1049 = vmatpush1.msra.mxu0 0.0
      %1050 = vmatprep.subr.mxu0 0.0
      %1051 = vmatpush1.msra.mxu0 0.0
      %1052 = vmatprep.subr.mxu0 0.0
      %1053 = vmatpush1.msra.mxu0 0.0
      %1054 = vmatprep.subr.mxu0 0.0
      %1055 = vmatpush1.msra.mxu0 0.0
      %1056 = vmatprep.subr.mxu0 0.0
      %1057 = vmatpush1.msra.mxu0 0.0
      %1058 = vmatprep.subr.mxu0 0.0
      %1059 = vmatpush1.msra.mxu0 0.0
      %1060 = vmatprep.subr.mxu0 0.0
      %1061 = vmatpush1.msra.mxu0 %v746
      %1062 = vmatprep.subr.mxu0 0.0
      %1063 = vmatpush1.msra.mxu0 %v682
      %1064 = vmatprep.subr.mxu0 0.0
      %1065 = vmatpush2.msra.mxu0 0.0
      %1066 = vmatprep.subr.mxu0 0.0
      %1067 = vmatpush2.msra.mxu0 0.0
      %1068 = vmatprep.subr.mxu0 0.0
      %1069 = vmatpush2.msra.mxu0 0.0
      %1070 = vmatprep.subr.mxu0 0.0
      %1071 = vmatpush2.msra.mxu0 0.0
      %1072 = vmatprep.subr.mxu0 0.0
      %1073 = vmatpush2.msra.mxu0 0.0
      %1074 = vmatprep.subr.mxu0 0.0
      %1075 = vmatpush2.msra.mxu0 0.0
      %1076 = vmatprep.subr.mxu0 0.0
      %1077 = vmatpush2.msra.mxu0 0.0
      %1078 = vmatprep.subr.mxu0 0.0
      %1079 = vmatpush2.msra.mxu0 0.0
      %1080 = vmatprep.subr.mxu0 0.0
      %1081 = vmatpush2.msra.mxu0 0.0
      %1082 = vmatprep.subr.mxu0 0.0
      %1083 = vmatpush2.msra.mxu0 0.0
      %1084 = vmatprep.subr.mxu0 0.0
      %1085 = vmatpush2.msra.mxu0 0.0
      %1086 = vmatprep.subr.mxu0 0.0
      %1087 = vmatpush2.msra.mxu0 0.0
      %1088 = vmatprep.subr.mxu0 0.0
      %1089 = vmatpush2.msra.mxu0 0.0
      %1090 = vmatprep.subr.mxu0 0.0
      %1091 = vmatpush2.msra.mxu0 0.0
      %1092 = vmatprep.subr.mxu0 0.0
      %1093 = vmatpush2.msra.mxu0 0.0
      %1094 = vmatprep.subr.mxu0 0.0
      %1095 = vmatpush2.msra.mxu0 0.0
      %1096 = vmatprep.mubr.f32.mxu0 0.0
      %1097 = vmatmul.mubr.f32.gmra.mxu0 %v728
      %v1098 = vpop.f32.mrf.mxu0
      %v1099 = vadd.f32 0.0, %v1098
      %v1100 = vpop.f32.mrf.mxu0
      %1101 = vdwg.mxu0
      %v1102 = vadd.f32 %v654, %v815
      %v1103 = vadd.f32 %v655, %v817
      %v1104 = vadd.f32 %v656, %v886
      %v1105 = vadd.f32 %v657, %v888
      %v1106 = vadd.f32 %v658, %v957
      %v1107 = vadd.f32 %v659, %v959
      %v1108 = vadd.f32 %v660, %v1028
      %v1109 = vadd.f32 %v661, %v1030
      %v1110 = vadd.f32 %v662, %v1099
      %s1111 = scalar_lea.vmem %s1, 52
      %v1112 = vld [vmem:[%s1111] sm:$0x7]
      %1113 = vrot.lane.b32.xlu0 %v177, 127
      %v1114 = vpop.permute.xlu0 %1113
      %1115 = vrot.lane.b32.xlu0 %v178, 127
      %v1116 = vpop.permute.xlu0 %1115
      %1117 = vrot.lane.b32.xlu0 %v179, 127
      %v1118 = vpop.permute.xlu0 %1117
      %1119 = vrot.lane.b32.xlu0 %v180, 127
      %v1120 = vpop.permute.xlu0 %1119
      %1121 = vrot.lane.b32.xlu0 %v181, 127
      %v1122 = vpop.permute.xlu0 %1121
      %1123 = vrot.lane.b32.xlu0 %v182, 127
      %v1124 = vpop.permute.xlu0 %1123
      %1125 = vrot.lane.b32.xlu0 %v183, 127
      %v1126 = vpop.permute.xlu0 %1125
      %1127 = vrot.lane.b32.xlu0 %v184, 127
      %v1128 = vpop.permute.xlu0 %1127
      %1129 = vrot.lane.b32.xlu0 %v185, 127
      %v1130 = vpop.permute.xlu0 %1129
      %1131 = vrot.lane.b32.xlu0 %v186, 127
      %v1132 = vpop.permute.xlu0 %1131
      %1133 = vrot.lane.b32.xlu0 %v187, 127
      %v1134 = vpop.permute.xlu0 %1133
      %1135 = vrot.lane.b32.xlu0 %v188, 127
      %v1136 = vpop.permute.xlu0 %1135
      %1137 = vrot.lane.b32.xlu0 %v189, 127
      %v1138 = vpop.permute.xlu0 %1137
      %1139 = vrot.lane.b32.xlu0 %v190, 127
      %v1140 = vpop.permute.xlu0 %1139
      %1141 = vrot.lane.b32.xlu0 %v191, 127
      %v1142 = vpop.permute.xlu0 %1141
      %1143 = vrot.lane.b32.xlu0 %v192, 127
      %v1144 = vpop.permute.xlu0 %1143
      %1145 = vrot.lane.b32.xlu0 %v193, 127
      %v1146 = vpop.permute.xlu0 %1145
      %1147 = vrot.lane.b32.xlu0 %v194, 127
      %v1148 = vpop.permute.xlu0 %1147
      %vm1149 = vcmask 1039360
      %v1150 = vsel %vm1149, %v1114, %v1116
      %v1151 = vsel %vm1149, %v1116, %v1118
      %v1152 = vsel %vm1149, %v1118, %v1120
      %v1153 = vsel %vm1149, %v1120, %v1122
      %v1154 = vsel %vm1149, %v1122, %v1124
      %v1155 = vsel %vm1149, %v1124, %v1126
      %v1156 = vsel %vm1149, %v1126, %v1128
      %v1157 = vsel %vm1149, %v1128, %v1130
      %v1158 = vsel %vm1149, %v1132, %v1134
      %v1159 = vsel %vm1149, %v1134, %v1136
      %v1160 = vsel %vm1149, %v1136, %v1138
      %v1161 = vsel %vm1149, %v1138, %v1140
      %v1162 = vsel %vm1149, %v1140, %v1142
      %v1163 = vsel %vm1149, %v1142, %v1144
      %v1164 = vsel %vm1149, %v1144, %v1146
      %v1165 = vsel %vm1149, %v1146, %v1148
      %v1176 = vsel %vm277, %v1112, 0
      %v1178 = vsel %vm281, %v1158, 0
      %v1180 = vsel %vm281, %v1159, 0
      %v1182 = vsel %vm281, %v1160, 0
      %v1184 = vsel %vm281, %v1161, 0
      %v1186 = vsel %vm281, %v1162, 0
      %v1188 = vsel %vm281, %v1163, 0
      %v1190 = vsel %vm281, %v1164, 0
      %v1192 = vsel %vm281, %v1165, 0
      %v1194 = vsel %vm281, %v1148, 0
      %1196 = vmatprep.subr.mxu0 0.0
      %1197 = vmatpush1.msra.mxu0 0.0
      %1198 = vmatprep.subr.mxu0 0.0
      %1199 = vmatpush1.msra.mxu0 0.0
      %1200 = vmatprep.subr.mxu0 0.0
      %1201 = vmatpush1.msra.mxu0 0.0
      %1202 = vmatprep.subr.mxu0 0.0
      %1203 = vmatpush1.msra.mxu0 0.0
      %1204 = vmatprep.subr.mxu0 0.0
      %1205 = vmatpush1.msra.mxu0 0.0
      %1206 = vmatprep.subr.mxu0 0.0
      %1207 = vmatpush1.msra.mxu0 0.0
      %1208 = vmatprep.subr.mxu0 0.0
      %1209 = vmatpush1.msra.mxu0 0.0
      %1210 = vmatprep.subr.mxu0 0.0
      %1211 = vmatpush1.msra.mxu0 0.0
      %1212 = vmatprep.subr.mxu0 0.0
      %1213 = vmatpush1.msra.mxu0 0.0
      %1214 = vmatprep.subr.mxu0 0.0
      %1215 = vmatpush1.msra.mxu0 0.0
      %1216 = vmatprep.subr.mxu0 0.0
      %1217 = vmatpush1.msra.mxu0 0.0
      %1218 = vmatprep.subr.mxu0 0.0
      %1219 = vmatpush1.msra.mxu0 0.0
      %1220 = vmatprep.subr.mxu0 0.0
      %1221 = vmatpush1.msra.mxu0 0.0
      %1222 = vmatprep.subr.mxu0 0.0
      %1223 = vmatpush1.msra.mxu0 0.0
      %1224 = vmatprep.subr.mxu0 %v1180
      %1225 = vmatpush1.msra.mxu0 %v1178
      %1226 = vmatprep.subr.mxu0 %v1151
      %1227 = vmatpush1.msra.mxu0 %v1150
      %1228 = vmatprep.subr.mxu0 0.0
      %1229 = vmatpush2.msra.mxu0 0.0
      %1230 = vmatprep.subr.mxu0 0.0
      %1231 = vmatpush2.msra.mxu0 0.0
      %1232 = vmatprep.subr.mxu0 0.0
      %1233 = vmatpush2.msra.mxu0 0.0
      %1234 = vmatprep.subr.mxu0 0.0
      %1235 = vmatpush2.msra.mxu0 0.0
      %1236 = vmatprep.subr.mxu0 0.0
      %1237 = vmatpush2.msra.mxu0 0.0
      %1238 = vmatprep.subr.mxu0 0.0
      %1239 = vmatpush2.msra.mxu0 0.0
      %1240 = vmatprep.subr.mxu0 0.0
      %1241 = vmatpush2.msra.mxu0 0.0
      %1242 = vmatprep.subr.mxu0 0.0
      %1243 = vmatpush2.msra.mxu0 0.0
      %1244 = vmatprep.subr.mxu0 0.0
      %1245 = vmatpush2.msra.mxu0 0.0
      %1246 = vmatprep.subr.mxu0 0.0
      %1247 = vmatpush2.msra.mxu0 0.0
      %1248 = vmatprep.subr.mxu0 0.0
      %1249 = vmatpush2.msra.mxu0 0.0
      %1250 = vmatprep.subr.mxu0 0.0
      %1251 = vmatpush2.msra.mxu0 0.0
      %1252 = vmatprep.subr.mxu0 0.0
      %1253 = vmatpush2.msra.mxu0 0.0
      %1254 = vmatprep.subr.mxu0 0.0
      %1255 = vmatpush2.msra.mxu0 0.0
      %1256 = vmatprep.subr.mxu0 0.0
      %1257 = vmatpush2.msra.mxu0 0.0
      %1258 = vmatprep.subr.mxu0 0.0
      %1259 = vmatpush2.msra.mxu0 0.0
      %1260 = vmatprep.mubr.f32.mxu0 0.0
      %1261 = vmatmul.mubr.f32.gmra.mxu0 %v1176
      %v1262 = vpop.f32.mrf.mxu0
      %v1263 = vadd.f32 0.0, %v1262
      %v1264 = vpop.f32.mrf.mxu0
      %v1265 = vadd.f32 0.0, %v1264
      %1266 = vdwg.mxu0
      %1267 = vmatprep.subr.mxu0 0.0
      %1268 = vmatpush1.msra.mxu0 0.0
      %1269 = vmatprep.subr.mxu0 0.0
      %1270 = vmatpush1.msra.mxu0 0.0
      %1271 = vmatprep.subr.mxu0 0.0
      %1272 = vmatpush1.msra.mxu0 0.0
      %1273 = vmatprep.subr.mxu0 0.0
      %1274 = vmatpush1.msra.mxu0 0.0
      %1275 = vmatprep.subr.mxu0 0.0
      %1276 = vmatpush1.msra.mxu0 0.0
      %1277 = vmatprep.subr.mxu0 0.0
      %1278 = vmatpush1.msra.mxu0 0.0
      %1279 = vmatprep.subr.mxu0 0.0
      %1280 = vmatpush1.msra.mxu0 0.0
      %1281 = vmatprep.subr.mxu0 0.0
      %1282 = vmatpush1.msra.mxu0 0.0
      %1283 = vmatprep.subr.mxu0 0.0
      %1284 = vmatpush1.msra.mxu0 0.0
      %1285 = vmatprep.subr.mxu0 0.0
      %1286 = vmatpush1.msra.mxu0 0.0
      %1287 = vmatprep.subr.mxu0 0.0
      %1288 = vmatpush1.msra.mxu0 0.0
      %1289 = vmatprep.subr.mxu0 0.0
      %1290 = vmatpush1.msra.mxu0 0.0
      %1291 = vmatprep.subr.mxu0 0.0
      %1292 = vmatpush1.msra.mxu0 0.0
      %1293 = vmatprep.subr.mxu0 0.0
      %1294 = vmatpush1.msra.mxu0 0.0
      %1295 = vmatprep.subr.mxu0 %v1184
      %1296 = vmatpush1.msra.mxu0 %v1182
      %1297 = vmatprep.subr.mxu0 %v1153
      %1298 = vmatpush1.msra.mxu0 %v1152
      %1299 = vmatprep.subr.mxu0 0.0
      %1300 = vmatpush2.msra.mxu0 0.0
      %1301 = vmatprep.subr.mxu0 0.0
      %1302 = vmatpush2.msra.mxu0 0.0
      %1303 = vmatprep.subr.mxu0 0.0
      %1304 = vmatpush2.msra.mxu0 0.0
      %1305 = vmatprep.subr.mxu0 0.0
      %1306 = vmatpush2.msra.mxu0 0.0
      %1307 = vmatprep.subr.mxu0 0.0
      %1308 = vmatpush2.msra.mxu0 0.0
      %1309 = vmatprep.subr.mxu0 0.0
      %1310 = vmatpush2.msra.mxu0 0.0
      %1311 = vmatprep.subr.mxu0 0.0
      %1312 = vmatpush2.msra.mxu0 0.0
      %1313 = vmatprep.subr.mxu0 0.0
      %1314 = vmatpush2.msra.mxu0 0.0
      %1315 = vmatprep.subr.mxu0 0.0
      %1316 = vmatpush2.msra.mxu0 0.0
      %1317 = vmatprep.subr.mxu0 0.0
      %1318 = vmatpush2.msra.mxu0 0.0
      %1319 = vmatprep.subr.mxu0 0.0
      %1320 = vmatpush2.msra.mxu0 0.0
      %1321 = vmatprep.subr.mxu0 0.0
      %1322 = vmatpush2.msra.mxu0 0.0
      %1323 = vmatprep.subr.mxu0 0.0
      %1324 = vmatpush2.msra.mxu0 0.0
      %1325 = vmatprep.subr.mxu0 0.0
      %1326 = vmatpush2.msra.mxu0 0.0
      %1327 = vmatprep.subr.mxu0 0.0
      %1328 = vmatpush2.msra.mxu0 0.0
      %1329 = vmatprep.subr.mxu0 0.0
      %1330 = vmatpush2.msra.mxu0 0.0
      %1331 = vmatprep.mubr.f32.mxu0 0.0
      %1332 = vmatmul.mubr.f32.gmra.mxu0 %v1176
      %v1333 = vpop.f32.mrf.mxu0
      %v1334 = vadd.f32 0.0, %v1333
      %v1335 = vpop.f32.mrf.mxu0
      %v1336 = vadd.f32 0.0, %v1335
      %1337 = vdwg.mxu0
      %1338 = vmatprep.subr.mxu0 0.0
      %1339 = vmatpush1.msra.mxu0 0.0
      %1340 = vmatprep.subr.mxu0 0.0
      %1341 = vmatpush1.msra.mxu0 0.0
      %1342 = vmatprep.subr.mxu0 0.0
      %1343 = vmatpush1.msra.mxu0 0.0
      %1344 = vmatprep.subr.mxu0 0.0
      %1345 = vmatpush1.msra.mxu0 0.0
      %1346 = vmatprep.subr.mxu0 0.0
      %1347 = vmatpush1.msra.mxu0 0.0
      %1348 = vmatprep.subr.mxu0 0.0
      %1349 = vmatpush1.msra.mxu0 0.0
      %1350 = vmatprep.subr.mxu0 0.0
      %1351 = vmatpush1.msra.mxu0 0.0
      %1352 = vmatprep.subr.mxu0 0.0
      %1353 = vmatpush1.msra.mxu0 0.0
      %1354 = vmatprep.subr.mxu0 0.0
      %1355 = vmatpush1.msra.mxu0 0.0
      %1356 = vmatprep.subr.mxu0 0.0
      %1357 = vmatpush1.msra.mxu0 0.0
      %1358 = vmatprep.subr.mxu0 0.0
      %1359 = vmatpush1.msra.mxu0 0.0
      %1360 = vmatprep.subr.mxu0 0.0
      %1361 = vmatpush1.msra.mxu0 0.0
      %1362 = vmatprep.subr.mxu0 0.0
      %1363 = vmatpush1.msra.mxu0 0.0
      %1364 = vmatprep.subr.mxu0 0.0
      %1365 = vmatpush1.msra.mxu0 0.0
      %1366 = vmatprep.subr.mxu0 %v1188
      %1367 = vmatpush1.msra.mxu0 %v1186
      %1368 = vmatprep.subr.mxu0 %v1155
      %1369 = vmatpush1.msra.mxu0 %v1154
      %1370 = vmatprep.subr.mxu0 0.0
      %1371 = vmatpush2.msra.mxu0 0.0
      %1372 = vmatprep.subr.mxu0 0.0
      %1373 = vmatpush2.msra.mxu0 0.0
      %1374 = vmatprep.subr.mxu0 0.0
      %1375 = vmatpush2.msra.mxu0 0.0
      %1376 = vmatprep.subr.mxu0 0.0
      %1377 = vmatpush2.msra.mxu0 0.0
      %1378 = vmatprep.subr.mxu0 0.0
      %1379 = vmatpush2.msra.mxu0 0.0
      %1380 = vmatprep.subr.mxu0 0.0
      %1381 = vmatpush2.msra.mxu0 0.0
      %1382 = vmatprep.subr.mxu0 0.0
      %1383 = vmatpush2.msra.mxu0 0.0
      %1384 = vmatprep.subr.mxu0 0.0
      %1385 = vmatpush2.msra.mxu0 0.0
      %1386 = vmatprep.subr.mxu0 0.0
      %1387 = vmatpush2.msra.mxu0 0.0
      %1388 = vmatprep.subr.mxu0 0.0
      %1389 = vmatpush2.msra.mxu0 0.0
      %1390 = vmatprep.subr.mxu0 0.0
      %1391 = vmatpush2.msra.mxu0 0.0
      %1392 = vmatprep.subr.mxu0 0.0
      %1393 = vmatpush2.msra.mxu0 0.0
      %1394 = vmatprep.subr.mxu0 0.0
      %1395 = vmatpush2.msra.mxu0 0.0
      %1396 = vmatprep.subr.mxu0 0.0
      %1397 = vmatpush2.msra.mxu0 0.0
      %1398 = vmatprep.subr.mxu0 0.0
      %1399 = vmatpush2.msra.mxu0 0.0
      %1400 = vmatprep.subr.mxu0 0.0
      %1401 = vmatpush2.msra.mxu0 0.0
      %1402 = vmatprep.mubr.f32.mxu0 0.0
      %1403 = vmatmul.mubr.f32.gmra.mxu0 %v1176
      %v1404 = vpop.f32.mrf.mxu0
      %v1405 = vadd.f32 0.0, %v1404
      %v1406 = vpop.f32.mrf.mxu0
      %v1407 = vadd.f32 0.0, %v1406
      %1408 = vdwg.mxu0
      %1409 = vmatprep.subr.mxu0 0.0
      %1410 = vmatpush1.msra.mxu0 0.0
      %1411 = vmatprep.subr.mxu0 0.0
      %1412 = vmatpush1.msra.mxu0 0.0
      %1413 = vmatprep.subr.mxu0 0.0
      %1414 = vmatpush1.msra.mxu0 0.0
      %1415 = vmatprep.subr.mxu0 0.0
      %1416 = vmatpush1.msra.mxu0 0.0
      %1417 = vmatprep.subr.mxu0 0.0
      %1418 = vmatpush1.msra.mxu0 0.0
      %1419 = vmatprep.subr.mxu0 0.0
      %1420 = vmatpush1.msra.mxu0 0.0
      %1421 = vmatprep.subr.mxu0 0.0
      %1422 = vmatpush1.msra.mxu0 0.0
      %1423 = vmatprep.subr.mxu0 0.0
      %1424 = vmatpush1.msra.mxu0 0.0
      %1425 = vmatprep.subr.mxu0 0.0
      %1426 = vmatpush1.msra.mxu0 0.0
      %1427 = vmatprep.subr.mxu0 0.0
      %1428 = vmatpush1.msra.mxu0 0.0
      %1429 = vmatprep.subr.mxu0 0.0
      %1430 = vmatpush1.msra.mxu0 0.0
      %1431 = vmatprep.subr.mxu0 0.0
      %1432 = vmatpush1.msra.mxu0 0.0
      %1433 = vmatprep.subr.mxu0 0.0
      %1434 = vmatpush1.msra.mxu0 0.0
      %1435 = vmatprep.subr.mxu0 0.0
      %1436 = vmatpush1.msra.mxu0 0.0
      %1437 = vmatprep.subr.mxu0 %v1192
      %1438 = vmatpush1.msra.mxu0 %v1190
      %1439 = vmatprep.subr.mxu0 %v1157
      %1440 = vmatpush1.msra.mxu0 %v1156
      %1441 = vmatprep.subr.mxu0 0.0
      %1442 = vmatpush2.msra.mxu0 0.0
      %1443 = vmatprep.subr.mxu0 0.0
      %1444 = vmatpush2.msra.mxu0 0.0
      %1445 = vmatprep.subr.mxu0 0.0
      %1446 = vmatpush2.msra.mxu0 0.0
      %1447 = vmatprep.subr.mxu0 0.0
      %1448 = vmatpush2.msra.mxu0 0.0
      %1449 = vmatprep.subr.mxu0 0.0
      %1450 = vmatpush2.msra.mxu0 0.0
      %1451 = vmatprep.subr.mxu0 0.0
      %1452 = vmatpush2.msra.mxu0 0.0
      %1453 = vmatprep.subr.mxu0 0.0
      %1454 = vmatpush2.msra.mxu0 0.0
      %1455 = vmatprep.subr.mxu0 0.0
      %1456 = vmatpush2.msra.mxu0 0.0
      %1457 = vmatprep.subr.mxu0 0.0
      %1458 = vmatpush2.msra.mxu0 0.0
      %1459 = vmatprep.subr.mxu0 0.0
      %1460 = vmatpush2.msra.mxu0 0.0
      %1461 = vmatprep.subr.mxu0 0.0
      %1462 = vmatpush2.msra.mxu0 0.0
      %1463 = vmatprep.subr.mxu0 0.0
      %1464 = vmatpush2.msra.mxu0 0.0
      %1465 = vmatprep.subr.mxu0 0.0
      %1466 = vmatpush2.msra.mxu0 0.0
      %1467 = vmatprep.subr.mxu0 0.0
      %1468 = vmatpush2.msra.mxu0 0.0
      %1469 = vmatprep.subr.mxu0 0.0
      %1470 = vmatpush2.msra.mxu0 0.0
      %1471 = vmatprep.subr.mxu0 0.0
      %1472 = vmatpush2.msra.mxu0 0.0
      %1473 = vmatprep.mubr.f32.mxu0 0.0
      %1474 = vmatmul.mubr.f32.gmra.mxu0 %v1176
      %v1475 = vpop.f32.mrf.mxu0
      %v1476 = vadd.f32 0.0, %v1475
      %v1477 = vpop.f32.mrf.mxu0
      %v1478 = vadd.f32 0.0, %v1477
      %1479 = vdwg.mxu0
      %1480 = vmatprep.subr.mxu0 0.0
      %1481 = vmatpush1.msra.mxu0 0.0
      %1482 = vmatprep.subr.mxu0 0.0
      %1483 = vmatpush1.msra.mxu0 0.0
      %1484 = vmatprep.subr.mxu0 0.0
      %1485 = vmatpush1.msra.mxu0 0.0
      %1486 = vmatprep.subr.mxu0 0.0
      %1487 = vmatpush1.msra.mxu0 0.0
      %1488 = vmatprep.subr.mxu0 0.0
      %1489 = vmatpush1.msra.mxu0 0.0
      %1490 = vmatprep.subr.mxu0 0.0
      %1491 = vmatpush1.msra.mxu0 0.0
      %1492 = vmatprep.subr.mxu0 0.0
      %1493 = vmatpush1.msra.mxu0 0.0
      %1494 = vmatprep.subr.mxu0 0.0
      %1495 = vmatpush1.msra.mxu0 0.0
      %1496 = vmatprep.subr.mxu0 0.0
      %1497 = vmatpush1.msra.mxu0 0.0
      %1498 = vmatprep.subr.mxu0 0.0
      %1499 = vmatpush1.msra.mxu0 0.0
      %1500 = vmatprep.subr.mxu0 0.0
      %1501 = vmatpush1.msra.mxu0 0.0
      %1502 = vmatprep.subr.mxu0 0.0
      %1503 = vmatpush1.msra.mxu0 0.0
      %1504 = vmatprep.subr.mxu0 0.0
      %1505 = vmatpush1.msra.mxu0 0.0
      %1506 = vmatprep.subr.mxu0 0.0
      %1507 = vmatpush1.msra.mxu0 0.0
      %1508 = vmatprep.subr.mxu0 0.0
      %1509 = vmatpush1.msra.mxu0 %v1194
      %1510 = vmatprep.subr.mxu0 0.0
      %1511 = vmatpush1.msra.mxu0 %v1130
      %1512 = vmatprep.subr.mxu0 0.0
      %1513 = vmatpush2.msra.mxu0 0.0
      %1514 = vmatprep.subr.mxu0 0.0
      %1515 = vmatpush2.msra.mxu0 0.0
      %1516 = vmatprep.subr.mxu0 0.0
      %1517 = vmatpush2.msra.mxu0 0.0
      %1518 = vmatprep.subr.mxu0 0.0
      %1519 = vmatpush2.msra.mxu0 0.0
      %1520 = vmatprep.subr.mxu0 0.0
      %1521 = vmatpush2.msra.mxu0 0.0
      %1522 = vmatprep.subr.mxu0 0.0
      %1523 = vmatpush2.msra.mxu0 0.0
      %1524 = vmatprep.subr.mxu0 0.0
      %1525 = vmatpush2.msra.mxu0 0.0
      %1526 = vmatprep.subr.mxu0 0.0
      %1527 = vmatpush2.msra.mxu0 0.0
      %1528 = vmatprep.subr.mxu0 0.0
      %1529 = vmatpush2.msra.mxu0 0.0
      %1530 = vmatprep.subr.mxu0 0.0
      %1531 = vmatpush2.msra.mxu0 0.0
      %1532 = vmatprep.subr.mxu0 0.0
      %1533 = vmatpush2.msra.mxu0 0.0
      %1534 = vmatprep.subr.mxu0 0.0
      %1535 = vmatpush2.msra.mxu0 0.0
      %1536 = vmatprep.subr.mxu0 0.0
      %1537 = vmatpush2.msra.mxu0 0.0
      %1538 = vmatprep.subr.mxu0 0.0
      %1539 = vmatpush2.msra.mxu0 0.0
      %1540 = vmatprep.subr.mxu0 0.0
      %1541 = vmatpush2.msra.mxu0 0.0
      %1542 = vmatprep.subr.mxu0 0.0
      %1543 = vmatpush2.msra.mxu0 0.0
      %1544 = vmatprep.mubr.f32.mxu0 0.0
      %1545 = vmatmul.mubr.f32.gmra.mxu0 %v1176
      %v1546 = vpop.f32.mrf.mxu0
      %v1547 = vadd.f32 0.0, %v1546
      %v1548 = vpop.f32.mrf.mxu0
      %1549 = vdwg.mxu0
      %v1550 = vadd.f32 %v1102, %v1263
      %v1551 = vadd.f32 %v1103, %v1265
      %v1552 = vadd.f32 %v1104, %v1334
      %v1553 = vadd.f32 %v1105, %v1336
      %v1554 = vadd.f32 %v1106, %v1405
      %v1555 = vadd.f32 %v1107, %v1407
      %v1556 = vadd.f32 %v1108, %v1476
      %v1557 = vadd.f32 %v1109, %v1478
      %v1558 = vadd.f32 %v1110, %v1547
      %s1559 = scalar_lea.vmem %s1, 60
      %v1560 = vld [vmem:[%s1559] sm:$0x7]
      %v1562 = vsel %vm277, %v1560, 0
      %v1564 = vsel %vm281, %v186, 0
      %v1566 = vsel %vm281, %v187, 0
      %v1568 = vsel %vm281, %v188, 0
      %v1570 = vsel %vm281, %v189, 0
      %v1572 = vsel %vm281, %v190, 0
      %v1574 = vsel %vm281, %v191, 0
      %v1576 = vsel %vm281, %v192, 0
      %v1578 = vsel %vm281, %v193, 0
      %v1580 = vsel %vm281, %v194, 0
      %1582 = vmatprep.subr.mxu0 0.0
      %1583 = vmatpush1.msra.mxu0 0.0
      %1584 = vmatprep.subr.mxu0 0.0
      %1585 = vmatpush1.msra.mxu0 0.0
      %1586 = vmatprep.subr.mxu0 0.0
      %1587 = vmatpush1.msra.mxu0 0.0
      %1588 = vmatprep.subr.mxu0 0.0
      %1589 = vmatpush1.msra.mxu0 0.0
      %1590 = vmatprep.subr.mxu0 0.0
      %1591 = vmatpush1.msra.mxu0 0.0
      %1592 = vmatprep.subr.mxu0 0.0
      %1593 = vmatpush1.msra.mxu0 0.0
      %1594 = vmatprep.subr.mxu0 0.0
      %1595 = vmatpush1.msra.mxu0 0.0
      %1596 = vmatprep.subr.mxu0 0.0
      %1597 = vmatpush1.msra.mxu0 0.0
      %1598 = vmatprep.subr.mxu0 0.0
      %1599 = vmatpush1.msra.mxu0 0.0
      %1600 = vmatprep.subr.mxu0 0.0
      %1601 = vmatpush1.msra.mxu0 0.0
      %1602 = vmatprep.subr.mxu0 0.0
      %1603 = vmatpush1.msra.mxu0 0.0
      %1604 = vmatprep.subr.mxu0 0.0
      %1605 = vmatpush1.msra.mxu0 0.0
      %1606 = vmatprep.subr.mxu0 0.0
      %1607 = vmatpush1.msra.mxu0 0.0
      %1608 = vmatprep.subr.mxu0 0.0
      %1609 = vmatpush1.msra.mxu0 0.0
      %1610 = vmatprep.subr.mxu0 %v1566
      %1611 = vmatpush1.msra.mxu0 %v1564
      %1612 = vmatprep.subr.mxu0 %v178
      %1613 = vmatpush1.msra.mxu0 %v177
      %1614 = vmatprep.subr.mxu0 0.0
      %1615 = vmatpush2.msra.mxu0 0.0
      %1616 = vmatprep.subr.mxu0 0.0
      %1617 = vmatpush2.msra.mxu0 0.0
      %1618 = vmatprep.subr.mxu0 0.0
      %1619 = vmatpush2.msra.mxu0 0.0
      %1620 = vmatprep.subr.mxu0 0.0
      %1621 = vmatpush2.msra.mxu0 0.0
      %1622 = vmatprep.subr.mxu0 0.0
      %1623 = vmatpush2.msra.mxu0 0.0
      %1624 = vmatprep.subr.mxu0 0.0
      %1625 = vmatpush2.msra.mxu0 0.0
      %1626 = vmatprep.subr.mxu0 0.0
      %1627 = vmatpush2.msra.mxu0 0.0
      %1628 = vmatprep.subr.mxu0 0.0
      %1629 = vmatpush2.msra.mxu0 0.0
      %1630 = vmatprep.subr.mxu0 0.0
      %1631 = vmatpush2.msra.mxu0 0.0
      %1632 = vmatprep.subr.mxu0 0.0
      %1633 = vmatpush2.msra.mxu0 0.0
      %1634 = vmatprep.subr.mxu0 0.0
      %1635 = vmatpush2.msra.mxu0 0.0
      %1636 = vmatprep.subr.mxu0 0.0
      %1637 = vmatpush2.msra.mxu0 0.0
      %1638 = vmatprep.subr.mxu0 0.0
      %1639 = vmatpush2.msra.mxu0 0.0
      %1640 = vmatprep.subr.mxu0 0.0
      %1641 = vmatpush2.msra.mxu0 0.0
      %1642 = vmatprep.subr.mxu0 0.0
      %1643 = vmatpush2.msra.mxu0 0.0
      %1644 = vmatprep.subr.mxu0 0.0
      %1645 = vmatpush2.msra.mxu0 0.0
      %1646 = vmatprep.mubr.f32.mxu0 0.0
      %1647 = vmatmul.mubr.f32.gmra.mxu0 %v1562
      %v1648 = vpop.f32.mrf.mxu0
      %v1649 = vadd.f32 0.0, %v1648
      %v1650 = vpop.f32.mrf.mxu0
      %v1651 = vadd.f32 0.0, %v1650
      %1652 = vdwg.mxu0
      %1653 = vmatprep.subr.mxu0 0.0
      %1654 = vmatpush1.msra.mxu0 0.0
      %1655 = vmatprep.subr.mxu0 0.0
      %1656 = vmatpush1.msra.mxu0 0.0
      %1657 = vmatprep.subr.mxu0 0.0
      %1658 = vmatpush1.msra.mxu0 0.0
      %1659 = vmatprep.subr.mxu0 0.0
      %1660 = vmatpush1.msra.mxu0 0.0
      %1661 = vmatprep.subr.mxu0 0.0
      %1662 = vmatpush1.msra.mxu0 0.0
      %1663 = vmatprep.subr.mxu0 0.0
      %1664 = vmatpush1.msra.mxu0 0.0
      %1665 = vmatprep.subr.mxu0 0.0
      %1666 = vmatpush1.msra.mxu0 0.0
      %1667 = vmatprep.subr.mxu0 0.0
      %1668 = vmatpush1.msra.mxu0 0.0
      %1669 = vmatprep.subr.mxu0 0.0
      %1670 = vmatpush1.msra.mxu0 0.0
      %1671 = vmatprep.subr.mxu0 0.0
      %1672 = vmatpush1.msra.mxu0 0.0
      %1673 = vmatprep.subr.mxu0 0.0
      %1674 = vmatpush1.msra.mxu0 0.0
      %1675 = vmatprep.subr.mxu0 0.0
      %1676 = vmatpush1.msra.mxu0 0.0
      %1677 = vmatprep.subr.mxu0 0.0
      %1678 = vmatpush1.msra.mxu0 0.0
      %1679 = vmatprep.subr.mxu0 0.0
      %1680 = vmatpush1.msra.mxu0 0.0
      %1681 = vmatprep.subr.mxu0 %v1570
      %1682 = vmatpush1.msra.mxu0 %v1568
      %1683 = vmatprep.subr.mxu0 %v180
      %1684 = vmatpush1.msra.mxu0 %v179
      %1685 = vmatprep.subr.mxu0 0.0
      %1686 = vmatpush2.msra.mxu0 0.0
      %1687 = vmatprep.subr.mxu0 0.0
      %1688 = vmatpush2.msra.mxu0 0.0
      %1689 = vmatprep.subr.mxu0 0.0
      %1690 = vmatpush2.msra.mxu0 0.0
      %1691 = vmatprep.subr.mxu0 0.0
      %1692 = vmatpush2.msra.mxu0 0.0
      %1693 = vmatprep.subr.mxu0 0.0
      %1694 = vmatpush2.msra.mxu0 0.0
      %1695 = vmatprep.subr.mxu0 0.0
      %1696 = vmatpush2.msra.mxu0 0.0
      %1697 = vmatprep.subr.mxu0 0.0
      %1698 = vmatpush2.msra.mxu0 0.0
      %1699 = vmatprep.subr.mxu0 0.0
      %1700 = vmatpush2.msra.mxu0 0.0
      %1701 = vmatprep.subr.mxu0 0.0
      %1702 = vmatpush2.msra.mxu0 0.0
      %1703 = vmatprep.subr.mxu0 0.0
      %1704 = vmatpush2.msra.mxu0 0.0
      %1705 = vmatprep.subr.mxu0 0.0
      %1706 = vmatpush2.msra.mxu0 0.0
      %1707 = vmatprep.subr.mxu0 0.0
      %1708 = vmatpush2.msra.mxu0 0.0
      %1709 = vmatprep.subr.mxu0 0.0
      %1710 = vmatpush2.msra.mxu0 0.0
      %1711 = vmatprep.subr.mxu0 0.0
      %1712 = vmatpush2.msra.mxu0 0.0
      %1713 = vmatprep.subr.mxu0 0.0
      %1714 = vmatpush2.msra.mxu0 0.0
      %1715 = vmatprep.subr.mxu0 0.0
      %1716 = vmatpush2.msra.mxu0 0.0
      %1717 = vmatprep.mubr.f32.mxu0 0.0
      %1718 = vmatmul.mubr.f32.gmra.mxu0 %v1562
      %v1719 = vpop.f32.mrf.mxu0
      %v1720 = vadd.f32 0.0, %v1719
      %v1721 = vpop.f32.mrf.mxu0
      %v1722 = vadd.f32 0.0, %v1721
      %1723 = vdwg.mxu0
      %1724 = vmatprep.subr.mxu0 0.0
      %1725 = vmatpush1.msra.mxu0 0.0
      %1726 = vmatprep.subr.mxu0 0.0
      %1727 = vmatpush1.msra.mxu0 0.0
      %1728 = vmatprep.subr.mxu0 0.0
      %1729 = vmatpush1.msra.mxu0 0.0
      %1730 = vmatprep.subr.mxu0 0.0
      %1731 = vmatpush1.msra.mxu0 0.0
      %1732 = vmatprep.subr.mxu0 0.0
      %1733 = vmatpush1.msra.mxu0 0.0
      %1734 = vmatprep.subr.mxu0 0.0
      %1735 = vmatpush1.msra.mxu0 0.0
      %1736 = vmatprep.subr.mxu0 0.0
      %1737 = vmatpush1.msra.mxu0 0.0
      %1738 = vmatprep.subr.mxu0 0.0
      %1739 = vmatpush1.msra.mxu0 0.0
      %1740 = vmatprep.subr.mxu0 0.0
      %1741 = vmatpush1.msra.mxu0 0.0
      %1742 = vmatprep.subr.mxu0 0.0
      %1743 = vmatpush1.msra.mxu0 0.0
      %1744 = vmatprep.subr.mxu0 0.0
      %1745 = vmatpush1.msra.mxu0 0.0
      %1746 = vmatprep.subr.mxu0 0.0
      %1747 = vmatpush1.msra.mxu0 0.0
      %1748 = vmatprep.subr.mxu0 0.0
      %1749 = vmatpush1.msra.mxu0 0.0
      %1750 = vmatprep.subr.mxu0 0.0
      %1751 = vmatpush1.msra.mxu0 0.0
      %1752 = vmatprep.subr.mxu0 %v1574
      %1753 = vmatpush1.msra.mxu0 %v1572
      %1754 = vmatprep.subr.mxu0 %v182
      %1755 = vmatpush1.msra.mxu0 %v181
      %1756 = vmatprep.subr.mxu0 0.0
      %1757 = vmatpush2.msra.mxu0 0.0
      %1758 = vmatprep.subr.mxu0 0.0
      %1759 = vmatpush2.msra.mxu0 0.0
      %1760 = vmatprep.subr.mxu0 0.0
      %1761 = vmatpush2.msra.mxu0 0.0
      %1762 = vmatprep.subr.mxu0 0.0
      %1763 = vmatpush2.msra.mxu0 0.0
      %1764 = vmatprep.subr.mxu0 0.0
      %1765 = vmatpush2.msra.mxu0 0.0
      %1766 = vmatprep.subr.mxu0 0.0
      %1767 = vmatpush2.msra.mxu0 0.0
      %1768 = vmatprep.subr.mxu0 0.0
      %1769 = vmatpush2.msra.mxu0 0.0
      %1770 = vmatprep.subr.mxu0 0.0
      %1771 = vmatpush2.msra.mxu0 0.0
      %1772 = vmatprep.subr.mxu0 0.0
      %1773 = vmatpush2.msra.mxu0 0.0
      %1774 = vmatprep.subr.mxu0 0.0
      %1775 = vmatpush2.msra.mxu0 0.0
      %1776 = vmatprep.subr.mxu0 0.0
      %1777 = vmatpush2.msra.mxu0 0.0
      %1778 = vmatprep.subr.mxu0 0.0
      %1779 = vmatpush2.msra.mxu0 0.0
      %1780 = vmatprep.subr.mxu0 0.0
      %1781 = vmatpush2.msra.mxu0 0.0
      %1782 = vmatprep.subr.mxu0 0.0
      %1783 = vmatpush2.msra.mxu0 0.0
      %1784 = vmatprep.subr.mxu0 0.0
      %1785 = vmatpush2.msra.mxu0 0.0
      %1786 = vmatprep.subr.mxu0 0.0
      %1787 = vmatpush2.msra.mxu0 0.0
      %1788 = vmatprep.mubr.f32.mxu0 0.0
      %1789 = vmatmul.mubr.f32.gmra.mxu0 %v1562
      %v1790 = vpop.f32.mrf.mxu0
      %v1791 = vadd.f32 0.0, %v1790
      %v1792 = vpop.f32.mrf.mxu0
      %v1793 = vadd.f32 0.0, %v1792
      %1794 = vdwg.mxu0
      %1795 = vmatprep.subr.mxu0 0.0
      %1796 = vmatpush1.msra.mxu0 0.0
      %1797 = vmatprep.subr.mxu0 0.0
      %1798 = vmatpush1.msra.mxu0 0.0
      %1799 = vmatprep.subr.mxu0 0.0
      %1800 = vmatpush1.msra.mxu0 0.0
      %1801 = vmatprep.subr.mxu0 0.0
      %1802 = vmatpush1.msra.mxu0 0.0
      %1803 = vmatprep.subr.mxu0 0.0
      %1804 = vmatpush1.msra.mxu0 0.0
      %1805 = vmatprep.subr.mxu0 0.0
      %1806 = vmatpush1.msra.mxu0 0.0
      %1807 = vmatprep.subr.mxu0 0.0
      %1808 = vmatpush1.msra.mxu0 0.0
      %1809 = vmatprep.subr.mxu0 0.0
      %1810 = vmatpush1.msra.mxu0 0.0
      %1811 = vmatprep.subr.mxu0 0.0
      %1812 = vmatpush1.msra.mxu0 0.0
      %1813 = vmatprep.subr.mxu0 0.0
      %1814 = vmatpush1.msra.mxu0 0.0
      %1815 = vmatprep.subr.mxu0 0.0
      %1816 = vmatpush1.msra.mxu0 0.0
      %1817 = vmatprep.subr.mxu0 0.0
      %1818 = vmatpush1.msra.mxu0 0.0
      %1819 = vmatprep.subr.mxu0 0.0
      %1820 = vmatpush1.msra.mxu0 0.0
      %1821 = vmatprep.subr.mxu0 0.0
      %1822 = vmatpush1.msra.mxu0 0.0
      %1823 = vmatprep.subr.mxu0 %v1578
      %1824 = vmatpush1.msra.mxu0 %v1576
      %1825 = vmatprep.subr.mxu0 %v184
      %1826 = vmatpush1.msra.mxu0 %v183
      %1827 = vmatprep.subr.mxu0 0.0
      %1828 = vmatpush2.msra.mxu0 0.0
      %1829 = vmatprep.subr.mxu0 0.0
      %1830 = vmatpush2.msra.mxu0 0.0
      %1831 = vmatprep.subr.mxu0 0.0
      %1832 = vmatpush2.msra.mxu0 0.0
      %1833 = vmatprep.subr.mxu0 0.0
      %1834 = vmatpush2.msra.mxu0 0.0
      %1835 = vmatprep.subr.mxu0 0.0
      %1836 = vmatpush2.msra.mxu0 0.0
      %1837 = vmatprep.subr.mxu0 0.0
      %1838 = vmatpush2.msra.mxu0 0.0
      %1839 = vmatprep.subr.mxu0 0.0
      %1840 = vmatpush2.msra.mxu0 0.0
      %1841 = vmatprep.subr.mxu0 0.0
      %1842 = vmatpush2.msra.mxu0 0.0
      %1843 = vmatprep.subr.mxu0 0.0
      %1844 = vmatpush2.msra.mxu0 0.0
      %1845 = vmatprep.subr.mxu0 0.0
      %1846 = vmatpush2.msra.mxu0 0.0
      %1847 = vmatprep.subr.mxu0 0.0
      %1848 = vmatpush2.msra.mxu0 0.0
      %1849 = vmatprep.subr.mxu0 0.0
      %1850 = vmatpush2.msra.mxu0 0.0
      %1851 = vmatprep.subr.mxu0 0.0
      %1852 = vmatpush2.msra.mxu0 0.0
      %1853 = vmatprep.subr.mxu0 0.0
      %1854 = vmatpush2.msra.mxu0 0.0
      %1855 = vmatprep.subr.mxu0 0.0
      %1856 = vmatpush2.msra.mxu0 0.0
      %1857 = vmatprep.subr.mxu0 0.0
      %1858 = vmatpush2.msra.mxu0 0.0
      %1859 = vmatprep.mubr.f32.mxu0 0.0
      %1860 = vmatmul.mubr.f32.gmra.mxu0 %v1562
      %v1861 = vpop.f32.mrf.mxu0
      %v1862 = vadd.f32 0.0, %v1861
      %v1863 = vpop.f32.mrf.mxu0
      %v1864 = vadd.f32 0.0, %v1863
      %1865 = vdwg.mxu0
      %1866 = vmatprep.subr.mxu0 0.0
      %1867 = vmatpush1.msra.mxu0 0.0
      %1868 = vmatprep.subr.mxu0 0.0
      %1869 = vmatpush1.msra.mxu0 0.0
      %1870 = vmatprep.subr.mxu0 0.0
      %1871 = vmatpush1.msra.mxu0 0.0
      %1872 = vmatprep.subr.mxu0 0.0
      %1873 = vmatpush1.msra.mxu0 0.0
      %1874 = vmatprep.subr.mxu0 0.0
      %1875 = vmatpush1.msra.mxu0 0.0
      %1876 = vmatprep.subr.mxu0 0.0
      %1877 = vmatpush1.msra.mxu0 0.0
      %1878 = vmatprep.subr.mxu0 0.0
      %1879 = vmatpush1.msra.mxu0 0.0
      %1880 = vmatprep.subr.mxu0 0.0
      %1881 = vmatpush1.msra.mxu0 0.0
      %1882 = vmatprep.subr.mxu0 0.0
      %1883 = vmatpush1.msra.mxu0 0.0
      %1884 = vmatprep.subr.mxu0 0.0
      %1885 = vmatpush1.msra.mxu0 0.0
      %1886 = vmatprep.subr.mxu0 0.0
      %1887 = vmatpush1.msra.mxu0 0.0
      %1888 = vmatprep.subr.mxu0 0.0
      %1889 = vmatpush1.msra.mxu0 0.0
      %1890 = vmatprep.subr.mxu0 0.0
      %1891 = vmatpush1.msra.mxu0 0.0
      %1892 = vmatprep.subr.mxu0 0.0
      %1893 = vmatpush1.msra.mxu0 0.0
      %1894 = vmatprep.subr.mxu0 0.0
      %1895 = vmatpush1.msra.mxu0 %v1580
      %1896 = vmatprep.subr.mxu0 0.0
      %1897 = vmatpush1.msra.mxu0 %v185
      %1898 = vmatprep.subr.mxu0 0.0
      %1899 = vmatpush2.msra.mxu0 0.0
      %1900 = vmatprep.subr.mxu0 0.0
      %1901 = vmatpush2.msra.mxu0 0.0
      %1902 = vmatprep.subr.mxu0 0.0
      %1903 = vmatpush2.msra.mxu0 0.0
      %1904 = vmatprep.subr.mxu0 0.0
      %1905 = vmatpush2.msra.mxu0 0.0
      %1906 = vmatprep.subr.mxu0 0.0
      %1907 = vmatpush2.msra.mxu0 0.0
      %1908 = vmatprep.subr.mxu0 0.0
      %1909 = vmatpush2.msra.mxu0 0.0
      %1910 = vmatprep.subr.mxu0 0.0
      %1911 = vmatpush2.msra.mxu0 0.0
      %1912 = vmatprep.subr.mxu0 0.0
      %1913 = vmatpush2.msra.mxu0 0.0
      %1914 = vmatprep.subr.mxu0 0.0
      %1915 = vmatpush2.msra.mxu0 0.0
      %1916 = vmatprep.subr.mxu0 0.0
      %1917 = vmatpush2.msra.mxu0 0.0
      %1918 = vmatprep.subr.mxu0 0.0
      %1919 = vmatpush2.msra.mxu0 0.0
      %1920 = vmatprep.subr.mxu0 0.0
      %1921 = vmatpush2.msra.mxu0 0.0
      %1922 = vmatprep.subr.mxu0 0.0
      %1923 = vmatpush2.msra.mxu0 0.0
      %1924 = vmatprep.subr.mxu0 0.0
      %1925 = vmatpush2.msra.mxu0 0.0
      %1926 = vmatprep.subr.mxu0 0.0
      %1927 = vmatpush2.msra.mxu0 0.0
      %1928 = vmatprep.subr.mxu0 0.0
      %1929 = vmatpush2.msra.mxu0 0.0
      %1930 = vmatprep.mubr.f32.mxu0 0.0
      %1931 = vmatmul.mubr.f32.gmra.mxu0 %v1562
      %v1932 = vpop.f32.mrf.mxu0
      %v1933 = vadd.f32 0.0, %v1932
      %v1934 = vpop.f32.mrf.mxu0
      %1935 = vdwg.mxu0
      %v1936 = vadd.f32 %v1550, %v1649
      %v1937 = vadd.f32 %v1551, %v1651
      %v1938 = vadd.f32 %v1552, %v1720
      %v1939 = vadd.f32 %v1553, %v1722
      %v1940 = vadd.f32 %v1554, %v1791
      %v1941 = vadd.f32 %v1555, %v1793
      %v1942 = vadd.f32 %v1556, %v1862
      %v1943 = vadd.f32 %v1557, %v1864
      %v1944 = vadd.f32 %v1558, %v1933
      %v1953 = vcombine.low %v1936, %v1937
      %v1954 = vcombine.low %v1938, %v1939
      %v1955 = vcombine.low %v1940, %v1941
      %v1956 = vcombine.low %v1942, %v1943
      %1961 = vst [vmem:[%s170] sm:$0x77] %v1953
      %1962 = vst [vmem:[%s170 + $0x8] sm:$0x77] %v1954
      %1963 = vst [vmem:[%s170 + $0x10] sm:$0x77] %v1955
      %1964 = vst [vmem:[%s170 + $0x18] sm:$0x77] %v1956
      %vm1965 = vcmask 518144
      %1966 = vst.msk [vmem:[%s170 + $0x20] sm:$0x7] %vm1965, %v1944
      %v1967 = vld [vmem:[%s165] sm:$0xff]
      %v1968 = vld [vmem:[%s165 + $0x8] sm:$0xff]
      %v1969 = vld [vmem:[%s165 + $0x10] sm:$0xff]
      %v1970 = vld [vmem:[%s165 + $0x18] sm:$0xff]
      %v1971 = vld [vmem:[%s165 + $0x20] sm:$0xff]
      %v1972 = vld [vmem:[%s165 + $0x28] sm:$0xff]
      %v1973 = vld [vmem:[%s165 + $0x30] sm:$0xff]
      %v1974 = vld [vmem:[%s165 + $0x38] sm:$0xff]
      %v1975 = vld [vmem:[%s165 + $0x40] sm:$0xff]
      %v1976 = vld [vmem:[%s165 + $0x50] sm:$0xf]
      %v1977 = vld [vmem:[%s165 + $0x58] sm:$0xf]
      %v1978 = vld [vmem:[%s165 + $0x60] sm:$0xf]
      %v1979 = vld [vmem:[%s165 + $0x68] sm:$0xf]
      %v1980 = vld [vmem:[%s165 + $0x70] sm:$0xf]
      %v1981 = vld [vmem:[%s165 + $0x78] sm:$0xf]
      %v1982 = vld [vmem:[%s165 + $0x80] sm:$0xf]
      %v1983 = vld [vmem:[%s165 + $0x88] sm:$0xf]
      %v1984 = vld [vmem:[%s165 + $0x90] sm:$0xf]
      %s1985 = scalar_lea.vmem %s1, 16
      %v1986 = vld [vmem:[%s1985] sm:$0x7]
      %2005 = vrot.lane.b32.xlu0 %v1967, 92
      %v2006 = vpop.permute.xlu0 %2005
      %2007 = vrot.lane.b32.xlu0 %v1968, 92
      %v2008 = vpop.permute.xlu0 %2007
      %2009 = vrot.lane.b32.xlu0 %v1969, 92
      %v2010 = vpop.permute.xlu0 %2009
      %2011 = vrot.lane.b32.xlu0 %v1970, 92
      %v2012 = vpop.permute.xlu0 %2011
      %2013 = vrot.lane.b32.xlu0 %v1971, 92
      %v2014 = vpop.permute.xlu0 %2013
      %2015 = vrot.lane.b32.xlu0 %v1972, 92
      %v2016 = vpop.permute.xlu0 %2015
      %2017 = vrot.lane.b32.xlu0 %v1973, 92
      %v2018 = vpop.permute.xlu0 %2017
      %2019 = vrot.lane.b32.xlu0 %v1974, 92
      %v2020 = vpop.permute.xlu0 %2019
      %2021 = vrot.lane.b32.xlu0 %v1975, 92
      %v2022 = vpop.permute.xlu0 %2021
      %2023 = vrot.lane.b32.xlu0 %v1976, 92
      %v2024 = vpop.permute.xlu0 %2023
      %2025 = vrot.lane.b32.xlu0 %v1977, 92
      %v2026 = vpop.permute.xlu0 %2025
      %2027 = vrot.lane.b32.xlu0 %v1978, 92
      %v2028 = vpop.permute.xlu0 %2027
      %2029 = vrot.lane.b32.xlu0 %v1979, 92
      %v2030 = vpop.permute.xlu0 %2029
      %2031 = vrot.lane.b32.xlu0 %v1980, 92
      %v2032 = vpop.permute.xlu0 %2031
      %2033 = vrot.lane.b32.xlu0 %v1981, 92
      %v2034 = vpop.permute.xlu0 %2033
      %2035 = vrot.lane.b32.xlu0 %v1982, 92
      %v2036 = vpop.permute.xlu0 %2035
      %2037 = vrot.lane.b32.xlu0 %v1983, 92
      %v2038 = vpop.permute.xlu0 %2037
      %2039 = vrot.lane.b32.xlu0 %v1984, 92
      %v2040 = vpop.permute.xlu0 %2039
      %vm2041 = vcmask 752640
      %v2042 = vsel %vm2041, %v2006, %v2008
      %v2043 = vsel %vm2041, %v2008, %v2010
      %v2044 = vsel %vm2041, %v2010, %v2012
      %v2045 = vsel %vm2041, %v2012, %v2014
      %v2046 = vsel %vm2041, %v2014, %v2016
      %v2047 = vsel %vm2041, %v2016, %v2018
      %v2048 = vsel %vm2041, %v2018, %v2020
      %v2049 = vsel %vm2041, %v2020, %v2022
      %v2050 = vsel %vm2041, %v2024, %v2026
      %v2051 = vsel %vm2041, %v2026, %v2028
      %v2052 = vsel %vm2041, %v2028, %v2030
      %v2053 = vsel %vm2041, %v2030, %v2032
      %v2054 = vsel %vm2041, %v2032, %v2034
      %v2055 = vsel %vm2041, %v2034, %v2036
      %v2056 = vsel %vm2041, %v2036, %v2038
      %v2057 = vsel %vm2041, %v2038, %v2040
      %v2068 = vsel %vm277, %v1986, 0
      %v2070 = vsel %vm281, %v2050, 0
      %v2072 = vsel %vm281, %v2051, 0
      %v2074 = vsel %vm281, %v2052, 0
      %v2076 = vsel %vm281, %v2053, 0
      %v2078 = vsel %vm281, %v2054, 0
      %v2080 = vsel %vm281, %v2055, 0
      %v2082 = vsel %vm281, %v2056, 0
      %v2084 = vsel %vm281, %v2057, 0
      %v2086 = vsel %vm281, %v2040, 0
      %2088 = vmatprep.subr.mxu0 0.0
      %2089 = vmatpush1.msra.mxu0 0.0
      %2090 = vmatprep.subr.mxu0 0.0
      %2091 = vmatpush1.msra.mxu0 0.0
      %2092 = vmatprep.subr.mxu0 0.0
      %2093 = vmatpush1.msra.mxu0 0.0
      %2094 = vmatprep.subr.mxu0 0.0
      %2095 = vmatpush1.msra.mxu0 0.0
      %2096 = vmatprep.subr.mxu0 0.0
      %2097 = vmatpush1.msra.mxu0 0.0
      %2098 = vmatprep.subr.mxu0 0.0
      %2099 = vmatpush1.msra.mxu0 0.0
      %2100 = vmatprep.subr.mxu0 0.0
      %2101 = vmatpush1.msra.mxu0 0.0
      %2102 = vmatprep.subr.mxu0 0.0
      %2103 = vmatpush1.msra.mxu0 0.0
      %2104 = vmatprep.subr.mxu0 0.0
      %2105 = vmatpush1.msra.mxu0 0.0
      %2106 = vmatprep.subr.mxu0 0.0
      %2107 = vmatpush1.msra.mxu0 0.0
      %2108 = vmatprep.subr.mxu0 0.0
      %2109 = vmatpush1.msra.mxu0 0.0
      %2110 = vmatprep.subr.mxu0 0.0
      %2111 = vmatpush1.msra.mxu0 0.0
      %2112 = vmatprep.subr.mxu0 0.0
      %2113 = vmatpush1.msra.mxu0 0.0
      %2114 = vmatprep.subr.mxu0 0.0
      %2115 = vmatpush1.msra.mxu0 0.0
      %2116 = vmatprep.subr.mxu0 %v2072
      %2117 = vmatpush1.msra.mxu0 %v2070
      %2118 = vmatprep.subr.mxu0 %v2043
      %2119 = vmatpush1.msra.mxu0 %v2042
      %2120 = vmatprep.subr.mxu0 0.0
      %2121 = vmatpush2.msra.mxu0 0.0
      %2122 = vmatprep.subr.mxu0 0.0
      %2123 = vmatpush2.msra.mxu0 0.0
      %2124 = vmatprep.subr.mxu0 0.0
      %2125 = vmatpush2.msra.mxu0 0.0
      %2126 = vmatprep.subr.mxu0 0.0
      %2127 = vmatpush2.msra.mxu0 0.0
      %2128 = vmatprep.subr.mxu0 0.0
      %2129 = vmatpush2.msra.mxu0 0.0
      %2130 = vmatprep.subr.mxu0 0.0
      %2131 = vmatpush2.msra.mxu0 0.0
      %2132 = vmatprep.subr.mxu0 0.0
      %2133 = vmatpush2.msra.mxu0 0.0
      %2134 = vmatprep.subr.mxu0 0.0
      %2135 = vmatpush2.msra.mxu0 0.0
      %2136 = vmatprep.subr.mxu0 0.0
      %2137 = vmatpush2.msra.mxu0 0.0
      %2138 = vmatprep.subr.mxu0 0.0
      %2139 = vmatpush2.msra.mxu0 0.0
      %2140 = vmatprep.subr.mxu0 0.0
      %2141 = vmatpush2.msra.mxu0 0.0
      %2142 = vmatprep.subr.mxu0 0.0
      %2143 = vmatpush2.msra.mxu0 0.0
      %2144 = vmatprep.subr.mxu0 0.0
      %2145 = vmatpush2.msra.mxu0 0.0
      %2146 = vmatprep.subr.mxu0 0.0
      %2147 = vmatpush2.msra.mxu0 0.0
      %2148 = vmatprep.subr.mxu0 0.0
      %2149 = vmatpush2.msra.mxu0 0.0
      %2150 = vmatprep.subr.mxu0 0.0
      %2151 = vmatpush2.msra.mxu0 0.0
      %2152 = vmatprep.mubr.f32.mxu0 0.0
      %2153 = vmatmul.mubr.f32.gmra.mxu0 %v2068
      %v2154 = vpop.f32.mrf.mxu0
      %v2155 = vadd.f32 0.0, %v2154
      %v2156 = vpop.f32.mrf.mxu0
      %v2157 = vadd.f32 0.0, %v2156
      %2158 = vdwg.mxu0
      %2159 = vmatprep.subr.mxu0 0.0
      %2160 = vmatpush1.msra.mxu0 0.0
      %2161 = vmatprep.subr.mxu0 0.0
      %2162 = vmatpush1.msra.mxu0 0.0
      %2163 = vmatprep.subr.mxu0 0.0
      %2164 = vmatpush1.msra.mxu0 0.0
      %2165 = vmatprep.subr.mxu0 0.0
      %2166 = vmatpush1.msra.mxu0 0.0
      %2167 = vmatprep.subr.mxu0 0.0
      %2168 = vmatpush1.msra.mxu0 0.0
      %2169 = vmatprep.subr.mxu0 0.0
      %2170 = vmatpush1.msra.mxu0 0.0
      %2171 = vmatprep.subr.mxu0 0.0
      %2172 = vmatpush1.msra.mxu0 0.0
      %2173 = vmatprep.subr.mxu0 0.0
      %2174 = vmatpush1.msra.mxu0 0.0
      %2175 = vmatprep.subr.mxu0 0.0
      %2176 = vmatpush1.msra.mxu0 0.0
      %2177 = vmatprep.subr.mxu0 0.0
      %2178 = vmatpush1.msra.mxu0 0.0
      %2179 = vmatprep.subr.mxu0 0.0
      %2180 = vmatpush1.msra.mxu0 0.0
      %2181 = vmatprep.subr.mxu0 0.0
      %2182 = vmatpush1.msra.mxu0 0.0
      %2183 = vmatprep.subr.mxu0 0.0
      %2184 = vmatpush1.msra.mxu0 0.0
      %2185 = vmatprep.subr.mxu0 0.0
      %2186 = vmatpush1.msra.mxu0 0.0
      %2187 = vmatprep.subr.mxu0 %v2076
      %2188 = vmatpush1.msra.mxu0 %v2074
      %2189 = vmatprep.subr.mxu0 %v2045
      %2190 = vmatpush1.msra.mxu0 %v2044
      %2191 = vmatprep.subr.mxu0 0.0
      %2192 = vmatpush2.msra.mxu0 0.0
      %2193 = vmatprep.subr.mxu0 0.0
      %2194 = vmatpush2.msra.mxu0 0.0
      %2195 = vmatprep.subr.mxu0 0.0
      %2196 = vmatpush2.msra.mxu0 0.0
      %2197 = vmatprep.subr.mxu0 0.0
      %2198 = vmatpush2.msra.mxu0 0.0
      %2199 = vmatprep.subr.mxu0 0.0
      %2200 = vmatpush2.msra.mxu0 0.0
      %2201 = vmatprep.subr.mxu0 0.0
      %2202 = vmatpush2.msra.mxu0 0.0
      %2203 = vmatprep.subr.mxu0 0.0
      %2204 = vmatpush2.msra.mxu0 0.0
      %2205 = vmatprep.subr.mxu0 0.0
      %2206 = vmatpush2.msra.mxu0 0.0
      %2207 = vmatprep.subr.mxu0 0.0
      %2208 = vmatpush2.msra.mxu0 0.0
      %2209 = vmatprep.subr.mxu0 0.0
      %2210 = vmatpush2.msra.mxu0 0.0
      %2211 = vmatprep.subr.mxu0 0.0
      %2212 = vmatpush2.msra.mxu0 0.0
      %2213 = vmatprep.subr.mxu0 0.0
      %2214 = vmatpush2.msra.mxu0 0.0
      %2215 = vmatprep.subr.mxu0 0.0
      %2216 = vmatpush2.msra.mxu0 0.0
      %2217 = vmatprep.subr.mxu0 0.0
      %2218 = vmatpush2.msra.mxu0 0.0
      %2219 = vmatprep.subr.mxu0 0.0
      %2220 = vmatpush2.msra.mxu0 0.0
      %2221 = vmatprep.subr.mxu0 0.0
      %2222 = vmatpush2.msra.mxu0 0.0
      %2223 = vmatprep.mubr.f32.mxu0 0.0
      %2224 = vmatmul.mubr.f32.gmra.mxu0 %v2068
      %v2225 = vpop.f32.mrf.mxu0
      %v2226 = vadd.f32 0.0, %v2225
      %v2227 = vpop.f32.mrf.mxu0
      %v2228 = vadd.f32 0.0, %v2227
      %2229 = vdwg.mxu0
      %2230 = vmatprep.subr.mxu0 0.0
      %2231 = vmatpush1.msra.mxu0 0.0
      %2232 = vmatprep.subr.mxu0 0.0
      %2233 = vmatpush1.msra.mxu0 0.0
      %2234 = vmatprep.subr.mxu0 0.0
      %2235 = vmatpush1.msra.mxu0 0.0
      %2236 = vmatprep.subr.mxu0 0.0
      %2237 = vmatpush1.msra.mxu0 0.0
      %2238 = vmatprep.subr.mxu0 0.0
      %2239 = vmatpush1.msra.mxu0 0.0
      %2240 = vmatprep.subr.mxu0 0.0
      %2241 = vmatpush1.msra.mxu0 0.0
      %2242 = vmatprep.subr.mxu0 0.0
      %2243 = vmatpush1.msra.mxu0 0.0
      %2244 = vmatprep.subr.mxu0 0.0
      %2245 = vmatpush1.msra.mxu0 0.0
      %2246 = vmatprep.subr.mxu0 0.0
      %2247 = vmatpush1.msra.mxu0 0.0
      %2248 = vmatprep.subr.mxu0 0.0
      %2249 = vmatpush1.msra.mxu0 0.0
      %2250 = vmatprep.subr.mxu0 0.0
      %2251 = vmatpush1.msra.mxu0 0.0
      %2252 = vmatprep.subr.mxu0 0.0
      %2253 = vmatpush1.msra.mxu0 0.0
      %2254 = vmatprep.subr.mxu0 0.0
      %2255 = vmatpush1.msra.mxu0 0.0
      %2256 = vmatprep.subr.mxu0 0.0
      %2257 = vmatpush1.msra.mxu0 0.0
      %2258 = vmatprep.subr.mxu0 %v2080
      %2259 = vmatpush1.msra.mxu0 %v2078
      %2260 = vmatprep.subr.mxu0 %v2047
      %2261 = vmatpush1.msra.mxu0 %v2046
      %2262 = vmatprep.subr.mxu0 0.0
      %2263 = vmatpush2.msra.mxu0 0.0
      %2264 = vmatprep.subr.mxu0 0.0
      %2265 = vmatpush2.msra.mxu0 0.0
      %2266 = vmatprep.subr.mxu0 0.0
      %2267 = vmatpush2.msra.mxu0 0.0
      %2268 = vmatprep.subr.mxu0 0.0
      %2269 = vmatpush2.msra.mxu0 0.0
      %2270 = vmatprep.subr.mxu0 0.0
      %2271 = vmatpush2.msra.mxu0 0.0
      %2272 = vmatprep.subr.mxu0 0.0
      %2273 = vmatpush2.msra.mxu0 0.0
      %2274 = vmatprep.subr.mxu0 0.0
      %2275 = vmatpush2.msra.mxu0 0.0
      %2276 = vmatprep.subr.mxu0 0.0
      %2277 = vmatpush2.msra.mxu0 0.0
      %2278 = vmatprep.subr.mxu0 0.0
      %2279 = vmatpush2.msra.mxu0 0.0
      %2280 = vmatprep.subr.mxu0 0.0
      %2281 = vmatpush2.msra.mxu0 0.0
      %2282 = vmatprep.subr.mxu0 0.0
      %2283 = vmatpush2.msra.mxu0 0.0
      %2284 = vmatprep.subr.mxu0 0.0
      %2285 = vmatpush2.msra.mxu0 0.0
      %2286 = vmatprep.subr.mxu0 0.0
      %2287 = vmatpush2.msra.mxu0 0.0
      %2288 = vmatprep.subr.mxu0 0.0
      %2289 = vmatpush2.msra.mxu0 0.0
      %2290 = vmatprep.subr.mxu0 0.0
      %2291 = vmatpush2.msra.mxu0 0.0
      %2292 = vmatprep.subr.mxu0 0.0
      %2293 = vmatpush2.msra.mxu0 0.0
      %2294 = vmatprep.mubr.f32.mxu0 0.0
      %2295 = vmatmul.mubr.f32.gmra.mxu0 %v2068
      %v2296 = vpop.f32.mrf.mxu0
      %v2297 = vadd.f32 0.0, %v2296
      %v2298 = vpop.f32.mrf.mxu0
      %v2299 = vadd.f32 0.0, %v2298
      %2300 = vdwg.mxu0
      %2301 = vmatprep.subr.mxu0 0.0
      %2302 = vmatpush1.msra.mxu0 0.0
      %2303 = vmatprep.subr.mxu0 0.0
      %2304 = vmatpush1.msra.mxu0 0.0
      %2305 = vmatprep.subr.mxu0 0.0
      %2306 = vmatpush1.msra.mxu0 0.0
      %2307 = vmatprep.subr.mxu0 0.0
      %2308 = vmatpush1.msra.mxu0 0.0
      %2309 = vmatprep.subr.mxu0 0.0
      %2310 = vmatpush1.msra.mxu0 0.0
      %2311 = vmatprep.subr.mxu0 0.0
      %2312 = vmatpush1.msra.mxu0 0.0
      %2313 = vmatprep.subr.mxu0 0.0
      %2314 = vmatpush1.msra.mxu0 0.0
      %2315 = vmatprep.subr.mxu0 0.0
      %2316 = vmatpush1.msra.mxu0 0.0
      %2317 = vmatprep.subr.mxu0 0.0
      %2318 = vmatpush1.msra.mxu0 0.0
      %2319 = vmatprep.subr.mxu0 0.0
      %2320 = vmatpush1.msra.mxu0 0.0
      %2321 = vmatprep.subr.mxu0 0.0
      %2322 = vmatpush1.msra.mxu0 0.0
      %2323 = vmatprep.subr.mxu0 0.0
      %2324 = vmatpush1.msra.mxu0 0.0
      %2325 = vmatprep.subr.mxu0 0.0
      %2326 = vmatpush1.msra.mxu0 0.0
      %2327 = vmatprep.subr.mxu0 0.0
      %2328 = vmatpush1.msra.mxu0 0.0
      %2329 = vmatprep.subr.mxu0 %v2084
      %2330 = vmatpush1.msra.mxu0 %v2082
      %2331 = vmatprep.subr.mxu0 %v2049
      %2332 = vmatpush1.msra.mxu0 %v2048
      %2333 = vmatprep.subr.mxu0 0.0
      %2334 = vmatpush2.msra.mxu0 0.0
      %2335 = vmatprep.subr.mxu0 0.0
      %2336 = vmatpush2.msra.mxu0 0.0
      %2337 = vmatprep.subr.mxu0 0.0
      %2338 = vmatpush2.msra.mxu0 0.0
      %2339 = vmatprep.subr.mxu0 0.0
      %2340 = vmatpush2.msra.mxu0 0.0
      %2341 = vmatprep.subr.mxu0 0.0
      %2342 = vmatpush2.msra.mxu0 0.0
      %2343 = vmatprep.subr.mxu0 0.0
      %2344 = vmatpush2.msra.mxu0 0.0
      %2345 = vmatprep.subr.mxu0 0.0
      %2346 = vmatpush2.msra.mxu0 0.0
      %2347 = vmatprep.subr.mxu0 0.0
      %2348 = vmatpush2.msra.mxu0 0.0
      %2349 = vmatprep.subr.mxu0 0.0
      %2350 = vmatpush2.msra.mxu0 0.0
      %2351 = vmatprep.subr.mxu0 0.0
      %2352 = vmatpush2.msra.mxu0 0.0
      %2353 = vmatprep.subr.mxu0 0.0
      %2354 = vmatpush2.msra.mxu0 0.0
      %2355 = vmatprep.subr.mxu0 0.0
      %2356 = vmatpush2.msra.mxu0 0.0
      %2357 = vmatprep.subr.mxu0 0.0
      %2358 = vmatpush2.msra.mxu0 0.0
      %2359 = vmatprep.subr.mxu0 0.0
      %2360 = vmatpush2.msra.mxu0 0.0
      %2361 = vmatprep.subr.mxu0 0.0
      %2362 = vmatpush2.msra.mxu0 0.0
      %2363 = vmatprep.subr.mxu0 0.0
      %2364 = vmatpush2.msra.mxu0 0.0
      %2365 = vmatprep.mubr.f32.mxu0 0.0
      %2366 = vmatmul.mubr.f32.gmra.mxu0 %v2068
      %v2367 = vpop.f32.mrf.mxu0
      %v2368 = vadd.f32 0.0, %v2367
      %v2369 = vpop.f32.mrf.mxu0
      %v2370 = vadd.f32 0.0, %v2369
      %2371 = vdwg.mxu0
      %2372 = vmatprep.subr.mxu0 0.0
      %2373 = vmatpush1.msra.mxu0 0.0
      %2374 = vmatprep.subr.mxu0 0.0
      %2375 = vmatpush1.msra.mxu0 0.0
      %2376 = vmatprep.subr.mxu0 0.0
      %2377 = vmatpush1.msra.mxu0 0.0
      %2378 = vmatprep.subr.mxu0 0.0
      %2379 = vmatpush1.msra.mxu0 0.0
      %2380 = vmatprep.subr.mxu0 0.0
      %2381 = vmatpush1.msra.mxu0 0.0
      %2382 = vmatprep.subr.mxu0 0.0
      %2383 = vmatpush1.msra.mxu0 0.0
      %2384 = vmatprep.subr.mxu0 0.0
      %2385 = vmatpush1.msra.mxu0 0.0
      %2386 = vmatprep.subr.mxu0 0.0
      %2387 = vmatpush1.msra.mxu0 0.0
      %2388 = vmatprep.subr.mxu0 0.0
      %2389 = vmatpush1.msra.mxu0 0.0
      %2390 = vmatprep.subr.mxu0 0.0
      %2391 = vmatpush1.msra.mxu0 0.0
      %2392 = vmatprep.subr.mxu0 0.0
      %2393 = vmatpush1.msra.mxu0 0.0
      %2394 = vmatprep.subr.mxu0 0.0
      %2395 = vmatpush1.msra.mxu0 0.0
      %2396 = vmatprep.subr.mxu0 0.0
      %2397 = vmatpush1.msra.mxu0 0.0
      %2398 = vmatprep.subr.mxu0 0.0
      %2399 = vmatpush1.msra.mxu0 0.0
      %2400 = vmatprep.subr.mxu0 0.0
      %2401 = vmatpush1.msra.mxu0 %v2086
      %2402 = vmatprep.subr.mxu0 0.0
      %2403 = vmatpush1.msra.mxu0 %v2022
      %2404 = vmatprep.subr.mxu0 0.0
      %2405 = vmatpush2.msra.mxu0 0.0
      %2406 = vmatprep.subr.mxu0 0.0
      %2407 = vmatpush2.msra.mxu0 0.0
      %2408 = vmatprep.subr.mxu0 0.0
      %2409 = vmatpush2.msra.mxu0 0.0
      %2410 = vmatprep.subr.mxu0 0.0
      %2411 = vmatpush2.msra.mxu0 0.0
      %2412 = vmatprep.subr.mxu0 0.0
      %2413 = vmatpush2.msra.mxu0 0.0
      %2414 = vmatprep.subr.mxu0 0.0
      %2415 = vmatpush2.msra.mxu0 0.0
      %2416 = vmatprep.subr.mxu0 0.0
      %2417 = vmatpush2.msra.mxu0 0.0
      %2418 = vmatprep.subr.mxu0 0.0
      %2419 = vmatpush2.msra.mxu0 0.0
      %2420 = vmatprep.subr.mxu0 0.0
      %2421 = vmatpush2.msra.mxu0 0.0
      %2422 = vmatprep.subr.mxu0 0.0
      %2423 = vmatpush2.msra.mxu0 0.0
      %2424 = vmatprep.subr.mxu0 0.0
      %2425 = vmatpush2.msra.mxu0 0.0
      %2426 = vmatprep.subr.mxu0 0.0
      %2427 = vmatpush2.msra.mxu0 0.0
      %2428 = vmatprep.subr.mxu0 0.0
      %2429 = vmatpush2.msra.mxu0 0.0
      %2430 = vmatprep.subr.mxu0 0.0
      %2431 = vmatpush2.msra.mxu0 0.0
      %2432 = vmatprep.subr.mxu0 0.0
      %2433 = vmatpush2.msra.mxu0 0.0
      %2434 = vmatprep.subr.mxu0 0.0
      %2435 = vmatpush2.msra.mxu0 0.0
      %2436 = vmatprep.mubr.f32.mxu0 0.0
      %2437 = vmatmul.mubr.f32.gmra.mxu0 %v2068
      %v2438 = vpop.f32.mrf.mxu0
      %v2439 = vadd.f32 0.0, %v2438
      %v2440 = vpop.f32.mrf.mxu0
      %2441 = vdwg.mxu0
      %v2442 = vadd.f32 %v175, %v2155
      %v2443 = vadd.f32 %v175, %v2157
      %v2444 = vadd.f32 %v175, %v2226
      %v2445 = vadd.f32 %v175, %v2228
      %v2446 = vadd.f32 %v175, %v2297
      %v2447 = vadd.f32 %v175, %v2299
      %v2448 = vadd.f32 %v175, %v2368
      %v2449 = vadd.f32 %v175, %v2370
      %v2450 = vadd.f32 %v175, %v2439
      %s2451 = scalar_lea.vmem %s1, 24
      %v2452 = vld [vmem:[%s2451] sm:$0x7]
      %2453 = vrot.lane.b32.xlu0 %v1967, 93
      %v2454 = vpop.permute.xlu0 %2453
      %2455 = vrot.lane.b32.xlu0 %v1968, 93
      %v2456 = vpop.permute.xlu0 %2455
      %2457 = vrot.lane.b32.xlu0 %v1969, 93
      %v2458 = vpop.permute.xlu0 %2457
      %2459 = vrot.lane.b32.xlu0 %v1970, 93
      %v2460 = vpop.permute.xlu0 %2459
      %2461 = vrot.lane.b32.xlu0 %v1971, 93
      %v2462 = vpop.permute.xlu0 %2461
      %2463 = vrot.lane.b32.xlu0 %v1972, 93
      %v2464 = vpop.permute.xlu0 %2463
      %2465 = vrot.lane.b32.xlu0 %v1973, 93
      %v2466 = vpop.permute.xlu0 %2465
      %2467 = vrot.lane.b32.xlu0 %v1974, 93
      %v2468 = vpop.permute.xlu0 %2467
      %2469 = vrot.lane.b32.xlu0 %v1975, 93
      %v2470 = vpop.permute.xlu0 %2469
      %2471 = vrot.lane.b32.xlu0 %v1976, 93
      %v2472 = vpop.permute.xlu0 %2471
      %2473 = vrot.lane.b32.xlu0 %v1977, 93
      %v2474 = vpop.permute.xlu0 %2473
      %2475 = vrot.lane.b32.xlu0 %v1978, 93
      %v2476 = vpop.permute.xlu0 %2475
      %2477 = vrot.lane.b32.xlu0 %v1979, 93
      %v2478 = vpop.permute.xlu0 %2477
      %2479 = vrot.lane.b32.xlu0 %v1980, 93
      %v2480 = vpop.permute.xlu0 %2479
      %2481 = vrot.lane.b32.xlu0 %v1981, 93
      %v2482 = vpop.permute.xlu0 %2481
      %2483 = vrot.lane.b32.xlu0 %v1982, 93
      %v2484 = vpop.permute.xlu0 %2483
      %2485 = vrot.lane.b32.xlu0 %v1983, 93
      %v2486 = vpop.permute.xlu0 %2485
      %2487 = vrot.lane.b32.xlu0 %v1984, 93
      %v2488 = vpop.permute.xlu0 %2487
      %v2489 = vsel %vm251, %v2454, %v2456
      %v2490 = vsel %vm251, %v2456, %v2458
      %v2491 = vsel %vm251, %v2458, %v2460
      %v2492 = vsel %vm251, %v2460, %v2462
      %v2493 = vsel %vm251, %v2462, %v2464
      %v2494 = vsel %vm251, %v2464, %v2466
      %v2495 = vsel %vm251, %v2466, %v2468
      %v2496 = vsel %vm251, %v2468, %v2470
      %v2497 = vsel %vm251, %v2472, %v2474
      %v2498 = vsel %vm251, %v2474, %v2476
      %v2499 = vsel %vm251, %v2476, %v2478
      %v2500 = vsel %vm251, %v2478, %v2480
      %v2501 = vsel %vm251, %v2480, %v2482
      %v2502 = vsel %vm251, %v2482, %v2484
      %v2503 = vsel %vm251, %v2484, %v2486
      %v2504 = vsel %vm251, %v2486, %v2488
      %v2515 = vsel %vm277, %v2452, 0
      %v2517 = vsel %vm281, %v2497, 0
      %v2519 = vsel %vm281, %v2498, 0
      %v2521 = vsel %vm281, %v2499, 0
      %v2523 = vsel %vm281, %v2500, 0
      %v2525 = vsel %vm281, %v2501, 0
      %v2527 = vsel %vm281, %v2502, 0
      %v2529 = vsel %vm281, %v2503, 0
      %v2531 = vsel %vm281, %v2504, 0
      %v2533 = vsel %vm281, %v2488, 0
      %2535 = vmatprep.subr.mxu0 0.0
      %2536 = vmatpush1.msra.mxu0 0.0
      %2537 = vmatprep.subr.mxu0 0.0
      %2538 = vmatpush1.msra.mxu0 0.0
      %2539 = vmatprep.subr.mxu0 0.0
      %2540 = vmatpush1.msra.mxu0 0.0
      %2541 = vmatprep.subr.mxu0 0.0
      %2542 = vmatpush1.msra.mxu0 0.0
      %2543 = vmatprep.subr.mxu0 0.0
      %2544 = vmatpush1.msra.mxu0 0.0
      %2545 = vmatprep.subr.mxu0 0.0
      %2546 = vmatpush1.msra.mxu0 0.0
      %2547 = vmatprep.subr.mxu0 0.0
      %2548 = vmatpush1.msra.mxu0 0.0
      %2549 = vmatprep.subr.mxu0 0.0
      %2550 = vmatpush1.msra.mxu0 0.0
      %2551 = vmatprep.subr.mxu0 0.0
      %2552 = vmatpush1.msra.mxu0 0.0
      %2553 = vmatprep.subr.mxu0 0.0
      %2554 = vmatpush1.msra.mxu0 0.0
      %2555 = vmatprep.subr.mxu0 0.0
      %2556 = vmatpush1.msra.mxu0 0.0
      %2557 = vmatprep.subr.mxu0 0.0
      %2558 = vmatpush1.msra.mxu0 0.0
      %2559 = vmatprep.subr.mxu0 0.0
      %2560 = vmatpush1.msra.mxu0 0.0
      %2561 = vmatprep.subr.mxu0 0.0
      %2562 = vmatpush1.msra.mxu0 0.0
      %2563 = vmatprep.subr.mxu0 %v2519
      %2564 = vmatpush1.msra.mxu0 %v2517
      %2565 = vmatprep.subr.mxu0 %v2490
      %2566 = vmatpush1.msra.mxu0 %v2489
      %2567 = vmatprep.subr.mxu0 0.0
      %2568 = vmatpush2.msra.mxu0 0.0
      %2569 = vmatprep.subr.mxu0 0.0
      %2570 = vmatpush2.msra.mxu0 0.0
      %2571 = vmatprep.subr.mxu0 0.0
      %2572 = vmatpush2.msra.mxu0 0.0
      %2573 = vmatprep.subr.mxu0 0.0
      %2574 = vmatpush2.msra.mxu0 0.0
      %2575 = vmatprep.subr.mxu0 0.0
      %2576 = vmatpush2.msra.mxu0 0.0
      %2577 = vmatprep.subr.mxu0 0.0
      %2578 = vmatpush2.msra.mxu0 0.0
      %2579 = vmatprep.subr.mxu0 0.0
      %2580 = vmatpush2.msra.mxu0 0.0
      %2581 = vmatprep.subr.mxu0 0.0
      %2582 = vmatpush2.msra.mxu0 0.0
      %2583 = vmatprep.subr.mxu0 0.0
      %2584 = vmatpush2.msra.mxu0 0.0
      %2585 = vmatprep.subr.mxu0 0.0
      %2586 = vmatpush2.msra.mxu0 0.0
      %2587 = vmatprep.subr.mxu0 0.0
      %2588 = vmatpush2.msra.mxu0 0.0
      %2589 = vmatprep.subr.mxu0 0.0
      %2590 = vmatpush2.msra.mxu0 0.0
      %2591 = vmatprep.subr.mxu0 0.0
      %2592 = vmatpush2.msra.mxu0 0.0
      %2593 = vmatprep.subr.mxu0 0.0
      %2594 = vmatpush2.msra.mxu0 0.0
      %2595 = vmatprep.subr.mxu0 0.0
      %2596 = vmatpush2.msra.mxu0 0.0
      %2597 = vmatprep.subr.mxu0 0.0
      %2598 = vmatpush2.msra.mxu0 0.0
      %2599 = vmatprep.mubr.f32.mxu0 0.0
      %2600 = vmatmul.mubr.f32.gmra.mxu0 %v2515
      %v2601 = vpop.f32.mrf.mxu0
      %v2602 = vadd.f32 0.0, %v2601
      %v2603 = vpop.f32.mrf.mxu0
      %v2604 = vadd.f32 0.0, %v2603
      %2605 = vdwg.mxu0
      %2606 = vmatprep.subr.mxu0 0.0
      %2607 = vmatpush1.msra.mxu0 0.0
      %2608 = vmatprep.subr.mxu0 0.0
      %2609 = vmatpush1.msra.mxu0 0.0
      %2610 = vmatprep.subr.mxu0 0.0
      %2611 = vmatpush1.msra.mxu0 0.0
      %2612 = vmatprep.subr.mxu0 0.0
      %2613 = vmatpush1.msra.mxu0 0.0
      %2614 = vmatprep.subr.mxu0 0.0
      %2615 = vmatpush1.msra.mxu0 0.0
      %2616 = vmatprep.subr.mxu0 0.0
      %2617 = vmatpush1.msra.mxu0 0.0
      %2618 = vmatprep.subr.mxu0 0.0
      %2619 = vmatpush1.msra.mxu0 0.0
      %2620 = vmatprep.subr.mxu0 0.0
      %2621 = vmatpush1.msra.mxu0 0.0
      %2622 = vmatprep.subr.mxu0 0.0
      %2623 = vmatpush1.msra.mxu0 0.0
      %2624 = vmatprep.subr.mxu0 0.0
      %2625 = vmatpush1.msra.mxu0 0.0
      %2626 = vmatprep.subr.mxu0 0.0
      %2627 = vmatpush1.msra.mxu0 0.0
      %2628 = vmatprep.subr.mxu0 0.0
      %2629 = vmatpush1.msra.mxu0 0.0
      %2630 = vmatprep.subr.mxu0 0.0
      %2631 = vmatpush1.msra.mxu0 0.0
      %2632 = vmatprep.subr.mxu0 0.0
      %2633 = vmatpush1.msra.mxu0 0.0
      %2634 = vmatprep.subr.mxu0 %v2523
      %2635 = vmatpush1.msra.mxu0 %v2521
      %2636 = vmatprep.subr.mxu0 %v2492
      %2637 = vmatpush1.msra.mxu0 %v2491
      %2638 = vmatprep.subr.mxu0 0.0
      %2639 = vmatpush2.msra.mxu0 0.0
      %2640 = vmatprep.subr.mxu0 0.0
      %2641 = vmatpush2.msra.mxu0 0.0
      %2642 = vmatprep.subr.mxu0 0.0
      %2643 = vmatpush2.msra.mxu0 0.0
      %2644 = vmatprep.subr.mxu0 0.0
      %2645 = vmatpush2.msra.mxu0 0.0
      %2646 = vmatprep.subr.mxu0 0.0
      %2647 = vmatpush2.msra.mxu0 0.0
      %2648 = vmatprep.subr.mxu0 0.0
      %2649 = vmatpush2.msra.mxu0 0.0
      %2650 = vmatprep.subr.mxu0 0.0
      %2651 = vmatpush2.msra.mxu0 0.0
      %2652 = vmatprep.subr.mxu0 0.0
      %2653 = vmatpush2.msra.mxu0 0.0
      %2654 = vmatprep.subr.mxu0 0.0
      %2655 = vmatpush2.msra.mxu0 0.0
      %2656 = vmatprep.subr.mxu0 0.0
      %2657 = vmatpush2.msra.mxu0 0.0
      %2658 = vmatprep.subr.mxu0 0.0
      %2659 = vmatpush2.msra.mxu0 0.0
      %2660 = vmatprep.subr.mxu0 0.0
      %2661 = vmatpush2.msra.mxu0 0.0
      %2662 = vmatprep.subr.mxu0 0.0
      %2663 = vmatpush2.msra.mxu0 0.0
      %2664 = vmatprep.subr.mxu0 0.0
      %2665 = vmatpush2.msra.mxu0 0.0
      %2666 = vmatprep.subr.mxu0 0.0
      %2667 = vmatpush2.msra.mxu0 0.0
      %2668 = vmatprep.subr.mxu0 0.0
      %2669 = vmatpush2.msra.mxu0 0.0
      %2670 = vmatprep.mubr.f32.mxu0 0.0
      %2671 = vmatmul.mubr.f32.gmra.mxu0 %v2515
      %v2672 = vpop.f32.mrf.mxu0
      %v2673 = vadd.f32 0.0, %v2672
      %v2674 = vpop.f32.mrf.mxu0
      %v2675 = vadd.f32 0.0, %v2674
      %2676 = vdwg.mxu0
      %2677 = vmatprep.subr.mxu0 0.0
      %2678 = vmatpush1.msra.mxu0 0.0
      %2679 = vmatprep.subr.mxu0 0.0
      %2680 = vmatpush1.msra.mxu0 0.0
      %2681 = vmatprep.subr.mxu0 0.0
      %2682 = vmatpush1.msra.mxu0 0.0
      %2683 = vmatprep.subr.mxu0 0.0
      %2684 = vmatpush1.msra.mxu0 0.0
      %2685 = vmatprep.subr.mxu0 0.0
      %2686 = vmatpush1.msra.mxu0 0.0
      %2687 = vmatprep.subr.mxu0 0.0
      %2688 = vmatpush1.msra.mxu0 0.0
      %2689 = vmatprep.subr.mxu0 0.0
      %2690 = vmatpush1.msra.mxu0 0.0
      %2691 = vmatprep.subr.mxu0 0.0
      %2692 = vmatpush1.msra.mxu0 0.0
      %2693 = vmatprep.subr.mxu0 0.0
      %2694 = vmatpush1.msra.mxu0 0.0
      %2695 = vmatprep.subr.mxu0 0.0
      %2696 = vmatpush1.msra.mxu0 0.0
      %2697 = vmatprep.subr.mxu0 0.0
      %2698 = vmatpush1.msra.mxu0 0.0
      %2699 = vmatprep.subr.mxu0 0.0
      %2700 = vmatpush1.msra.mxu0 0.0
      %2701 = vmatprep.subr.mxu0 0.0
      %2702 = vmatpush1.msra.mxu0 0.0
      %2703 = vmatprep.subr.mxu0 0.0
      %2704 = vmatpush1.msra.mxu0 0.0
      %2705 = vmatprep.subr.mxu0 %v2527
      %2706 = vmatpush1.msra.mxu0 %v2525
      %2707 = vmatprep.subr.mxu0 %v2494
      %2708 = vmatpush1.msra.mxu0 %v2493
      %2709 = vmatprep.subr.mxu0 0.0
      %2710 = vmatpush2.msra.mxu0 0.0
      %2711 = vmatprep.subr.mxu0 0.0
      %2712 = vmatpush2.msra.mxu0 0.0
      %2713 = vmatprep.subr.mxu0 0.0
      %2714 = vmatpush2.msra.mxu0 0.0
      %2715 = vmatprep.subr.mxu0 0.0
      %2716 = vmatpush2.msra.mxu0 0.0
      %2717 = vmatprep.subr.mxu0 0.0
      %2718 = vmatpush2.msra.mxu0 0.0
      %2719 = vmatprep.subr.mxu0 0.0
      %2720 = vmatpush2.msra.mxu0 0.0
      %2721 = vmatprep.subr.mxu0 0.0
      %2722 = vmatpush2.msra.mxu0 0.0
      %2723 = vmatprep.subr.mxu0 0.0
      %2724 = vmatpush2.msra.mxu0 0.0
      %2725 = vmatprep.subr.mxu0 0.0
      %2726 = vmatpush2.msra.mxu0 0.0
      %2727 = vmatprep.subr.mxu0 0.0
      %2728 = vmatpush2.msra.mxu0 0.0
      %2729 = vmatprep.subr.mxu0 0.0
      %2730 = vmatpush2.msra.mxu0 0.0
      %2731 = vmatprep.subr.mxu0 0.0
      %2732 = vmatpush2.msra.mxu0 0.0
      %2733 = vmatprep.subr.mxu0 0.0
      %2734 = vmatpush2.msra.mxu0 0.0
      %2735 = vmatprep.subr.mxu0 0.0
      %2736 = vmatpush2.msra.mxu0 0.0
      %2737 = vmatprep.subr.mxu0 0.0
      %2738 = vmatpush2.msra.mxu0 0.0
      %2739 = vmatprep.subr.mxu0 0.0
      %2740 = vmatpush2.msra.mxu0 0.0
      %2741 = vmatprep.mubr.f32.mxu0 0.0
      %2742 = vmatmul.mubr.f32.gmra.mxu0 %v2515
      %v2743 = vpop.f32.mrf.mxu0
      %v2744 = vadd.f32 0.0, %v2743
      %v2745 = vpop.f32.mrf.mxu0
      %v2746 = vadd.f32 0.0, %v2745
      %2747 = vdwg.mxu0
      %2748 = vmatprep.subr.mxu0 0.0
      %2749 = vmatpush1.msra.mxu0 0.0
      %2750 = vmatprep.subr.mxu0 0.0
      %2751 = vmatpush1.msra.mxu0 0.0
      %2752 = vmatprep.subr.mxu0 0.0
      %2753 = vmatpush1.msra.mxu0 0.0
      %2754 = vmatprep.subr.mxu0 0.0
      %2755 = vmatpush1.msra.mxu0 0.0
      %2756 = vmatprep.subr.mxu0 0.0
      %2757 = vmatpush1.msra.mxu0 0.0
      %2758 = vmatprep.subr.mxu0 0.0
      %2759 = vmatpush1.msra.mxu0 0.0
      %2760 = vmatprep.subr.mxu0 0.0
      %2761 = vmatpush1.msra.mxu0 0.0
      %2762 = vmatprep.subr.mxu0 0.0
      %2763 = vmatpush1.msra.mxu0 0.0
      %2764 = vmatprep.subr.mxu0 0.0
      %2765 = vmatpush1.msra.mxu0 0.0
      %2766 = vmatprep.subr.mxu0 0.0
      %2767 = vmatpush1.msra.mxu0 0.0
      %2768 = vmatprep.subr.mxu0 0.0
      %2769 = vmatpush1.msra.mxu0 0.0
      %2770 = vmatprep.subr.mxu0 0.0
      %2771 = vmatpush1.msra.mxu0 0.0
      %2772 = vmatprep.subr.mxu0 0.0
      %2773 = vmatpush1.msra.mxu0 0.0
      %2774 = vmatprep.subr.mxu0 0.0
      %2775 = vmatpush1.msra.mxu0 0.0
      %2776 = vmatprep.subr.mxu0 %v2531
      %2777 = vmatpush1.msra.mxu0 %v2529
      %2778 = vmatprep.subr.mxu0 %v2496
      %2779 = vmatpush1.msra.mxu0 %v2495
      %2780 = vmatprep.subr.mxu0 0.0
      %2781 = vmatpush2.msra.mxu0 0.0
      %2782 = vmatprep.subr.mxu0 0.0
      %2783 = vmatpush2.msra.mxu0 0.0
      %2784 = vmatprep.subr.mxu0 0.0
      %2785 = vmatpush2.msra.mxu0 0.0
      %2786 = vmatprep.subr.mxu0 0.0
      %2787 = vmatpush2.msra.mxu0 0.0
      %2788 = vmatprep.subr.mxu0 0.0
      %2789 = vmatpush2.msra.mxu0 0.0
      %2790 = vmatprep.subr.mxu0 0.0
      %2791 = vmatpush2.msra.mxu0 0.0
      %2792 = vmatprep.subr.mxu0 0.0
      %2793 = vmatpush2.msra.mxu0 0.0
      %2794 = vmatprep.subr.mxu0 0.0
      %2795 = vmatpush2.msra.mxu0 0.0
      %2796 = vmatprep.subr.mxu0 0.0
      %2797 = vmatpush2.msra.mxu0 0.0
      %2798 = vmatprep.subr.mxu0 0.0
      %2799 = vmatpush2.msra.mxu0 0.0
      %2800 = vmatprep.subr.mxu0 0.0
      %2801 = vmatpush2.msra.mxu0 0.0
      %2802 = vmatprep.subr.mxu0 0.0
      %2803 = vmatpush2.msra.mxu0 0.0
      %2804 = vmatprep.subr.mxu0 0.0
      %2805 = vmatpush2.msra.mxu0 0.0
      %2806 = vmatprep.subr.mxu0 0.0
      %2807 = vmatpush2.msra.mxu0 0.0
      %2808 = vmatprep.subr.mxu0 0.0
      %2809 = vmatpush2.msra.mxu0 0.0
      %2810 = vmatprep.subr.mxu0 0.0
      %2811 = vmatpush2.msra.mxu0 0.0
      %2812 = vmatprep.mubr.f32.mxu0 0.0
      %2813 = vmatmul.mubr.f32.gmra.mxu0 %v2515
      %v2814 = vpop.f32.mrf.mxu0
      %v2815 = vadd.f32 0.0, %v2814
      %v2816 = vpop.f32.mrf.mxu0
      %v2817 = vadd.f32 0.0, %v2816
      %2818 = vdwg.mxu0
      %2819 = vmatprep.subr.mxu0 0.0
      %2820 = vmatpush1.msra.mxu0 0.0
      %2821 = vmatprep.subr.mxu0 0.0
      %2822 = vmatpush1.msra.mxu0 0.0
      %2823 = vmatprep.subr.mxu0 0.0
      %2824 = vmatpush1.msra.mxu0 0.0
      %2825 = vmatprep.subr.mxu0 0.0
      %2826 = vmatpush1.msra.mxu0 0.0
      %2827 = vmatprep.subr.mxu0 0.0
      %2828 = vmatpush1.msra.mxu0 0.0
      %2829 = vmatprep.subr.mxu0 0.0
      %2830 = vmatpush1.msra.mxu0 0.0
      %2831 = vmatprep.subr.mxu0 0.0
      %2832 = vmatpush1.msra.mxu0 0.0
      %2833 = vmatprep.subr.mxu0 0.0
      %2834 = vmatpush1.msra.mxu0 0.0
      %2835 = vmatprep.subr.mxu0 0.0
      %2836 = vmatpush1.msra.mxu0 0.0
      %2837 = vmatprep.subr.mxu0 0.0
      %2838 = vmatpush1.msra.mxu0 0.0
      %2839 = vmatprep.subr.mxu0 0.0
      %2840 = vmatpush1.msra.mxu0 0.0
      %2841 = vmatprep.subr.mxu0 0.0
      %2842 = vmatpush1.msra.mxu0 0.0
      %2843 = vmatprep.subr.mxu0 0.0
      %2844 = vmatpush1.msra.mxu0 0.0
      %2845 = vmatprep.subr.mxu0 0.0
      %2846 = vmatpush1.msra.mxu0 0.0
      %2847 = vmatprep.subr.mxu0 0.0
      %2848 = vmatpush1.msra.mxu0 %v2533
      %2849 = vmatprep.subr.mxu0 0.0
      %2850 = vmatpush1.msra.mxu0 %v2470
      %2851 = vmatprep.subr.mxu0 0.0
      %2852 = vmatpush2.msra.mxu0 0.0
      %2853 = vmatprep.subr.mxu0 0.0
      %2854 = vmatpush2.msra.mxu0 0.0
      %2855 = vmatprep.subr.mxu0 0.0
      %2856 = vmatpush2.msra.mxu0 0.0
      %2857 = vmatprep.subr.mxu0 0.0
      %2858 = vmatpush2.msra.mxu0 0.0
      %2859 = vmatprep.subr.mxu0 0.0
      %2860 = vmatpush2.msra.mxu0 0.0
      %2861 = vmatprep.subr.mxu0 0.0
      %2862 = vmatpush2.msra.mxu0 0.0
      %2863 = vmatprep.subr.mxu0 0.0
      %2864 = vmatpush2.msra.mxu0 0.0
      %2865 = vmatprep.subr.mxu0 0.0
      %2866 = vmatpush2.msra.mxu0 0.0
      %2867 = vmatprep.subr.mxu0 0.0
      %2868 = vmatpush2.msra.mxu0 0.0
      %2869 = vmatprep.subr.mxu0 0.0
      %2870 = vmatpush2.msra.mxu0 0.0
      %2871 = vmatprep.subr.mxu0 0.0
      %2872 = vmatpush2.msra.mxu0 0.0
      %2873 = vmatprep.subr.mxu0 0.0
      %2874 = vmatpush2.msra.mxu0 0.0
      %2875 = vmatprep.subr.mxu0 0.0
      %2876 = vmatpush2.msra.mxu0 0.0
      %2877 = vmatprep.subr.mxu0 0.0
      %2878 = vmatpush2.msra.mxu0 0.0
      %2879 = vmatprep.subr.mxu0 0.0
      %2880 = vmatpush2.msra.mxu0 0.0
      %2881 = vmatprep.subr.mxu0 0.0
      %2882 = vmatpush2.msra.mxu0 0.0
      %2883 = vmatprep.mubr.f32.mxu0 0.0
      %2884 = vmatmul.mubr.f32.gmra.mxu0 %v2515
      %v2885 = vpop.f32.mrf.mxu0
      %v2886 = vadd.f32 0.0, %v2885
      %v2887 = vpop.f32.mrf.mxu0
      %2888 = vdwg.mxu0
      %v2889 = vadd.f32 %v2442, %v2602
      %v2890 = vadd.f32 %v2443, %v2604
      %v2891 = vadd.f32 %v2444, %v2673
      %v2892 = vadd.f32 %v2445, %v2675
      %v2893 = vadd.f32 %v2446, %v2744
      %v2894 = vadd.f32 %v2447, %v2746
      %v2895 = vadd.f32 %v2448, %v2815
      %v2896 = vadd.f32 %v2449, %v2817
      %v2897 = vadd.f32 %v2450, %v2886
      %s2898 = scalar_lea.vmem %s1, 48
      %v2899 = vld [vmem:[%s2898] sm:$0x7]
      %2900 = vrot.lane.b32.xlu0 %v1967, 126
      %v2901 = vpop.permute.xlu0 %2900
      %2902 = vrot.lane.b32.xlu0 %v1968, 126
      %v2903 = vpop.permute.xlu0 %2902
      %2904 = vrot.lane.b32.xlu0 %v1969, 126
      %v2905 = vpop.permute.xlu0 %2904
      %2906 = vrot.lane.b32.xlu0 %v1970, 126
      %v2907 = vpop.permute.xlu0 %2906
      %2908 = vrot.lane.b32.xlu0 %v1971, 126
      %v2909 = vpop.permute.xlu0 %2908
      %2910 = vrot.lane.b32.xlu0 %v1972, 126
      %v2911 = vpop.permute.xlu0 %2910
      %2912 = vrot.lane.b32.xlu0 %v1973, 126
      %v2913 = vpop.permute.xlu0 %2912
      %2914 = vrot.lane.b32.xlu0 %v1974, 126
      %v2915 = vpop.permute.xlu0 %2914
      %2916 = vrot.lane.b32.xlu0 %v1975, 126
      %v2917 = vpop.permute.xlu0 %2916
      %2918 = vrot.lane.b32.xlu0 %v1976, 126
      %v2919 = vpop.permute.xlu0 %2918
      %2920 = vrot.lane.b32.xlu0 %v1977, 126
      %v2921 = vpop.permute.xlu0 %2920
      %2922 = vrot.lane.b32.xlu0 %v1978, 126
      %v2923 = vpop.permute.xlu0 %2922
      %2924 = vrot.lane.b32.xlu0 %v1979, 126
      %v2925 = vpop.permute.xlu0 %2924
      %2926 = vrot.lane.b32.xlu0 %v1980, 126
      %v2927 = vpop.permute.xlu0 %2926
      %2928 = vrot.lane.b32.xlu0 %v1981, 126
      %v2929 = vpop.permute.xlu0 %2928
      %2930 = vrot.lane.b32.xlu0 %v1982, 126
      %v2931 = vpop.permute.xlu0 %2930
      %2932 = vrot.lane.b32.xlu0 %v1983, 126
      %v2933 = vpop.permute.xlu0 %2932
      %2934 = vrot.lane.b32.xlu0 %v1984, 126
      %v2935 = vpop.permute.xlu0 %2934
      %vm2936 = vcmask 1031168
      %v2937 = vsel %vm2936, %v2901, %v2903
      %v2938 = vsel %vm2936, %v2903, %v2905
      %v2939 = vsel %vm2936, %v2905, %v2907
      %v2940 = vsel %vm2936, %v2907, %v2909
      %v2941 = vsel %vm2936, %v2909, %v2911
      %v2942 = vsel %vm2936, %v2911, %v2913
      %v2943 = vsel %vm2936, %v2913, %v2915
      %v2944 = vsel %vm2936, %v2915, %v2917
      %v2945 = vsel %vm2936, %v2919, %v2921
      %v2946 = vsel %vm2936, %v2921, %v2923
      %v2947 = vsel %vm2936, %v2923, %v2925
      %v2948 = vsel %vm2936, %v2925, %v2927
      %v2949 = vsel %vm2936, %v2927, %v2929
      %v2950 = vsel %vm2936, %v2929, %v2931
      %v2951 = vsel %vm2936, %v2931, %v2933
      %v2952 = vsel %vm2936, %v2933, %v2935
      %v2963 = vsel %vm277, %v2899, 0
      %v2965 = vsel %vm281, %v2945, 0
      %v2967 = vsel %vm281, %v2946, 0
      %v2969 = vsel %vm281, %v2947, 0
      %v2971 = vsel %vm281, %v2948, 0
      %v2973 = vsel %vm281, %v2949, 0
      %v2975 = vsel %vm281, %v2950, 0
      %v2977 = vsel %vm281, %v2951, 0
      %v2979 = vsel %vm281, %v2952, 0
      %v2981 = vsel %vm281, %v2935, 0
      %2983 = vmatprep.subr.mxu0 0.0
      %2984 = vmatpush1.msra.mxu0 0.0
      %2985 = vmatprep.subr.mxu0 0.0
      %2986 = vmatpush1.msra.mxu0 0.0
      %2987 = vmatprep.subr.mxu0 0.0
      %2988 = vmatpush1.msra.mxu0 0.0
      %2989 = vmatprep.subr.mxu0 0.0
      %2990 = vmatpush1.msra.mxu0 0.0
      %2991 = vmatprep.subr.mxu0 0.0
      %2992 = vmatpush1.msra.mxu0 0.0
      %2993 = vmatprep.subr.mxu0 0.0
      %2994 = vmatpush1.msra.mxu0 0.0
      %2995 = vmatprep.subr.mxu0 0.0
      %2996 = vmatpush1.msra.mxu0 0.0
      %2997 = vmatprep.subr.mxu0 0.0
      %2998 = vmatpush1.msra.mxu0 0.0
      %2999 = vmatprep.subr.mxu0 0.0
      %3000 = vmatpush1.msra.mxu0 0.0
      %3001 = vmatprep.subr.mxu0 0.0
      %3002 = vmatpush1.msra.mxu0 0.0
      %3003 = vmatprep.subr.mxu0 0.0
      %3004 = vmatpush1.msra.mxu0 0.0
      %3005 = vmatprep.subr.mxu0 0.0
      %3006 = vmatpush1.msra.mxu0 0.0
      %3007 = vmatprep.subr.mxu0 0.0
      %3008 = vmatpush1.msra.mxu0 0.0
      %3009 = vmatprep.subr.mxu0 0.0
      %3010 = vmatpush1.msra.mxu0 0.0
      %3011 = vmatprep.subr.mxu0 %v2967
      %3012 = vmatpush1.msra.mxu0 %v2965
      %3013 = vmatprep.subr.mxu0 %v2938
      %3014 = vmatpush1.msra.mxu0 %v2937
      %3015 = vmatprep.subr.mxu0 0.0
      %3016 = vmatpush2.msra.mxu0 0.0
      %3017 = vmatprep.subr.mxu0 0.0
      %3018 = vmatpush2.msra.mxu0 0.0
      %3019 = vmatprep.subr.mxu0 0.0
      %3020 = vmatpush2.msra.mxu0 0.0
      %3021 = vmatprep.subr.mxu0 0.0
      %3022 = vmatpush2.msra.mxu0 0.0
      %3023 = vmatprep.subr.mxu0 0.0
      %3024 = vmatpush2.msra.mxu0 0.0
      %3025 = vmatprep.subr.mxu0 0.0
      %3026 = vmatpush2.msra.mxu0 0.0
      %3027 = vmatprep.subr.mxu0 0.0
      %3028 = vmatpush2.msra.mxu0 0.0
      %3029 = vmatprep.subr.mxu0 0.0
      %3030 = vmatpush2.msra.mxu0 0.0
      %3031 = vmatprep.subr.mxu0 0.0
      %3032 = vmatpush2.msra.mxu0 0.0
      %3033 = vmatprep.subr.mxu0 0.0
      %3034 = vmatpush2.msra.mxu0 0.0
      %3035 = vmatprep.subr.mxu0 0.0
      %3036 = vmatpush2.msra.mxu0 0.0
      %3037 = vmatprep.subr.mxu0 0.0
      %3038 = vmatpush2.msra.mxu0 0.0
      %3039 = vmatprep.subr.mxu0 0.0
      %3040 = vmatpush2.msra.mxu0 0.0
      %3041 = vmatprep.subr.mxu0 0.0
      %3042 = vmatpush2.msra.mxu0 0.0
      %3043 = vmatprep.subr.mxu0 0.0
      %3044 = vmatpush2.msra.mxu0 0.0
      %3045 = vmatprep.subr.mxu0 0.0
      %3046 = vmatpush2.msra.mxu0 0.0
      %3047 = vmatprep.mubr.f32.mxu0 0.0
      %3048 = vmatmul.mubr.f32.gmra.mxu0 %v2963
      %v3049 = vpop.f32.mrf.mxu0
      %v3050 = vadd.f32 0.0, %v3049
      %v3051 = vpop.f32.mrf.mxu0
      %v3052 = vadd.f32 0.0, %v3051
      %3053 = vdwg.mxu0
      %3054 = vmatprep.subr.mxu0 0.0
      %3055 = vmatpush1.msra.mxu0 0.0
      %3056 = vmatprep.subr.mxu0 0.0
      %3057 = vmatpush1.msra.mxu0 0.0
      %3058 = vmatprep.subr.mxu0 0.0
      %3059 = vmatpush1.msra.mxu0 0.0
      %3060 = vmatprep.subr.mxu0 0.0
      %3061 = vmatpush1.msra.mxu0 0.0
      %3062 = vmatprep.subr.mxu0 0.0
      %3063 = vmatpush1.msra.mxu0 0.0
      %3064 = vmatprep.subr.mxu0 0.0
      %3065 = vmatpush1.msra.mxu0 0.0
      %3066 = vmatprep.subr.mxu0 0.0
      %3067 = vmatpush1.msra.mxu0 0.0
      %3068 = vmatprep.subr.mxu0 0.0
      %3069 = vmatpush1.msra.mxu0 0.0
      %3070 = vmatprep.subr.mxu0 0.0
      %3071 = vmatpush1.msra.mxu0 0.0
      %3072 = vmatprep.subr.mxu0 0.0
      %3073 = vmatpush1.msra.mxu0 0.0
      %3074 = vmatprep.subr.mxu0 0.0
      %3075 = vmatpush1.msra.mxu0 0.0
      %3076 = vmatprep.subr.mxu0 0.0
      %3077 = vmatpush1.msra.mxu0 0.0
      %3078 = vmatprep.subr.mxu0 0.0
      %3079 = vmatpush1.msra.mxu0 0.0
      %3080 = vmatprep.subr.mxu0 0.0
      %3081 = vmatpush1.msra.mxu0 0.0
      %3082 = vmatprep.subr.mxu0 %v2971
      %3083 = vmatpush1.msra.mxu0 %v2969
      %3084 = vmatprep.subr.mxu0 %v2940
      %3085 = vmatpush1.msra.mxu0 %v2939
      %3086 = vmatprep.subr.mxu0 0.0
      %3087 = vmatpush2.msra.mxu0 0.0
      %3088 = vmatprep.subr.mxu0 0.0
      %3089 = vmatpush2.msra.mxu0 0.0
      %3090 = vmatprep.subr.mxu0 0.0
      %3091 = vmatpush2.msra.mxu0 0.0
      %3092 = vmatprep.subr.mxu0 0.0
      %3093 = vmatpush2.msra.mxu0 0.0
      %3094 = vmatprep.subr.mxu0 0.0
      %3095 = vmatpush2.msra.mxu0 0.0
      %3096 = vmatprep.subr.mxu0 0.0
      %3097 = vmatpush2.msra.mxu0 0.0
      %3098 = vmatprep.subr.mxu0 0.0
      %3099 = vmatpush2.msra.mxu0 0.0
      %3100 = vmatprep.subr.mxu0 0.0
      %3101 = vmatpush2.msra.mxu0 0.0
      %3102 = vmatprep.subr.mxu0 0.0
      %3103 = vmatpush2.msra.mxu0 0.0
      %3104 = vmatprep.subr.mxu0 0.0
      %3105 = vmatpush2.msra.mxu0 0.0
      %3106 = vmatprep.subr.mxu0 0.0
      %3107 = vmatpush2.msra.mxu0 0.0
      %3108 = vmatprep.subr.mxu0 0.0
      %3109 = vmatpush2.msra.mxu0 0.0
      %3110 = vmatprep.subr.mxu0 0.0
      %3111 = vmatpush2.msra.mxu0 0.0
      %3112 = vmatprep.subr.mxu0 0.0
      %3113 = vmatpush2.msra.mxu0 0.0
      %3114 = vmatprep.subr.mxu0 0.0
      %3115 = vmatpush2.msra.mxu0 0.0
      %3116 = vmatprep.subr.mxu0 0.0
      %3117 = vmatpush2.msra.mxu0 0.0
      %3118 = vmatprep.mubr.f32.mxu0 0.0
      %3119 = vmatmul.mubr.f32.gmra.mxu0 %v2963
      %v3120 = vpop.f32.mrf.mxu0
      %v3121 = vadd.f32 0.0, %v3120
      %v3122 = vpop.f32.mrf.mxu0
      %v3123 = vadd.f32 0.0, %v3122
      %3124 = vdwg.mxu0
      %3125 = vmatprep.subr.mxu0 0.0
      %3126 = vmatpush1.msra.mxu0 0.0
      %3127 = vmatprep.subr.mxu0 0.0
      %3128 = vmatpush1.msra.mxu0 0.0
      %3129 = vmatprep.subr.mxu0 0.0
      %3130 = vmatpush1.msra.mxu0 0.0
      %3131 = vmatprep.subr.mxu0 0.0
      %3132 = vmatpush1.msra.mxu0 0.0
      %3133 = vmatprep.subr.mxu0 0.0
      %3134 = vmatpush1.msra.mxu0 0.0
      %3135 = vmatprep.subr.mxu0 0.0
      %3136 = vmatpush1.msra.mxu0 0.0
      %3137 = vmatprep.subr.mxu0 0.0
      %3138 = vmatpush1.msra.mxu0 0.0
      %3139 = vmatprep.subr.mxu0 0.0
      %3140 = vmatpush1.msra.mxu0 0.0
      %3141 = vmatprep.subr.mxu0 0.0
      %3142 = vmatpush1.msra.mxu0 0.0
      %3143 = vmatprep.subr.mxu0 0.0
      %3144 = vmatpush1.msra.mxu0 0.0
      %3145 = vmatprep.subr.mxu0 0.0
      %3146 = vmatpush1.msra.mxu0 0.0
      %3147 = vmatprep.subr.mxu0 0.0
      %3148 = vmatpush1.msra.mxu0 0.0
      %3149 = vmatprep.subr.mxu0 0.0
      %3150 = vmatpush1.msra.mxu0 0.0
      %3151 = vmatprep.subr.mxu0 0.0
      %3152 = vmatpush1.msra.mxu0 0.0
      %3153 = vmatprep.subr.mxu0 %v2975
      %3154 = vmatpush1.msra.mxu0 %v2973
      %3155 = vmatprep.subr.mxu0 %v2942
      %3156 = vmatpush1.msra.mxu0 %v2941
      %3157 = vmatprep.subr.mxu0 0.0
      %3158 = vmatpush2.msra.mxu0 0.0
      %3159 = vmatprep.subr.mxu0 0.0
      %3160 = vmatpush2.msra.mxu0 0.0
      %3161 = vmatprep.subr.mxu0 0.0
      %3162 = vmatpush2.msra.mxu0 0.0
      %3163 = vmatprep.subr.mxu0 0.0
      %3164 = vmatpush2.msra.mxu0 0.0
      %3165 = vmatprep.subr.mxu0 0.0
      %3166 = vmatpush2.msra.mxu0 0.0
      %3167 = vmatprep.subr.mxu0 0.0
      %3168 = vmatpush2.msra.mxu0 0.0
      %3169 = vmatprep.subr.mxu0 0.0
      %3170 = vmatpush2.msra.mxu0 0.0
      %3171 = vmatprep.subr.mxu0 0.0
      %3172 = vmatpush2.msra.mxu0 0.0
      %3173 = vmatprep.subr.mxu0 0.0
      %3174 = vmatpush2.msra.mxu0 0.0
      %3175 = vmatprep.subr.mxu0 0.0
      %3176 = vmatpush2.msra.mxu0 0.0
      %3177 = vmatprep.subr.mxu0 0.0
      %3178 = vmatpush2.msra.mxu0 0.0
      %3179 = vmatprep.subr.mxu0 0.0
      %3180 = vmatpush2.msra.mxu0 0.0
      %3181 = vmatprep.subr.mxu0 0.0
      %3182 = vmatpush2.msra.mxu0 0.0
      %3183 = vmatprep.subr.mxu0 0.0
      %3184 = vmatpush2.msra.mxu0 0.0
      %3185 = vmatprep.subr.mxu0 0.0
      %3186 = vmatpush2.msra.mxu0 0.0
      %3187 = vmatprep.subr.mxu0 0.0
      %3188 = vmatpush2.msra.mxu0 0.0
      %3189 = vmatprep.mubr.f32.mxu0 0.0
      %3190 = vmatmul.mubr.f32.gmra.mxu0 %v2963
      %v3191 = vpop.f32.mrf.mxu0
      %v3192 = vadd.f32 0.0, %v3191
      %v3193 = vpop.f32.mrf.mxu0
      %v3194 = vadd.f32 0.0, %v3193
      %3195 = vdwg.mxu0
      %3196 = vmatprep.subr.mxu0 0.0
      %3197 = vmatpush1.msra.mxu0 0.0
      %3198 = vmatprep.subr.mxu0 0.0
      %3199 = vmatpush1.msra.mxu0 0.0
      %3200 = vmatprep.subr.mxu0 0.0
      %3201 = vmatpush1.msra.mxu0 0.0
      %3202 = vmatprep.subr.mxu0 0.0
      %3203 = vmatpush1.msra.mxu0 0.0
      %3204 = vmatprep.subr.mxu0 0.0
      %3205 = vmatpush1.msra.mxu0 0.0
      %3206 = vmatprep.subr.mxu0 0.0
      %3207 = vmatpush1.msra.mxu0 0.0
      %3208 = vmatprep.subr.mxu0 0.0
      %3209 = vmatpush1.msra.mxu0 0.0
      %3210 = vmatprep.subr.mxu0 0.0
      %3211 = vmatpush1.msra.mxu0 0.0
      %3212 = vmatprep.subr.mxu0 0.0
      %3213 = vmatpush1.msra.mxu0 0.0
      %3214 = vmatprep.subr.mxu0 0.0
      %3215 = vmatpush1.msra.mxu0 0.0
      %3216 = vmatprep.subr.mxu0 0.0
      %3217 = vmatpush1.msra.mxu0 0.0
      %3218 = vmatprep.subr.mxu0 0.0
      %3219 = vmatpush1.msra.mxu0 0.0
      %3220 = vmatprep.subr.mxu0 0.0
      %3221 = vmatpush1.msra.mxu0 0.0
      %3222 = vmatprep.subr.mxu0 0.0
      %3223 = vmatpush1.msra.mxu0 0.0
      %3224 = vmatprep.subr.mxu0 %v2979
      %3225 = vmatpush1.msra.mxu0 %v2977
      %3226 = vmatprep.subr.mxu0 %v2944
      %3227 = vmatpush1.msra.mxu0 %v2943
      %3228 = vmatprep.subr.mxu0 0.0
      %3229 = vmatpush2.msra.mxu0 0.0
      %3230 = vmatprep.subr.mxu0 0.0
      %3231 = vmatpush2.msra.mxu0 0.0
      %3232 = vmatprep.subr.mxu0 0.0
      %3233 = vmatpush2.msra.mxu0 0.0
      %3234 = vmatprep.subr.mxu0 0.0
      %3235 = vmatpush2.msra.mxu0 0.0
      %3236 = vmatprep.subr.mxu0 0.0
      %3237 = vmatpush2.msra.mxu0 0.0
      %3238 = vmatprep.subr.mxu0 0.0
      %3239 = vmatpush2.msra.mxu0 0.0
      %3240 = vmatprep.subr.mxu0 0.0
      %3241 = vmatpush2.msra.mxu0 0.0
      %3242 = vmatprep.subr.mxu0 0.0
      %3243 = vmatpush2.msra.mxu0 0.0
      %3244 = vmatprep.subr.mxu0 0.0
      %3245 = vmatpush2.msra.mxu0 0.0
      %3246 = vmatprep.subr.mxu0 0.0
      %3247 = vmatpush2.msra.mxu0 0.0
      %3248 = vmatprep.subr.mxu0 0.0
      %3249 = vmatpush2.msra.mxu0 0.0
      %3250 = vmatprep.subr.mxu0 0.0
      %3251 = vmatpush2.msra.mxu0 0.0
      %3252 = vmatprep.subr.mxu0 0.0
      %3253 = vmatpush2.msra.mxu0 0.0
      %3254 = vmatprep.subr.mxu0 0.0
      %3255 = vmatpush2.msra.mxu0 0.0
      %3256 = vmatprep.subr.mxu0 0.0
      %3257 = vmatpush2.msra.mxu0 0.0
      %3258 = vmatprep.subr.mxu0 0.0
      %3259 = vmatpush2.msra.mxu0 0.0
      %3260 = vmatprep.mubr.f32.mxu0 0.0
      %3261 = vmatmul.mubr.f32.gmra.mxu0 %v2963
      %v3262 = vpop.f32.mrf.mxu0
      %v3263 = vadd.f32 0.0, %v3262
      %v3264 = vpop.f32.mrf.mxu0
      %v3265 = vadd.f32 0.0, %v3264
      %3266 = vdwg.mxu0
      %3267 = vmatprep.subr.mxu0 0.0
      %3268 = vmatpush1.msra.mxu0 0.0
      %3269 = vmatprep.subr.mxu0 0.0
      %3270 = vmatpush1.msra.mxu0 0.0
      %3271 = vmatprep.subr.mxu0 0.0
      %3272 = vmatpush1.msra.mxu0 0.0
      %3273 = vmatprep.subr.mxu0 0.0
      %3274 = vmatpush1.msra.mxu0 0.0
      %3275 = vmatprep.subr.mxu0 0.0
      %3276 = vmatpush1.msra.mxu0 0.0
      %3277 = vmatprep.subr.mxu0 0.0
      %3278 = vmatpush1.msra.mxu0 0.0
      %3279 = vmatprep.subr.mxu0 0.0
      %3280 = vmatpush1.msra.mxu0 0.0
      %3281 = vmatprep.subr.mxu0 0.0
      %3282 = vmatpush1.msra.mxu0 0.0
      %3283 = vmatprep.subr.mxu0 0.0
      %3284 = vmatpush1.msra.mxu0 0.0
      %3285 = vmatprep.subr.mxu0 0.0
      %3286 = vmatpush1.msra.mxu0 0.0
      %3287 = vmatprep.subr.mxu0 0.0
      %3288 = vmatpush1.msra.mxu0 0.0
      %3289 = vmatprep.subr.mxu0 0.0
      %3290 = vmatpush1.msra.mxu0 0.0
      %3291 = vmatprep.subr.mxu0 0.0
      %3292 = vmatpush1.msra.mxu0 0.0
      %3293 = vmatprep.subr.mxu0 0.0
      %3294 = vmatpush1.msra.mxu0 0.0
      %3295 = vmatprep.subr.mxu0 0.0
      %3296 = vmatpush1.msra.mxu0 %v2981
      %3297 = vmatprep.subr.mxu0 0.0
      %3298 = vmatpush1.msra.mxu0 %v2917
      %3299 = vmatprep.subr.mxu0 0.0
      %3300 = vmatpush2.msra.mxu0 0.0
      %3301 = vmatprep.subr.mxu0 0.0
      %3302 = vmatpush2.msra.mxu0 0.0
      %3303 = vmatprep.subr.mxu0 0.0
      %3304 = vmatpush2.msra.mxu0 0.0
      %3305 = vmatprep.subr.mxu0 0.0
      %3306 = vmatpush2.msra.mxu0 0.0
      %3307 = vmatprep.subr.mxu0 0.0
      %3308 = vmatpush2.msra.mxu0 0.0
      %3309 = vmatprep.subr.mxu0 0.0
      %3310 = vmatpush2.msra.mxu0 0.0
      %3311 = vmatprep.subr.mxu0 0.0
      %3312 = vmatpush2.msra.mxu0 0.0
      %3313 = vmatprep.subr.mxu0 0.0
      %3314 = vmatpush2.msra.mxu0 0.0
      %3315 = vmatprep.subr.mxu0 0.0
      %3316 = vmatpush2.msra.mxu0 0.0
      %3317 = vmatprep.subr.mxu0 0.0
      %3318 = vmatpush2.msra.mxu0 0.0
      %3319 = vmatprep.subr.mxu0 0.0
      %3320 = vmatpush2.msra.mxu0 0.0
      %3321 = vmatprep.subr.mxu0 0.0
      %3322 = vmatpush2.msra.mxu0 0.0
      %3323 = vmatprep.subr.mxu0 0.0
      %3324 = vmatpush2.msra.mxu0 0.0
      %3325 = vmatprep.subr.mxu0 0.0
      %3326 = vmatpush2.msra.mxu0 0.0
      %3327 = vmatprep.subr.mxu0 0.0
      %3328 = vmatpush2.msra.mxu0 0.0
      %3329 = vmatprep.subr.mxu0 0.0
      %3330 = vmatpush2.msra.mxu0 0.0
      %3331 = vmatprep.mubr.f32.mxu0 0.0
      %3332 = vmatmul.mubr.f32.gmra.mxu0 %v2963
      %v3333 = vpop.f32.mrf.mxu0
      %v3334 = vadd.f32 0.0, %v3333
      %v3335 = vpop.f32.mrf.mxu0
      %3336 = vdwg.mxu0
      %v3337 = vadd.f32 %v2889, %v3050
      %v3338 = vadd.f32 %v2890, %v3052
      %v3339 = vadd.f32 %v2891, %v3121
      %v3340 = vadd.f32 %v2892, %v3123
      %v3341 = vadd.f32 %v2893, %v3192
      %v3342 = vadd.f32 %v2894, %v3194
      %v3343 = vadd.f32 %v2895, %v3263
      %v3344 = vadd.f32 %v2896, %v3265
      %v3345 = vadd.f32 %v2897, %v3334
      %s3346 = scalar_lea.vmem %s1, 56
      %v3347 = vld [vmem:[%s3346] sm:$0x7]
      %3348 = vrot.lane.b32.xlu0 %v1967, 127
      %v3349 = vpop.permute.xlu0 %3348
      %3350 = vrot.lane.b32.xlu0 %v1968, 127
      %v3351 = vpop.permute.xlu0 %3350
      %3352 = vrot.lane.b32.xlu0 %v1969, 127
      %v3353 = vpop.permute.xlu0 %3352
      %3354 = vrot.lane.b32.xlu0 %v1970, 127
      %v3355 = vpop.permute.xlu0 %3354
      %3356 = vrot.lane.b32.xlu0 %v1971, 127
      %v3357 = vpop.permute.xlu0 %3356
      %3358 = vrot.lane.b32.xlu0 %v1972, 127
      %v3359 = vpop.permute.xlu0 %3358
      %3360 = vrot.lane.b32.xlu0 %v1973, 127
      %v3361 = vpop.permute.xlu0 %3360
      %3362 = vrot.lane.b32.xlu0 %v1974, 127
      %v3363 = vpop.permute.xlu0 %3362
      %3364 = vrot.lane.b32.xlu0 %v1975, 127
      %v3365 = vpop.permute.xlu0 %3364
      %3366 = vrot.lane.b32.xlu0 %v1976, 127
      %v3367 = vpop.permute.xlu0 %3366
      %3368 = vrot.lane.b32.xlu0 %v1977, 127
      %v3369 = vpop.permute.xlu0 %3368
      %3370 = vrot.lane.b32.xlu0 %v1978, 127
      %v3371 = vpop.permute.xlu0 %3370
      %3372 = vrot.lane.b32.xlu0 %v1979, 127
      %v3373 = vpop.permute.xlu0 %3372
      %3374 = vrot.lane.b32.xlu0 %v1980, 127
      %v3375 = vpop.permute.xlu0 %3374
      %3376 = vrot.lane.b32.xlu0 %v1981, 127
      %v3377 = vpop.permute.xlu0 %3376
      %3378 = vrot.lane.b32.xlu0 %v1982, 127
      %v3379 = vpop.permute.xlu0 %3378
      %3380 = vrot.lane.b32.xlu0 %v1983, 127
      %v3381 = vpop.permute.xlu0 %3380
      %3382 = vrot.lane.b32.xlu0 %v1984, 127
      %v3383 = vpop.permute.xlu0 %3382
      %v3384 = vsel %vm1149, %v3349, %v3351
      %v3385 = vsel %vm1149, %v3351, %v3353
      %v3386 = vsel %vm1149, %v3353, %v3355
      %v3387 = vsel %vm1149, %v3355, %v3357
      %v3388 = vsel %vm1149, %v3357, %v3359
      %v3389 = vsel %vm1149, %v3359, %v3361
      %v3390 = vsel %vm1149, %v3361, %v3363
      %v3391 = vsel %vm1149, %v3363, %v3365
      %v3392 = vsel %vm1149, %v3367, %v3369
      %v3393 = vsel %vm1149, %v3369, %v3371
      %v3394 = vsel %vm1149, %v3371, %v3373
      %v3395 = vsel %vm1149, %v3373, %v3375
      %v3396 = vsel %vm1149, %v3375, %v3377
      %v3397 = vsel %vm1149, %v3377, %v3379
      %v3398 = vsel %vm1149, %v3379, %v3381
      %v3399 = vsel %vm1149, %v3381, %v3383
      %v3410 = vsel %vm277, %v3347, 0
      %v3412 = vsel %vm281, %v3392, 0
      %v3414 = vsel %vm281, %v3393, 0
      %v3416 = vsel %vm281, %v3394, 0
      %v3418 = vsel %vm281, %v3395, 0
      %v3420 = vsel %vm281, %v3396, 0
      %v3422 = vsel %vm281, %v3397, 0
      %v3424 = vsel %vm281, %v3398, 0
      %v3426 = vsel %vm281, %v3399, 0
      %v3428 = vsel %vm281, %v3383, 0
      %3430 = vmatprep.subr.mxu0 0.0
      %3431 = vmatpush1.msra.mxu0 0.0
      %3432 = vmatprep.subr.mxu0 0.0
      %3433 = vmatpush1.msra.mxu0 0.0
      %3434 = vmatprep.subr.mxu0 0.0
      %3435 = vmatpush1.msra.mxu0 0.0
      %3436 = vmatprep.subr.mxu0 0.0
      %3437 = vmatpush1.msra.mxu0 0.0
      %3438 = vmatprep.subr.mxu0 0.0
      %3439 = vmatpush1.msra.mxu0 0.0
      %3440 = vmatprep.subr.mxu0 0.0
      %3441 = vmatpush1.msra.mxu0 0.0
      %3442 = vmatprep.subr.mxu0 0.0
      %3443 = vmatpush1.msra.mxu0 0.0
      %3444 = vmatprep.subr.mxu0 0.0
      %3445 = vmatpush1.msra.mxu0 0.0
      %3446 = vmatprep.subr.mxu0 0.0
      %3447 = vmatpush1.msra.mxu0 0.0
      %3448 = vmatprep.subr.mxu0 0.0
      %3449 = vmatpush1.msra.mxu0 0.0
      %3450 = vmatprep.subr.mxu0 0.0
      %3451 = vmatpush1.msra.mxu0 0.0
      %3452 = vmatprep.subr.mxu0 0.0
      %3453 = vmatpush1.msra.mxu0 0.0
      %3454 = vmatprep.subr.mxu0 0.0
      %3455 = vmatpush1.msra.mxu0 0.0
      %3456 = vmatprep.subr.mxu0 0.0
      %3457 = vmatpush1.msra.mxu0 0.0
      %3458 = vmatprep.subr.mxu0 %v3414
      %3459 = vmatpush1.msra.mxu0 %v3412
      %3460 = vmatprep.subr.mxu0 %v3385
      %3461 = vmatpush1.msra.mxu0 %v3384
      %3462 = vmatprep.subr.mxu0 0.0
      %3463 = vmatpush2.msra.mxu0 0.0
      %3464 = vmatprep.subr.mxu0 0.0
      %3465 = vmatpush2.msra.mxu0 0.0
      %3466 = vmatprep.subr.mxu0 0.0
      %3467 = vmatpush2.msra.mxu0 0.0
      %3468 = vmatprep.subr.mxu0 0.0
      %3469 = vmatpush2.msra.mxu0 0.0
      %3470 = vmatprep.subr.mxu0 0.0
      %3471 = vmatpush2.msra.mxu0 0.0
      %3472 = vmatprep.subr.mxu0 0.0
      %3473 = vmatpush2.msra.mxu0 0.0
      %3474 = vmatprep.subr.mxu0 0.0
      %3475 = vmatpush2.msra.mxu0 0.0
      %3476 = vmatprep.subr.mxu0 0.0
      %3477 = vmatpush2.msra.mxu0 0.0
      %3478 = vmatprep.subr.mxu0 0.0
      %3479 = vmatpush2.msra.mxu0 0.0
      %3480 = vmatprep.subr.mxu0 0.0
      %3481 = vmatpush2.msra.mxu0 0.0
      %3482 = vmatprep.subr.mxu0 0.0
      %3483 = vmatpush2.msra.mxu0 0.0
      %3484 = vmatprep.subr.mxu0 0.0
      %3485 = vmatpush2.msra.mxu0 0.0
      %3486 = vmatprep.subr.mxu0 0.0
      %3487 = vmatpush2.msra.mxu0 0.0
      %3488 = vmatprep.subr.mxu0 0.0
      %3489 = vmatpush2.msra.mxu0 0.0
      %3490 = vmatprep.subr.mxu0 0.0
      %3491 = vmatpush2.msra.mxu0 0.0
      %3492 = vmatprep.subr.mxu0 0.0
      %3493 = vmatpush2.msra.mxu0 0.0
      %3494 = vmatprep.mubr.f32.mxu0 0.0
      %3495 = vmatmul.mubr.f32.gmra.mxu0 %v3410
      %v3496 = vpop.f32.mrf.mxu0
      %v3497 = vadd.f32 0.0, %v3496
      %v3498 = vpop.f32.mrf.mxu0
      %v3499 = vadd.f32 0.0, %v3498
      %3500 = vdwg.mxu0
      %3501 = vmatprep.subr.mxu0 0.0
      %3502 = vmatpush1.msra.mxu0 0.0
      %3503 = vmatprep.subr.mxu0 0.0
      %3504 = vmatpush1.msra.mxu0 0.0
      %3505 = vmatprep.subr.mxu0 0.0
      %3506 = vmatpush1.msra.mxu0 0.0
      %3507 = vmatprep.subr.mxu0 0.0
      %3508 = vmatpush1.msra.mxu0 0.0
      %3509 = vmatprep.subr.mxu0 0.0
      %3510 = vmatpush1.msra.mxu0 0.0
      %3511 = vmatprep.subr.mxu0 0.0
      %3512 = vmatpush1.msra.mxu0 0.0
      %3513 = vmatprep.subr.mxu0 0.0
      %3514 = vmatpush1.msra.mxu0 0.0
      %3515 = vmatprep.subr.mxu0 0.0
      %3516 = vmatpush1.msra.mxu0 0.0
      %3517 = vmatprep.subr.mxu0 0.0
      %3518 = vmatpush1.msra.mxu0 0.0
      %3519 = vmatprep.subr.mxu0 0.0
      %3520 = vmatpush1.msra.mxu0 0.0
      %3521 = vmatprep.subr.mxu0 0.0
      %3522 = vmatpush1.msra.mxu0 0.0
      %3523 = vmatprep.subr.mxu0 0.0
      %3524 = vmatpush1.msra.mxu0 0.0
      %3525 = vmatprep.subr.mxu0 0.0
      %3526 = vmatpush1.msra.mxu0 0.0
      %3527 = vmatprep.subr.mxu0 0.0
      %3528 = vmatpush1.msra.mxu0 0.0
      %3529 = vmatprep.subr.mxu0 %v3418
      %3530 = vmatpush1.msra.mxu0 %v3416
      %3531 = vmatprep.subr.mxu0 %v3387
      %3532 = vmatpush1.msra.mxu0 %v3386
      %3533 = vmatprep.subr.mxu0 0.0
      %3534 = vmatpush2.msra.mxu0 0.0
      %3535 = vmatprep.subr.mxu0 0.0
      %3536 = vmatpush2.msra.mxu0 0.0
      %3537 = vmatprep.subr.mxu0 0.0
      %3538 = vmatpush2.msra.mxu0 0.0
      %3539 = vmatprep.subr.mxu0 0.0
      %3540 = vmatpush2.msra.mxu0 0.0
      %3541 = vmatprep.subr.mxu0 0.0
      %3542 = vmatpush2.msra.mxu0 0.0
      %3543 = vmatprep.subr.mxu0 0.0
      %3544 = vmatpush2.msra.mxu0 0.0
      %3545 = vmatprep.subr.mxu0 0.0
      %3546 = vmatpush2.msra.mxu0 0.0
      %3547 = vmatprep.subr.mxu0 0.0
      %3548 = vmatpush2.msra.mxu0 0.0
      %3549 = vmatprep.subr.mxu0 0.0
      %3550 = vmatpush2.msra.mxu0 0.0
      %3551 = vmatprep.subr.mxu0 0.0
      %3552 = vmatpush2.msra.mxu0 0.0
      %3553 = vmatprep.subr.mxu0 0.0
      %3554 = vmatpush2.msra.mxu0 0.0
      %3555 = vmatprep.subr.mxu0 0.0
      %3556 = vmatpush2.msra.mxu0 0.0
      %3557 = vmatprep.subr.mxu0 0.0
      %3558 = vmatpush2.msra.mxu0 0.0
      %3559 = vmatprep.subr.mxu0 0.0
      %3560 = vmatpush2.msra.mxu0 0.0
      %3561 = vmatprep.subr.mxu0 0.0
      %3562 = vmatpush2.msra.mxu0 0.0
      %3563 = vmatprep.subr.mxu0 0.0
      %3564 = vmatpush2.msra.mxu0 0.0
      %3565 = vmatprep.mubr.f32.mxu0 0.0
      %3566 = vmatmul.mubr.f32.gmra.mxu0 %v3410
      %v3567 = vpop.f32.mrf.mxu0
      %v3568 = vadd.f32 0.0, %v3567
      %v3569 = vpop.f32.mrf.mxu0
      %v3570 = vadd.f32 0.0, %v3569
      %3571 = vdwg.mxu0
      %3572 = vmatprep.subr.mxu0 0.0
      %3573 = vmatpush1.msra.mxu0 0.0
      %3574 = vmatprep.subr.mxu0 0.0
      %3575 = vmatpush1.msra.mxu0 0.0
      %3576 = vmatprep.subr.mxu0 0.0
      %3577 = vmatpush1.msra.mxu0 0.0
      %3578 = vmatprep.subr.mxu0 0.0
      %3579 = vmatpush1.msra.mxu0 0.0
      %3580 = vmatprep.subr.mxu0 0.0
      %3581 = vmatpush1.msra.mxu0 0.0
      %3582 = vmatprep.subr.mxu0 0.0
      %3583 = vmatpush1.msra.mxu0 0.0
      %3584 = vmatprep.subr.mxu0 0.0
      %3585 = vmatpush1.msra.mxu0 0.0
      %3586 = vmatprep.subr.mxu0 0.0
      %3587 = vmatpush1.msra.mxu0 0.0
      %3588 = vmatprep.subr.mxu0 0.0
      %3589 = vmatpush1.msra.mxu0 0.0
      %3590 = vmatprep.subr.mxu0 0.0
      %3591 = vmatpush1.msra.mxu0 0.0
      %3592 = vmatprep.subr.mxu0 0.0
      %3593 = vmatpush1.msra.mxu0 0.0
      %3594 = vmatprep.subr.mxu0 0.0
      %3595 = vmatpush1.msra.mxu0 0.0
      %3596 = vmatprep.subr.mxu0 0.0
      %3597 = vmatpush1.msra.mxu0 0.0
      %3598 = vmatprep.subr.mxu0 0.0
      %3599 = vmatpush1.msra.mxu0 0.0
      %3600 = vmatprep.subr.mxu0 %v3422
      %3601 = vmatpush1.msra.mxu0 %v3420
      %3602 = vmatprep.subr.mxu0 %v3389
      %3603 = vmatpush1.msra.mxu0 %v3388
      %3604 = vmatprep.subr.mxu0 0.0
      %3605 = vmatpush2.msra.mxu0 0.0
      %3606 = vmatprep.subr.mxu0 0.0
      %3607 = vmatpush2.msra.mxu0 0.0
      %3608 = vmatprep.subr.mxu0 0.0
      %3609 = vmatpush2.msra.mxu0 0.0
      %3610 = vmatprep.subr.mxu0 0.0
      %3611 = vmatpush2.msra.mxu0 0.0
      %3612 = vmatprep.subr.mxu0 0.0
      %3613 = vmatpush2.msra.mxu0 0.0
      %3614 = vmatprep.subr.mxu0 0.0
      %3615 = vmatpush2.msra.mxu0 0.0
      %3616 = vmatprep.subr.mxu0 0.0
      %3617 = vmatpush2.msra.mxu0 0.0
      %3618 = vmatprep.subr.mxu0 0.0
      %3619 = vmatpush2.msra.mxu0 0.0
      %3620 = vmatprep.subr.mxu0 0.0
      %3621 = vmatpush2.msra.mxu0 0.0
      %3622 = vmatprep.subr.mxu0 0.0
      %3623 = vmatpush2.msra.mxu0 0.0
      %3624 = vmatprep.subr.mxu0 0.0
      %3625 = vmatpush2.msra.mxu0 0.0
      %3626 = vmatprep.subr.mxu0 0.0
      %3627 = vmatpush2.msra.mxu0 0.0
      %3628 = vmatprep.subr.mxu0 0.0
      %3629 = vmatpush2.msra.mxu0 0.0
      %3630 = vmatprep.subr.mxu0 0.0
      %3631 = vmatpush2.msra.mxu0 0.0
      %3632 = vmatprep.subr.mxu0 0.0
      %3633 = vmatpush2.msra.mxu0 0.0
      %3634 = vmatprep.subr.mxu0 0.0
      %3635 = vmatpush2.msra.mxu0 0.0
      %3636 = vmatprep.mubr.f32.mxu0 0.0
      %3637 = vmatmul.mubr.f32.gmra.mxu0 %v3410
      %v3638 = vpop.f32.mrf.mxu0
      %v3639 = vadd.f32 0.0, %v3638
      %v3640 = vpop.f32.mrf.mxu0
      %v3641 = vadd.f32 0.0, %v3640
      %3642 = vdwg.mxu0
      %3643 = vmatprep.subr.mxu0 0.0
      %3644 = vmatpush1.msra.mxu0 0.0
      %3645 = vmatprep.subr.mxu0 0.0
      %3646 = vmatpush1.msra.mxu0 0.0
      %3647 = vmatprep.subr.mxu0 0.0
      %3648 = vmatpush1.msra.mxu0 0.0
      %3649 = vmatprep.subr.mxu0 0.0
      %3650 = vmatpush1.msra.mxu0 0.0
      %3651 = vmatprep.subr.mxu0 0.0
      %3652 = vmatpush1.msra.mxu0 0.0
      %3653 = vmatprep.subr.mxu0 0.0
      %3654 = vmatpush1.msra.mxu0 0.0
      %3655 = vmatprep.subr.mxu0 0.0
      %3656 = vmatpush1.msra.mxu0 0.0
      %3657 = vmatprep.subr.mxu0 0.0
      %3658 = vmatpush1.msra.mxu0 0.0
      %3659 = vmatprep.subr.mxu0 0.0
      %3660 = vmatpush1.msra.mxu0 0.0
      %3661 = vmatprep.subr.mxu0 0.0
      %3662 = vmatpush1.msra.mxu0 0.0
      %3663 = vmatprep.subr.mxu0 0.0
      %3664 = vmatpush1.msra.mxu0 0.0
      %3665 = vmatprep.subr.mxu0 0.0
      %3666 = vmatpush1.msra.mxu0 0.0
      %3667 = vmatprep.subr.mxu0 0.0
      %3668 = vmatpush1.msra.mxu0 0.0
      %3669 = vmatprep.subr.mxu0 0.0
      %3670 = vmatpush1.msra.mxu0 0.0
      %3671 = vmatprep.subr.mxu0 %v3426
      %3672 = vmatpush1.msra.mxu0 %v3424
      %3673 = vmatprep.subr.mxu0 %v3391
      %3674 = vmatpush1.msra.mxu0 %v3390
      %3675 = vmatprep.subr.mxu0 0.0
      %3676 = vmatpush2.msra.mxu0 0.0
      %3677 = vmatprep.subr.mxu0 0.0
      %3678 = vmatpush2.msra.mxu0 0.0
      %3679 = vmatprep.subr.mxu0 0.0
      %3680 = vmatpush2.msra.mxu0 0.0
      %3681 = vmatprep.subr.mxu0 0.0
      %3682 = vmatpush2.msra.mxu0 0.0
      %3683 = vmatprep.subr.mxu0 0.0
      %3684 = vmatpush2.msra.mxu0 0.0
      %3685 = vmatprep.subr.mxu0 0.0
      %3686 = vmatpush2.msra.mxu0 0.0
      %3687 = vmatprep.subr.mxu0 0.0
      %3688 = vmatpush2.msra.mxu0 0.0
      %3689 = vmatprep.subr.mxu0 0.0
      %3690 = vmatpush2.msra.mxu0 0.0
      %3691 = vmatprep.subr.mxu0 0.0
      %3692 = vmatpush2.msra.mxu0 0.0
      %3693 = vmatprep.subr.mxu0 0.0
      %3694 = vmatpush2.msra.mxu0 0.0
      %3695 = vmatprep.subr.mxu0 0.0
      %3696 = vmatpush2.msra.mxu0 0.0
      %3697 = vmatprep.subr.mxu0 0.0
      %3698 = vmatpush2.msra.mxu0 0.0
      %3699 = vmatprep.subr.mxu0 0.0
      %3700 = vmatpush2.msra.mxu0 0.0
      %3701 = vmatprep.subr.mxu0 0.0
      %3702 = vmatpush2.msra.mxu0 0.0
      %3703 = vmatprep.subr.mxu0 0.0
      %3704 = vmatpush2.msra.mxu0 0.0
      %3705 = vmatprep.subr.mxu0 0.0
      %3706 = vmatpush2.msra.mxu0 0.0
      %3707 = vmatprep.mubr.f32.mxu0 0.0
      %3708 = vmatmul.mubr.f32.gmra.mxu0 %v3410
      %v3709 = vpop.f32.mrf.mxu0
      %v3710 = vadd.f32 0.0, %v3709
      %v3711 = vpop.f32.mrf.mxu0
      %v3712 = vadd.f32 0.0, %v3711
      %3713 = vdwg.mxu0
      %3714 = vmatprep.subr.mxu0 0.0
      %3715 = vmatpush1.msra.mxu0 0.0
      %3716 = vmatprep.subr.mxu0 0.0
      %3717 = vmatpush1.msra.mxu0 0.0
      %3718 = vmatprep.subr.mxu0 0.0
      %3719 = vmatpush1.msra.mxu0 0.0
      %3720 = vmatprep.subr.mxu0 0.0
      %3721 = vmatpush1.msra.mxu0 0.0
      %3722 = vmatprep.subr.mxu0 0.0
      %3723 = vmatpush1.msra.mxu0 0.0
      %3724 = vmatprep.subr.mxu0 0.0
      %3725 = vmatpush1.msra.mxu0 0.0
      %3726 = vmatprep.subr.mxu0 0.0
      %3727 = vmatpush1.msra.mxu0 0.0
      %3728 = vmatprep.subr.mxu0 0.0
      %3729 = vmatpush1.msra.mxu0 0.0
      %3730 = vmatprep.subr.mxu0 0.0
      %3731 = vmatpush1.msra.mxu0 0.0
      %3732 = vmatprep.subr.mxu0 0.0
      %3733 = vmatpush1.msra.mxu0 0.0
      %3734 = vmatprep.subr.mxu0 0.0
      %3735 = vmatpush1.msra.mxu0 0.0
      %3736 = vmatprep.subr.mxu0 0.0
      %3737 = vmatpush1.msra.mxu0 0.0
      %3738 = vmatprep.subr.mxu0 0.0
      %3739 = vmatpush1.msra.mxu0 0.0
      %3740 = vmatprep.subr.mxu0 0.0
      %3741 = vmatpush1.msra.mxu0 0.0
      %3742 = vmatprep.subr.mxu0 0.0
      %3743 = vmatpush1.msra.mxu0 %v3428
      %3744 = vmatprep.subr.mxu0 0.0
      %3745 = vmatpush1.msra.mxu0 %v3365
      %3746 = vmatprep.subr.mxu0 0.0
      %3747 = vmatpush2.msra.mxu0 0.0
      %3748 = vmatprep.subr.mxu0 0.0
      %3749 = vmatpush2.msra.mxu0 0.0
      %3750 = vmatprep.subr.mxu0 0.0
      %3751 = vmatpush2.msra.mxu0 0.0
      %3752 = vmatprep.subr.mxu0 0.0
      %3753 = vmatpush2.msra.mxu0 0.0
      %3754 = vmatprep.subr.mxu0 0.0
      %3755 = vmatpush2.msra.mxu0 0.0
      %3756 = vmatprep.subr.mxu0 0.0
      %3757 = vmatpush2.msra.mxu0 0.0
      %3758 = vmatprep.subr.mxu0 0.0
      %3759 = vmatpush2.msra.mxu0 0.0
      %3760 = vmatprep.subr.mxu0 0.0
      %3761 = vmatpush2.msra.mxu0 0.0
      %3762 = vmatprep.subr.mxu0 0.0
      %3763 = vmatpush2.msra.mxu0 0.0
      %3764 = vmatprep.subr.mxu0 0.0
      %3765 = vmatpush2.msra.mxu0 0.0
      %3766 = vmatprep.subr.mxu0 0.0
      %3767 = vmatpush2.msra.mxu0 0.0
      %3768 = vmatprep.subr.mxu0 0.0
      %3769 = vmatpush2.msra.mxu0 0.0
      %3770 = vmatprep.subr.mxu0 0.0
      %3771 = vmatpush2.msra.mxu0 0.0
      %3772 = vmatprep.subr.mxu0 0.0
      %3773 = vmatpush2.msra.mxu0 0.0
      %3774 = vmatprep.subr.mxu0 0.0
      %3775 = vmatpush2.msra.mxu0 0.0
      %3776 = vmatprep.subr.mxu0 0.0
      %3777 = vmatpush2.msra.mxu0 0.0
      %3778 = vmatprep.mubr.f32.mxu0 0.0
      %3779 = vmatmul.mubr.f32.gmra.mxu0 %v3410
      %v3780 = vpop.f32.mrf.mxu0
      %v3781 = vadd.f32 0.0, %v3780
      %v3782 = vpop.f32.mrf.mxu0
      %3783 = vdwg.mxu0
      %v3784 = vadd.f32 %v3337, %v3497
      %v3785 = vadd.f32 %v3338, %v3499
      %v3786 = vadd.f32 %v3339, %v3568
      %v3787 = vadd.f32 %v3340, %v3570
      %v3788 = vadd.f32 %v3341, %v3639
      %v3789 = vadd.f32 %v3342, %v3641
      %v3790 = vadd.f32 %v3343, %v3710
      %v3791 = vadd.f32 %v3344, %v3712
      %v3792 = vadd.f32 %v3345, %v3781
      %v3801 = vcombine.low %v3784, %v3785
      %v3802 = vcombine.low %v3786, %v3787
      %v3803 = vcombine.low %v3788, %v3789
      %v3804 = vcombine.low %v3790, %v3791
      %s3809 = scalar_lea.vmem %s170, 36
      %3810 = vst [vmem:[%s3809] sm:$0x77] %v3801
      %3811 = vst [vmem:[%s3809 + $0x8] sm:$0x77] %v3802
      %3812 = vst [vmem:[%s3809 + $0x10] sm:$0x77] %v3803
      %3813 = vst [vmem:[%s3809 + $0x18] sm:$0x77] %v3804
      %3814 = vst.msk [vmem:[%s3809 + $0x20] sm:$0x7] %vm1965, %v3792
      %v3815 = vld [vmem:[%s165] sm:$0xff]
      %v3816 = vld [vmem:[%s165 + $0x8] sm:$0xff]
      %v3817 = vld [vmem:[%s165 + $0x10] sm:$0xff]
      %v3818 = vld [vmem:[%s165 + $0x18] sm:$0xff]
      %v3819 = vld [vmem:[%s165 + $0x20] sm:$0xff]
      %v3820 = vld [vmem:[%s165 + $0x28] sm:$0xff]
      %v3821 = vld [vmem:[%s165 + $0x30] sm:$0xff]
      %v3822 = vld [vmem:[%s165 + $0x38] sm:$0xff]
      %v3823 = vld [vmem:[%s165 + $0x40] sm:$0xff]
      %v3824 = vld [vmem:[%s165 + $0x48] sm:$0xff]
      %v3825 = vld [vmem:[%s165 + $0x50] sm:$0xf]
      %v3826 = vld [vmem:[%s165 + $0x58] sm:$0xf]
      %v3827 = vld [vmem:[%s165 + $0x60] sm:$0xf]
      %v3828 = vld [vmem:[%s165 + $0x68] sm:$0xf]
      %v3829 = vld [vmem:[%s165 + $0x70] sm:$0xf]
      %v3830 = vld [vmem:[%s165 + $0x78] sm:$0xf]
      %v3831 = vld [vmem:[%s165 + $0x80] sm:$0xf]
      %v3832 = vld [vmem:[%s165 + $0x88] sm:$0xf]
      %v3833 = vld [vmem:[%s165 + $0x90] sm:$0xf]
      %v3834 = vld [vmem:[%s165 + $0x98] sm:$0xf]
      %s3835 = scalar_lea.vmem %s1, 4
      %v3836 = vld [vmem:[%s3835] sm:$0x7]
      %3857 = vrot.lane.b32.xlu0 %v3815, 59
      %v3858 = vpop.permute.xlu0 %3857
      %3859 = vrot.lane.b32.xlu0 %v3816, 59
      %v3860 = vpop.permute.xlu0 %3859
      %3861 = vrot.lane.b32.xlu0 %v3817, 59
      %v3862 = vpop.permute.xlu0 %3861
      %3863 = vrot.lane.b32.xlu0 %v3818, 59
      %v3864 = vpop.permute.xlu0 %3863
      %3865 = vrot.lane.b32.xlu0 %v3819, 59
      %v3866 = vpop.permute.xlu0 %3865
      %3867 = vrot.lane.b32.xlu0 %v3820, 59
      %v3868 = vpop.permute.xlu0 %3867
      %3869 = vrot.lane.b32.xlu0 %v3821, 59
      %v3870 = vpop.permute.xlu0 %3869
      %3871 = vrot.lane.b32.xlu0 %v3822, 59
      %v3872 = vpop.permute.xlu0 %3871
      %3873 = vrot.lane.b32.xlu0 %v3823, 59
      %v3874 = vpop.permute.xlu0 %3873
      %3875 = vrot.lane.b32.xlu0 %v3824, 59
      %v3876 = vpop.permute.xlu0 %3875
      %3877 = vrot.lane.b32.xlu0 %v3825, 59
      %v3878 = vpop.permute.xlu0 %3877
      %3879 = vrot.lane.b32.xlu0 %v3826, 59
      %v3880 = vpop.permute.xlu0 %3879
      %3881 = vrot.lane.b32.xlu0 %v3827, 59
      %v3882 = vpop.permute.xlu0 %3881
      %3883 = vrot.lane.b32.xlu0 %v3828, 59
      %v3884 = vpop.permute.xlu0 %3883
      %3885 = vrot.lane.b32.xlu0 %v3829, 59
      %v3886 = vpop.permute.xlu0 %3885
      %3887 = vrot.lane.b32.xlu0 %v3830, 59
      %v3888 = vpop.permute.xlu0 %3887
      %3889 = vrot.lane.b32.xlu0 %v3831, 59
      %v3890 = vpop.permute.xlu0 %3889
      %3891 = vrot.lane.b32.xlu0 %v3832, 59
      %v3892 = vpop.permute.xlu0 %3891
      %3893 = vrot.lane.b32.xlu0 %v3833, 59
      %v3894 = vpop.permute.xlu0 %3893
      %3895 = vrot.lane.b32.xlu0 %v3834, 59
      %v3896 = vpop.permute.xlu0 %3895
      %vm3897 = vcmask 482304
      %v3898 = vsel %vm3897, %v3858, %v3860
      %v3899 = vsel %vm3897, %v3860, %v3862
      %v3900 = vsel %vm3897, %v3862, %v3864
      %v3901 = vsel %vm3897, %v3864, %v3866
      %v3902 = vsel %vm3897, %v3866, %v3868
      %v3903 = vsel %vm3897, %v3868, %v3870
      %v3904 = vsel %vm3897, %v3870, %v3872
      %v3905 = vsel %vm3897, %v3872, %v3874
      %v3906 = vsel %vm3897, %v3874, %v3876
      %v3907 = vsel %vm3897, %v3878, %v3880
      %v3908 = vsel %vm3897, %v3880, %v3882
      %v3909 = vsel %vm3897, %v3882, %v3884
      %v3910 = vsel %vm3897, %v3884, %v3886
      %v3911 = vsel %vm3897, %v3886, %v3888
      %v3912 = vsel %vm3897, %v3888, %v3890
      %v3913 = vsel %vm3897, %v3890, %v3892
      %v3914 = vsel %vm3897, %v3892, %v3894
      %v3915 = vsel %vm3897, %v3894, %v3896
      %v3926 = vsel %vm277, %v3836, 0
      %v3928 = vsel %vm281, %v3907, 0
      %v3930 = vsel %vm281, %v3908, 0
      %v3932 = vsel %vm281, %v3909, 0
      %v3934 = vsel %vm281, %v3910, 0
      %v3936 = vsel %vm281, %v3911, 0
      %v3938 = vsel %vm281, %v3912, 0
      %v3940 = vsel %vm281, %v3913, 0
      %v3942 = vsel %vm281, %v3914, 0
      %v3944 = vsel %vm281, %v3915, 0
      %3946 = vmatprep.subr.mxu0 0.0
      %3947 = vmatpush1.msra.mxu0 0.0
      %3948 = vmatprep.subr.mxu0 0.0
      %3949 = vmatpush1.msra.mxu0 0.0
      %3950 = vmatprep.subr.mxu0 0.0
      %3951 = vmatpush1.msra.mxu0 0.0
      %3952 = vmatprep.subr.mxu0 0.0
      %3953 = vmatpush1.msra.mxu0 0.0
      %3954 = vmatprep.subr.mxu0 0.0
      %3955 = vmatpush1.msra.mxu0 0.0
      %3956 = vmatprep.subr.mxu0 0.0
      %3957 = vmatpush1.msra.mxu0 0.0
      %3958 = vmatprep.subr.mxu0 0.0
      %3959 = vmatpush1.msra.mxu0 0.0
      %3960 = vmatprep.subr.mxu0 0.0
      %3961 = vmatpush1.msra.mxu0 0.0
      %3962 = vmatprep.subr.mxu0 0.0
      %3963 = vmatpush1.msra.mxu0 0.0
      %3964 = vmatprep.subr.mxu0 0.0
      %3965 = vmatpush1.msra.mxu0 0.0
      %3966 = vmatprep.subr.mxu0 0.0
      %3967 = vmatpush1.msra.mxu0 0.0
      %3968 = vmatprep.subr.mxu0 0.0
      %3969 = vmatpush1.msra.mxu0 0.0
      %3970 = vmatprep.subr.mxu0 0.0
      %3971 = vmatpush1.msra.mxu0 0.0
      %3972 = vmatprep.subr.mxu0 0.0
      %3973 = vmatpush1.msra.mxu0 0.0
      %3974 = vmatprep.subr.mxu0 %v3930
      %3975 = vmatpush1.msra.mxu0 %v3928
      %3976 = vmatprep.subr.mxu0 %v3899
      %3977 = vmatpush1.msra.mxu0 %v3898
      %3978 = vmatprep.subr.mxu0 0.0
      %3979 = vmatpush2.msra.mxu0 0.0
      %3980 = vmatprep.subr.mxu0 0.0
      %3981 = vmatpush2.msra.mxu0 0.0
      %3982 = vmatprep.subr.mxu0 0.0
      %3983 = vmatpush2.msra.mxu0 0.0
      %3984 = vmatprep.subr.mxu0 0.0
      %3985 = vmatpush2.msra.mxu0 0.0
      %3986 = vmatprep.subr.mxu0 0.0
      %3987 = vmatpush2.msra.mxu0 0.0
      %3988 = vmatprep.subr.mxu0 0.0
      %3989 = vmatpush2.msra.mxu0 0.0
      %3990 = vmatprep.subr.mxu0 0.0
      %3991 = vmatpush2.msra.mxu0 0.0
      %3992 = vmatprep.subr.mxu0 0.0
      %3993 = vmatpush2.msra.mxu0 0.0
      %3994 = vmatprep.subr.mxu0 0.0
      %3995 = vmatpush2.msra.mxu0 0.0
      %3996 = vmatprep.subr.mxu0 0.0
      %3997 = vmatpush2.msra.mxu0 0.0
      %3998 = vmatprep.subr.mxu0 0.0
      %3999 = vmatpush2.msra.mxu0 0.0
      %4000 = vmatprep.subr.mxu0 0.0
      %4001 = vmatpush2.msra.mxu0 0.0
      %4002 = vmatprep.subr.mxu0 0.0
      %4003 = vmatpush2.msra.mxu0 0.0
      %4004 = vmatprep.subr.mxu0 0.0
      %4005 = vmatpush2.msra.mxu0 0.0
      %4006 = vmatprep.subr.mxu0 0.0
      %4007 = vmatpush2.msra.mxu0 0.0
      %4008 = vmatprep.subr.mxu0 0.0
      %4009 = vmatpush2.msra.mxu0 0.0
      %4010 = vmatprep.mubr.f32.mxu0 0.0
      %4011 = vmatmul.mubr.f32.gmra.mxu0 %v3926
      %v4012 = vpop.f32.mrf.mxu0
      %v4013 = vadd.f32 0.0, %v4012
      %v4014 = vpop.f32.mrf.mxu0
      %v4015 = vadd.f32 0.0, %v4014
      %4016 = vdwg.mxu0
      %4017 = vmatprep.subr.mxu0 0.0
      %4018 = vmatpush1.msra.mxu0 0.0
      %4019 = vmatprep.subr.mxu0 0.0
      %4020 = vmatpush1.msra.mxu0 0.0
      %4021 = vmatprep.subr.mxu0 0.0
      %4022 = vmatpush1.msra.mxu0 0.0
      %4023 = vmatprep.subr.mxu0 0.0
      %4024 = vmatpush1.msra.mxu0 0.0
      %4025 = vmatprep.subr.mxu0 0.0
      %4026 = vmatpush1.msra.mxu0 0.0
      %4027 = vmatprep.subr.mxu0 0.0
      %4028 = vmatpush1.msra.mxu0 0.0
      %4029 = vmatprep.subr.mxu0 0.0
      %4030 = vmatpush1.msra.mxu0 0.0
      %4031 = vmatprep.subr.mxu0 0.0
      %4032 = vmatpush1.msra.mxu0 0.0
      %4033 = vmatprep.subr.mxu0 0.0
      %4034 = vmatpush1.msra.mxu0 0.0
      %4035 = vmatprep.subr.mxu0 0.0
      %4036 = vmatpush1.msra.mxu0 0.0
      %4037 = vmatprep.subr.mxu0 0.0
      %4038 = vmatpush1.msra.mxu0 0.0
      %4039 = vmatprep.subr.mxu0 0.0
      %4040 = vmatpush1.msra.mxu0 0.0
      %4041 = vmatprep.subr.mxu0 0.0
      %4042 = vmatpush1.msra.mxu0 0.0
      %4043 = vmatprep.subr.mxu0 0.0
      %4044 = vmatpush1.msra.mxu0 0.0
      %4045 = vmatprep.subr.mxu0 %v3934
      %4046 = vmatpush1.msra.mxu0 %v3932
      %4047 = vmatprep.subr.mxu0 %v3901
      %4048 = vmatpush1.msra.mxu0 %v3900
      %4049 = vmatprep.subr.mxu0 0.0
      %4050 = vmatpush2.msra.mxu0 0.0
      %4051 = vmatprep.subr.mxu0 0.0
      %4052 = vmatpush2.msra.mxu0 0.0
      %4053 = vmatprep.subr.mxu0 0.0
      %4054 = vmatpush2.msra.mxu0 0.0
      %4055 = vmatprep.subr.mxu0 0.0
      %4056 = vmatpush2.msra.mxu0 0.0
      %4057 = vmatprep.subr.mxu0 0.0
      %4058 = vmatpush2.msra.mxu0 0.0
      %4059 = vmatprep.subr.mxu0 0.0
      %4060 = vmatpush2.msra.mxu0 0.0
      %4061 = vmatprep.subr.mxu0 0.0
      %4062 = vmatpush2.msra.mxu0 0.0
      %4063 = vmatprep.subr.mxu0 0.0
      %4064 = vmatpush2.msra.mxu0 0.0
      %4065 = vmatprep.subr.mxu0 0.0
      %4066 = vmatpush2.msra.mxu0 0.0
      %4067 = vmatprep.subr.mxu0 0.0
      %4068 = vmatpush2.msra.mxu0 0.0
      %4069 = vmatprep.subr.mxu0 0.0
      %4070 = vmatpush2.msra.mxu0 0.0
      %4071 = vmatprep.subr.mxu0 0.0
      %4072 = vmatpush2.msra.mxu0 0.0
      %4073 = vmatprep.subr.mxu0 0.0
      %4074 = vmatpush2.msra.mxu0 0.0
      %4075 = vmatprep.subr.mxu0 0.0
      %4076 = vmatpush2.msra.mxu0 0.0
      %4077 = vmatprep.subr.mxu0 0.0
      %4078 = vmatpush2.msra.mxu0 0.0
      %4079 = vmatprep.subr.mxu0 0.0
      %4080 = vmatpush2.msra.mxu0 0.0
      %4081 = vmatprep.mubr.f32.mxu0 0.0
      %4082 = vmatmul.mubr.f32.gmra.mxu0 %v3926
      %v4083 = vpop.f32.mrf.mxu0
      %v4084 = vadd.f32 0.0, %v4083
      %v4085 = vpop.f32.mrf.mxu0
      %v4086 = vadd.f32 0.0, %v4085
      %4087 = vdwg.mxu0
      %4088 = vmatprep.subr.mxu0 0.0
      %4089 = vmatpush1.msra.mxu0 0.0
      %4090 = vmatprep.subr.mxu0 0.0
      %4091 = vmatpush1.msra.mxu0 0.0
      %4092 = vmatprep.subr.mxu0 0.0
      %4093 = vmatpush1.msra.mxu0 0.0
      %4094 = vmatprep.subr.mxu0 0.0
      %4095 = vmatpush1.msra.mxu0 0.0
      %4096 = vmatprep.subr.mxu0 0.0
      %4097 = vmatpush1.msra.mxu0 0.0
      %4098 = vmatprep.subr.mxu0 0.0
      %4099 = vmatpush1.msra.mxu0 0.0
      %4100 = vmatprep.subr.mxu0 0.0
      %4101 = vmatpush1.msra.mxu0 0.0
      %4102 = vmatprep.subr.mxu0 0.0
      %4103 = vmatpush1.msra.mxu0 0.0
      %4104 = vmatprep.subr.mxu0 0.0
      %4105 = vmatpush1.msra.mxu0 0.0
      %4106 = vmatprep.subr.mxu0 0.0
      %4107 = vmatpush1.msra.mxu0 0.0
      %4108 = vmatprep.subr.mxu0 0.0
      %4109 = vmatpush1.msra.mxu0 0.0
      %4110 = vmatprep.subr.mxu0 0.0
      %4111 = vmatpush1.msra.mxu0 0.0
      %4112 = vmatprep.subr.mxu0 0.0
      %4113 = vmatpush1.msra.mxu0 0.0
      %4114 = vmatprep.subr.mxu0 0.0
      %4115 = vmatpush1.msra.mxu0 0.0
      %4116 = vmatprep.subr.mxu0 %v3938
      %4117 = vmatpush1.msra.mxu0 %v3936
      %4118 = vmatprep.subr.mxu0 %v3903
      %4119 = vmatpush1.msra.mxu0 %v3902
      %4120 = vmatprep.subr.mxu0 0.0
      %4121 = vmatpush2.msra.mxu0 0.0
      %4122 = vmatprep.subr.mxu0 0.0
      %4123 = vmatpush2.msra.mxu0 0.0
      %4124 = vmatprep.subr.mxu0 0.0
      %4125 = vmatpush2.msra.mxu0 0.0
      %4126 = vmatprep.subr.mxu0 0.0
      %4127 = vmatpush2.msra.mxu0 0.0
      %4128 = vmatprep.subr.mxu0 0.0
      %4129 = vmatpush2.msra.mxu0 0.0
      %4130 = vmatprep.subr.mxu0 0.0
      %4131 = vmatpush2.msra.mxu0 0.0
      %4132 = vmatprep.subr.mxu0 0.0
      %4133 = vmatpush2.msra.mxu0 0.0
      %4134 = vmatprep.subr.mxu0 0.0
      %4135 = vmatpush2.msra.mxu0 0.0
      %4136 = vmatprep.subr.mxu0 0.0
      %4137 = vmatpush2.msra.mxu0 0.0
      %4138 = vmatprep.subr.mxu0 0.0
      %4139 = vmatpush2.msra.mxu0 0.0
      %4140 = vmatprep.subr.mxu0 0.0
      %4141 = vmatpush2.msra.mxu0 0.0
      %4142 = vmatprep.subr.mxu0 0.0
      %4143 = vmatpush2.msra.mxu0 0.0
      %4144 = vmatprep.subr.mxu0 0.0
      %4145 = vmatpush2.msra.mxu0 0.0
      %4146 = vmatprep.subr.mxu0 0.0
      %4147 = vmatpush2.msra.mxu0 0.0
      %4148 = vmatprep.subr.mxu0 0.0
      %4149 = vmatpush2.msra.mxu0 0.0
      %4150 = vmatprep.subr.mxu0 0.0
      %4151 = vmatpush2.msra.mxu0 0.0
      %4152 = vmatprep.mubr.f32.mxu0 0.0
      %4153 = vmatmul.mubr.f32.gmra.mxu0 %v3926
      %v4154 = vpop.f32.mrf.mxu0
      %v4155 = vadd.f32 0.0, %v4154
      %v4156 = vpop.f32.mrf.mxu0
      %v4157 = vadd.f32 0.0, %v4156
      %4158 = vdwg.mxu0
      %4159 = vmatprep.subr.mxu0 0.0
      %4160 = vmatpush1.msra.mxu0 0.0
      %4161 = vmatprep.subr.mxu0 0.0
      %4162 = vmatpush1.msra.mxu0 0.0
      %4163 = vmatprep.subr.mxu0 0.0
      %4164 = vmatpush1.msra.mxu0 0.0
      %4165 = vmatprep.subr.mxu0 0.0
      %4166 = vmatpush1.msra.mxu0 0.0
      %4167 = vmatprep.subr.mxu0 0.0
      %4168 = vmatpush1.msra.mxu0 0.0
      %4169 = vmatprep.subr.mxu0 0.0
      %4170 = vmatpush1.msra.mxu0 0.0
      %4171 = vmatprep.subr.mxu0 0.0
      %4172 = vmatpush1.msra.mxu0 0.0
      %4173 = vmatprep.subr.mxu0 0.0
      %4174 = vmatpush1.msra.mxu0 0.0
      %4175 = vmatprep.subr.mxu0 0.0
      %4176 = vmatpush1.msra.mxu0 0.0
      %4177 = vmatprep.subr.mxu0 0.0
      %4178 = vmatpush1.msra.mxu0 0.0
      %4179 = vmatprep.subr.mxu0 0.0
      %4180 = vmatpush1.msra.mxu0 0.0
      %4181 = vmatprep.subr.mxu0 0.0
      %4182 = vmatpush1.msra.mxu0 0.0
      %4183 = vmatprep.subr.mxu0 0.0
      %4184 = vmatpush1.msra.mxu0 0.0
      %4185 = vmatprep.subr.mxu0 0.0
      %4186 = vmatpush1.msra.mxu0 0.0
      %4187 = vmatprep.subr.mxu0 %v3942
      %4188 = vmatpush1.msra.mxu0 %v3940
      %4189 = vmatprep.subr.mxu0 %v3905
      %4190 = vmatpush1.msra.mxu0 %v3904
      %4191 = vmatprep.subr.mxu0 0.0
      %4192 = vmatpush2.msra.mxu0 0.0
      %4193 = vmatprep.subr.mxu0 0.0
      %4194 = vmatpush2.msra.mxu0 0.0
      %4195 = vmatprep.subr.mxu0 0.0
      %4196 = vmatpush2.msra.mxu0 0.0
      %4197 = vmatprep.subr.mxu0 0.0
      %4198 = vmatpush2.msra.mxu0 0.0
      %4199 = vmatprep.subr.mxu0 0.0
      %4200 = vmatpush2.msra.mxu0 0.0
      %4201 = vmatprep.subr.mxu0 0.0
      %4202 = vmatpush2.msra.mxu0 0.0
      %4203 = vmatprep.subr.mxu0 0.0
      %4204 = vmatpush2.msra.mxu0 0.0
      %4205 = vmatprep.subr.mxu0 0.0
      %4206 = vmatpush2.msra.mxu0 0.0
      %4207 = vmatprep.subr.mxu0 0.0
      %4208 = vmatpush2.msra.mxu0 0.0
      %4209 = vmatprep.subr.mxu0 0.0
      %4210 = vmatpush2.msra.mxu0 0.0
      %4211 = vmatprep.subr.mxu0 0.0
      %4212 = vmatpush2.msra.mxu0 0.0
      %4213 = vmatprep.subr.mxu0 0.0
      %4214 = vmatpush2.msra.mxu0 0.0
      %4215 = vmatprep.subr.mxu0 0.0
      %4216 = vmatpush2.msra.mxu0 0.0
      %4217 = vmatprep.subr.mxu0 0.0
      %4218 = vmatpush2.msra.mxu0 0.0
      %4219 = vmatprep.subr.mxu0 0.0
      %4220 = vmatpush2.msra.mxu0 0.0
      %4221 = vmatprep.subr.mxu0 0.0
      %4222 = vmatpush2.msra.mxu0 0.0
      %4223 = vmatprep.mubr.f32.mxu0 0.0
      %4224 = vmatmul.mubr.f32.gmra.mxu0 %v3926
      %v4225 = vpop.f32.mrf.mxu0
      %v4226 = vadd.f32 0.0, %v4225
      %v4227 = vpop.f32.mrf.mxu0
      %v4228 = vadd.f32 0.0, %v4227
      %4229 = vdwg.mxu0
      %4230 = vmatprep.subr.mxu0 0.0
      %4231 = vmatpush1.msra.mxu0 0.0
      %4232 = vmatprep.subr.mxu0 0.0
      %4233 = vmatpush1.msra.mxu0 0.0
      %4234 = vmatprep.subr.mxu0 0.0
      %4235 = vmatpush1.msra.mxu0 0.0
      %4236 = vmatprep.subr.mxu0 0.0
      %4237 = vmatpush1.msra.mxu0 0.0
      %4238 = vmatprep.subr.mxu0 0.0
      %4239 = vmatpush1.msra.mxu0 0.0
      %4240 = vmatprep.subr.mxu0 0.0
      %4241 = vmatpush1.msra.mxu0 0.0
      %4242 = vmatprep.subr.mxu0 0.0
      %4243 = vmatpush1.msra.mxu0 0.0
      %4244 = vmatprep.subr.mxu0 0.0
      %4245 = vmatpush1.msra.mxu0 0.0
      %4246 = vmatprep.subr.mxu0 0.0
      %4247 = vmatpush1.msra.mxu0 0.0
      %4248 = vmatprep.subr.mxu0 0.0
      %4249 = vmatpush1.msra.mxu0 0.0
      %4250 = vmatprep.subr.mxu0 0.0
      %4251 = vmatpush1.msra.mxu0 0.0
      %4252 = vmatprep.subr.mxu0 0.0
      %4253 = vmatpush1.msra.mxu0 0.0
      %4254 = vmatprep.subr.mxu0 0.0
      %4255 = vmatpush1.msra.mxu0 0.0
      %4256 = vmatprep.subr.mxu0 0.0
      %4257 = vmatpush1.msra.mxu0 0.0
      %4258 = vmatprep.subr.mxu0 0.0
      %4259 = vmatpush1.msra.mxu0 %v3944
      %4260 = vmatprep.subr.mxu0 0.0
      %4261 = vmatpush1.msra.mxu0 %v3906
      %4262 = vmatprep.subr.mxu0 0.0
      %4263 = vmatpush2.msra.mxu0 0.0
      %4264 = vmatprep.subr.mxu0 0.0
      %4265 = vmatpush2.msra.mxu0 0.0
      %4266 = vmatprep.subr.mxu0 0.0
      %4267 = vmatpush2.msra.mxu0 0.0
      %4268 = vmatprep.subr.mxu0 0.0
      %4269 = vmatpush2.msra.mxu0 0.0
      %4270 = vmatprep.subr.mxu0 0.0
      %4271 = vmatpush2.msra.mxu0 0.0
      %4272 = vmatprep.subr.mxu0 0.0
      %4273 = vmatpush2.msra.mxu0 0.0
      %4274 = vmatprep.subr.mxu0 0.0
      %4275 = vmatpush2.msra.mxu0 0.0
      %4276 = vmatprep.subr.mxu0 0.0
      %4277 = vmatpush2.msra.mxu0 0.0
      %4278 = vmatprep.subr.mxu0 0.0
      %4279 = vmatpush2.msra.mxu0 0.0
      %4280 = vmatprep.subr.mxu0 0.0
      %4281 = vmatpush2.msra.mxu0 0.0
      %4282 = vmatprep.subr.mxu0 0.0
      %4283 = vmatpush2.msra.mxu0 0.0
      %4284 = vmatprep.subr.mxu0 0.0
      %4285 = vmatpush2.msra.mxu0 0.0
      %4286 = vmatprep.subr.mxu0 0.0
      %4287 = vmatpush2.msra.mxu0 0.0
      %4288 = vmatprep.subr.mxu0 0.0
      %4289 = vmatpush2.msra.mxu0 0.0
      %4290 = vmatprep.subr.mxu0 0.0
      %4291 = vmatpush2.msra.mxu0 0.0
      %4292 = vmatprep.subr.mxu0 0.0
      %4293 = vmatpush2.msra.mxu0 0.0
      %4294 = vmatprep.mubr.f32.mxu0 0.0
      %4295 = vmatmul.mubr.f32.gmra.mxu0 %v3926
      %v4296 = vpop.f32.mrf.mxu0
      %v4297 = vadd.f32 0.0, %v4296
      %v4298 = vpop.f32.mrf.mxu0
      %4299 = vdwg.mxu0
      %v4300 = vadd.f32 %v175, %v4013
      %v4301 = vadd.f32 %v175, %v4015
      %v4302 = vadd.f32 %v175, %v4084
      %v4303 = vadd.f32 %v175, %v4086
      %v4304 = vadd.f32 %v175, %v4155
      %v4305 = vadd.f32 %v175, %v4157
      %v4306 = vadd.f32 %v175, %v4226
      %v4307 = vadd.f32 %v175, %v4228
      %v4308 = vadd.f32 %v175, %v4297
      %s4309 = scalar_lea.vmem %s1, 12
      %v4310 = vld [vmem:[%s4309] sm:$0x7]
      %4311 = vrot.lane.b32.xlu0 %v3815, 60
      %v4312 = vpop.permute.xlu0 %4311
      %4313 = vrot.lane.b32.xlu0 %v3816, 60
      %v4314 = vpop.permute.xlu0 %4313
      %4315 = vrot.lane.b32.xlu0 %v3817, 60
      %v4316 = vpop.permute.xlu0 %4315
      %4317 = vrot.lane.b32.xlu0 %v3818, 60
      %v4318 = vpop.permute.xlu0 %4317
      %4319 = vrot.lane.b32.xlu0 %v3819, 60
      %v4320 = vpop.permute.xlu0 %4319
      %4321 = vrot.lane.b32.xlu0 %v3820, 60
      %v4322 = vpop.permute.xlu0 %4321
      %4323 = vrot.lane.b32.xlu0 %v3821, 60
      %v4324 = vpop.permute.xlu0 %4323
      %4325 = vrot.lane.b32.xlu0 %v3822, 60
      %v4326 = vpop.permute.xlu0 %4325
      %4327 = vrot.lane.b32.xlu0 %v3823, 60
      %v4328 = vpop.permute.xlu0 %4327
      %4329 = vrot.lane.b32.xlu0 %v3824, 60
      %v4330 = vpop.permute.xlu0 %4329
      %4331 = vrot.lane.b32.xlu0 %v3825, 60
      %v4332 = vpop.permute.xlu0 %4331
      %4333 = vrot.lane.b32.xlu0 %v3826, 60
      %v4334 = vpop.permute.xlu0 %4333
      %4335 = vrot.lane.b32.xlu0 %v3827, 60
      %v4336 = vpop.permute.xlu0 %4335
      %4337 = vrot.lane.b32.xlu0 %v3828, 60
      %v4338 = vpop.permute.xlu0 %4337
      %4339 = vrot.lane.b32.xlu0 %v3829, 60
      %v4340 = vpop.permute.xlu0 %4339
      %4341 = vrot.lane.b32.xlu0 %v3830, 60
      %v4342 = vpop.permute.xlu0 %4341
      %4343 = vrot.lane.b32.xlu0 %v3831, 60
      %v4344 = vpop.permute.xlu0 %4343
      %4345 = vrot.lane.b32.xlu0 %v3832, 60
      %v4346 = vpop.permute.xlu0 %4345
      %4347 = vrot.lane.b32.xlu0 %v3833, 60
      %v4348 = vpop.permute.xlu0 %4347
      %4349 = vrot.lane.b32.xlu0 %v3834, 60
      %v4350 = vpop.permute.xlu0 %4349
      %vm4351 = vcmask 490496
      %v4352 = vsel %vm4351, %v4312, %v4314
      %v4353 = vsel %vm4351, %v4314, %v4316
      %v4354 = vsel %vm4351, %v4316, %v4318
      %v4355 = vsel %vm4351, %v4318, %v4320
      %v4356 = vsel %vm4351, %v4320, %v4322
      %v4357 = vsel %vm4351, %v4322, %v4324
      %v4358 = vsel %vm4351, %v4324, %v4326
      %v4359 = vsel %vm4351, %v4326, %v4328
      %v4360 = vsel %vm4351, %v4328, %v4330
      %v4361 = vsel %vm4351, %v4332, %v4334
      %v4362 = vsel %vm4351, %v4334, %v4336
      %v4363 = vsel %vm4351, %v4336, %v4338
      %v4364 = vsel %vm4351, %v4338, %v4340
      %v4365 = vsel %vm4351, %v4340, %v4342
      %v4366 = vsel %vm4351, %v4342, %v4344
      %v4367 = vsel %vm4351, %v4344, %v4346
      %v4368 = vsel %vm4351, %v4346, %v4348
      %v4369 = vsel %vm4351, %v4348, %v4350
      %v4380 = vsel %vm277, %v4310, 0
      %v4382 = vsel %vm281, %v4361, 0
      %v4384 = vsel %vm281, %v4362, 0
      %v4386 = vsel %vm281, %v4363, 0
      %v4388 = vsel %vm281, %v4364, 0
      %v4390 = vsel %vm281, %v4365, 0
      %v4392 = vsel %vm281, %v4366, 0
      %v4394 = vsel %vm281, %v4367, 0
      %v4396 = vsel %vm281, %v4368, 0
      %v4398 = vsel %vm281, %v4369, 0
      %4400 = vmatprep.subr.mxu0 0.0
      %4401 = vmatpush1.msra.mxu0 0.0
      %4402 = vmatprep.subr.mxu0 0.0
      %4403 = vmatpush1.msra.mxu0 0.0
      %4404 = vmatprep.subr.mxu0 0.0
      %4405 = vmatpush1.msra.mxu0 0.0
      %4406 = vmatprep.subr.mxu0 0.0
      %4407 = vmatpush1.msra.mxu0 0.0
      %4408 = vmatprep.subr.mxu0 0.0
      %4409 = vmatpush1.msra.mxu0 0.0
      %4410 = vmatprep.subr.mxu0 0.0
      %4411 = vmatpush1.msra.mxu0 0.0
      %4412 = vmatprep.subr.mxu0 0.0
      %4413 = vmatpush1.msra.mxu0 0.0
      %4414 = vmatprep.subr.mxu0 0.0
      %4415 = vmatpush1.msra.mxu0 0.0
      %4416 = vmatprep.subr.mxu0 0.0
      %4417 = vmatpush1.msra.mxu0 0.0
      %4418 = vmatprep.subr.mxu0 0.0
      %4419 = vmatpush1.msra.mxu0 0.0
      %4420 = vmatprep.subr.mxu0 0.0
      %4421 = vmatpush1.msra.mxu0 0.0
      %4422 = vmatprep.subr.mxu0 0.0
      %4423 = vmatpush1.msra.mxu0 0.0
      %4424 = vmatprep.subr.mxu0 0.0
      %4425 = vmatpush1.msra.mxu0 0.0
      %4426 = vmatprep.subr.mxu0 0.0
      %4427 = vmatpush1.msra.mxu0 0.0
      %4428 = vmatprep.subr.mxu0 %v4384
      %4429 = vmatpush1.msra.mxu0 %v4382
      %4430 = vmatprep.subr.mxu0 %v4353
      %4431 = vmatpush1.msra.mxu0 %v4352
      %4432 = vmatprep.subr.mxu0 0.0
      %4433 = vmatpush2.msra.mxu0 0.0
      %4434 = vmatprep.subr.mxu0 0.0
      %4435 = vmatpush2.msra.mxu0 0.0
      %4436 = vmatprep.subr.mxu0 0.0
      %4437 = vmatpush2.msra.mxu0 0.0
      %4438 = vmatprep.subr.mxu0 0.0
      %4439 = vmatpush2.msra.mxu0 0.0
      %4440 = vmatprep.subr.mxu0 0.0
      %4441 = vmatpush2.msra.mxu0 0.0
      %4442 = vmatprep.subr.mxu0 0.0
      %4443 = vmatpush2.msra.mxu0 0.0
      %4444 = vmatprep.subr.mxu0 0.0
      %4445 = vmatpush2.msra.mxu0 0.0
      %4446 = vmatprep.subr.mxu0 0.0
      %4447 = vmatpush2.msra.mxu0 0.0
      %4448 = vmatprep.subr.mxu0 0.0
      %4449 = vmatpush2.msra.mxu0 0.0
      %4450 = vmatprep.subr.mxu0 0.0
      %4451 = vmatpush2.msra.mxu0 0.0
      %4452 = vmatprep.subr.mxu0 0.0
      %4453 = vmatpush2.msra.mxu0 0.0
      %4454 = vmatprep.subr.mxu0 0.0
      %4455 = vmatpush2.msra.mxu0 0.0
      %4456 = vmatprep.subr.mxu0 0.0
      %4457 = vmatpush2.msra.mxu0 0.0
      %4458 = vmatprep.subr.mxu0 0.0
      %4459 = vmatpush2.msra.mxu0 0.0
      %4460 = vmatprep.subr.mxu0 0.0
      %4461 = vmatpush2.msra.mxu0 0.0
      %4462 = vmatprep.subr.mxu0 0.0
      %4463 = vmatpush2.msra.mxu0 0.0
      %4464 = vmatprep.mubr.f32.mxu0 0.0
      %4465 = vmatmul.mubr.f32.gmra.mxu0 %v4380
      %v4466 = vpop.f32.mrf.mxu0
      %v4467 = vadd.f32 0.0, %v4466
      %v4468 = vpop.f32.mrf.mxu0
      %v4469 = vadd.f32 0.0, %v4468
      %4470 = vdwg.mxu0
      %4471 = vmatprep.subr.mxu0 0.0
      %4472 = vmatpush1.msra.mxu0 0.0
      %4473 = vmatprep.subr.mxu0 0.0
      %4474 = vmatpush1.msra.mxu0 0.0
      %4475 = vmatprep.subr.mxu0 0.0
      %4476 = vmatpush1.msra.mxu0 0.0
      %4477 = vmatprep.subr.mxu0 0.0
      %4478 = vmatpush1.msra.mxu0 0.0
      %4479 = vmatprep.subr.mxu0 0.0
      %4480 = vmatpush1.msra.mxu0 0.0
      %4481 = vmatprep.subr.mxu0 0.0
      %4482 = vmatpush1.msra.mxu0 0.0
      %4483 = vmatprep.subr.mxu0 0.0
      %4484 = vmatpush1.msra.mxu0 0.0
      %4485 = vmatprep.subr.mxu0 0.0
      %4486 = vmatpush1.msra.mxu0 0.0
      %4487 = vmatprep.subr.mxu0 0.0
      %4488 = vmatpush1.msra.mxu0 0.0
      %4489 = vmatprep.subr.mxu0 0.0
      %4490 = vmatpush1.msra.mxu0 0.0
      %4491 = vmatprep.subr.mxu0 0.0
      %4492 = vmatpush1.msra.mxu0 0.0
      %4493 = vmatprep.subr.mxu0 0.0
      %4494 = vmatpush1.msra.mxu0 0.0
      %4495 = vmatprep.subr.mxu0 0.0
      %4496 = vmatpush1.msra.mxu0 0.0
      %4497 = vmatprep.subr.mxu0 0.0
      %4498 = vmatpush1.msra.mxu0 0.0
      %4499 = vmatprep.subr.mxu0 %v4388
      %4500 = vmatpush1.msra.mxu0 %v4386
      %4501 = vmatprep.subr.mxu0 %v4355
      %4502 = vmatpush1.msra.mxu0 %v4354
      %4503 = vmatprep.subr.mxu0 0.0
      %4504 = vmatpush2.msra.mxu0 0.0
      %4505 = vmatprep.subr.mxu0 0.0
      %4506 = vmatpush2.msra.mxu0 0.0
      %4507 = vmatprep.subr.mxu0 0.0
      %4508 = vmatpush2.msra.mxu0 0.0
      %4509 = vmatprep.subr.mxu0 0.0
      %4510 = vmatpush2.msra.mxu0 0.0
      %4511 = vmatprep.subr.mxu0 0.0
      %4512 = vmatpush2.msra.mxu0 0.0
      %4513 = vmatprep.subr.mxu0 0.0
      %4514 = vmatpush2.msra.mxu0 0.0
      %4515 = vmatprep.subr.mxu0 0.0
      %4516 = vmatpush2.msra.mxu0 0.0
      %4517 = vmatprep.subr.mxu0 0.0
      %4518 = vmatpush2.msra.mxu0 0.0
      %4519 = vmatprep.subr.mxu0 0.0
      %4520 = vmatpush2.msra.mxu0 0.0
      %4521 = vmatprep.subr.mxu0 0.0
      %4522 = vmatpush2.msra.mxu0 0.0
      %4523 = vmatprep.subr.mxu0 0.0
      %4524 = vmatpush2.msra.mxu0 0.0
      %4525 = vmatprep.subr.mxu0 0.0
      %4526 = vmatpush2.msra.mxu0 0.0
      %4527 = vmatprep.subr.mxu0 0.0
      %4528 = vmatpush2.msra.mxu0 0.0
      %4529 = vmatprep.subr.mxu0 0.0
      %4530 = vmatpush2.msra.mxu0 0.0
      %4531 = vmatprep.subr.mxu0 0.0
      %4532 = vmatpush2.msra.mxu0 0.0
      %4533 = vmatprep.subr.mxu0 0.0
      %4534 = vmatpush2.msra.mxu0 0.0
      %4535 = vmatprep.mubr.f32.mxu0 0.0
      %4536 = vmatmul.mubr.f32.gmra.mxu0 %v4380
      %v4537 = vpop.f32.mrf.mxu0
      %v4538 = vadd.f32 0.0, %v4537
      %v4539 = vpop.f32.mrf.mxu0
      %v4540 = vadd.f32 0.0, %v4539
      %4541 = vdwg.mxu0
      %4542 = vmatprep.subr.mxu0 0.0
      %4543 = vmatpush1.msra.mxu0 0.0
      %4544 = vmatprep.subr.mxu0 0.0
      %4545 = vmatpush1.msra.mxu0 0.0
      %4546 = vmatprep.subr.mxu0 0.0
      %4547 = vmatpush1.msra.mxu0 0.0
      %4548 = vmatprep.subr.mxu0 0.0
      %4549 = vmatpush1.msra.mxu0 0.0
      %4550 = vmatprep.subr.mxu0 0.0
      %4551 = vmatpush1.msra.mxu0 0.0
      %4552 = vmatprep.subr.mxu0 0.0
      %4553 = vmatpush1.msra.mxu0 0.0
      %4554 = vmatprep.subr.mxu0 0.0
      %4555 = vmatpush1.msra.mxu0 0.0
      %4556 = vmatprep.subr.mxu0 0.0
      %4557 = vmatpush1.msra.mxu0 0.0
      %4558 = vmatprep.subr.mxu0 0.0
      %4559 = vmatpush1.msra.mxu0 0.0
      %4560 = vmatprep.subr.mxu0 0.0
      %4561 = vmatpush1.msra.mxu0 0.0
      %4562 = vmatprep.subr.mxu0 0.0
      %4563 = vmatpush1.msra.mxu0 0.0
      %4564 = vmatprep.subr.mxu0 0.0
      %4565 = vmatpush1.msra.mxu0 0.0
      %4566 = vmatprep.subr.mxu0 0.0
      %4567 = vmatpush1.msra.mxu0 0.0
      %4568 = vmatprep.subr.mxu0 0.0
      %4569 = vmatpush1.msra.mxu0 0.0
      %4570 = vmatprep.subr.mxu0 %v4392
      %4571 = vmatpush1.msra.mxu0 %v4390
      %4572 = vmatprep.subr.mxu0 %v4357
      %4573 = vmatpush1.msra.mxu0 %v4356
      %4574 = vmatprep.subr.mxu0 0.0
      %4575 = vmatpush2.msra.mxu0 0.0
      %4576 = vmatprep.subr.mxu0 0.0
      %4577 = vmatpush2.msra.mxu0 0.0
      %4578 = vmatprep.subr.mxu0 0.0
      %4579 = vmatpush2.msra.mxu0 0.0
      %4580 = vmatprep.subr.mxu0 0.0
      %4581 = vmatpush2.msra.mxu0 0.0
      %4582 = vmatprep.subr.mxu0 0.0
      %4583 = vmatpush2.msra.mxu0 0.0
      %4584 = vmatprep.subr.mxu0 0.0
      %4585 = vmatpush2.msra.mxu0 0.0
      %4586 = vmatprep.subr.mxu0 0.0
      %4587 = vmatpush2.msra.mxu0 0.0
      %4588 = vmatprep.subr.mxu0 0.0
      %4589 = vmatpush2.msra.mxu0 0.0
      %4590 = vmatprep.subr.mxu0 0.0
      %4591 = vmatpush2.msra.mxu0 0.0
      %4592 = vmatprep.subr.mxu0 0.0
      %4593 = vmatpush2.msra.mxu0 0.0
      %4594 = vmatprep.subr.mxu0 0.0
      %4595 = vmatpush2.msra.mxu0 0.0
      %4596 = vmatprep.subr.mxu0 0.0
      %4597 = vmatpush2.msra.mxu0 0.0
      %4598 = vmatprep.subr.mxu0 0.0
      %4599 = vmatpush2.msra.mxu0 0.0
      %4600 = vmatprep.subr.mxu0 0.0
      %4601 = vmatpush2.msra.mxu0 0.0
      %4602 = vmatprep.subr.mxu0 0.0
      %4603 = vmatpush2.msra.mxu0 0.0
      %4604 = vmatprep.subr.mxu0 0.0
      %4605 = vmatpush2.msra.mxu0 0.0
      %4606 = vmatprep.mubr.f32.mxu0 0.0
      %4607 = vmatmul.mubr.f32.gmra.mxu0 %v4380
      %v4608 = vpop.f32.mrf.mxu0
      %v4609 = vadd.f32 0.0, %v4608
      %v4610 = vpop.f32.mrf.mxu0
      %v4611 = vadd.f32 0.0, %v4610
      %4612 = vdwg.mxu0
      %4613 = vmatprep.subr.mxu0 0.0
      %4614 = vmatpush1.msra.mxu0 0.0
      %4615 = vmatprep.subr.mxu0 0.0
      %4616 = vmatpush1.msra.mxu0 0.0
      %4617 = vmatprep.subr.mxu0 0.0
      %4618 = vmatpush1.msra.mxu0 0.0
      %4619 = vmatprep.subr.mxu0 0.0
      %4620 = vmatpush1.msra.mxu0 0.0
      %4621 = vmatprep.subr.mxu0 0.0
      %4622 = vmatpush1.msra.mxu0 0.0
      %4623 = vmatprep.subr.mxu0 0.0
      %4624 = vmatpush1.msra.mxu0 0.0
      %4625 = vmatprep.subr.mxu0 0.0
      %4626 = vmatpush1.msra.mxu0 0.0
      %4627 = vmatprep.subr.mxu0 0.0
      %4628 = vmatpush1.msra.mxu0 0.0
      %4629 = vmatprep.subr.mxu0 0.0
      %4630 = vmatpush1.msra.mxu0 0.0
      %4631 = vmatprep.subr.mxu0 0.0
      %4632 = vmatpush1.msra.mxu0 0.0
      %4633 = vmatprep.subr.mxu0 0.0
      %4634 = vmatpush1.msra.mxu0 0.0
      %4635 = vmatprep.subr.mxu0 0.0
      %4636 = vmatpush1.msra.mxu0 0.0
      %4637 = vmatprep.subr.mxu0 0.0
      %4638 = vmatpush1.msra.mxu0 0.0
      %4639 = vmatprep.subr.mxu0 0.0
      %4640 = vmatpush1.msra.mxu0 0.0
      %4641 = vmatprep.subr.mxu0 %v4396
      %4642 = vmatpush1.msra.mxu0 %v4394
      %4643 = vmatprep.subr.mxu0 %v4359
      %4644 = vmatpush1.msra.mxu0 %v4358
      %4645 = vmatprep.subr.mxu0 0.0
      %4646 = vmatpush2.msra.mxu0 0.0
      %4647 = vmatprep.subr.mxu0 0.0
      %4648 = vmatpush2.msra.mxu0 0.0
      %4649 = vmatprep.subr.mxu0 0.0
      %4650 = vmatpush2.msra.mxu0 0.0
      %4651 = vmatprep.subr.mxu0 0.0
      %4652 = vmatpush2.msra.mxu0 0.0
      %4653 = vmatprep.subr.mxu0 0.0
      %4654 = vmatpush2.msra.mxu0 0.0
      %4655 = vmatprep.subr.mxu0 0.0
      %4656 = vmatpush2.msra.mxu0 0.0
      %4657 = vmatprep.subr.mxu0 0.0
      %4658 = vmatpush2.msra.mxu0 0.0
      %4659 = vmatprep.subr.mxu0 0.0
      %4660 = vmatpush2.msra.mxu0 0.0
      %4661 = vmatprep.subr.mxu0 0.0
      %4662 = vmatpush2.msra.mxu0 0.0
      %4663 = vmatprep.subr.mxu0 0.0
      %4664 = vmatpush2.msra.mxu0 0.0
      %4665 = vmatprep.subr.mxu0 0.0
      %4666 = vmatpush2.msra.mxu0 0.0
      %4667 = vmatprep.subr.mxu0 0.0
      %4668 = vmatpush2.msra.mxu0 0.0
      %4669 = vmatprep.subr.mxu0 0.0
      %4670 = vmatpush2.msra.mxu0 0.0
      %4671 = vmatprep.subr.mxu0 0.0
      %4672 = vmatpush2.msra.mxu0 0.0
      %4673 = vmatprep.subr.mxu0 0.0
      %4674 = vmatpush2.msra.mxu0 0.0
      %4675 = vmatprep.subr.mxu0 0.0
      %4676 = vmatpush2.msra.mxu0 0.0
      %4677 = vmatprep.mubr.f32.mxu0 0.0
      %4678 = vmatmul.mubr.f32.gmra.mxu0 %v4380
      %v4679 = vpop.f32.mrf.mxu0
      %v4680 = vadd.f32 0.0, %v4679
      %v4681 = vpop.f32.mrf.mxu0
      %v4682 = vadd.f32 0.0, %v4681
      %4683 = vdwg.mxu0
      %4684 = vmatprep.subr.mxu0 0.0
      %4685 = vmatpush1.msra.mxu0 0.0
      %4686 = vmatprep.subr.mxu0 0.0
      %4687 = vmatpush1.msra.mxu0 0.0
      %4688 = vmatprep.subr.mxu0 0.0
      %4689 = vmatpush1.msra.mxu0 0.0
      %4690 = vmatprep.subr.mxu0 0.0
      %4691 = vmatpush1.msra.mxu0 0.0
      %4692 = vmatprep.subr.mxu0 0.0
      %4693 = vmatpush1.msra.mxu0 0.0
      %4694 = vmatprep.subr.mxu0 0.0
      %4695 = vmatpush1.msra.mxu0 0.0
      %4696 = vmatprep.subr.mxu0 0.0
      %4697 = vmatpush1.msra.mxu0 0.0
      %4698 = vmatprep.subr.mxu0 0.0
      %4699 = vmatpush1.msra.mxu0 0.0
      %4700 = vmatprep.subr.mxu0 0.0
      %4701 = vmatpush1.msra.mxu0 0.0
      %4702 = vmatprep.subr.mxu0 0.0
      %4703 = vmatpush1.msra.mxu0 0.0
      %4704 = vmatprep.subr.mxu0 0.0
      %4705 = vmatpush1.msra.mxu0 0.0
      %4706 = vmatprep.subr.mxu0 0.0
      %4707 = vmatpush1.msra.mxu0 0.0
      %4708 = vmatprep.subr.mxu0 0.0
      %4709 = vmatpush1.msra.mxu0 0.0
      %4710 = vmatprep.subr.mxu0 0.0
      %4711 = vmatpush1.msra.mxu0 0.0
      %4712 = vmatprep.subr.mxu0 0.0
      %4713 = vmatpush1.msra.mxu0 %v4398
      %4714 = vmatprep.subr.mxu0 0.0
      %4715 = vmatpush1.msra.mxu0 %v4360
      %4716 = vmatprep.subr.mxu0 0.0
      %4717 = vmatpush2.msra.mxu0 0.0
      %4718 = vmatprep.subr.mxu0 0.0
      %4719 = vmatpush2.msra.mxu0 0.0
      %4720 = vmatprep.subr.mxu0 0.0
      %4721 = vmatpush2.msra.mxu0 0.0
      %4722 = vmatprep.subr.mxu0 0.0
      %4723 = vmatpush2.msra.mxu0 0.0
      %4724 = vmatprep.subr.mxu0 0.0
      %4725 = vmatpush2.msra.mxu0 0.0
      %4726 = vmatprep.subr.mxu0 0.0
      %4727 = vmatpush2.msra.mxu0 0.0
      %4728 = vmatprep.subr.mxu0 0.0
      %4729 = vmatpush2.msra.mxu0 0.0
      %4730 = vmatprep.subr.mxu0 0.0
      %4731 = vmatpush2.msra.mxu0 0.0
      %4732 = vmatprep.subr.mxu0 0.0
      %4733 = vmatpush2.msra.mxu0 0.0
      %4734 = vmatprep.subr.mxu0 0.0
      %4735 = vmatpush2.msra.mxu0 0.0
      %4736 = vmatprep.subr.mxu0 0.0
      %4737 = vmatpush2.msra.mxu0 0.0
      %4738 = vmatprep.subr.mxu0 0.0
      %4739 = vmatpush2.msra.mxu0 0.0
      %4740 = vmatprep.subr.mxu0 0.0
      %4741 = vmatpush2.msra.mxu0 0.0
      %4742 = vmatprep.subr.mxu0 0.0
      %4743 = vmatpush2.msra.mxu0 0.0
      %4744 = vmatprep.subr.mxu0 0.0
      %4745 = vmatpush2.msra.mxu0 0.0
      %4746 = vmatprep.subr.mxu0 0.0
      %4747 = vmatpush2.msra.mxu0 0.0
      %4748 = vmatprep.mubr.f32.mxu0 0.0
      %4749 = vmatmul.mubr.f32.gmra.mxu0 %v4380
      %v4750 = vpop.f32.mrf.mxu0
      %v4751 = vadd.f32 0.0, %v4750
      %v4752 = vpop.f32.mrf.mxu0
      %4753 = vdwg.mxu0
      %v4754 = vadd.f32 %v4300, %v4467
      %v4755 = vadd.f32 %v4301, %v4469
      %v4756 = vadd.f32 %v4302, %v4538
      %v4757 = vadd.f32 %v4303, %v4540
      %v4758 = vadd.f32 %v4304, %v4609
      %v4759 = vadd.f32 %v4305, %v4611
      %v4760 = vadd.f32 %v4306, %v4680
      %v4761 = vadd.f32 %v4307, %v4682
      %v4762 = vadd.f32 %v4308, %v4751
      %v4763 = vld [vmem:[%s165] sm:$0xff]
      %v4764 = vld [vmem:[%s165 + $0x8] sm:$0xff]
      %v4765 = vld [vmem:[%s165 + $0x10] sm:$0xff]
      %v4766 = vld [vmem:[%s165 + $0x18] sm:$0xff]
      %v4767 = vld [vmem:[%s165 + $0x20] sm:$0xff]
      %v4768 = vld [vmem:[%s165 + $0x28] sm:$0xff]
      %v4769 = vld [vmem:[%s165 + $0x30] sm:$0xff]
      %v4770 = vld [vmem:[%s165 + $0x38] sm:$0xff]
      %v4771 = vld [vmem:[%s165 + $0x40] sm:$0xff]
      %v4772 = vld [vmem:[%s165 + $0x50] sm:$0xf]
      %v4773 = vld [vmem:[%s165 + $0x58] sm:$0xf]
      %v4774 = vld [vmem:[%s165 + $0x60] sm:$0xf]
      %v4775 = vld [vmem:[%s165 + $0x68] sm:$0xf]
      %v4776 = vld [vmem:[%s165 + $0x70] sm:$0xf]
      %v4777 = vld [vmem:[%s165 + $0x78] sm:$0xf]
      %v4778 = vld [vmem:[%s165 + $0x80] sm:$0xf]
      %v4779 = vld [vmem:[%s165 + $0x88] sm:$0xf]
      %v4780 = vld [vmem:[%s165 + $0x90] sm:$0xf]
      %s4781 = scalar_lea.vmem %s1, 36
      %v4782 = vld [vmem:[%s4781] sm:$0x7]
      %4801 = vrot.lane.b32.xlu0 %v4763, 93
      %v4802 = vpop.permute.xlu0 %4801
      %4803 = vrot.lane.b32.xlu0 %v4764, 93
      %v4804 = vpop.permute.xlu0 %4803
      %4805 = vrot.lane.b32.xlu0 %v4765, 93
      %v4806 = vpop.permute.xlu0 %4805
      %4807 = vrot.lane.b32.xlu0 %v4766, 93
      %v4808 = vpop.permute.xlu0 %4807
      %4809 = vrot.lane.b32.xlu0 %v4767, 93
      %v4810 = vpop.permute.xlu0 %4809
      %4811 = vrot.lane.b32.xlu0 %v4768, 93
      %v4812 = vpop.permute.xlu0 %4811
      %4813 = vrot.lane.b32.xlu0 %v4769, 93
      %v4814 = vpop.permute.xlu0 %4813
      %4815 = vrot.lane.b32.xlu0 %v4770, 93
      %v4816 = vpop.permute.xlu0 %4815
      %4817 = vrot.lane.b32.xlu0 %v4771, 93
      %v4818 = vpop.permute.xlu0 %4817
      %4819 = vrot.lane.b32.xlu0 %v4772, 93
      %v4820 = vpop.permute.xlu0 %4819
      %4821 = vrot.lane.b32.xlu0 %v4773, 93
      %v4822 = vpop.permute.xlu0 %4821
      %4823 = vrot.lane.b32.xlu0 %v4774, 93
      %v4824 = vpop.permute.xlu0 %4823
      %4825 = vrot.lane.b32.xlu0 %v4775, 93
      %v4826 = vpop.permute.xlu0 %4825
      %4827 = vrot.lane.b32.xlu0 %v4776, 93
      %v4828 = vpop.permute.xlu0 %4827
      %4829 = vrot.lane.b32.xlu0 %v4777, 93
      %v4830 = vpop.permute.xlu0 %4829
      %4831 = vrot.lane.b32.xlu0 %v4778, 93
      %v4832 = vpop.permute.xlu0 %4831
      %4833 = vrot.lane.b32.xlu0 %v4779, 93
      %v4834 = vpop.permute.xlu0 %4833
      %4835 = vrot.lane.b32.xlu0 %v4780, 93
      %v4836 = vpop.permute.xlu0 %4835
      %v4837 = vsel %vm251, %v4802, %v4804
      %v4838 = vsel %vm251, %v4804, %v4806
      %v4839 = vsel %vm251, %v4806, %v4808
      %v4840 = vsel %vm251, %v4808, %v4810
      %v4841 = vsel %vm251, %v4810, %v4812
      %v4842 = vsel %vm251, %v4812, %v4814
      %v4843 = vsel %vm251, %v4814, %v4816
      %v4844 = vsel %vm251, %v4816, %v4818
      %v4845 = vsel %vm251, %v4820, %v4822
      %v4846 = vsel %vm251, %v4822, %v4824
      %v4847 = vsel %vm251, %v4824, %v4826
      %v4848 = vsel %vm251, %v4826, %v4828
      %v4849 = vsel %vm251, %v4828, %v4830
      %v4850 = vsel %vm251, %v4830, %v4832
      %v4851 = vsel %vm251, %v4832, %v4834
      %v4852 = vsel %vm251, %v4834, %v4836
      %v4863 = vsel %vm277, %v4782, 0
      %v4865 = vsel %vm281, %v4845, 0
      %v4867 = vsel %vm281, %v4846, 0
      %v4869 = vsel %vm281, %v4847, 0
      %v4871 = vsel %vm281, %v4848, 0
      %v4873 = vsel %vm281, %v4849, 0
      %v4875 = vsel %vm281, %v4850, 0
      %v4877 = vsel %vm281, %v4851, 0
      %v4879 = vsel %vm281, %v4852, 0
      %v4881 = vsel %vm281, %v4836, 0
      %4883 = vmatprep.subr.mxu0 0.0
      %4884 = vmatpush1.msra.mxu0 0.0
      %4885 = vmatprep.subr.mxu0 0.0
      %4886 = vmatpush1.msra.mxu0 0.0
      %4887 = vmatprep.subr.mxu0 0.0
      %4888 = vmatpush1.msra.mxu0 0.0
      %4889 = vmatprep.subr.mxu0 0.0
      %4890 = vmatpush1.msra.mxu0 0.0
      %4891 = vmatprep.subr.mxu0 0.0
      %4892 = vmatpush1.msra.mxu0 0.0
      %4893 = vmatprep.subr.mxu0 0.0
      %4894 = vmatpush1.msra.mxu0 0.0
      %4895 = vmatprep.subr.mxu0 0.0
      %4896 = vmatpush1.msra.mxu0 0.0
      %4897 = vmatprep.subr.mxu0 0.0
      %4898 = vmatpush1.msra.mxu0 0.0
      %4899 = vmatprep.subr.mxu0 0.0
      %4900 = vmatpush1.msra.mxu0 0.0
      %4901 = vmatprep.subr.mxu0 0.0
      %4902 = vmatpush1.msra.mxu0 0.0
      %4903 = vmatprep.subr.mxu0 0.0
      %4904 = vmatpush1.msra.mxu0 0.0
      %4905 = vmatprep.subr.mxu0 0.0
      %4906 = vmatpush1.msra.mxu0 0.0
      %4907 = vmatprep.subr.mxu0 0.0
      %4908 = vmatpush1.msra.mxu0 0.0
      %4909 = vmatprep.subr.mxu0 0.0
      %4910 = vmatpush1.msra.mxu0 0.0
      %4911 = vmatprep.subr.mxu0 %v4867
      %4912 = vmatpush1.msra.mxu0 %v4865
      %4913 = vmatprep.subr.mxu0 %v4838
      %4914 = vmatpush1.msra.mxu0 %v4837
      %4915 = vmatprep.subr.mxu0 0.0
      %4916 = vmatpush2.msra.mxu0 0.0
      %4917 = vmatprep.subr.mxu0 0.0
      %4918 = vmatpush2.msra.mxu0 0.0
      %4919 = vmatprep.subr.mxu0 0.0
      %4920 = vmatpush2.msra.mxu0 0.0
      %4921 = vmatprep.subr.mxu0 0.0
      %4922 = vmatpush2.msra.mxu0 0.0
      %4923 = vmatprep.subr.mxu0 0.0
      %4924 = vmatpush2.msra.mxu0 0.0
      %4925 = vmatprep.subr.mxu0 0.0
      %4926 = vmatpush2.msra.mxu0 0.0
      %4927 = vmatprep.subr.mxu0 0.0
      %4928 = vmatpush2.msra.mxu0 0.0
      %4929 = vmatprep.subr.mxu0 0.0
      %4930 = vmatpush2.msra.mxu0 0.0
      %4931 = vmatprep.subr.mxu0 0.0
      %4932 = vmatpush2.msra.mxu0 0.0
      %4933 = vmatprep.subr.mxu0 0.0
      %4934 = vmatpush2.msra.mxu0 0.0
      %4935 = vmatprep.subr.mxu0 0.0
      %4936 = vmatpush2.msra.mxu0 0.0
      %4937 = vmatprep.subr.mxu0 0.0
      %4938 = vmatpush2.msra.mxu0 0.0
      %4939 = vmatprep.subr.mxu0 0.0
      %4940 = vmatpush2.msra.mxu0 0.0
      %4941 = vmatprep.subr.mxu0 0.0
      %4942 = vmatpush2.msra.mxu0 0.0
      %4943 = vmatprep.subr.mxu0 0.0
      %4944 = vmatpush2.msra.mxu0 0.0
      %4945 = vmatprep.subr.mxu0 0.0
      %4946 = vmatpush2.msra.mxu0 0.0
      %4947 = vmatprep.mubr.f32.mxu0 0.0
      %4948 = vmatmul.mubr.f32.gmra.mxu0 %v4863
      %v4949 = vpop.f32.mrf.mxu0
      %v4950 = vadd.f32 0.0, %v4949
      %v4951 = vpop.f32.mrf.mxu0
      %v4952 = vadd.f32 0.0, %v4951
      %4953 = vdwg.mxu0
      %4954 = vmatprep.subr.mxu0 0.0
      %4955 = vmatpush1.msra.mxu0 0.0
      %4956 = vmatprep.subr.mxu0 0.0
      %4957 = vmatpush1.msra.mxu0 0.0
      %4958 = vmatprep.subr.mxu0 0.0
      %4959 = vmatpush1.msra.mxu0 0.0
      %4960 = vmatprep.subr.mxu0 0.0
      %4961 = vmatpush1.msra.mxu0 0.0
      %4962 = vmatprep.subr.mxu0 0.0
      %4963 = vmatpush1.msra.mxu0 0.0
      %4964 = vmatprep.subr.mxu0 0.0
      %4965 = vmatpush1.msra.mxu0 0.0
      %4966 = vmatprep.subr.mxu0 0.0
      %4967 = vmatpush1.msra.mxu0 0.0
      %4968 = vmatprep.subr.mxu0 0.0
      %4969 = vmatpush1.msra.mxu0 0.0
      %4970 = vmatprep.subr.mxu0 0.0
      %4971 = vmatpush1.msra.mxu0 0.0
      %4972 = vmatprep.subr.mxu0 0.0
      %4973 = vmatpush1.msra.mxu0 0.0
      %4974 = vmatprep.subr.mxu0 0.0
      %4975 = vmatpush1.msra.mxu0 0.0
      %4976 = vmatprep.subr.mxu0 0.0
      %4977 = vmatpush1.msra.mxu0 0.0
      %4978 = vmatprep.subr.mxu0 0.0
      %4979 = vmatpush1.msra.mxu0 0.0
      %4980 = vmatprep.subr.mxu0 0.0
      %4981 = vmatpush1.msra.mxu0 0.0
      %4982 = vmatprep.subr.mxu0 %v4871
      %4983 = vmatpush1.msra.mxu0 %v4869
      %4984 = vmatprep.subr.mxu0 %v4840
      %4985 = vmatpush1.msra.mxu0 %v4839
      %4986 = vmatprep.subr.mxu0 0.0
      %4987 = vmatpush2.msra.mxu0 0.0
      %4988 = vmatprep.subr.mxu0 0.0
      %4989 = vmatpush2.msra.mxu0 0.0
      %4990 = vmatprep.subr.mxu0 0.0
      %4991 = vmatpush2.msra.mxu0 0.0
      %4992 = vmatprep.subr.mxu0 0.0
      %4993 = vmatpush2.msra.mxu0 0.0
      %4994 = vmatprep.subr.mxu0 0.0
      %4995 = vmatpush2.msra.mxu0 0.0
      %4996 = vmatprep.subr.mxu0 0.0
      %4997 = vmatpush2.msra.mxu0 0.0
      %4998 = vmatprep.subr.mxu0 0.0
      %4999 = vmatpush2.msra.mxu0 0.0
      %5000 = vmatprep.subr.mxu0 0.0
      %5001 = vmatpush2.msra.mxu0 0.0
      %5002 = vmatprep.subr.mxu0 0.0
      %5003 = vmatpush2.msra.mxu0 0.0
      %5004 = vmatprep.subr.mxu0 0.0
      %5005 = vmatpush2.msra.mxu0 0.0
      %5006 = vmatprep.subr.mxu0 0.0
      %5007 = vmatpush2.msra.mxu0 0.0
      %5008 = vmatprep.subr.mxu0 0.0
      %5009 = vmatpush2.msra.mxu0 0.0
      %5010 = vmatprep.subr.mxu0 0.0
      %5011 = vmatpush2.msra.mxu0 0.0
      %5012 = vmatprep.subr.mxu0 0.0
      %5013 = vmatpush2.msra.mxu0 0.0
      %5014 = vmatprep.subr.mxu0 0.0
      %5015 = vmatpush2.msra.mxu0 0.0
      %5016 = vmatprep.subr.mxu0 0.0
      %5017 = vmatpush2.msra.mxu0 0.0
      %5018 = vmatprep.mubr.f32.mxu0 0.0
      %5019 = vmatmul.mubr.f32.gmra.mxu0 %v4863
      %v5020 = vpop.f32.mrf.mxu0
      %v5021 = vadd.f32 0.0, %v5020
      %v5022 = vpop.f32.mrf.mxu0
      %v5023 = vadd.f32 0.0, %v5022
      %5024 = vdwg.mxu0
      %5025 = vmatprep.subr.mxu0 0.0
      %5026 = vmatpush1.msra.mxu0 0.0
      %5027 = vmatprep.subr.mxu0 0.0
      %5028 = vmatpush1.msra.mxu0 0.0
      %5029 = vmatprep.subr.mxu0 0.0
      %5030 = vmatpush1.msra.mxu0 0.0
      %5031 = vmatprep.subr.mxu0 0.0
      %5032 = vmatpush1.msra.mxu0 0.0
      %5033 = vmatprep.subr.mxu0 0.0
      %5034 = vmatpush1.msra.mxu0 0.0
      %5035 = vmatprep.subr.mxu0 0.0
      %5036 = vmatpush1.msra.mxu0 0.0
      %5037 = vmatprep.subr.mxu0 0.0
      %5038 = vmatpush1.msra.mxu0 0.0
      %5039 = vmatprep.subr.mxu0 0.0
      %5040 = vmatpush1.msra.mxu0 0.0
      %5041 = vmatprep.subr.mxu0 0.0
      %5042 = vmatpush1.msra.mxu0 0.0
      %5043 = vmatprep.subr.mxu0 0.0
      %5044 = vmatpush1.msra.mxu0 0.0
      %5045 = vmatprep.subr.mxu0 0.0
      %5046 = vmatpush1.msra.mxu0 0.0
      %5047 = vmatprep.subr.mxu0 0.0
      %5048 = vmatpush1.msra.mxu0 0.0
      %5049 = vmatprep.subr.mxu0 0.0
      %5050 = vmatpush1.msra.mxu0 0.0
      %5051 = vmatprep.subr.mxu0 0.0
      %5052 = vmatpush1.msra.mxu0 0.0
      %5053 = vmatprep.subr.mxu0 %v4875
      %5054 = vmatpush1.msra.mxu0 %v4873
      %5055 = vmatprep.subr.mxu0 %v4842
      %5056 = vmatpush1.msra.mxu0 %v4841
      %5057 = vmatprep.subr.mxu0 0.0
      %5058 = vmatpush2.msra.mxu0 0.0
      %5059 = vmatprep.subr.mxu0 0.0
      %5060 = vmatpush2.msra.mxu0 0.0
      %5061 = vmatprep.subr.mxu0 0.0
      %5062 = vmatpush2.msra.mxu0 0.0
      %5063 = vmatprep.subr.mxu0 0.0
      %5064 = vmatpush2.msra.mxu0 0.0
      %5065 = vmatprep.subr.mxu0 0.0
      %5066 = vmatpush2.msra.mxu0 0.0
      %5067 = vmatprep.subr.mxu0 0.0
      %5068 = vmatpush2.msra.mxu0 0.0
      %5069 = vmatprep.subr.mxu0 0.0
      %5070 = vmatpush2.msra.mxu0 0.0
      %5071 = vmatprep.subr.mxu0 0.0
      %5072 = vmatpush2.msra.mxu0 0.0
      %5073 = vmatprep.subr.mxu0 0.0
      %5074 = vmatpush2.msra.mxu0 0.0
      %5075 = vmatprep.subr.mxu0 0.0
      %5076 = vmatpush2.msra.mxu0 0.0
      %5077 = vmatprep.subr.mxu0 0.0
      %5078 = vmatpush2.msra.mxu0 0.0
      %5079 = vmatprep.subr.mxu0 0.0
      %5080 = vmatpush2.msra.mxu0 0.0
      %5081 = vmatprep.subr.mxu0 0.0
      %5082 = vmatpush2.msra.mxu0 0.0
      %5083 = vmatprep.subr.mxu0 0.0
      %5084 = vmatpush2.msra.mxu0 0.0
      %5085 = vmatprep.subr.mxu0 0.0
      %5086 = vmatpush2.msra.mxu0 0.0
      %5087 = vmatprep.subr.mxu0 0.0
      %5088 = vmatpush2.msra.mxu0 0.0
      %5089 = vmatprep.mubr.f32.mxu0 0.0
      %5090 = vmatmul.mubr.f32.gmra.mxu0 %v4863
      %v5091 = vpop.f32.mrf.mxu0
      %v5092 = vadd.f32 0.0, %v5091
      %v5093 = vpop.f32.mrf.mxu0
      %v5094 = vadd.f32 0.0, %v5093
      %5095 = vdwg.mxu0
      %5096 = vmatprep.subr.mxu0 0.0
      %5097 = vmatpush1.msra.mxu0 0.0
      %5098 = vmatprep.subr.mxu0 0.0
      %5099 = vmatpush1.msra.mxu0 0.0
      %5100 = vmatprep.subr.mxu0 0.0
      %5101 = vmatpush1.msra.mxu0 0.0
      %5102 = vmatprep.subr.mxu0 0.0
      %5103 = vmatpush1.msra.mxu0 0.0
      %5104 = vmatprep.subr.mxu0 0.0
      %5105 = vmatpush1.msra.mxu0 0.0
      %5106 = vmatprep.subr.mxu0 0.0
      %5107 = vmatpush1.msra.mxu0 0.0
      %5108 = vmatprep.subr.mxu0 0.0
      %5109 = vmatpush1.msra.mxu0 0.0
      %5110 = vmatprep.subr.mxu0 0.0
      %5111 = vmatpush1.msra.mxu0 0.0
      %5112 = vmatprep.subr.mxu0 0.0
      %5113 = vmatpush1.msra.mxu0 0.0
      %5114 = vmatprep.subr.mxu0 0.0
      %5115 = vmatpush1.msra.mxu0 0.0
      %5116 = vmatprep.subr.mxu0 0.0
      %5117 = vmatpush1.msra.mxu0 0.0
      %5118 = vmatprep.subr.mxu0 0.0
      %5119 = vmatpush1.msra.mxu0 0.0
      %5120 = vmatprep.subr.mxu0 0.0
      %5121 = vmatpush1.msra.mxu0 0.0
      %5122 = vmatprep.subr.mxu0 0.0
      %5123 = vmatpush1.msra.mxu0 0.0
      %5124 = vmatprep.subr.mxu0 %v4879
      %5125 = vmatpush1.msra.mxu0 %v4877
      %5126 = vmatprep.subr.mxu0 %v4844
      %5127 = vmatpush1.msra.mxu0 %v4843
      %5128 = vmatprep.subr.mxu0 0.0
      %5129 = vmatpush2.msra.mxu0 0.0
      %5130 = vmatprep.subr.mxu0 0.0
      %5131 = vmatpush2.msra.mxu0 0.0
      %5132 = vmatprep.subr.mxu0 0.0
      %5133 = vmatpush2.msra.mxu0 0.0
      %5134 = vmatprep.subr.mxu0 0.0
      %5135 = vmatpush2.msra.mxu0 0.0
      %5136 = vmatprep.subr.mxu0 0.0
      %5137 = vmatpush2.msra.mxu0 0.0
      %5138 = vmatprep.subr.mxu0 0.0
      %5139 = vmatpush2.msra.mxu0 0.0
      %5140 = vmatprep.subr.mxu0 0.0
      %5141 = vmatpush2.msra.mxu0 0.0
      %5142 = vmatprep.subr.mxu0 0.0
      %5143 = vmatpush2.msra.mxu0 0.0
      %5144 = vmatprep.subr.mxu0 0.0
      %5145 = vmatpush2.msra.mxu0 0.0
      %5146 = vmatprep.subr.mxu0 0.0
      %5147 = vmatpush2.msra.mxu0 0.0
      %5148 = vmatprep.subr.mxu0 0.0
      %5149 = vmatpush2.msra.mxu0 0.0
      %5150 = vmatprep.subr.mxu0 0.0
      %5151 = vmatpush2.msra.mxu0 0.0
      %5152 = vmatprep.subr.mxu0 0.0
      %5153 = vmatpush2.msra.mxu0 0.0
      %5154 = vmatprep.subr.mxu0 0.0
      %5155 = vmatpush2.msra.mxu0 0.0
      %5156 = vmatprep.subr.mxu0 0.0
      %5157 = vmatpush2.msra.mxu0 0.0
      %5158 = vmatprep.subr.mxu0 0.0
      %5159 = vmatpush2.msra.mxu0 0.0
      %5160 = vmatprep.mubr.f32.mxu0 0.0
      %5161 = vmatmul.mubr.f32.gmra.mxu0 %v4863
      %v5162 = vpop.f32.mrf.mxu0
      %v5163 = vadd.f32 0.0, %v5162
      %v5164 = vpop.f32.mrf.mxu0
      %v5165 = vadd.f32 0.0, %v5164
      %5166 = vdwg.mxu0
      %5167 = vmatprep.subr.mxu0 0.0
      %5168 = vmatpush1.msra.mxu0 0.0
      %5169 = vmatprep.subr.mxu0 0.0
      %5170 = vmatpush1.msra.mxu0 0.0
      %5171 = vmatprep.subr.mxu0 0.0
      %5172 = vmatpush1.msra.mxu0 0.0
      %5173 = vmatprep.subr.mxu0 0.0
      %5174 = vmatpush1.msra.mxu0 0.0
      %5175 = vmatprep.subr.mxu0 0.0
      %5176 = vmatpush1.msra.mxu0 0.0
      %5177 = vmatprep.subr.mxu0 0.0
      %5178 = vmatpush1.msra.mxu0 0.0
      %5179 = vmatprep.subr.mxu0 0.0
      %5180 = vmatpush1.msra.mxu0 0.0
      %5181 = vmatprep.subr.mxu0 0.0
      %5182 = vmatpush1.msra.mxu0 0.0
      %5183 = vmatprep.subr.mxu0 0.0
      %5184 = vmatpush1.msra.mxu0 0.0
      %5185 = vmatprep.subr.mxu0 0.0
      %5186 = vmatpush1.msra.mxu0 0.0
      %5187 = vmatprep.subr.mxu0 0.0
      %5188 = vmatpush1.msra.mxu0 0.0
      %5189 = vmatprep.subr.mxu0 0.0
      %5190 = vmatpush1.msra.mxu0 0.0
      %5191 = vmatprep.subr.mxu0 0.0
      %5192 = vmatpush1.msra.mxu0 0.0
      %5193 = vmatprep.subr.mxu0 0.0
      %5194 = vmatpush1.msra.mxu0 0.0
      %5195 = vmatprep.subr.mxu0 0.0
      %5196 = vmatpush1.msra.mxu0 %v4881
      %5197 = vmatprep.subr.mxu0 0.0
      %5198 = vmatpush1.msra.mxu0 %v4818
      %5199 = vmatprep.subr.mxu0 0.0
      %5200 = vmatpush2.msra.mxu0 0.0
      %5201 = vmatprep.subr.mxu0 0.0
      %5202 = vmatpush2.msra.mxu0 0.0
      %5203 = vmatprep.subr.mxu0 0.0
      %5204 = vmatpush2.msra.mxu0 0.0
      %5205 = vmatprep.subr.mxu0 0.0
      %5206 = vmatpush2.msra.mxu0 0.0
      %5207 = vmatprep.subr.mxu0 0.0
      %5208 = vmatpush2.msra.mxu0 0.0
      %5209 = vmatprep.subr.mxu0 0.0
      %5210 = vmatpush2.msra.mxu0 0.0
      %5211 = vmatprep.subr.mxu0 0.0
      %5212 = vmatpush2.msra.mxu0 0.0
      %5213 = vmatprep.subr.mxu0 0.0
      %5214 = vmatpush2.msra.mxu0 0.0
      %5215 = vmatprep.subr.mxu0 0.0
      %5216 = vmatpush2.msra.mxu0 0.0
      %5217 = vmatprep.subr.mxu0 0.0
      %5218 = vmatpush2.msra.mxu0 0.0
      %5219 = vmatprep.subr.mxu0 0.0
      %5220 = vmatpush2.msra.mxu0 0.0
      %5221 = vmatprep.subr.mxu0 0.0
      %5222 = vmatpush2.msra.mxu0 0.0
      %5223 = vmatprep.subr.mxu0 0.0
      %5224 = vmatpush2.msra.mxu0 0.0
      %5225 = vmatprep.subr.mxu0 0.0
      %5226 = vmatpush2.msra.mxu0 0.0
      %5227 = vmatprep.subr.mxu0 0.0
      %5228 = vmatpush2.msra.mxu0 0.0
      %5229 = vmatprep.subr.mxu0 0.0
      %5230 = vmatpush2.msra.mxu0 0.0
      %5231 = vmatprep.mubr.f32.mxu0 0.0
      %5232 = vmatmul.mubr.f32.gmra.mxu0 %v4863
      %v5233 = vpop.f32.mrf.mxu0
      %v5234 = vadd.f32 0.0, %v5233
      %v5235 = vpop.f32.mrf.mxu0
      %5236 = vdwg.mxu0
      %v5237 = vadd.f32 %v4754, %v4950
      %v5238 = vadd.f32 %v4755, %v4952
      %v5239 = vadd.f32 %v4756, %v5021
      %v5240 = vadd.f32 %v4757, %v5023
      %v5241 = vadd.f32 %v4758, %v5092
      %v5242 = vadd.f32 %v4759, %v5094
      %v5243 = vadd.f32 %v4760, %v5163
      %v5244 = vadd.f32 %v4761, %v5165
      %v5245 = vadd.f32 %v4762, %v5234
      %s5246 = scalar_lea.vmem %s1, 44
      %v5247 = vld [vmem:[%s5246] sm:$0x7]
      %5248 = vrot.lane.b32.xlu0 %v4763, 94
      %v5249 = vpop.permute.xlu0 %5248
      %5250 = vrot.lane.b32.xlu0 %v4764, 94
      %v5251 = vpop.permute.xlu0 %5250
      %5252 = vrot.lane.b32.xlu0 %v4765, 94
      %v5253 = vpop.permute.xlu0 %5252
      %5254 = vrot.lane.b32.xlu0 %v4766, 94
      %v5255 = vpop.permute.xlu0 %5254
      %5256 = vrot.lane.b32.xlu0 %v4767, 94
      %v5257 = vpop.permute.xlu0 %5256
      %5258 = vrot.lane.b32.xlu0 %v4768, 94
      %v5259 = vpop.permute.xlu0 %5258
      %5260 = vrot.lane.b32.xlu0 %v4769, 94
      %v5261 = vpop.permute.xlu0 %5260
      %5262 = vrot.lane.b32.xlu0 %v4770, 94
      %v5263 = vpop.permute.xlu0 %5262
      %5264 = vrot.lane.b32.xlu0 %v4771, 94
      %v5265 = vpop.permute.xlu0 %5264
      %5266 = vrot.lane.b32.xlu0 %v4772, 94
      %v5267 = vpop.permute.xlu0 %5266
      %5268 = vrot.lane.b32.xlu0 %v4773, 94
      %v5269 = vpop.permute.xlu0 %5268
      %5270 = vrot.lane.b32.xlu0 %v4774, 94
      %v5271 = vpop.permute.xlu0 %5270
      %5272 = vrot.lane.b32.xlu0 %v4775, 94
      %v5273 = vpop.permute.xlu0 %5272
      %5274 = vrot.lane.b32.xlu0 %v4776, 94
      %v5275 = vpop.permute.xlu0 %5274
      %5276 = vrot.lane.b32.xlu0 %v4777, 94
      %v5277 = vpop.permute.xlu0 %5276
      %5278 = vrot.lane.b32.xlu0 %v4778, 94
      %v5279 = vpop.permute.xlu0 %5278
      %5280 = vrot.lane.b32.xlu0 %v4779, 94
      %v5281 = vpop.permute.xlu0 %5280
      %5282 = vrot.lane.b32.xlu0 %v4780, 94
      %v5283 = vpop.permute.xlu0 %5282
      %v5284 = vsel %vm701, %v5249, %v5251
      %v5285 = vsel %vm701, %v5251, %v5253
      %v5286 = vsel %vm701, %v5253, %v5255
      %v5287 = vsel %vm701, %v5255, %v5257
      %v5288 = vsel %vm701, %v5257, %v5259
      %v5289 = vsel %vm701, %v5259, %v5261
      %v5290 = vsel %vm701, %v5261, %v5263
      %v5291 = vsel %vm701, %v5263, %v5265
      %v5292 = vsel %vm701, %v5267, %v5269
      %v5293 = vsel %vm701, %v5269, %v5271
      %v5294 = vsel %vm701, %v5271, %v5273
      %v5295 = vsel %vm701, %v5273, %v5275
      %v5296 = vsel %vm701, %v5275, %v5277
      %v5297 = vsel %vm701, %v5277, %v5279
      %v5298 = vsel %vm701, %v5279, %v5281
      %v5299 = vsel %vm701, %v5281, %v5283
      %v5310 = vsel %vm277, %v5247, 0
      %v5312 = vsel %vm281, %v5292, 0
      %v5314 = vsel %vm281, %v5293, 0
      %v5316 = vsel %vm281, %v5294, 0
      %v5318 = vsel %vm281, %v5295, 0
      %v5320 = vsel %vm281, %v5296, 0
      %v5322 = vsel %vm281, %v5297, 0
      %v5324 = vsel %vm281, %v5298, 0
      %v5326 = vsel %vm281, %v5299, 0
      %v5328 = vsel %vm281, %v5283, 0
      %5330 = vmatprep.subr.mxu0 0.0
      %5331 = vmatpush1.msra.mxu0 0.0
      %5332 = vmatprep.subr.mxu0 0.0
      %5333 = vmatpush1.msra.mxu0 0.0
      %5334 = vmatprep.subr.mxu0 0.0
      %5335 = vmatpush1.msra.mxu0 0.0
      %5336 = vmatprep.subr.mxu0 0.0
      %5337 = vmatpush1.msra.mxu0 0.0
      %5338 = vmatprep.subr.mxu0 0.0
      %5339 = vmatpush1.msra.mxu0 0.0
      %5340 = vmatprep.subr.mxu0 0.0
      %5341 = vmatpush1.msra.mxu0 0.0
      %5342 = vmatprep.subr.mxu0 0.0
      %5343 = vmatpush1.msra.mxu0 0.0
      %5344 = vmatprep.subr.mxu0 0.0
      %5345 = vmatpush1.msra.mxu0 0.0
      %5346 = vmatprep.subr.mxu0 0.0
      %5347 = vmatpush1.msra.mxu0 0.0
      %5348 = vmatprep.subr.mxu0 0.0
      %5349 = vmatpush1.msra.mxu0 0.0
      %5350 = vmatprep.subr.mxu0 0.0
      %5351 = vmatpush1.msra.mxu0 0.0
      %5352 = vmatprep.subr.mxu0 0.0
      %5353 = vmatpush1.msra.mxu0 0.0
      %5354 = vmatprep.subr.mxu0 0.0
      %5355 = vmatpush1.msra.mxu0 0.0
      %5356 = vmatprep.subr.mxu0 0.0
      %5357 = vmatpush1.msra.mxu0 0.0
      %5358 = vmatprep.subr.mxu0 %v5314
      %5359 = vmatpush1.msra.mxu0 %v5312
      %5360 = vmatprep.subr.mxu0 %v5285
      %5361 = vmatpush1.msra.mxu0 %v5284
      %5362 = vmatprep.subr.mxu0 0.0
      %5363 = vmatpush2.msra.mxu0 0.0
      %5364 = vmatprep.subr.mxu0 0.0
      %5365 = vmatpush2.msra.mxu0 0.0
      %5366 = vmatprep.subr.mxu0 0.0
      %5367 = vmatpush2.msra.mxu0 0.0
      %5368 = vmatprep.subr.mxu0 0.0
      %5369 = vmatpush2.msra.mxu0 0.0
      %5370 = vmatprep.subr.mxu0 0.0
      %5371 = vmatpush2.msra.mxu0 0.0
      %5372 = vmatprep.subr.mxu0 0.0
      %5373 = vmatpush2.msra.mxu0 0.0
      %5374 = vmatprep.subr.mxu0 0.0
      %5375 = vmatpush2.msra.mxu0 0.0
      %5376 = vmatprep.subr.mxu0 0.0
      %5377 = vmatpush2.msra.mxu0 0.0
      %5378 = vmatprep.subr.mxu0 0.0
      %5379 = vmatpush2.msra.mxu0 0.0
      %5380 = vmatprep.subr.mxu0 0.0
      %5381 = vmatpush2.msra.mxu0 0.0
      %5382 = vmatprep.subr.mxu0 0.0
      %5383 = vmatpush2.msra.mxu0 0.0
      %5384 = vmatprep.subr.mxu0 0.0
      %5385 = vmatpush2.msra.mxu0 0.0
      %5386 = vmatprep.subr.mxu0 0.0
      %5387 = vmatpush2.msra.mxu0 0.0
      %5388 = vmatprep.subr.mxu0 0.0
      %5389 = vmatpush2.msra.mxu0 0.0
      %5390 = vmatprep.subr.mxu0 0.0
      %5391 = vmatpush2.msra.mxu0 0.0
      %5392 = vmatprep.subr.mxu0 0.0
      %5393 = vmatpush2.msra.mxu0 0.0
      %5394 = vmatprep.mubr.f32.mxu0 0.0
      %5395 = vmatmul.mubr.f32.gmra.mxu0 %v5310
      %v5396 = vpop.f32.mrf.mxu0
      %v5397 = vadd.f32 0.0, %v5396
      %v5398 = vpop.f32.mrf.mxu0
      %v5399 = vadd.f32 0.0, %v5398
      %5400 = vdwg.mxu0
      %5401 = vmatprep.subr.mxu0 0.0
      %5402 = vmatpush1.msra.mxu0 0.0
      %5403 = vmatprep.subr.mxu0 0.0
      %5404 = vmatpush1.msra.mxu0 0.0
      %5405 = vmatprep.subr.mxu0 0.0
      %5406 = vmatpush1.msra.mxu0 0.0
      %5407 = vmatprep.subr.mxu0 0.0
      %5408 = vmatpush1.msra.mxu0 0.0
      %5409 = vmatprep.subr.mxu0 0.0
      %5410 = vmatpush1.msra.mxu0 0.0
      %5411 = vmatprep.subr.mxu0 0.0
      %5412 = vmatpush1.msra.mxu0 0.0
      %5413 = vmatprep.subr.mxu0 0.0
      %5414 = vmatpush1.msra.mxu0 0.0
      %5415 = vmatprep.subr.mxu0 0.0
      %5416 = vmatpush1.msra.mxu0 0.0
      %5417 = vmatprep.subr.mxu0 0.0
      %5418 = vmatpush1.msra.mxu0 0.0
      %5419 = vmatprep.subr.mxu0 0.0
      %5420 = vmatpush1.msra.mxu0 0.0
      %5421 = vmatprep.subr.mxu0 0.0
      %5422 = vmatpush1.msra.mxu0 0.0
      %5423 = vmatprep.subr.mxu0 0.0
      %5424 = vmatpush1.msra.mxu0 0.0
      %5425 = vmatprep.subr.mxu0 0.0
      %5426 = vmatpush1.msra.mxu0 0.0
      %5427 = vmatprep.subr.mxu0 0.0
      %5428 = vmatpush1.msra.mxu0 0.0
      %5429 = vmatprep.subr.mxu0 %v5318
      %5430 = vmatpush1.msra.mxu0 %v5316
      %5431 = vmatprep.subr.mxu0 %v5287
      %5432 = vmatpush1.msra.mxu0 %v5286
      %5433 = vmatprep.subr.mxu0 0.0
      %5434 = vmatpush2.msra.mxu0 0.0
      %5435 = vmatprep.subr.mxu0 0.0
      %5436 = vmatpush2.msra.mxu0 0.0
      %5437 = vmatprep.subr.mxu0 0.0
      %5438 = vmatpush2.msra.mxu0 0.0
      %5439 = vmatprep.subr.mxu0 0.0
      %5440 = vmatpush2.msra.mxu0 0.0
      %5441 = vmatprep.subr.mxu0 0.0
      %5442 = vmatpush2.msra.mxu0 0.0
      %5443 = vmatprep.subr.mxu0 0.0
      %5444 = vmatpush2.msra.mxu0 0.0
      %5445 = vmatprep.subr.mxu0 0.0
      %5446 = vmatpush2.msra.mxu0 0.0
      %5447 = vmatprep.subr.mxu0 0.0
      %5448 = vmatpush2.msra.mxu0 0.0
      %5449 = vmatprep.subr.mxu0 0.0
      %5450 = vmatpush2.msra.mxu0 0.0
      %5451 = vmatprep.subr.mxu0 0.0
      %5452 = vmatpush2.msra.mxu0 0.0
      %5453 = vmatprep.subr.mxu0 0.0
      %5454 = vmatpush2.msra.mxu0 0.0
      %5455 = vmatprep.subr.mxu0 0.0
      %5456 = vmatpush2.msra.mxu0 0.0
      %5457 = vmatprep.subr.mxu0 0.0
      %5458 = vmatpush2.msra.mxu0 0.0
      %5459 = vmatprep.subr.mxu0 0.0
      %5460 = vmatpush2.msra.mxu0 0.0
      %5461 = vmatprep.subr.mxu0 0.0
      %5462 = vmatpush2.msra.mxu0 0.0
      %5463 = vmatprep.subr.mxu0 0.0
      %5464 = vmatpush2.msra.mxu0 0.0
      %5465 = vmatprep.mubr.f32.mxu0 0.0
      %5466 = vmatmul.mubr.f32.gmra.mxu0 %v5310
      %v5467 = vpop.f32.mrf.mxu0
      %v5468 = vadd.f32 0.0, %v5467
      %v5469 = vpop.f32.mrf.mxu0
      %v5470 = vadd.f32 0.0, %v5469
      %5471 = vdwg.mxu0
      %5472 = vmatprep.subr.mxu0 0.0
      %5473 = vmatpush1.msra.mxu0 0.0
      %5474 = vmatprep.subr.mxu0 0.0
      %5475 = vmatpush1.msra.mxu0 0.0
      %5476 = vmatprep.subr.mxu0 0.0
      %5477 = vmatpush1.msra.mxu0 0.0
      %5478 = vmatprep.subr.mxu0 0.0
      %5479 = vmatpush1.msra.mxu0 0.0
      %5480 = vmatprep.subr.mxu0 0.0
      %5481 = vmatpush1.msra.mxu0 0.0
      %5482 = vmatprep.subr.mxu0 0.0
      %5483 = vmatpush1.msra.mxu0 0.0
      %5484 = vmatprep.subr.mxu0 0.0
      %5485 = vmatpush1.msra.mxu0 0.0
      %5486 = vmatprep.subr.mxu0 0.0
      %5487 = vmatpush1.msra.mxu0 0.0
      %5488 = vmatprep.subr.mxu0 0.0
      %5489 = vmatpush1.msra.mxu0 0.0
      %5490 = vmatprep.subr.mxu0 0.0
      %5491 = vmatpush1.msra.mxu0 0.0
      %5492 = vmatprep.subr.mxu0 0.0
      %5493 = vmatpush1.msra.mxu0 0.0
      %5494 = vmatprep.subr.mxu0 0.0
      %5495 = vmatpush1.msra.mxu0 0.0
      %5496 = vmatprep.subr.mxu0 0.0
      %5497 = vmatpush1.msra.mxu0 0.0
      %5498 = vmatprep.subr.mxu0 0.0
      %5499 = vmatpush1.msra.mxu0 0.0
      %5500 = vmatprep.subr.mxu0 %v5322
      %5501 = vmatpush1.msra.mxu0 %v5320
      %5502 = vmatprep.subr.mxu0 %v5289
      %5503 = vmatpush1.msra.mxu0 %v5288
      %5504 = vmatprep.subr.mxu0 0.0
      %5505 = vmatpush2.msra.mxu0 0.0
      %5506 = vmatprep.subr.mxu0 0.0
      %5507 = vmatpush2.msra.mxu0 0.0
      %5508 = vmatprep.subr.mxu0 0.0
      %5509 = vmatpush2.msra.mxu0 0.0
      %5510 = vmatprep.subr.mxu0 0.0
      %5511 = vmatpush2.msra.mxu0 0.0
      %5512 = vmatprep.subr.mxu0 0.0
      %5513 = vmatpush2.msra.mxu0 0.0
      %5514 = vmatprep.subr.mxu0 0.0
      %5515 = vmatpush2.msra.mxu0 0.0
      %5516 = vmatprep.subr.mxu0 0.0
      %5517 = vmatpush2.msra.mxu0 0.0
      %5518 = vmatprep.subr.mxu0 0.0
      %5519 = vmatpush2.msra.mxu0 0.0
      %5520 = vmatprep.subr.mxu0 0.0
      %5521 = vmatpush2.msra.mxu0 0.0
      %5522 = vmatprep.subr.mxu0 0.0
      %5523 = vmatpush2.msra.mxu0 0.0
      %5524 = vmatprep.subr.mxu0 0.0
      %5525 = vmatpush2.msra.mxu0 0.0
      %5526 = vmatprep.subr.mxu0 0.0
      %5527 = vmatpush2.msra.mxu0 0.0
      %5528 = vmatprep.subr.mxu0 0.0
      %5529 = vmatpush2.msra.mxu0 0.0
      %5530 = vmatprep.subr.mxu0 0.0
      %5531 = vmatpush2.msra.mxu0 0.0
      %5532 = vmatprep.subr.mxu0 0.0
      %5533 = vmatpush2.msra.mxu0 0.0
      %5534 = vmatprep.subr.mxu0 0.0
      %5535 = vmatpush2.msra.mxu0 0.0
      %5536 = vmatprep.mubr.f32.mxu0 0.0
      %5537 = vmatmul.mubr.f32.gmra.mxu0 %v5310
      %v5538 = vpop.f32.mrf.mxu0
      %v5539 = vadd.f32 0.0, %v5538
      %v5540 = vpop.f32.mrf.mxu0
      %v5541 = vadd.f32 0.0, %v5540
      %5542 = vdwg.mxu0
      %5543 = vmatprep.subr.mxu0 0.0
      %5544 = vmatpush1.msra.mxu0 0.0
      %5545 = vmatprep.subr.mxu0 0.0
      %5546 = vmatpush1.msra.mxu0 0.0
      %5547 = vmatprep.subr.mxu0 0.0
      %5548 = vmatpush1.msra.mxu0 0.0
      %5549 = vmatprep.subr.mxu0 0.0
      %5550 = vmatpush1.msra.mxu0 0.0
      %5551 = vmatprep.subr.mxu0 0.0
      %5552 = vmatpush1.msra.mxu0 0.0
      %5553 = vmatprep.subr.mxu0 0.0
      %5554 = vmatpush1.msra.mxu0 0.0
      %5555 = vmatprep.subr.mxu0 0.0
      %5556 = vmatpush1.msra.mxu0 0.0
      %5557 = vmatprep.subr.mxu0 0.0
      %5558 = vmatpush1.msra.mxu0 0.0
      %5559 = vmatprep.subr.mxu0 0.0
      %5560 = vmatpush1.msra.mxu0 0.0
      %5561 = vmatprep.subr.mxu0 0.0
      %5562 = vmatpush1.msra.mxu0 0.0
      %5563 = vmatprep.subr.mxu0 0.0
      %5564 = vmatpush1.msra.mxu0 0.0
      %5565 = vmatprep.subr.mxu0 0.0
      %5566 = vmatpush1.msra.mxu0 0.0
      %5567 = vmatprep.subr.mxu0 0.0
      %5568 = vmatpush1.msra.mxu0 0.0
      %5569 = vmatprep.subr.mxu0 0.0
      %5570 = vmatpush1.msra.mxu0 0.0
      %5571 = vmatprep.subr.mxu0 %v5326
      %5572 = vmatpush1.msra.mxu0 %v5324
      %5573 = vmatprep.subr.mxu0 %v5291
      %5574 = vmatpush1.msra.mxu0 %v5290
      %5575 = vmatprep.subr.mxu0 0.0
      %5576 = vmatpush2.msra.mxu0 0.0
      %5577 = vmatprep.subr.mxu0 0.0
      %5578 = vmatpush2.msra.mxu0 0.0
      %5579 = vmatprep.subr.mxu0 0.0
      %5580 = vmatpush2.msra.mxu0 0.0
      %5581 = vmatprep.subr.mxu0 0.0
      %5582 = vmatpush2.msra.mxu0 0.0
      %5583 = vmatprep.subr.mxu0 0.0
      %5584 = vmatpush2.msra.mxu0 0.0
      %5585 = vmatprep.subr.mxu0 0.0
      %5586 = vmatpush2.msra.mxu0 0.0
      %5587 = vmatprep.subr.mxu0 0.0
      %5588 = vmatpush2.msra.mxu0 0.0
      %5589 = vmatprep.subr.mxu0 0.0
      %5590 = vmatpush2.msra.mxu0 0.0
      %5591 = vmatprep.subr.mxu0 0.0
      %5592 = vmatpush2.msra.mxu0 0.0
      %5593 = vmatprep.subr.mxu0 0.0
      %5594 = vmatpush2.msra.mxu0 0.0
      %5595 = vmatprep.subr.mxu0 0.0
      %5596 = vmatpush2.msra.mxu0 0.0
      %5597 = vmatprep.subr.mxu0 0.0
      %5598 = vmatpush2.msra.mxu0 0.0
      %5599 = vmatprep.subr.mxu0 0.0
      %5600 = vmatpush2.msra.mxu0 0.0
      %5601 = vmatprep.subr.mxu0 0.0
      %5602 = vmatpush2.msra.mxu0 0.0
      %5603 = vmatprep.subr.mxu0 0.0
      %5604 = vmatpush2.msra.mxu0 0.0
      %5605 = vmatprep.subr.mxu0 0.0
      %5606 = vmatpush2.msra.mxu0 0.0
      %5607 = vmatprep.mubr.f32.mxu0 0.0
      %5608 = vmatmul.mubr.f32.gmra.mxu0 %v5310
      %v5609 = vpop.f32.mrf.mxu0
      %v5610 = vadd.f32 0.0, %v5609
      %v5611 = vpop.f32.mrf.mxu0
      %v5612 = vadd.f32 0.0, %v5611
      %5613 = vdwg.mxu0
      %5614 = vmatprep.subr.mxu0 0.0
      %5615 = vmatpush1.msra.mxu0 0.0
      %5616 = vmatprep.subr.mxu0 0.0
      %5617 = vmatpush1.msra.mxu0 0.0
      %5618 = vmatprep.subr.mxu0 0.0
      %5619 = vmatpush1.msra.mxu0 0.0
      %5620 = vmatprep.subr.mxu0 0.0
      %5621 = vmatpush1.msra.mxu0 0.0
      %5622 = vmatprep.subr.mxu0 0.0
      %5623 = vmatpush1.msra.mxu0 0.0
      %5624 = vmatprep.subr.mxu0 0.0
      %5625 = vmatpush1.msra.mxu0 0.0
      %5626 = vmatprep.subr.mxu0 0.0
      %5627 = vmatpush1.msra.mxu0 0.0
      %5628 = vmatprep.subr.mxu0 0.0
      %5629 = vmatpush1.msra.mxu0 0.0
      %5630 = vmatprep.subr.mxu0 0.0
      %5631 = vmatpush1.msra.mxu0 0.0
      %5632 = vmatprep.subr.mxu0 0.0
      %5633 = vmatpush1.msra.mxu0 0.0
      %5634 = vmatprep.subr.mxu0 0.0
      %5635 = vmatpush1.msra.mxu0 0.0
      %5636 = vmatprep.subr.mxu0 0.0
      %5637 = vmatpush1.msra.mxu0 0.0
      %5638 = vmatprep.subr.mxu0 0.0
      %5639 = vmatpush1.msra.mxu0 0.0
      %5640 = vmatprep.subr.mxu0 0.0
      %5641 = vmatpush1.msra.mxu0 0.0
      %5642 = vmatprep.subr.mxu0 0.0
      %5643 = vmatpush1.msra.mxu0 %v5328
      %5644 = vmatprep.subr.mxu0 0.0
      %5645 = vmatpush1.msra.mxu0 %v5265
      %5646 = vmatprep.subr.mxu0 0.0
      %5647 = vmatpush2.msra.mxu0 0.0
      %5648 = vmatprep.subr.mxu0 0.0
      %5649 = vmatpush2.msra.mxu0 0.0
      %5650 = vmatprep.subr.mxu0 0.0
      %5651 = vmatpush2.msra.mxu0 0.0
      %5652 = vmatprep.subr.mxu0 0.0
      %5653 = vmatpush2.msra.mxu0 0.0
      %5654 = vmatprep.subr.mxu0 0.0
      %5655 = vmatpush2.msra.mxu0 0.0
      %5656 = vmatprep.subr.mxu0 0.0
      %5657 = vmatpush2.msra.mxu0 0.0
      %5658 = vmatprep.subr.mxu0 0.0
      %5659 = vmatpush2.msra.mxu0 0.0
      %5660 = vmatprep.subr.mxu0 0.0
      %5661 = vmatpush2.msra.mxu0 0.0
      %5662 = vmatprep.subr.mxu0 0.0
      %5663 = vmatpush2.msra.mxu0 0.0
      %5664 = vmatprep.subr.mxu0 0.0
      %5665 = vmatpush2.msra.mxu0 0.0
      %5666 = vmatprep.subr.mxu0 0.0
      %5667 = vmatpush2.msra.mxu0 0.0
      %5668 = vmatprep.subr.mxu0 0.0
      %5669 = vmatpush2.msra.mxu0 0.0
      %5670 = vmatprep.subr.mxu0 0.0
      %5671 = vmatpush2.msra.mxu0 0.0
      %5672 = vmatprep.subr.mxu0 0.0
      %5673 = vmatpush2.msra.mxu0 0.0
      %5674 = vmatprep.subr.mxu0 0.0
      %5675 = vmatpush2.msra.mxu0 0.0
      %5676 = vmatprep.subr.mxu0 0.0
      %5677 = vmatpush2.msra.mxu0 0.0
      %5678 = vmatprep.mubr.f32.mxu0 0.0
      %5679 = vmatmul.mubr.f32.gmra.mxu0 %v5310
      %v5680 = vpop.f32.mrf.mxu0
      %v5681 = vadd.f32 0.0, %v5680
      %v5682 = vpop.f32.mrf.mxu0
      %5683 = vdwg.mxu0
      %v5684 = vadd.f32 %v5237, %v5397
      %v5685 = vadd.f32 %v5238, %v5399
      %v5686 = vadd.f32 %v5239, %v5468
      %v5687 = vadd.f32 %v5240, %v5470
      %v5688 = vadd.f32 %v5241, %v5539
      %v5689 = vadd.f32 %v5242, %v5541
      %v5690 = vadd.f32 %v5243, %v5610
      %v5691 = vadd.f32 %v5244, %v5612
      %v5692 = vadd.f32 %v5245, %v5681
      %v5701 = vcombine.low %v5684, %v5685
      %v5702 = vcombine.low %v5686, %v5687
      %v5703 = vcombine.low %v5688, %v5689
      %v5704 = vcombine.low %v5690, %v5691
      %s5709 = scalar_lea.vmem %s170, 72
      %5710 = vst [vmem:[%s5709] sm:$0x77] %v5701
      %5711 = vst [vmem:[%s5709 + $0x8] sm:$0x77] %v5702
      %5712 = vst [vmem:[%s5709 + $0x10] sm:$0x77] %v5703
      %5713 = vst [vmem:[%s5709 + $0x18] sm:$0x77] %v5704
      %5714 = vst.msk [vmem:[%s5709 + $0x20] sm:$0x7] %vm1965, %v5692
      %v5715 = vld [vmem:[%s165] sm:$0xff]
      %v5716 = vld [vmem:[%s165 + $0x8] sm:$0xff]
      %v5717 = vld [vmem:[%s165 + $0x10] sm:$0xff]
      %v5718 = vld [vmem:[%s165 + $0x18] sm:$0xff]
      %v5719 = vld [vmem:[%s165 + $0x20] sm:$0xff]
      %v5720 = vld [vmem:[%s165 + $0x28] sm:$0xff]
      %v5721 = vld [vmem:[%s165 + $0x30] sm:$0xff]
      %v5722 = vld [vmem:[%s165 + $0x38] sm:$0xff]
      %v5723 = vld [vmem:[%s165 + $0x40] sm:$0xff]
      %v5724 = vld [vmem:[%s165 + $0x48] sm:$0xff]
      %v5725 = vld [vmem:[%s165 + $0x50] sm:$0xf]
      %v5726 = vld [vmem:[%s165 + $0x58] sm:$0xf]
      %v5727 = vld [vmem:[%s165 + $0x60] sm:$0xf]
      %v5728 = vld [vmem:[%s165 + $0x68] sm:$0xf]
      %v5729 = vld [vmem:[%s165 + $0x70] sm:$0xf]
      %v5730 = vld [vmem:[%s165 + $0x78] sm:$0xf]
      %v5731 = vld [vmem:[%s165 + $0x80] sm:$0xf]
      %v5732 = vld [vmem:[%s165 + $0x88] sm:$0xf]
      %v5733 = vld [vmem:[%s165 + $0x90] sm:$0xf]
      %v5734 = vld [vmem:[%s165 + $0x98] sm:$0xf]
      %v5735 = vld [vmem:[%s1] sm:$0x7]
      %5756 = vrot.lane.b32.xlu0 %v5715, 58
      %v5757 = vpop.permute.xlu0 %5756
      %5758 = vrot.lane.b32.xlu0 %v5716, 58
      %v5759 = vpop.permute.xlu0 %5758
      %5760 = vrot.lane.b32.xlu0 %v5717, 58
      %v5761 = vpop.permute.xlu0 %5760
      %5762 = vrot.lane.b32.xlu0 %v5718, 58
      %v5763 = vpop.permute.xlu0 %5762
      %5764 = vrot.lane.b32.xlu0 %v5719, 58
      %v5765 = vpop.permute.xlu0 %5764
      %5766 = vrot.lane.b32.xlu0 %v5720, 58
      %v5767 = vpop.permute.xlu0 %5766
      %5768 = vrot.lane.b32.xlu0 %v5721, 58
      %v5769 = vpop.permute.xlu0 %5768
      %5770 = vrot.lane.b32.xlu0 %v5722, 58
      %v5771 = vpop.permute.xlu0 %5770
      %5772 = vrot.lane.b32.xlu0 %v5723, 58
      %v5773 = vpop.permute.xlu0 %5772
      %5774 = vrot.lane.b32.xlu0 %v5724, 58
      %v5775 = vpop.permute.xlu0 %5774
      %5776 = vrot.lane.b32.xlu0 %v5725, 58
      %v5777 = vpop.permute.xlu0 %5776
      %5778 = vrot.lane.b32.xlu0 %v5726, 58
      %v5779 = vpop.permute.xlu0 %5778
      %5780 = vrot.lane.b32.xlu0 %v5727, 58
      %v5781 = vpop.permute.xlu0 %5780
      %5782 = vrot.lane.b32.xlu0 %v5728, 58
      %v5783 = vpop.permute.xlu0 %5782
      %5784 = vrot.lane.b32.xlu0 %v5729, 58
      %v5785 = vpop.permute.xlu0 %5784
      %5786 = vrot.lane.b32.xlu0 %v5730, 58
      %v5787 = vpop.permute.xlu0 %5786
      %5788 = vrot.lane.b32.xlu0 %v5731, 58
      %v5789 = vpop.permute.xlu0 %5788
      %5790 = vrot.lane.b32.xlu0 %v5732, 58
      %v5791 = vpop.permute.xlu0 %5790
      %5792 = vrot.lane.b32.xlu0 %v5733, 58
      %v5793 = vpop.permute.xlu0 %5792
      %5794 = vrot.lane.b32.xlu0 %v5734, 58
      %v5795 = vpop.permute.xlu0 %5794
      %vm5796 = vcmask 474112
      %v5797 = vsel %vm5796, %v5757, %v5759
      %v5798 = vsel %vm5796, %v5759, %v5761
      %v5799 = vsel %vm5796, %v5761, %v5763
      %v5800 = vsel %vm5796, %v5763, %v5765
      %v5801 = vsel %vm5796, %v5765, %v5767
      %v5802 = vsel %vm5796, %v5767, %v5769
      %v5803 = vsel %vm5796, %v5769, %v5771
      %v5804 = vsel %vm5796, %v5771, %v5773
      %v5805 = vsel %vm5796, %v5773, %v5775
      %v5806 = vsel %vm5796, %v5777, %v5779
      %v5807 = vsel %vm5796, %v5779, %v5781
      %v5808 = vsel %vm5796, %v5781, %v5783
      %v5809 = vsel %vm5796, %v5783, %v5785
      %v5810 = vsel %vm5796, %v5785, %v5787
      %v5811 = vsel %vm5796, %v5787, %v5789
      %v5812 = vsel %vm5796, %v5789, %v5791
      %v5813 = vsel %vm5796, %v5791, %v5793
      %v5814 = vsel %vm5796, %v5793, %v5795
      %v5825 = vsel %vm277, %v5735, 0
      %v5827 = vsel %vm281, %v5806, 0
      %v5829 = vsel %vm281, %v5807, 0
      %v5831 = vsel %vm281, %v5808, 0
      %v5833 = vsel %vm281, %v5809, 0
      %v5835 = vsel %vm281, %v5810, 0
      %v5837 = vsel %vm281, %v5811, 0
      %v5839 = vsel %vm281, %v5812, 0
      %v5841 = vsel %vm281, %v5813, 0
      %v5843 = vsel %vm281, %v5814, 0
      %5845 = vmatprep.subr.mxu0 0.0
      %5846 = vmatpush1.msra.mxu0 0.0
      %5847 = vmatprep.subr.mxu0 0.0
      %5848 = vmatpush1.msra.mxu0 0.0
      %5849 = vmatprep.subr.mxu0 0.0
      %5850 = vmatpush1.msra.mxu0 0.0
      %5851 = vmatprep.subr.mxu0 0.0
      %5852 = vmatpush1.msra.mxu0 0.0
      %5853 = vmatprep.subr.mxu0 0.0
      %5854 = vmatpush1.msra.mxu0 0.0
      %5855 = vmatprep.subr.mxu0 0.0
      %5856 = vmatpush1.msra.mxu0 0.0
      %5857 = vmatprep.subr.mxu0 0.0
      %5858 = vmatpush1.msra.mxu0 0.0
      %5859 = vmatprep.subr.mxu0 0.0
      %5860 = vmatpush1.msra.mxu0 0.0
      %5861 = vmatprep.subr.mxu0 0.0
      %5862 = vmatpush1.msra.mxu0 0.0
      %5863 = vmatprep.subr.mxu0 0.0
      %5864 = vmatpush1.msra.mxu0 0.0
      %5865 = vmatprep.subr.mxu0 0.0
      %5866 = vmatpush1.msra.mxu0 0.0
      %5867 = vmatprep.subr.mxu0 0.0
      %5868 = vmatpush1.msra.mxu0 0.0
      %5869 = vmatprep.subr.mxu0 0.0
      %5870 = vmatpush1.msra.mxu0 0.0
      %5871 = vmatprep.subr.mxu0 0.0
      %5872 = vmatpush1.msra.mxu0 0.0
      %5873 = vmatprep.subr.mxu0 %v5829
      %5874 = vmatpush1.msra.mxu0 %v5827
      %5875 = vmatprep.subr.mxu0 %v5798
      %5876 = vmatpush1.msra.mxu0 %v5797
      %5877 = vmatprep.subr.mxu0 0.0
      %5878 = vmatpush2.msra.mxu0 0.0
      %5879 = vmatprep.subr.mxu0 0.0
      %5880 = vmatpush2.msra.mxu0 0.0
      %5881 = vmatprep.subr.mxu0 0.0
      %5882 = vmatpush2.msra.mxu0 0.0
      %5883 = vmatprep.subr.mxu0 0.0
      %5884 = vmatpush2.msra.mxu0 0.0
      %5885 = vmatprep.subr.mxu0 0.0
      %5886 = vmatpush2.msra.mxu0 0.0
      %5887 = vmatprep.subr.mxu0 0.0
      %5888 = vmatpush2.msra.mxu0 0.0
      %5889 = vmatprep.subr.mxu0 0.0
      %5890 = vmatpush2.msra.mxu0 0.0
      %5891 = vmatprep.subr.mxu0 0.0
      %5892 = vmatpush2.msra.mxu0 0.0
      %5893 = vmatprep.subr.mxu0 0.0
      %5894 = vmatpush2.msra.mxu0 0.0
      %5895 = vmatprep.subr.mxu0 0.0
      %5896 = vmatpush2.msra.mxu0 0.0
      %5897 = vmatprep.subr.mxu0 0.0
      %5898 = vmatpush2.msra.mxu0 0.0
      %5899 = vmatprep.subr.mxu0 0.0
      %5900 = vmatpush2.msra.mxu0 0.0
      %5901 = vmatprep.subr.mxu0 0.0
      %5902 = vmatpush2.msra.mxu0 0.0
      %5903 = vmatprep.subr.mxu0 0.0
      %5904 = vmatpush2.msra.mxu0 0.0
      %5905 = vmatprep.subr.mxu0 0.0
      %5906 = vmatpush2.msra.mxu0 0.0
      %5907 = vmatprep.subr.mxu0 0.0
      %5908 = vmatpush2.msra.mxu0 0.0
      %5909 = vmatprep.mubr.f32.mxu0 0.0
      %5910 = vmatmul.mubr.f32.gmra.mxu0 %v5825
      %v5911 = vpop.f32.mrf.mxu0
      %v5912 = vadd.f32 0.0, %v5911
      %v5913 = vpop.f32.mrf.mxu0
      %v5914 = vadd.f32 0.0, %v5913
      %5915 = vdwg.mxu0
      %5916 = vmatprep.subr.mxu0 0.0
      %5917 = vmatpush1.msra.mxu0 0.0
      %5918 = vmatprep.subr.mxu0 0.0
      %5919 = vmatpush1.msra.mxu0 0.0
      %5920 = vmatprep.subr.mxu0 0.0
      %5921 = vmatpush1.msra.mxu0 0.0
      %5922 = vmatprep.subr.mxu0 0.0
      %5923 = vmatpush1.msra.mxu0 0.0
      %5924 = vmatprep.subr.mxu0 0.0
      %5925 = vmatpush1.msra.mxu0 0.0
      %5926 = vmatprep.subr.mxu0 0.0
      %5927 = vmatpush1.msra.mxu0 0.0
      %5928 = vmatprep.subr.mxu0 0.0
      %5929 = vmatpush1.msra.mxu0 0.0
      %5930 = vmatprep.subr.mxu0 0.0
      %5931 = vmatpush1.msra.mxu0 0.0
      %5932 = vmatprep.subr.mxu0 0.0
      %5933 = vmatpush1.msra.mxu0 0.0
      %5934 = vmatprep.subr.mxu0 0.0
      %5935 = vmatpush1.msra.mxu0 0.0
      %5936 = vmatprep.subr.mxu0 0.0
      %5937 = vmatpush1.msra.mxu0 0.0
      %5938 = vmatprep.subr.mxu0 0.0
      %5939 = vmatpush1.msra.mxu0 0.0
      %5940 = vmatprep.subr.mxu0 0.0
      %5941 = vmatpush1.msra.mxu0 0.0
      %5942 = vmatprep.subr.mxu0 0.0
      %5943 = vmatpush1.msra.mxu0 0.0
      %5944 = vmatprep.subr.mxu0 %v5833
      %5945 = vmatpush1.msra.mxu0 %v5831
      %5946 = vmatprep.subr.mxu0 %v5800
      %5947 = vmatpush1.msra.mxu0 %v5799
      %5948 = vmatprep.subr.mxu0 0.0
      %5949 = vmatpush2.msra.mxu0 0.0
      %5950 = vmatprep.subr.mxu0 0.0
      %5951 = vmatpush2.msra.mxu0 0.0
      %5952 = vmatprep.subr.mxu0 0.0
      %5953 = vmatpush2.msra.mxu0 0.0
      %5954 = vmatprep.subr.mxu0 0.0
      %5955 = vmatpush2.msra.mxu0 0.0
      %5956 = vmatprep.subr.mxu0 0.0
      %5957 = vmatpush2.msra.mxu0 0.0
      %5958 = vmatprep.subr.mxu0 0.0
      %5959 = vmatpush2.msra.mxu0 0.0
      %5960 = vmatprep.subr.mxu0 0.0
      %5961 = vmatpush2.msra.mxu0 0.0
      %5962 = vmatprep.subr.mxu0 0.0
      %5963 = vmatpush2.msra.mxu0 0.0
      %5964 = vmatprep.subr.mxu0 0.0
      %5965 = vmatpush2.msra.mxu0 0.0
      %5966 = vmatprep.subr.mxu0 0.0
      %5967 = vmatpush2.msra.mxu0 0.0
      %5968 = vmatprep.subr.mxu0 0.0
      %5969 = vmatpush2.msra.mxu0 0.0
      %5970 = vmatprep.subr.mxu0 0.0
      %5971 = vmatpush2.msra.mxu0 0.0
      %5972 = vmatprep.subr.mxu0 0.0
      %5973 = vmatpush2.msra.mxu0 0.0
      %5974 = vmatprep.subr.mxu0 0.0
      %5975 = vmatpush2.msra.mxu0 0.0
      %5976 = vmatprep.subr.mxu0 0.0
      %5977 = vmatpush2.msra.mxu0 0.0
      %5978 = vmatprep.subr.mxu0 0.0
      %5979 = vmatpush2.msra.mxu0 0.0
      %5980 = vmatprep.mubr.f32.mxu0 0.0
      %5981 = vmatmul.mubr.f32.gmra.mxu0 %v5825
      %v5982 = vpop.f32.mrf.mxu0
      %v5983 = vadd.f32 0.0, %v5982
      %v5984 = vpop.f32.mrf.mxu0
      %v5985 = vadd.f32 0.0, %v5984
      %5986 = vdwg.mxu0
      %5987 = vmatprep.subr.mxu0 0.0
      %5988 = vmatpush1.msra.mxu0 0.0
      %5989 = vmatprep.subr.mxu0 0.0
      %5990 = vmatpush1.msra.mxu0 0.0
      %5991 = vmatprep.subr.mxu0 0.0
      %5992 = vmatpush1.msra.mxu0 0.0
      %5993 = vmatprep.subr.mxu0 0.0
      %5994 = vmatpush1.msra.mxu0 0.0
      %5995 = vmatprep.subr.mxu0 0.0
      %5996 = vmatpush1.msra.mxu0 0.0
      %5997 = vmatprep.subr.mxu0 0.0
      %5998 = vmatpush1.msra.mxu0 0.0
      %5999 = vmatprep.subr.mxu0 0.0
      %6000 = vmatpush1.msra.mxu0 0.0
      %6001 = vmatprep.subr.mxu0 0.0
      %6002 = vmatpush1.msra.mxu0 0.0
      %6003 = vmatprep.subr.mxu0 0.0
      %6004 = vmatpush1.msra.mxu0 0.0
      %6005 = vmatprep.subr.mxu0 0.0
      %6006 = vmatpush1.msra.mxu0 0.0
      %6007 = vmatprep.subr.mxu0 0.0
      %6008 = vmatpush1.msra.mxu0 0.0
      %6009 = vmatprep.subr.mxu0 0.0
      %6010 = vmatpush1.msra.mxu0 0.0
      %6011 = vmatprep.subr.mxu0 0.0
      %6012 = vmatpush1.msra.mxu0 0.0
      %6013 = vmatprep.subr.mxu0 0.0
      %6014 = vmatpush1.msra.mxu0 0.0
      %6015 = vmatprep.subr.mxu0 %v5837
      %6016 = vmatpush1.msra.mxu0 %v5835
      %6017 = vmatprep.subr.mxu0 %v5802
      %6018 = vmatpush1.msra.mxu0 %v5801
      %6019 = vmatprep.subr.mxu0 0.0
      %6020 = vmatpush2.msra.mxu0 0.0
      %6021 = vmatprep.subr.mxu0 0.0
      %6022 = vmatpush2.msra.mxu0 0.0
      %6023 = vmatprep.subr.mxu0 0.0
      %6024 = vmatpush2.msra.mxu0 0.0
      %6025 = vmatprep.subr.mxu0 0.0
      %6026 = vmatpush2.msra.mxu0 0.0
      %6027 = vmatprep.subr.mxu0 0.0
      %6028 = vmatpush2.msra.mxu0 0.0
      %6029 = vmatprep.subr.mxu0 0.0
      %6030 = vmatpush2.msra.mxu0 0.0
      %6031 = vmatprep.subr.mxu0 0.0
      %6032 = vmatpush2.msra.mxu0 0.0
      %6033 = vmatprep.subr.mxu0 0.0
      %6034 = vmatpush2.msra.mxu0 0.0
      %6035 = vmatprep.subr.mxu0 0.0
      %6036 = vmatpush2.msra.mxu0 0.0
      %6037 = vmatprep.subr.mxu0 0.0
      %6038 = vmatpush2.msra.mxu0 0.0
      %6039 = vmatprep.subr.mxu0 0.0
      %6040 = vmatpush2.msra.mxu0 0.0
      %6041 = vmatprep.subr.mxu0 0.0
      %6042 = vmatpush2.msra.mxu0 0.0
      %6043 = vmatprep.subr.mxu0 0.0
      %6044 = vmatpush2.msra.mxu0 0.0
      %6045 = vmatprep.subr.mxu0 0.0
      %6046 = vmatpush2.msra.mxu0 0.0
      %6047 = vmatprep.subr.mxu0 0.0
      %6048 = vmatpush2.msra.mxu0 0.0
      %6049 = vmatprep.subr.mxu0 0.0
      %6050 = vmatpush2.msra.mxu0 0.0
      %6051 = vmatprep.mubr.f32.mxu0 0.0
      %6052 = vmatmul.mubr.f32.gmra.mxu0 %v5825
      %v6053 = vpop.f32.mrf.mxu0
      %v6054 = vadd.f32 0.0, %v6053
      %v6055 = vpop.f32.mrf.mxu0
      %v6056 = vadd.f32 0.0, %v6055
      %6057 = vdwg.mxu0
      %6058 = vmatprep.subr.mxu0 0.0
      %6059 = vmatpush1.msra.mxu0 0.0
      %6060 = vmatprep.subr.mxu0 0.0
      %6061 = vmatpush1.msra.mxu0 0.0
      %6062 = vmatprep.subr.mxu0 0.0
      %6063 = vmatpush1.msra.mxu0 0.0
      %6064 = vmatprep.subr.mxu0 0.0
      %6065 = vmatpush1.msra.mxu0 0.0
      %6066 = vmatprep.subr.mxu0 0.0
      %6067 = vmatpush1.msra.mxu0 0.0
      %6068 = vmatprep.subr.mxu0 0.0
      %6069 = vmatpush1.msra.mxu0 0.0
      %6070 = vmatprep.subr.mxu0 0.0
      %6071 = vmatpush1.msra.mxu0 0.0
      %6072 = vmatprep.subr.mxu0 0.0
      %6073 = vmatpush1.msra.mxu0 0.0
      %6074 = vmatprep.subr.mxu0 0.0
      %6075 = vmatpush1.msra.mxu0 0.0
      %6076 = vmatprep.subr.mxu0 0.0
      %6077 = vmatpush1.msra.mxu0 0.0
      %6078 = vmatprep.subr.mxu0 0.0
      %6079 = vmatpush1.msra.mxu0 0.0
      %6080 = vmatprep.subr.mxu0 0.0
      %6081 = vmatpush1.msra.mxu0 0.0
      %6082 = vmatprep.subr.mxu0 0.0
      %6083 = vmatpush1.msra.mxu0 0.0
      %6084 = vmatprep.subr.mxu0 0.0
      %6085 = vmatpush1.msra.mxu0 0.0
      %6086 = vmatprep.subr.mxu0 %v5841
      %6087 = vmatpush1.msra.mxu0 %v5839
      %6088 = vmatprep.subr.mxu0 %v5804
      %6089 = vmatpush1.msra.mxu0 %v5803
      %6090 = vmatprep.subr.mxu0 0.0
      %6091 = vmatpush2.msra.mxu0 0.0
      %6092 = vmatprep.subr.mxu0 0.0
      %6093 = vmatpush2.msra.mxu0 0.0
      %6094 = vmatprep.subr.mxu0 0.0
      %6095 = vmatpush2.msra.mxu0 0.0
      %6096 = vmatprep.subr.mxu0 0.0
      %6097 = vmatpush2.msra.mxu0 0.0
      %6098 = vmatprep.subr.mxu0 0.0
      %6099 = vmatpush2.msra.mxu0 0.0
      %6100 = vmatprep.subr.mxu0 0.0
      %6101 = vmatpush2.msra.mxu0 0.0
      %6102 = vmatprep.subr.mxu0 0.0
      %6103 = vmatpush2.msra.mxu0 0.0
      %6104 = vmatprep.subr.mxu0 0.0
      %6105 = vmatpush2.msra.mxu0 0.0
      %6106 = vmatprep.subr.mxu0 0.0
      %6107 = vmatpush2.msra.mxu0 0.0
      %6108 = vmatprep.subr.mxu0 0.0
      %6109 = vmatpush2.msra.mxu0 0.0
      %6110 = vmatprep.subr.mxu0 0.0
      %6111 = vmatpush2.msra.mxu0 0.0
      %6112 = vmatprep.subr.mxu0 0.0
      %6113 = vmatpush2.msra.mxu0 0.0
      %6114 = vmatprep.subr.mxu0 0.0
      %6115 = vmatpush2.msra.mxu0 0.0
      %6116 = vmatprep.subr.mxu0 0.0
      %6117 = vmatpush2.msra.mxu0 0.0
      %6118 = vmatprep.subr.mxu0 0.0
      %6119 = vmatpush2.msra.mxu0 0.0
      %6120 = vmatprep.subr.mxu0 0.0
      %6121 = vmatpush2.msra.mxu0 0.0
      %6122 = vmatprep.mubr.f32.mxu0 0.0
      %6123 = vmatmul.mubr.f32.gmra.mxu0 %v5825
      %v6124 = vpop.f32.mrf.mxu0
      %v6125 = vadd.f32 0.0, %v6124
      %v6126 = vpop.f32.mrf.mxu0
      %v6127 = vadd.f32 0.0, %v6126
      %6128 = vdwg.mxu0
      %6129 = vmatprep.subr.mxu0 0.0
      %6130 = vmatpush1.msra.mxu0 0.0
      %6131 = vmatprep.subr.mxu0 0.0
      %6132 = vmatpush1.msra.mxu0 0.0
      %6133 = vmatprep.subr.mxu0 0.0
      %6134 = vmatpush1.msra.mxu0 0.0
      %6135 = vmatprep.subr.mxu0 0.0
      %6136 = vmatpush1.msra.mxu0 0.0
      %6137 = vmatprep.subr.mxu0 0.0
      %6138 = vmatpush1.msra.mxu0 0.0
      %6139 = vmatprep.subr.mxu0 0.0
      %6140 = vmatpush1.msra.mxu0 0.0
      %6141 = vmatprep.subr.mxu0 0.0
      %6142 = vmatpush1.msra.mxu0 0.0
      %6143 = vmatprep.subr.mxu0 0.0
      %6144 = vmatpush1.msra.mxu0 0.0
      %6145 = vmatprep.subr.mxu0 0.0
      %6146 = vmatpush1.msra.mxu0 0.0
      %6147 = vmatprep.subr.mxu0 0.0
      %6148 = vmatpush1.msra.mxu0 0.0
      %6149 = vmatprep.subr.mxu0 0.0
      %6150 = vmatpush1.msra.mxu0 0.0
      %6151 = vmatprep.subr.mxu0 0.0
      %6152 = vmatpush1.msra.mxu0 0.0
      %6153 = vmatprep.subr.mxu0 0.0
      %6154 = vmatpush1.msra.mxu0 0.0
      %6155 = vmatprep.subr.mxu0 0.0
      %6156 = vmatpush1.msra.mxu0 0.0
      %6157 = vmatprep.subr.mxu0 0.0
      %6158 = vmatpush1.msra.mxu0 %v5843
      %6159 = vmatprep.subr.mxu0 0.0
      %6160 = vmatpush1.msra.mxu0 %v5805
      %6161 = vmatprep.subr.mxu0 0.0
      %6162 = vmatpush2.msra.mxu0 0.0
      %6163 = vmatprep.subr.mxu0 0.0
      %6164 = vmatpush2.msra.mxu0 0.0
      %6165 = vmatprep.subr.mxu0 0.0
      %6166 = vmatpush2.msra.mxu0 0.0
      %6167 = vmatprep.subr.mxu0 0.0
      %6168 = vmatpush2.msra.mxu0 0.0
      %6169 = vmatprep.subr.mxu0 0.0
      %6170 = vmatpush2.msra.mxu0 0.0
      %6171 = vmatprep.subr.mxu0 0.0
      %6172 = vmatpush2.msra.mxu0 0.0
      %6173 = vmatprep.subr.mxu0 0.0
      %6174 = vmatpush2.msra.mxu0 0.0
      %6175 = vmatprep.subr.mxu0 0.0
      %6176 = vmatpush2.msra.mxu0 0.0
      %6177 = vmatprep.subr.mxu0 0.0
      %6178 = vmatpush2.msra.mxu0 0.0
      %6179 = vmatprep.subr.mxu0 0.0
      %6180 = vmatpush2.msra.mxu0 0.0
      %6181 = vmatprep.subr.mxu0 0.0
      %6182 = vmatpush2.msra.mxu0 0.0
      %6183 = vmatprep.subr.mxu0 0.0
      %6184 = vmatpush2.msra.mxu0 0.0
      %6185 = vmatprep.subr.mxu0 0.0
      %6186 = vmatpush2.msra.mxu0 0.0
      %6187 = vmatprep.subr.mxu0 0.0
      %6188 = vmatpush2.msra.mxu0 0.0
      %6189 = vmatprep.subr.mxu0 0.0
      %6190 = vmatpush2.msra.mxu0 0.0
      %6191 = vmatprep.subr.mxu0 0.0
      %6192 = vmatpush2.msra.mxu0 0.0
      %6193 = vmatprep.mubr.f32.mxu0 0.0
      %6194 = vmatmul.mubr.f32.gmra.mxu0 %v5825
      %v6195 = vpop.f32.mrf.mxu0
      %v6196 = vadd.f32 0.0, %v6195
      %v6197 = vpop.f32.mrf.mxu0
      %6198 = vdwg.mxu0
      %v6199 = vadd.f32 %v175, %v5912
      %v6200 = vadd.f32 %v175, %v5914
      %v6201 = vadd.f32 %v175, %v5983
      %v6202 = vadd.f32 %v175, %v5985
      %v6203 = vadd.f32 %v175, %v6054
      %v6204 = vadd.f32 %v175, %v6056
      %v6205 = vadd.f32 %v175, %v6125
      %v6206 = vadd.f32 %v175, %v6127
      %v6207 = vadd.f32 %v175, %v6196
      %s6208 = scalar_lea.vmem %s1, 8
      %v6209 = vld [vmem:[%s6208] sm:$0x7]
      %6210 = vrot.lane.b32.xlu0 %v5715, 59
      %v6211 = vpop.permute.xlu0 %6210
      %6212 = vrot.lane.b32.xlu0 %v5716, 59
      %v6213 = vpop.permute.xlu0 %6212
      %6214 = vrot.lane.b32.xlu0 %v5717, 59
      %v6215 = vpop.permute.xlu0 %6214
      %6216 = vrot.lane.b32.xlu0 %v5718, 59
      %v6217 = vpop.permute.xlu0 %6216
      %6218 = vrot.lane.b32.xlu0 %v5719, 59
      %v6219 = vpop.permute.xlu0 %6218
      %6220 = vrot.lane.b32.xlu0 %v5720, 59
      %v6221 = vpop.permute.xlu0 %6220
      %6222 = vrot.lane.b32.xlu0 %v5721, 59
      %v6223 = vpop.permute.xlu0 %6222
      %6224 = vrot.lane.b32.xlu0 %v5722, 59
      %v6225 = vpop.permute.xlu0 %6224
      %6226 = vrot.lane.b32.xlu0 %v5723, 59
      %v6227 = vpop.permute.xlu0 %6226
      %6228 = vrot.lane.b32.xlu0 %v5724, 59
      %v6229 = vpop.permute.xlu0 %6228
      %6230 = vrot.lane.b32.xlu0 %v5725, 59
      %v6231 = vpop.permute.xlu0 %6230
      %6232 = vrot.lane.b32.xlu0 %v5726, 59
      %v6233 = vpop.permute.xlu0 %6232
      %6234 = vrot.lane.b32.xlu0 %v5727, 59
      %v6235 = vpop.permute.xlu0 %6234
      %6236 = vrot.lane.b32.xlu0 %v5728, 59
      %v6237 = vpop.permute.xlu0 %6236
      %6238 = vrot.lane.b32.xlu0 %v5729, 59
      %v6239 = vpop.permute.xlu0 %6238
      %6240 = vrot.lane.b32.xlu0 %v5730, 59
      %v6241 = vpop.permute.xlu0 %6240
      %6242 = vrot.lane.b32.xlu0 %v5731, 59
      %v6243 = vpop.permute.xlu0 %6242
      %6244 = vrot.lane.b32.xlu0 %v5732, 59
      %v6245 = vpop.permute.xlu0 %6244
      %6246 = vrot.lane.b32.xlu0 %v5733, 59
      %v6247 = vpop.permute.xlu0 %6246
      %6248 = vrot.lane.b32.xlu0 %v5734, 59
      %v6249 = vpop.permute.xlu0 %6248
      %v6250 = vsel %vm3897, %v6211, %v6213
      %v6251 = vsel %vm3897, %v6213, %v6215
      %v6252 = vsel %vm3897, %v6215, %v6217
      %v6253 = vsel %vm3897, %v6217, %v6219
      %v6254 = vsel %vm3897, %v6219, %v6221
      %v6255 = vsel %vm3897, %v6221, %v6223
      %v6256 = vsel %vm3897, %v6223, %v6225
      %v6257 = vsel %vm3897, %v6225, %v6227
      %v6258 = vsel %vm3897, %v6227, %v6229
      %v6259 = vsel %vm3897, %v6231, %v6233
      %v6260 = vsel %vm3897, %v6233, %v6235
      %v6261 = vsel %vm3897, %v6235, %v6237
      %v6262 = vsel %vm3897, %v6237, %v6239
      %v6263 = vsel %vm3897, %v6239, %v6241
      %v6264 = vsel %vm3897, %v6241, %v6243
      %v6265 = vsel %vm3897, %v6243, %v6245
      %v6266 = vsel %vm3897, %v6245, %v6247
      %v6267 = vsel %vm3897, %v6247, %v6249
      %v6278 = vsel %vm277, %v6209, 0
      %v6280 = vsel %vm281, %v6259, 0
      %v6282 = vsel %vm281, %v6260, 0
      %v6284 = vsel %vm281, %v6261, 0
      %v6286 = vsel %vm281, %v6262, 0
      %v6288 = vsel %vm281, %v6263, 0
      %v6290 = vsel %vm281, %v6264, 0
      %v6292 = vsel %vm281, %v6265, 0
      %v6294 = vsel %vm281, %v6266, 0
      %v6296 = vsel %vm281, %v6267, 0
      %6298 = vmatprep.subr.mxu0 0.0
      %6299 = vmatpush1.msra.mxu0 0.0
      %6300 = vmatprep.subr.mxu0 0.0
      %6301 = vmatpush1.msra.mxu0 0.0
      %6302 = vmatprep.subr.mxu0 0.0
      %6303 = vmatpush1.msra.mxu0 0.0
      %6304 = vmatprep.subr.mxu0 0.0
      %6305 = vmatpush1.msra.mxu0 0.0
      %6306 = vmatprep.subr.mxu0 0.0
      %6307 = vmatpush1.msra.mxu0 0.0
      %6308 = vmatprep.subr.mxu0 0.0
      %6309 = vmatpush1.msra.mxu0 0.0
      %6310 = vmatprep.subr.mxu0 0.0
      %6311 = vmatpush1.msra.mxu0 0.0
      %6312 = vmatprep.subr.mxu0 0.0
      %6313 = vmatpush1.msra.mxu0 0.0
      %6314 = vmatprep.subr.mxu0 0.0
      %6315 = vmatpush1.msra.mxu0 0.0
      %6316 = vmatprep.subr.mxu0 0.0
      %6317 = vmatpush1.msra.mxu0 0.0
      %6318 = vmatprep.subr.mxu0 0.0
      %6319 = vmatpush1.msra.mxu0 0.0
      %6320 = vmatprep.subr.mxu0 0.0
      %6321 = vmatpush1.msra.mxu0 0.0
      %6322 = vmatprep.subr.mxu0 0.0
      %6323 = vmatpush1.msra.mxu0 0.0
      %6324 = vmatprep.subr.mxu0 0.0
      %6325 = vmatpush1.msra.mxu0 0.0
      %6326 = vmatprep.subr.mxu0 %v6282
      %6327 = vmatpush1.msra.mxu0 %v6280
      %6328 = vmatprep.subr.mxu0 %v6251
      %6329 = vmatpush1.msra.mxu0 %v6250
      %6330 = vmatprep.subr.mxu0 0.0
      %6331 = vmatpush2.msra.mxu0 0.0
      %6332 = vmatprep.subr.mxu0 0.0
      %6333 = vmatpush2.msra.mxu0 0.0
      %6334 = vmatprep.subr.mxu0 0.0
      %6335 = vmatpush2.msra.mxu0 0.0
      %6336 = vmatprep.subr.mxu0 0.0
      %6337 = vmatpush2.msra.mxu0 0.0
      %6338 = vmatprep.subr.mxu0 0.0
      %6339 = vmatpush2.msra.mxu0 0.0
      %6340 = vmatprep.subr.mxu0 0.0
      %6341 = vmatpush2.msra.mxu0 0.0
      %6342 = vmatprep.subr.mxu0 0.0
      %6343 = vmatpush2.msra.mxu0 0.0
      %6344 = vmatprep.subr.mxu0 0.0
      %6345 = vmatpush2.msra.mxu0 0.0
      %6346 = vmatprep.subr.mxu0 0.0
      %6347 = vmatpush2.msra.mxu0 0.0
      %6348 = vmatprep.subr.mxu0 0.0
      %6349 = vmatpush2.msra.mxu0 0.0
      %6350 = vmatprep.subr.mxu0 0.0
      %6351 = vmatpush2.msra.mxu0 0.0
      %6352 = vmatprep.subr.mxu0 0.0
      %6353 = vmatpush2.msra.mxu0 0.0
      %6354 = vmatprep.subr.mxu0 0.0
      %6355 = vmatpush2.msra.mxu0 0.0
      %6356 = vmatprep.subr.mxu0 0.0
      %6357 = vmatpush2.msra.mxu0 0.0
      %6358 = vmatprep.subr.mxu0 0.0
      %6359 = vmatpush2.msra.mxu0 0.0
      %6360 = vmatprep.subr.mxu0 0.0
      %6361 = vmatpush2.msra.mxu0 0.0
      %6362 = vmatprep.mubr.f32.mxu0 0.0
      %6363 = vmatmul.mubr.f32.gmra.mxu0 %v6278
      %v6364 = vpop.f32.mrf.mxu0
      %v6365 = vadd.f32 0.0, %v6364
      %v6366 = vpop.f32.mrf.mxu0
      %v6367 = vadd.f32 0.0, %v6366
      %6368 = vdwg.mxu0
      %6369 = vmatprep.subr.mxu0 0.0
      %6370 = vmatpush1.msra.mxu0 0.0
      %6371 = vmatprep.subr.mxu0 0.0
      %6372 = vmatpush1.msra.mxu0 0.0
      %6373 = vmatprep.subr.mxu0 0.0
      %6374 = vmatpush1.msra.mxu0 0.0
      %6375 = vmatprep.subr.mxu0 0.0
      %6376 = vmatpush1.msra.mxu0 0.0
      %6377 = vmatprep.subr.mxu0 0.0
      %6378 = vmatpush1.msra.mxu0 0.0
      %6379 = vmatprep.subr.mxu0 0.0
      %6380 = vmatpush1.msra.mxu0 0.0
      %6381 = vmatprep.subr.mxu0 0.0
      %6382 = vmatpush1.msra.mxu0 0.0
      %6383 = vmatprep.subr.mxu0 0.0
      %6384 = vmatpush1.msra.mxu0 0.0
      %6385 = vmatprep.subr.mxu0 0.0
      %6386 = vmatpush1.msra.mxu0 0.0
      %6387 = vmatprep.subr.mxu0 0.0
      %6388 = vmatpush1.msra.mxu0 0.0
      %6389 = vmatprep.subr.mxu0 0.0
      %6390 = vmatpush1.msra.mxu0 0.0
      %6391 = vmatprep.subr.mxu0 0.0
      %6392 = vmatpush1.msra.mxu0 0.0
      %6393 = vmatprep.subr.mxu0 0.0
      %6394 = vmatpush1.msra.mxu0 0.0
      %6395 = vmatprep.subr.mxu0 0.0
      %6396 = vmatpush1.msra.mxu0 0.0
      %6397 = vmatprep.subr.mxu0 %v6286
      %6398 = vmatpush1.msra.mxu0 %v6284
      %6399 = vmatprep.subr.mxu0 %v6253
      %6400 = vmatpush1.msra.mxu0 %v6252
      %6401 = vmatprep.subr.mxu0 0.0
      %6402 = vmatpush2.msra.mxu0 0.0
      %6403 = vmatprep.subr.mxu0 0.0
      %6404 = vmatpush2.msra.mxu0 0.0
      %6405 = vmatprep.subr.mxu0 0.0
      %6406 = vmatpush2.msra.mxu0 0.0
      %6407 = vmatprep.subr.mxu0 0.0
      %6408 = vmatpush2.msra.mxu0 0.0
      %6409 = vmatprep.subr.mxu0 0.0
      %6410 = vmatpush2.msra.mxu0 0.0
      %6411 = vmatprep.subr.mxu0 0.0
      %6412 = vmatpush2.msra.mxu0 0.0
      %6413 = vmatprep.subr.mxu0 0.0
      %6414 = vmatpush2.msra.mxu0 0.0
      %6415 = vmatprep.subr.mxu0 0.0
      %6416 = vmatpush2.msra.mxu0 0.0
      %6417 = vmatprep.subr.mxu0 0.0
      %6418 = vmatpush2.msra.mxu0 0.0
      %6419 = vmatprep.subr.mxu0 0.0
      %6420 = vmatpush2.msra.mxu0 0.0
      %6421 = vmatprep.subr.mxu0 0.0
      %6422 = vmatpush2.msra.mxu0 0.0
      %6423 = vmatprep.subr.mxu0 0.0
      %6424 = vmatpush2.msra.mxu0 0.0
      %6425 = vmatprep.subr.mxu0 0.0
      %6426 = vmatpush2.msra.mxu0 0.0
      %6427 = vmatprep.subr.mxu0 0.0
      %6428 = vmatpush2.msra.mxu0 0.0
      %6429 = vmatprep.subr.mxu0 0.0
      %6430 = vmatpush2.msra.mxu0 0.0
      %6431 = vmatprep.subr.mxu0 0.0
      %6432 = vmatpush2.msra.mxu0 0.0
      %6433 = vmatprep.mubr.f32.mxu0 0.0
      %6434 = vmatmul.mubr.f32.gmra.mxu0 %v6278
      %v6435 = vpop.f32.mrf.mxu0
      %v6436 = vadd.f32 0.0, %v6435
      %v6437 = vpop.f32.mrf.mxu0
      %v6438 = vadd.f32 0.0, %v6437
      %6439 = vdwg.mxu0
      %6440 = vmatprep.subr.mxu0 0.0
      %6441 = vmatpush1.msra.mxu0 0.0
      %6442 = vmatprep.subr.mxu0 0.0
      %6443 = vmatpush1.msra.mxu0 0.0
      %6444 = vmatprep.subr.mxu0 0.0
      %6445 = vmatpush1.msra.mxu0 0.0
      %6446 = vmatprep.subr.mxu0 0.0
      %6447 = vmatpush1.msra.mxu0 0.0
      %6448 = vmatprep.subr.mxu0 0.0
      %6449 = vmatpush1.msra.mxu0 0.0
      %6450 = vmatprep.subr.mxu0 0.0
      %6451 = vmatpush1.msra.mxu0 0.0
      %6452 = vmatprep.subr.mxu0 0.0
      %6453 = vmatpush1.msra.mxu0 0.0
      %6454 = vmatprep.subr.mxu0 0.0
      %6455 = vmatpush1.msra.mxu0 0.0
      %6456 = vmatprep.subr.mxu0 0.0
      %6457 = vmatpush1.msra.mxu0 0.0
      %6458 = vmatprep.subr.mxu0 0.0
      %6459 = vmatpush1.msra.mxu0 0.0
      %6460 = vmatprep.subr.mxu0 0.0
      %6461 = vmatpush1.msra.mxu0 0.0
      %6462 = vmatprep.subr.mxu0 0.0
      %6463 = vmatpush1.msra.mxu0 0.0
      %6464 = vmatprep.subr.mxu0 0.0
      %6465 = vmatpush1.msra.mxu0 0.0
      %6466 = vmatprep.subr.mxu0 0.0
      %6467 = vmatpush1.msra.mxu0 0.0
      %6468 = vmatprep.subr.mxu0 %v6290
      %6469 = vmatpush1.msra.mxu0 %v6288
      %6470 = vmatprep.subr.mxu0 %v6255
      %6471 = vmatpush1.msra.mxu0 %v6254
      %6472 = vmatprep.subr.mxu0 0.0
      %6473 = vmatpush2.msra.mxu0 0.0
      %6474 = vmatprep.subr.mxu0 0.0
      %6475 = vmatpush2.msra.mxu0 0.0
      %6476 = vmatprep.subr.mxu0 0.0
      %6477 = vmatpush2.msra.mxu0 0.0
      %6478 = vmatprep.subr.mxu0 0.0
      %6479 = vmatpush2.msra.mxu0 0.0
      %6480 = vmatprep.subr.mxu0 0.0
      %6481 = vmatpush2.msra.mxu0 0.0
      %6482 = vmatprep.subr.mxu0 0.0
      %6483 = vmatpush2.msra.mxu0 0.0
      %6484 = vmatprep.subr.mxu0 0.0
      %6485 = vmatpush2.msra.mxu0 0.0
      %6486 = vmatprep.subr.mxu0 0.0
      %6487 = vmatpush2.msra.mxu0 0.0
      %6488 = vmatprep.subr.mxu0 0.0
      %6489 = vmatpush2.msra.mxu0 0.0
      %6490 = vmatprep.subr.mxu0 0.0
      %6491 = vmatpush2.msra.mxu0 0.0
      %6492 = vmatprep.subr.mxu0 0.0
      %6493 = vmatpush2.msra.mxu0 0.0
      %6494 = vmatprep.subr.mxu0 0.0
      %6495 = vmatpush2.msra.mxu0 0.0
      %6496 = vmatprep.subr.mxu0 0.0
      %6497 = vmatpush2.msra.mxu0 0.0
      %6498 = vmatprep.subr.mxu0 0.0
      %6499 = vmatpush2.msra.mxu0 0.0
      %6500 = vmatprep.subr.mxu0 0.0
      %6501 = vmatpush2.msra.mxu0 0.0
      %6502 = vmatprep.subr.mxu0 0.0
      %6503 = vmatpush2.msra.mxu0 0.0
      %6504 = vmatprep.mubr.f32.mxu0 0.0
      %6505 = vmatmul.mubr.f32.gmra.mxu0 %v6278
      %v6506 = vpop.f32.mrf.mxu0
      %v6507 = vadd.f32 0.0, %v6506
      %v6508 = vpop.f32.mrf.mxu0
      %v6509 = vadd.f32 0.0, %v6508
      %6510 = vdwg.mxu0
      %6511 = vmatprep.subr.mxu0 0.0
      %6512 = vmatpush1.msra.mxu0 0.0
      %6513 = vmatprep.subr.mxu0 0.0
      %6514 = vmatpush1.msra.mxu0 0.0
      %6515 = vmatprep.subr.mxu0 0.0
      %6516 = vmatpush1.msra.mxu0 0.0
      %6517 = vmatprep.subr.mxu0 0.0
      %6518 = vmatpush1.msra.mxu0 0.0
      %6519 = vmatprep.subr.mxu0 0.0
      %6520 = vmatpush1.msra.mxu0 0.0
      %6521 = vmatprep.subr.mxu0 0.0
      %6522 = vmatpush1.msra.mxu0 0.0
      %6523 = vmatprep.subr.mxu0 0.0
      %6524 = vmatpush1.msra.mxu0 0.0
      %6525 = vmatprep.subr.mxu0 0.0
      %6526 = vmatpush1.msra.mxu0 0.0
      %6527 = vmatprep.subr.mxu0 0.0
      %6528 = vmatpush1.msra.mxu0 0.0
      %6529 = vmatprep.subr.mxu0 0.0
      %6530 = vmatpush1.msra.mxu0 0.0
      %6531 = vmatprep.subr.mxu0 0.0
      %6532 = vmatpush1.msra.mxu0 0.0
      %6533 = vmatprep.subr.mxu0 0.0
      %6534 = vmatpush1.msra.mxu0 0.0
      %6535 = vmatprep.subr.mxu0 0.0
      %6536 = vmatpush1.msra.mxu0 0.0
      %6537 = vmatprep.subr.mxu0 0.0
      %6538 = vmatpush1.msra.mxu0 0.0
      %6539 = vmatprep.subr.mxu0 %v6294
      %6540 = vmatpush1.msra.mxu0 %v6292
      %6541 = vmatprep.subr.mxu0 %v6257
      %6542 = vmatpush1.msra.mxu0 %v6256
      %6543 = vmatprep.subr.mxu0 0.0
      %6544 = vmatpush2.msra.mxu0 0.0
      %6545 = vmatprep.subr.mxu0 0.0
      %6546 = vmatpush2.msra.mxu0 0.0
      %6547 = vmatprep.subr.mxu0 0.0
      %6548 = vmatpush2.msra.mxu0 0.0
      %6549 = vmatprep.subr.mxu0 0.0
      %6550 = vmatpush2.msra.mxu0 0.0
      %6551 = vmatprep.subr.mxu0 0.0
      %6552 = vmatpush2.msra.mxu0 0.0
      %6553 = vmatprep.subr.mxu0 0.0
      %6554 = vmatpush2.msra.mxu0 0.0
      %6555 = vmatprep.subr.mxu0 0.0
      %6556 = vmatpush2.msra.mxu0 0.0
      %6557 = vmatprep.subr.mxu0 0.0
      %6558 = vmatpush2.msra.mxu0 0.0
      %6559 = vmatprep.subr.mxu0 0.0
      %6560 = vmatpush2.msra.mxu0 0.0
      %6561 = vmatprep.subr.mxu0 0.0
      %6562 = vmatpush2.msra.mxu0 0.0
      %6563 = vmatprep.subr.mxu0 0.0
      %6564 = vmatpush2.msra.mxu0 0.0
      %6565 = vmatprep.subr.mxu0 0.0
      %6566 = vmatpush2.msra.mxu0 0.0
      %6567 = vmatprep.subr.mxu0 0.0
      %6568 = vmatpush2.msra.mxu0 0.0
      %6569 = vmatprep.subr.mxu0 0.0
      %6570 = vmatpush2.msra.mxu0 0.0
      %6571 = vmatprep.subr.mxu0 0.0
      %6572 = vmatpush2.msra.mxu0 0.0
      %6573 = vmatprep.subr.mxu0 0.0
      %6574 = vmatpush2.msra.mxu0 0.0
      %6575 = vmatprep.mubr.f32.mxu0 0.0
      %6576 = vmatmul.mubr.f32.gmra.mxu0 %v6278
      %v6577 = vpop.f32.mrf.mxu0
      %v6578 = vadd.f32 0.0, %v6577
      %v6579 = vpop.f32.mrf.mxu0
      %v6580 = vadd.f32 0.0, %v6579
      %6581 = vdwg.mxu0
      %6582 = vmatprep.subr.mxu0 0.0
      %6583 = vmatpush1.msra.mxu0 0.0
      %6584 = vmatprep.subr.mxu0 0.0
      %6585 = vmatpush1.msra.mxu0 0.0
      %6586 = vmatprep.subr.mxu0 0.0
      %6587 = vmatpush1.msra.mxu0 0.0
      %6588 = vmatprep.subr.mxu0 0.0
      %6589 = vmatpush1.msra.mxu0 0.0
      %6590 = vmatprep.subr.mxu0 0.0
      %6591 = vmatpush1.msra.mxu0 0.0
      %6592 = vmatprep.subr.mxu0 0.0
      %6593 = vmatpush1.msra.mxu0 0.0
      %6594 = vmatprep.subr.mxu0 0.0
      %6595 = vmatpush1.msra.mxu0 0.0
      %6596 = vmatprep.subr.mxu0 0.0
      %6597 = vmatpush1.msra.mxu0 0.0
      %6598 = vmatprep.subr.mxu0 0.0
      %6599 = vmatpush1.msra.mxu0 0.0
      %6600 = vmatprep.subr.mxu0 0.0
      %6601 = vmatpush1.msra.mxu0 0.0
      %6602 = vmatprep.subr.mxu0 0.0
      %6603 = vmatpush1.msra.mxu0 0.0
      %6604 = vmatprep.subr.mxu0 0.0
      %6605 = vmatpush1.msra.mxu0 0.0
      %6606 = vmatprep.subr.mxu0 0.0
      %6607 = vmatpush1.msra.mxu0 0.0
      %6608 = vmatprep.subr.mxu0 0.0
      %6609 = vmatpush1.msra.mxu0 0.0
      %6610 = vmatprep.subr.mxu0 0.0
      %6611 = vmatpush1.msra.mxu0 %v6296
      %6612 = vmatprep.subr.mxu0 0.0
      %6613 = vmatpush1.msra.mxu0 %v6258
      %6614 = vmatprep.subr.mxu0 0.0
      %6615 = vmatpush2.msra.mxu0 0.0
      %6616 = vmatprep.subr.mxu0 0.0
      %6617 = vmatpush2.msra.mxu0 0.0
      %6618 = vmatprep.subr.mxu0 0.0
      %6619 = vmatpush2.msra.mxu0 0.0
      %6620 = vmatprep.subr.mxu0 0.0
      %6621 = vmatpush2.msra.mxu0 0.0
      %6622 = vmatprep.subr.mxu0 0.0
      %6623 = vmatpush2.msra.mxu0 0.0
      %6624 = vmatprep.subr.mxu0 0.0
      %6625 = vmatpush2.msra.mxu0 0.0
      %6626 = vmatprep.subr.mxu0 0.0
      %6627 = vmatpush2.msra.mxu0 0.0
      %6628 = vmatprep.subr.mxu0 0.0
      %6629 = vmatpush2.msra.mxu0 0.0
      %6630 = vmatprep.subr.mxu0 0.0
      %6631 = vmatpush2.msra.mxu0 0.0
      %6632 = vmatprep.subr.mxu0 0.0
      %6633 = vmatpush2.msra.mxu0 0.0
      %6634 = vmatprep.subr.mxu0 0.0
      %6635 = vmatpush2.msra.mxu0 0.0
      %6636 = vmatprep.subr.mxu0 0.0
      %6637 = vmatpush2.msra.mxu0 0.0
      %6638 = vmatprep.subr.mxu0 0.0
      %6639 = vmatpush2.msra.mxu0 0.0
      %6640 = vmatprep.subr.mxu0 0.0
      %6641 = vmatpush2.msra.mxu0 0.0
      %6642 = vmatprep.subr.mxu0 0.0
      %6643 = vmatpush2.msra.mxu0 0.0
      %6644 = vmatprep.subr.mxu0 0.0
      %6645 = vmatpush2.msra.mxu0 0.0
      %6646 = vmatprep.mubr.f32.mxu0 0.0
      %6647 = vmatmul.mubr.f32.gmra.mxu0 %v6278
      %v6648 = vpop.f32.mrf.mxu0
      %v6649 = vadd.f32 0.0, %v6648
      %v6650 = vpop.f32.mrf.mxu0
      %6651 = vdwg.mxu0
      %v6652 = vadd.f32 %v6199, %v6365
      %v6653 = vadd.f32 %v6200, %v6367
      %v6654 = vadd.f32 %v6201, %v6436
      %v6655 = vadd.f32 %v6202, %v6438
      %v6656 = vadd.f32 %v6203, %v6507
      %v6657 = vadd.f32 %v6204, %v6509
      %v6658 = vadd.f32 %v6205, %v6578
      %v6659 = vadd.f32 %v6206, %v6580
      %v6660 = vadd.f32 %v6207, %v6649
      %v6661 = vld [vmem:[%s165] sm:$0xff]
      %v6662 = vld [vmem:[%s165 + $0x8] sm:$0xff]
      %v6663 = vld [vmem:[%s165 + $0x10] sm:$0xff]
      %v6664 = vld [vmem:[%s165 + $0x18] sm:$0xff]
      %v6665 = vld [vmem:[%s165 + $0x20] sm:$0xff]
      %v6666 = vld [vmem:[%s165 + $0x28] sm:$0xff]
      %v6667 = vld [vmem:[%s165 + $0x30] sm:$0xff]
      %v6668 = vld [vmem:[%s165 + $0x38] sm:$0xff]
      %v6669 = vld [vmem:[%s165 + $0x40] sm:$0xff]
      %v6670 = vld [vmem:[%s165 + $0x50] sm:$0xf]
      %v6671 = vld [vmem:[%s165 + $0x58] sm:$0xf]
      %v6672 = vld [vmem:[%s165 + $0x60] sm:$0xf]
      %v6673 = vld [vmem:[%s165 + $0x68] sm:$0xf]
      %v6674 = vld [vmem:[%s165 + $0x70] sm:$0xf]
      %v6675 = vld [vmem:[%s165 + $0x78] sm:$0xf]
      %v6676 = vld [vmem:[%s165 + $0x80] sm:$0xf]
      %v6677 = vld [vmem:[%s165 + $0x88] sm:$0xf]
      %v6678 = vld [vmem:[%s165 + $0x90] sm:$0xf]
      %s6679 = scalar_lea.vmem %s1, 32
      %v6680 = vld [vmem:[%s6679] sm:$0x7]
      %6699 = vrot.lane.b32.xlu0 %v6661, 92
      %v6700 = vpop.permute.xlu0 %6699
      %6701 = vrot.lane.b32.xlu0 %v6662, 92
      %v6702 = vpop.permute.xlu0 %6701
      %6703 = vrot.lane.b32.xlu0 %v6663, 92
      %v6704 = vpop.permute.xlu0 %6703
      %6705 = vrot.lane.b32.xlu0 %v6664, 92
      %v6706 = vpop.permute.xlu0 %6705
      %6707 = vrot.lane.b32.xlu0 %v6665, 92
      %v6708 = vpop.permute.xlu0 %6707
      %6709 = vrot.lane.b32.xlu0 %v6666, 92
      %v6710 = vpop.permute.xlu0 %6709
      %6711 = vrot.lane.b32.xlu0 %v6667, 92
      %v6712 = vpop.permute.xlu0 %6711
      %6713 = vrot.lane.b32.xlu0 %v6668, 92
      %v6714 = vpop.permute.xlu0 %6713
      %6715 = vrot.lane.b32.xlu0 %v6669, 92
      %v6716 = vpop.permute.xlu0 %6715
      %6717 = vrot.lane.b32.xlu0 %v6670, 92
      %v6718 = vpop.permute.xlu0 %6717
      %6719 = vrot.lane.b32.xlu0 %v6671, 92
      %v6720 = vpop.permute.xlu0 %6719
      %6721 = vrot.lane.b32.xlu0 %v6672, 92
      %v6722 = vpop.permute.xlu0 %6721
      %6723 = vrot.lane.b32.xlu0 %v6673, 92
      %v6724 = vpop.permute.xlu0 %6723
      %6725 = vrot.lane.b32.xlu0 %v6674, 92
      %v6726 = vpop.permute.xlu0 %6725
      %6727 = vrot.lane.b32.xlu0 %v6675, 92
      %v6728 = vpop.permute.xlu0 %6727
      %6729 = vrot.lane.b32.xlu0 %v6676, 92
      %v6730 = vpop.permute.xlu0 %6729
      %6731 = vrot.lane.b32.xlu0 %v6677, 92
      %v6732 = vpop.permute.xlu0 %6731
      %6733 = vrot.lane.b32.xlu0 %v6678, 92
      %v6734 = vpop.permute.xlu0 %6733
      %v6735 = vsel %vm2041, %v6700, %v6702
      %v6736 = vsel %vm2041, %v6702, %v6704
      %v6737 = vsel %vm2041, %v6704, %v6706
      %v6738 = vsel %vm2041, %v6706, %v6708
      %v6739 = vsel %vm2041, %v6708, %v6710
      %v6740 = vsel %vm2041, %v6710, %v6712
      %v6741 = vsel %vm2041, %v6712, %v6714
      %v6742 = vsel %vm2041, %v6714, %v6716
      %v6743 = vsel %vm2041, %v6718, %v6720
      %v6744 = vsel %vm2041, %v6720, %v6722
      %v6745 = vsel %vm2041, %v6722, %v6724
      %v6746 = vsel %vm2041, %v6724, %v6726
      %v6747 = vsel %vm2041, %v6726, %v6728
      %v6748 = vsel %vm2041, %v6728, %v6730
      %v6749 = vsel %vm2041, %v6730, %v6732
      %v6750 = vsel %vm2041, %v6732, %v6734
      %v6761 = vsel %vm277, %v6680, 0
      %v6763 = vsel %vm281, %v6743, 0
      %v6765 = vsel %vm281, %v6744, 0
      %v6767 = vsel %vm281, %v6745, 0
      %v6769 = vsel %vm281, %v6746, 0
      %v6771 = vsel %vm281, %v6747, 0
      %v6773 = vsel %vm281, %v6748, 0
      %v6775 = vsel %vm281, %v6749, 0
      %v6777 = vsel %vm281, %v6750, 0
      %v6779 = vsel %vm281, %v6734, 0
      %6781 = vmatprep.subr.mxu0 0.0
      %6782 = vmatpush1.msra.mxu0 0.0
      %6783 = vmatprep.subr.mxu0 0.0
      %6784 = vmatpush1.msra.mxu0 0.0
      %6785 = vmatprep.subr.mxu0 0.0
      %6786 = vmatpush1.msra.mxu0 0.0
      %6787 = vmatprep.subr.mxu0 0.0
      %6788 = vmatpush1.msra.mxu0 0.0
      %6789 = vmatprep.subr.mxu0 0.0
      %6790 = vmatpush1.msra.mxu0 0.0
      %6791 = vmatprep.subr.mxu0 0.0
      %6792 = vmatpush1.msra.mxu0 0.0
      %6793 = vmatprep.subr.mxu0 0.0
      %6794 = vmatpush1.msra.mxu0 0.0
      %6795 = vmatprep.subr.mxu0 0.0
      %6796 = vmatpush1.msra.mxu0 0.0
      %6797 = vmatprep.subr.mxu0 0.0
      %6798 = vmatpush1.msra.mxu0 0.0
      %6799 = vmatprep.subr.mxu0 0.0
      %6800 = vmatpush1.msra.mxu0 0.0
      %6801 = vmatprep.subr.mxu0 0.0
      %6802 = vmatpush1.msra.mxu0 0.0
      %6803 = vmatprep.subr.mxu0 0.0
      %6804 = vmatpush1.msra.mxu0 0.0
      %6805 = vmatprep.subr.mxu0 0.0
      %6806 = vmatpush1.msra.mxu0 0.0
      %6807 = vmatprep.subr.mxu0 0.0
      %6808 = vmatpush1.msra.mxu0 0.0
      %6809 = vmatprep.subr.mxu0 %v6765
      %6810 = vmatpush1.msra.mxu0 %v6763
      %6811 = vmatprep.subr.mxu0 %v6736
      %6812 = vmatpush1.msra.mxu0 %v6735
      %6813 = vmatprep.subr.mxu0 0.0
      %6814 = vmatpush2.msra.mxu0 0.0
      %6815 = vmatprep.subr.mxu0 0.0
      %6816 = vmatpush2.msra.mxu0 0.0
      %6817 = vmatprep.subr.mxu0 0.0
      %6818 = vmatpush2.msra.mxu0 0.0
      %6819 = vmatprep.subr.mxu0 0.0
      %6820 = vmatpush2.msra.mxu0 0.0
      %6821 = vmatprep.subr.mxu0 0.0
      %6822 = vmatpush2.msra.mxu0 0.0
      %6823 = vmatprep.subr.mxu0 0.0
      %6824 = vmatpush2.msra.mxu0 0.0
      %6825 = vmatprep.subr.mxu0 0.0
      %6826 = vmatpush2.msra.mxu0 0.0
      %6827 = vmatprep.subr.mxu0 0.0
      %6828 = vmatpush2.msra.mxu0 0.0
      %6829 = vmatprep.subr.mxu0 0.0
      %6830 = vmatpush2.msra.mxu0 0.0
      %6831 = vmatprep.subr.mxu0 0.0
      %6832 = vmatpush2.msra.mxu0 0.0
      %6833 = vmatprep.subr.mxu0 0.0
      %6834 = vmatpush2.msra.mxu0 0.0
      %6835 = vmatprep.subr.mxu0 0.0
      %6836 = vmatpush2.msra.mxu0 0.0
      %6837 = vmatprep.subr.mxu0 0.0
      %6838 = vmatpush2.msra.mxu0 0.0
      %6839 = vmatprep.subr.mxu0 0.0
      %6840 = vmatpush2.msra.mxu0 0.0
      %6841 = vmatprep.subr.mxu0 0.0
      %6842 = vmatpush2.msra.mxu0 0.0
      %6843 = vmatprep.subr.mxu0 0.0
      %6844 = vmatpush2.msra.mxu0 0.0
      %6845 = vmatprep.mubr.f32.mxu0 0.0
      %6846 = vmatmul.mubr.f32.gmra.mxu0 %v6761
      %v6847 = vpop.f32.mrf.mxu0
      %v6848 = vadd.f32 0.0, %v6847
      %v6849 = vpop.f32.mrf.mxu0
      %v6850 = vadd.f32 0.0, %v6849
      %6851 = vdwg.mxu0
      %6852 = vmatprep.subr.mxu0 0.0
      %6853 = vmatpush1.msra.mxu0 0.0
      %6854 = vmatprep.subr.mxu0 0.0
      %6855 = vmatpush1.msra.mxu0 0.0
      %6856 = vmatprep.subr.mxu0 0.0
      %6857 = vmatpush1.msra.mxu0 0.0
      %6858 = vmatprep.subr.mxu0 0.0
      %6859 = vmatpush1.msra.mxu0 0.0
      %6860 = vmatprep.subr.mxu0 0.0
      %6861 = vmatpush1.msra.mxu0 0.0
      %6862 = vmatprep.subr.mxu0 0.0
      %6863 = vmatpush1.msra.mxu0 0.0
      %6864 = vmatprep.subr.mxu0 0.0
      %6865 = vmatpush1.msra.mxu0 0.0
      %6866 = vmatprep.subr.mxu0 0.0
      %6867 = vmatpush1.msra.mxu0 0.0
      %6868 = vmatprep.subr.mxu0 0.0
      %6869 = vmatpush1.msra.mxu0 0.0
      %6870 = vmatprep.subr.mxu0 0.0
      %6871 = vmatpush1.msra.mxu0 0.0
      %6872 = vmatprep.subr.mxu0 0.0
      %6873 = vmatpush1.msra.mxu0 0.0
      %6874 = vmatprep.subr.mxu0 0.0
      %6875 = vmatpush1.msra.mxu0 0.0
      %6876 = vmatprep.subr.mxu0 0.0
      %6877 = vmatpush1.msra.mxu0 0.0
      %6878 = vmatprep.subr.mxu0 0.0
      %6879 = vmatpush1.msra.mxu0 0.0
      %6880 = vmatprep.subr.mxu0 %v6769
      %6881 = vmatpush1.msra.mxu0 %v6767
      %6882 = vmatprep.subr.mxu0 %v6738
      %6883 = vmatpush1.msra.mxu0 %v6737
      %6884 = vmatprep.subr.mxu0 0.0
      %6885 = vmatpush2.msra.mxu0 0.0
      %6886 = vmatprep.subr.mxu0 0.0
      %6887 = vmatpush2.msra.mxu0 0.0
      %6888 = vmatprep.subr.mxu0 0.0
      %6889 = vmatpush2.msra.mxu0 0.0
      %6890 = vmatprep.subr.mxu0 0.0
      %6891 = vmatpush2.msra.mxu0 0.0
      %6892 = vmatprep.subr.mxu0 0.0
      %6893 = vmatpush2.msra.mxu0 0.0
      %6894 = vmatprep.subr.mxu0 0.0
      %6895 = vmatpush2.msra.mxu0 0.0
      %6896 = vmatprep.subr.mxu0 0.0
      %6897 = vmatpush2.msra.mxu0 0.0
      %6898 = vmatprep.subr.mxu0 0.0
      %6899 = vmatpush2.msra.mxu0 0.0
      %6900 = vmatprep.subr.mxu0 0.0
      %6901 = vmatpush2.msra.mxu0 0.0
      %6902 = vmatprep.subr.mxu0 0.0
      %6903 = vmatpush2.msra.mxu0 0.0
      %6904 = vmatprep.subr.mxu0 0.0
      %6905 = vmatpush2.msra.mxu0 0.0
      %6906 = vmatprep.subr.mxu0 0.0
      %6907 = vmatpush2.msra.mxu0 0.0
      %6908 = vmatprep.subr.mxu0 0.0
      %6909 = vmatpush2.msra.mxu0 0.0
      %6910 = vmatprep.subr.mxu0 0.0
      %6911 = vmatpush2.msra.mxu0 0.0
      %6912 = vmatprep.subr.mxu0 0.0
      %6913 = vmatpush2.msra.mxu0 0.0
      %6914 = vmatprep.subr.mxu0 0.0
      %6915 = vmatpush2.msra.mxu0 0.0
      %6916 = vmatprep.mubr.f32.mxu0 0.0
      %6917 = vmatmul.mubr.f32.gmra.mxu0 %v6761
      %v6918 = vpop.f32.mrf.mxu0
      %v6919 = vadd.f32 0.0, %v6918
      %v6920 = vpop.f32.mrf.mxu0
      %v6921 = vadd.f32 0.0, %v6920
      %6922 = vdwg.mxu0
      %6923 = vmatprep.subr.mxu0 0.0
      %6924 = vmatpush1.msra.mxu0 0.0
      %6925 = vmatprep.subr.mxu0 0.0
      %6926 = vmatpush1.msra.mxu0 0.0
      %6927 = vmatprep.subr.mxu0 0.0
      %6928 = vmatpush1.msra.mxu0 0.0
      %6929 = vmatprep.subr.mxu0 0.0
      %6930 = vmatpush1.msra.mxu0 0.0
      %6931 = vmatprep.subr.mxu0 0.0
      %6932 = vmatpush1.msra.mxu0 0.0
      %6933 = vmatprep.subr.mxu0 0.0
      %6934 = vmatpush1.msra.mxu0 0.0
      %6935 = vmatprep.subr.mxu0 0.0
      %6936 = vmatpush1.msra.mxu0 0.0
      %6937 = vmatprep.subr.mxu0 0.0
      %6938 = vmatpush1.msra.mxu0 0.0
      %6939 = vmatprep.subr.mxu0 0.0
      %6940 = vmatpush1.msra.mxu0 0.0
      %6941 = vmatprep.subr.mxu0 0.0
      %6942 = vmatpush1.msra.mxu0 0.0
      %6943 = vmatprep.subr.mxu0 0.0
      %6944 = vmatpush1.msra.mxu0 0.0
      %6945 = vmatprep.subr.mxu0 0.0
      %6946 = vmatpush1.msra.mxu0 0.0
      %6947 = vmatprep.subr.mxu0 0.0
      %6948 = vmatpush1.msra.mxu0 0.0
      %6949 = vmatprep.subr.mxu0 0.0
      %6950 = vmatpush1.msra.mxu0 0.0
      %6951 = vmatprep.subr.mxu0 %v6773
      %6952 = vmatpush1.msra.mxu0 %v6771
      %6953 = vmatprep.subr.mxu0 %v6740
      %6954 = vmatpush1.msra.mxu0 %v6739
      %6955 = vmatprep.subr.mxu0 0.0
      %6956 = vmatpush2.msra.mxu0 0.0
      %6957 = vmatprep.subr.mxu0 0.0
      %6958 = vmatpush2.msra.mxu0 0.0
      %6959 = vmatprep.subr.mxu0 0.0
      %6960 = vmatpush2.msra.mxu0 0.0
      %6961 = vmatprep.subr.mxu0 0.0
      %6962 = vmatpush2.msra.mxu0 0.0
      %6963 = vmatprep.subr.mxu0 0.0
      %6964 = vmatpush2.msra.mxu0 0.0
      %6965 = vmatprep.subr.mxu0 0.0
      %6966 = vmatpush2.msra.mxu0 0.0
      %6967 = vmatprep.subr.mxu0 0.0
      %6968 = vmatpush2.msra.mxu0 0.0
      %6969 = vmatprep.subr.mxu0 0.0
      %6970 = vmatpush2.msra.mxu0 0.0
      %6971 = vmatprep.subr.mxu0 0.0
      %6972 = vmatpush2.msra.mxu0 0.0
      %6973 = vmatprep.subr.mxu0 0.0
      %6974 = vmatpush2.msra.mxu0 0.0
      %6975 = vmatprep.subr.mxu0 0.0
      %6976 = vmatpush2.msra.mxu0 0.0
      %6977 = vmatprep.subr.mxu0 0.0
      %6978 = vmatpush2.msra.mxu0 0.0
      %6979 = vmatprep.subr.mxu0 0.0
      %6980 = vmatpush2.msra.mxu0 0.0
      %6981 = vmatprep.subr.mxu0 0.0
      %6982 = vmatpush2.msra.mxu0 0.0
      %6983 = vmatprep.subr.mxu0 0.0
      %6984 = vmatpush2.msra.mxu0 0.0
      %6985 = vmatprep.subr.mxu0 0.0
      %6986 = vmatpush2.msra.mxu0 0.0
      %6987 = vmatprep.mubr.f32.mxu0 0.0
      %6988 = vmatmul.mubr.f32.gmra.mxu0 %v6761
      %v6989 = vpop.f32.mrf.mxu0
      %v6990 = vadd.f32 0.0, %v6989
      %v6991 = vpop.f32.mrf.mxu0
      %v6992 = vadd.f32 0.0, %v6991
      %6993 = vdwg.mxu0
      %6994 = vmatprep.subr.mxu0 0.0
      %6995 = vmatpush1.msra.mxu0 0.0
      %6996 = vmatprep.subr.mxu0 0.0
      %6997 = vmatpush1.msra.mxu0 0.0
      %6998 = vmatprep.subr.mxu0 0.0
      %6999 = vmatpush1.msra.mxu0 0.0
      %7000 = vmatprep.subr.mxu0 0.0
      %7001 = vmatpush1.msra.mxu0 0.0
      %7002 = vmatprep.subr.mxu0 0.0
      %7003 = vmatpush1.msra.mxu0 0.0
      %7004 = vmatprep.subr.mxu0 0.0
      %7005 = vmatpush1.msra.mxu0 0.0
      %7006 = vmatprep.subr.mxu0 0.0
      %7007 = vmatpush1.msra.mxu0 0.0
      %7008 = vmatprep.subr.mxu0 0.0
      %7009 = vmatpush1.msra.mxu0 0.0
      %7010 = vmatprep.subr.mxu0 0.0
      %7011 = vmatpush1.msra.mxu0 0.0
      %7012 = vmatprep.subr.mxu0 0.0
      %7013 = vmatpush1.msra.mxu0 0.0
      %7014 = vmatprep.subr.mxu0 0.0
      %7015 = vmatpush1.msra.mxu0 0.0
      %7016 = vmatprep.subr.mxu0 0.0
      %7017 = vmatpush1.msra.mxu0 0.0
      %7018 = vmatprep.subr.mxu0 0.0
      %7019 = vmatpush1.msra.mxu0 0.0
      %7020 = vmatprep.subr.mxu0 0.0
      %7021 = vmatpush1.msra.mxu0 0.0
      %7022 = vmatprep.subr.mxu0 %v6777
      %7023 = vmatpush1.msra.mxu0 %v6775
      %7024 = vmatprep.subr.mxu0 %v6742
      %7025 = vmatpush1.msra.mxu0 %v6741
      %7026 = vmatprep.subr.mxu0 0.0
      %7027 = vmatpush2.msra.mxu0 0.0
      %7028 = vmatprep.subr.mxu0 0.0
      %7029 = vmatpush2.msra.mxu0 0.0
      %7030 = vmatprep.subr.mxu0 0.0
      %7031 = vmatpush2.msra.mxu0 0.0
      %7032 = vmatprep.subr.mxu0 0.0
      %7033 = vmatpush2.msra.mxu0 0.0
      %7034 = vmatprep.subr.mxu0 0.0
      %7035 = vmatpush2.msra.mxu0 0.0
      %7036 = vmatprep.subr.mxu0 0.0
      %7037 = vmatpush2.msra.mxu0 0.0
      %7038 = vmatprep.subr.mxu0 0.0
      %7039 = vmatpush2.msra.mxu0 0.0
      %7040 = vmatprep.subr.mxu0 0.0
      %7041 = vmatpush2.msra.mxu0 0.0
      %7042 = vmatprep.subr.mxu0 0.0
      %7043 = vmatpush2.msra.mxu0 0.0
      %7044 = vmatprep.subr.mxu0 0.0
      %7045 = vmatpush2.msra.mxu0 0.0
      %7046 = vmatprep.subr.mxu0 0.0
      %7047 = vmatpush2.msra.mxu0 0.0
      %7048 = vmatprep.subr.mxu0 0.0
      %7049 = vmatpush2.msra.mxu0 0.0
      %7050 = vmatprep.subr.mxu0 0.0
      %7051 = vmatpush2.msra.mxu0 0.0
      %7052 = vmatprep.subr.mxu0 0.0
      %7053 = vmatpush2.msra.mxu0 0.0
      %7054 = vmatprep.subr.mxu0 0.0
      %7055 = vmatpush2.msra.mxu0 0.0
      %7056 = vmatprep.subr.mxu0 0.0
      %7057 = vmatpush2.msra.mxu0 0.0
      %7058 = vmatprep.mubr.f32.mxu0 0.0
      %7059 = vmatmul.mubr.f32.gmra.mxu0 %v6761
      %v7060 = vpop.f32.mrf.mxu0
      %v7061 = vadd.f32 0.0, %v7060
      %v7062 = vpop.f32.mrf.mxu0
      %v7063 = vadd.f32 0.0, %v7062
      %7064 = vdwg.mxu0
      %7065 = vmatprep.subr.mxu0 0.0
      %7066 = vmatpush1.msra.mxu0 0.0
      %7067 = vmatprep.subr.mxu0 0.0
      %7068 = vmatpush1.msra.mxu0 0.0
      %7069 = vmatprep.subr.mxu0 0.0
      %7070 = vmatpush1.msra.mxu0 0.0
      %7071 = vmatprep.subr.mxu0 0.0
      %7072 = vmatpush1.msra.mxu0 0.0
      %7073 = vmatprep.subr.mxu0 0.0
      %7074 = vmatpush1.msra.mxu0 0.0
      %7075 = vmatprep.subr.mxu0 0.0
      %7076 = vmatpush1.msra.mxu0 0.0
      %7077 = vmatprep.subr.mxu0 0.0
      %7078 = vmatpush1.msra.mxu0 0.0
      %7079 = vmatprep.subr.mxu0 0.0
      %7080 = vmatpush1.msra.mxu0 0.0
      %7081 = vmatprep.subr.mxu0 0.0
      %7082 = vmatpush1.msra.mxu0 0.0
      %7083 = vmatprep.subr.mxu0 0.0
      %7084 = vmatpush1.msra.mxu0 0.0
      %7085 = vmatprep.subr.mxu0 0.0
      %7086 = vmatpush1.msra.mxu0 0.0
      %7087 = vmatprep.subr.mxu0 0.0
      %7088 = vmatpush1.msra.mxu0 0.0
      %7089 = vmatprep.subr.mxu0 0.0
      %7090 = vmatpush1.msra.mxu0 0.0
      %7091 = vmatprep.subr.mxu0 0.0
      %7092 = vmatpush1.msra.mxu0 0.0
      %7093 = vmatprep.subr.mxu0 0.0
      %7094 = vmatpush1.msra.mxu0 %v6779
      %7095 = vmatprep.subr.mxu0 0.0
      %7096 = vmatpush1.msra.mxu0 %v6716
      %7097 = vmatprep.subr.mxu0 0.0
      %7098 = vmatpush2.msra.mxu0 0.0
      %7099 = vmatprep.subr.mxu0 0.0
      %7100 = vmatpush2.msra.mxu0 0.0
      %7101 = vmatprep.subr.mxu0 0.0
      %7102 = vmatpush2.msra.mxu0 0.0
      %7103 = vmatprep.subr.mxu0 0.0
      %7104 = vmatpush2.msra.mxu0 0.0
      %7105 = vmatprep.subr.mxu0 0.0
      %7106 = vmatpush2.msra.mxu0 0.0
      %7107 = vmatprep.subr.mxu0 0.0
      %7108 = vmatpush2.msra.mxu0 0.0
      %7109 = vmatprep.subr.mxu0 0.0
      %7110 = vmatpush2.msra.mxu0 0.0
      %7111 = vmatprep.subr.mxu0 0.0
      %7112 = vmatpush2.msra.mxu0 0.0
      %7113 = vmatprep.subr.mxu0 0.0
      %7114 = vmatpush2.msra.mxu0 0.0
      %7115 = vmatprep.subr.mxu0 0.0
      %7116 = vmatpush2.msra.mxu0 0.0
      %7117 = vmatprep.subr.mxu0 0.0
      %7118 = vmatpush2.msra.mxu0 0.0
      %7119 = vmatprep.subr.mxu0 0.0
      %7120 = vmatpush2.msra.mxu0 0.0
      %7121 = vmatprep.subr.mxu0 0.0
      %7122 = vmatpush2.msra.mxu0 0.0
      %7123 = vmatprep.subr.mxu0 0.0
      %7124 = vmatpush2.msra.mxu0 0.0
      %7125 = vmatprep.subr.mxu0 0.0
      %7126 = vmatpush2.msra.mxu0 0.0
      %7127 = vmatprep.subr.mxu0 0.0
      %7128 = vmatpush2.msra.mxu0 0.0
      %7129 = vmatprep.mubr.f32.mxu0 0.0
      %7130 = vmatmul.mubr.f32.gmra.mxu0 %v6761
      %v7131 = vpop.f32.mrf.mxu0
      %v7132 = vadd.f32 0.0, %v7131
      %v7133 = vpop.f32.mrf.mxu0
      %7134 = vdwg.mxu0
      %v7135 = vadd.f32 %v6652, %v6848
      %v7136 = vadd.f32 %v6653, %v6850
      %v7137 = vadd.f32 %v6654, %v6919
      %v7138 = vadd.f32 %v6655, %v6921
      %v7139 = vadd.f32 %v6656, %v6990
      %v7140 = vadd.f32 %v6657, %v6992
      %v7141 = vadd.f32 %v6658, %v7061
      %v7142 = vadd.f32 %v6659, %v7063
      %v7143 = vadd.f32 %v6660, %v7132
      %s7144 = scalar_lea.vmem %s1, 40
      %v7145 = vld [vmem:[%s7144] sm:$0x7]
      %7146 = vrot.lane.b32.xlu0 %v6661, 93
      %v7147 = vpop.permute.xlu0 %7146
      %7148 = vrot.lane.b32.xlu0 %v6662, 93
      %v7149 = vpop.permute.xlu0 %7148
      %7150 = vrot.lane.b32.xlu0 %v6663, 93
      %v7151 = vpop.permute.xlu0 %7150
      %7152 = vrot.lane.b32.xlu0 %v6664, 93
      %v7153 = vpop.permute.xlu0 %7152
      %7154 = vrot.lane.b32.xlu0 %v6665, 93
      %v7155 = vpop.permute.xlu0 %7154
      %7156 = vrot.lane.b32.xlu0 %v6666, 93
      %v7157 = vpop.permute.xlu0 %7156
      %7158 = vrot.lane.b32.xlu0 %v6667, 93
      %v7159 = vpop.permute.xlu0 %7158
      %7160 = vrot.lane.b32.xlu0 %v6668, 93
      %v7161 = vpop.permute.xlu0 %7160
      %7162 = vrot.lane.b32.xlu0 %v6669, 93
      %v7163 = vpop.permute.xlu0 %7162
      %7164 = vrot.lane.b32.xlu0 %v6670, 93
      %v7165 = vpop.permute.xlu0 %7164
      %7166 = vrot.lane.b32.xlu0 %v6671, 93
      %v7167 = vpop.permute.xlu0 %7166
      %7168 = vrot.lane.b32.xlu0 %v6672, 93
      %v7169 = vpop.permute.xlu0 %7168
      %7170 = vrot.lane.b32.xlu0 %v6673, 93
      %v7171 = vpop.permute.xlu0 %7170
      %7172 = vrot.lane.b32.xlu0 %v6674, 93
      %v7173 = vpop.permute.xlu0 %7172
      %7174 = vrot.lane.b32.xlu0 %v6675, 93
      %v7175 = vpop.permute.xlu0 %7174
      %7176 = vrot.lane.b32.xlu0 %v6676, 93
      %v7177 = vpop.permute.xlu0 %7176
      %7178 = vrot.lane.b32.xlu0 %v6677, 93
      %v7179 = vpop.permute.xlu0 %7178
      %7180 = vrot.lane.b32.xlu0 %v6678, 93
      %v7181 = vpop.permute.xlu0 %7180
      %v7182 = vsel %vm251, %v7147, %v7149
      %v7183 = vsel %vm251, %v7149, %v7151
      %v7184 = vsel %vm251, %v7151, %v7153
      %v7185 = vsel %vm251, %v7153, %v7155
      %v7186 = vsel %vm251, %v7155, %v7157
      %v7187 = vsel %vm251, %v7157, %v7159
      %v7188 = vsel %vm251, %v7159, %v7161
      %v7189 = vsel %vm251, %v7161, %v7163
      %v7190 = vsel %vm251, %v7165, %v7167
      %v7191 = vsel %vm251, %v7167, %v7169
      %v7192 = vsel %vm251, %v7169, %v7171
      %v7193 = vsel %vm251, %v7171, %v7173
      %v7194 = vsel %vm251, %v7173, %v7175
      %v7195 = vsel %vm251, %v7175, %v7177
      %v7196 = vsel %vm251, %v7177, %v7179
      %v7197 = vsel %vm251, %v7179, %v7181
      %v7208 = vsel %vm277, %v7145, 0
      %v7210 = vsel %vm281, %v7190, 0
      %v7212 = vsel %vm281, %v7191, 0
      %v7214 = vsel %vm281, %v7192, 0
      %v7216 = vsel %vm281, %v7193, 0
      %v7218 = vsel %vm281, %v7194, 0
      %v7220 = vsel %vm281, %v7195, 0
      %v7222 = vsel %vm281, %v7196, 0
      %v7224 = vsel %vm281, %v7197, 0
      %v7226 = vsel %vm281, %v7181, 0
      %7228 = vmatprep.subr.mxu0 0.0
      %7229 = vmatpush1.msra.mxu0 0.0
      %7230 = vmatprep.subr.mxu0 0.0
      %7231 = vmatpush1.msra.mxu0 0.0
      %7232 = vmatprep.subr.mxu0 0.0
      %7233 = vmatpush1.msra.mxu0 0.0
      %7234 = vmatprep.subr.mxu0 0.0
      %7235 = vmatpush1.msra.mxu0 0.0
      %7236 = vmatprep.subr.mxu0 0.0
      %7237 = vmatpush1.msra.mxu0 0.0
      %7238 = vmatprep.subr.mxu0 0.0
      %7239 = vmatpush1.msra.mxu0 0.0
      %7240 = vmatprep.subr.mxu0 0.0
      %7241 = vmatpush1.msra.mxu0 0.0
      %7242 = vmatprep.subr.mxu0 0.0
      %7243 = vmatpush1.msra.mxu0 0.0
      %7244 = vmatprep.subr.mxu0 0.0
      %7245 = vmatpush1.msra.mxu0 0.0
      %7246 = vmatprep.subr.mxu0 0.0
      %7247 = vmatpush1.msra.mxu0 0.0
      %7248 = vmatprep.subr.mxu0 0.0
      %7249 = vmatpush1.msra.mxu0 0.0
      %7250 = vmatprep.subr.mxu0 0.0
      %7251 = vmatpush1.msra.mxu0 0.0
      %7252 = vmatprep.subr.mxu0 0.0
      %7253 = vmatpush1.msra.mxu0 0.0
      %7254 = vmatprep.subr.mxu0 0.0
      %7255 = vmatpush1.msra.mxu0 0.0
      %7256 = vmatprep.subr.mxu0 %v7212
      %7257 = vmatpush1.msra.mxu0 %v7210
      %7258 = vmatprep.subr.mxu0 %v7183
      %7259 = vmatpush1.msra.mxu0 %v7182
      %7260 = vmatprep.subr.mxu0 0.0
      %7261 = vmatpush2.msra.mxu0 0.0
      %7262 = vmatprep.subr.mxu0 0.0
      %7263 = vmatpush2.msra.mxu0 0.0
      %7264 = vmatprep.subr.mxu0 0.0
      %7265 = vmatpush2.msra.mxu0 0.0
      %7266 = vmatprep.subr.mxu0 0.0
      %7267 = vmatpush2.msra.mxu0 0.0
      %7268 = vmatprep.subr.mxu0 0.0
      %7269 = vmatpush2.msra.mxu0 0.0
      %7270 = vmatprep.subr.mxu0 0.0
      %7271 = vmatpush2.msra.mxu0 0.0
      %7272 = vmatprep.subr.mxu0 0.0
      %7273 = vmatpush2.msra.mxu0 0.0
      %7274 = vmatprep.subr.mxu0 0.0
      %7275 = vmatpush2.msra.mxu0 0.0
      %7276 = vmatprep.subr.mxu0 0.0
      %7277 = vmatpush2.msra.mxu0 0.0
      %7278 = vmatprep.subr.mxu0 0.0
      %7279 = vmatpush2.msra.mxu0 0.0
      %7280 = vmatprep.subr.mxu0 0.0
      %7281 = vmatpush2.msra.mxu0 0.0
      %7282 = vmatprep.subr.mxu0 0.0
      %7283 = vmatpush2.msra.mxu0 0.0
      %7284 = vmatprep.subr.mxu0 0.0
      %7285 = vmatpush2.msra.mxu0 0.0
      %7286 = vmatprep.subr.mxu0 0.0
      %7287 = vmatpush2.msra.mxu0 0.0
      %7288 = vmatprep.subr.mxu0 0.0
      %7289 = vmatpush2.msra.mxu0 0.0
      %7290 = vmatprep.subr.mxu0 0.0
      %7291 = vmatpush2.msra.mxu0 0.0
      %7292 = vmatprep.mubr.f32.mxu0 0.0
      %7293 = vmatmul.mubr.f32.gmra.mxu0 %v7208
      %v7294 = vpop.f32.mrf.mxu0
      %v7295 = vadd.f32 0.0, %v7294
      %v7296 = vpop.f32.mrf.mxu0
      %v7297 = vadd.f32 0.0, %v7296
      %7298 = vdwg.mxu0
      %7299 = vmatprep.subr.mxu0 0.0
      %7300 = vmatpush1.msra.mxu0 0.0
      %7301 = vmatprep.subr.mxu0 0.0
      %7302 = vmatpush1.msra.mxu0 0.0
      %7303 = vmatprep.subr.mxu0 0.0
      %7304 = vmatpush1.msra.mxu0 0.0
      %7305 = vmatprep.subr.mxu0 0.0
      %7306 = vmatpush1.msra.mxu0 0.0
      %7307 = vmatprep.subr.mxu0 0.0
      %7308 = vmatpush1.msra.mxu0 0.0
      %7309 = vmatprep.subr.mxu0 0.0
      %7310 = vmatpush1.msra.mxu0 0.0
      %7311 = vmatprep.subr.mxu0 0.0
      %7312 = vmatpush1.msra.mxu0 0.0
      %7313 = vmatprep.subr.mxu0 0.0
      %7314 = vmatpush1.msra.mxu0 0.0
      %7315 = vmatprep.subr.mxu0 0.0
      %7316 = vmatpush1.msra.mxu0 0.0
      %7317 = vmatprep.subr.mxu0 0.0
      %7318 = vmatpush1.msra.mxu0 0.0
      %7319 = vmatprep.subr.mxu0 0.0
      %7320 = vmatpush1.msra.mxu0 0.0
      %7321 = vmatprep.subr.mxu0 0.0
      %7322 = vmatpush1.msra.mxu0 0.0
      %7323 = vmatprep.subr.mxu0 0.0
      %7324 = vmatpush1.msra.mxu0 0.0
      %7325 = vmatprep.subr.mxu0 0.0
      %7326 = vmatpush1.msra.mxu0 0.0
      %7327 = vmatprep.subr.mxu0 %v7216
      %7328 = vmatpush1.msra.mxu0 %v7214
      %7329 = vmatprep.subr.mxu0 %v7185
      %7330 = vmatpush1.msra.mxu0 %v7184
      %7331 = vmatprep.subr.mxu0 0.0
      %7332 = vmatpush2.msra.mxu0 0.0
      %7333 = vmatprep.subr.mxu0 0.0
      %7334 = vmatpush2.msra.mxu0 0.0
      %7335 = vmatprep.subr.mxu0 0.0
      %7336 = vmatpush2.msra.mxu0 0.0
      %7337 = vmatprep.subr.mxu0 0.0
      %7338 = vmatpush2.msra.mxu0 0.0
      %7339 = vmatprep.subr.mxu0 0.0
      %7340 = vmatpush2.msra.mxu0 0.0
      %7341 = vmatprep.subr.mxu0 0.0
      %7342 = vmatpush2.msra.mxu0 0.0
      %7343 = vmatprep.subr.mxu0 0.0
      %7344 = vmatpush2.msra.mxu0 0.0
      %7345 = vmatprep.subr.mxu0 0.0
      %7346 = vmatpush2.msra.mxu0 0.0
      %7347 = vmatprep.subr.mxu0 0.0
      %7348 = vmatpush2.msra.mxu0 0.0
      %7349 = vmatprep.subr.mxu0 0.0
      %7350 = vmatpush2.msra.mxu0 0.0
      %7351 = vmatprep.subr.mxu0 0.0
      %7352 = vmatpush2.msra.mxu0 0.0
      %7353 = vmatprep.subr.mxu0 0.0
      %7354 = vmatpush2.msra.mxu0 0.0
      %7355 = vmatprep.subr.mxu0 0.0
      %7356 = vmatpush2.msra.mxu0 0.0
      %7357 = vmatprep.subr.mxu0 0.0
      %7358 = vmatpush2.msra.mxu0 0.0
      %7359 = vmatprep.subr.mxu0 0.0
      %7360 = vmatpush2.msra.mxu0 0.0
      %7361 = vmatprep.subr.mxu0 0.0
      %7362 = vmatpush2.msra.mxu0 0.0
      %7363 = vmatprep.mubr.f32.mxu0 0.0
      %7364 = vmatmul.mubr.f32.gmra.mxu0 %v7208
      %v7365 = vpop.f32.mrf.mxu0
      %v7366 = vadd.f32 0.0, %v7365
      %v7367 = vpop.f32.mrf.mxu0
      %v7368 = vadd.f32 0.0, %v7367
      %7369 = vdwg.mxu0
      %7370 = vmatprep.subr.mxu0 0.0
      %7371 = vmatpush1.msra.mxu0 0.0
      %7372 = vmatprep.subr.mxu0 0.0
      %7373 = vmatpush1.msra.mxu0 0.0
      %7374 = vmatprep.subr.mxu0 0.0
      %7375 = vmatpush1.msra.mxu0 0.0
      %7376 = vmatprep.subr.mxu0 0.0
      %7377 = vmatpush1.msra.mxu0 0.0
      %7378 = vmatprep.subr.mxu0 0.0
      %7379 = vmatpush1.msra.mxu0 0.0
      %7380 = vmatprep.subr.mxu0 0.0
      %7381 = vmatpush1.msra.mxu0 0.0
      %7382 = vmatprep.subr.mxu0 0.0
      %7383 = vmatpush1.msra.mxu0 0.0
      %7384 = vmatprep.subr.mxu0 0.0
      %7385 = vmatpush1.msra.mxu0 0.0
      %7386 = vmatprep.subr.mxu0 0.0
      %7387 = vmatpush1.msra.mxu0 0.0
      %7388 = vmatprep.subr.mxu0 0.0
      %7389 = vmatpush1.msra.mxu0 0.0
      %7390 = vmatprep.subr.mxu0 0.0
      %7391 = vmatpush1.msra.mxu0 0.0
      %7392 = vmatprep.subr.mxu0 0.0
      %7393 = vmatpush1.msra.mxu0 0.0
      %7394 = vmatprep.subr.mxu0 0.0
      %7395 = vmatpush1.msra.mxu0 0.0
      %7396 = vmatprep.subr.mxu0 0.0
      %7397 = vmatpush1.msra.mxu0 0.0
      %7398 = vmatprep.subr.mxu0 %v7220
      %7399 = vmatpush1.msra.mxu0 %v7218
      %7400 = vmatprep.subr.mxu0 %v7187
      %7401 = vmatpush1.msra.mxu0 %v7186
      %7402 = vmatprep.subr.mxu0 0.0
      %7403 = vmatpush2.msra.mxu0 0.0
      %7404 = vmatprep.subr.mxu0 0.0
      %7405 = vmatpush2.msra.mxu0 0.0
      %7406 = vmatprep.subr.mxu0 0.0
      %7407 = vmatpush2.msra.mxu0 0.0
      %7408 = vmatprep.subr.mxu0 0.0
      %7409 = vmatpush2.msra.mxu0 0.0
      %7410 = vmatprep.subr.mxu0 0.0
      %7411 = vmatpush2.msra.mxu0 0.0
      %7412 = vmatprep.subr.mxu0 0.0
      %7413 = vmatpush2.msra.mxu0 0.0
      %7414 = vmatprep.subr.mxu0 0.0
      %7415 = vmatpush2.msra.mxu0 0.0
      %7416 = vmatprep.subr.mxu0 0.0
      %7417 = vmatpush2.msra.mxu0 0.0
      %7418 = vmatprep.subr.mxu0 0.0
      %7419 = vmatpush2.msra.mxu0 0.0
      %7420 = vmatprep.subr.mxu0 0.0
      %7421 = vmatpush2.msra.mxu0 0.0
      %7422 = vmatprep.subr.mxu0 0.0
      %7423 = vmatpush2.msra.mxu0 0.0
      %7424 = vmatprep.subr.mxu0 0.0
      %7425 = vmatpush2.msra.mxu0 0.0
      %7426 = vmatprep.subr.mxu0 0.0
      %7427 = vmatpush2.msra.mxu0 0.0
      %7428 = vmatprep.subr.mxu0 0.0
      %7429 = vmatpush2.msra.mxu0 0.0
      %7430 = vmatprep.subr.mxu0 0.0
      %7431 = vmatpush2.msra.mxu0 0.0
      %7432 = vmatprep.subr.mxu0 0.0
      %7433 = vmatpush2.msra.mxu0 0.0
      %7434 = vmatprep.mubr.f32.mxu0 0.0
      %7435 = vmatmul.mubr.f32.gmra.mxu0 %v7208
      %v7436 = vpop.f32.mrf.mxu0
      %v7437 = vadd.f32 0.0, %v7436
      %v7438 = vpop.f32.mrf.mxu0
      %v7439 = vadd.f32 0.0, %v7438
      %7440 = vdwg.mxu0
      %7441 = vmatprep.subr.mxu0 0.0
      %7442 = vmatpush1.msra.mxu0 0.0
      %7443 = vmatprep.subr.mxu0 0.0
      %7444 = vmatpush1.msra.mxu0 0.0
      %7445 = vmatprep.subr.mxu0 0.0
      %7446 = vmatpush1.msra.mxu0 0.0
      %7447 = vmatprep.subr.mxu0 0.0
      %7448 = vmatpush1.msra.mxu0 0.0
      %7449 = vmatprep.subr.mxu0 0.0
      %7450 = vmatpush1.msra.mxu0 0.0
      %7451 = vmatprep.subr.mxu0 0.0
      %7452 = vmatpush1.msra.mxu0 0.0
      %7453 = vmatprep.subr.mxu0 0.0
      %7454 = vmatpush1.msra.mxu0 0.0
      %7455 = vmatprep.subr.mxu0 0.0
      %7456 = vmatpush1.msra.mxu0 0.0
      %7457 = vmatprep.subr.mxu0 0.0
      %7458 = vmatpush1.msra.mxu0 0.0
      %7459 = vmatprep.subr.mxu0 0.0
      %7460 = vmatpush1.msra.mxu0 0.0
      %7461 = vmatprep.subr.mxu0 0.0
      %7462 = vmatpush1.msra.mxu0 0.0
      %7463 = vmatprep.subr.mxu0 0.0
      %7464 = vmatpush1.msra.mxu0 0.0
      %7465 = vmatprep.subr.mxu0 0.0
      %7466 = vmatpush1.msra.mxu0 0.0
      %7467 = vmatprep.subr.mxu0 0.0
      %7468 = vmatpush1.msra.mxu0 0.0
      %7469 = vmatprep.subr.mxu0 %v7224
      %7470 = vmatpush1.msra.mxu0 %v7222
      %7471 = vmatprep.subr.mxu0 %v7189
      %7472 = vmatpush1.msra.mxu0 %v7188
      %7473 = vmatprep.subr.mxu0 0.0
      %7474 = vmatpush2.msra.mxu0 0.0
      %7475 = vmatprep.subr.mxu0 0.0
      %7476 = vmatpush2.msra.mxu0 0.0
      %7477 = vmatprep.subr.mxu0 0.0
      %7478 = vmatpush2.msra.mxu0 0.0
      %7479 = vmatprep.subr.mxu0 0.0
      %7480 = vmatpush2.msra.mxu0 0.0
      %7481 = vmatprep.subr.mxu0 0.0
      %7482 = vmatpush2.msra.mxu0 0.0
      %7483 = vmatprep.subr.mxu0 0.0
      %7484 = vmatpush2.msra.mxu0 0.0
      %7485 = vmatprep.subr.mxu0 0.0
      %7486 = vmatpush2.msra.mxu0 0.0
      %7487 = vmatprep.subr.mxu0 0.0
      %7488 = vmatpush2.msra.mxu0 0.0
      %7489 = vmatprep.subr.mxu0 0.0
      %7490 = vmatpush2.msra.mxu0 0.0
      %7491 = vmatprep.subr.mxu0 0.0
      %7492 = vmatpush2.msra.mxu0 0.0
      %7493 = vmatprep.subr.mxu0 0.0
      %7494 = vmatpush2.msra.mxu0 0.0
      %7495 = vmatprep.subr.mxu0 0.0
      %7496 = vmatpush2.msra.mxu0 0.0
      %7497 = vmatprep.subr.mxu0 0.0
      %7498 = vmatpush2.msra.mxu0 0.0
      %7499 = vmatprep.subr.mxu0 0.0
      %7500 = vmatpush2.msra.mxu0 0.0
      %7501 = vmatprep.subr.mxu0 0.0
      %7502 = vmatpush2.msra.mxu0 0.0
      %7503 = vmatprep.subr.mxu0 0.0
      %7504 = vmatpush2.msra.mxu0 0.0
      %7505 = vmatprep.mubr.f32.mxu0 0.0
      %7506 = vmatmul.mubr.f32.gmra.mxu0 %v7208
      %v7507 = vpop.f32.mrf.mxu0
      %v7508 = vadd.f32 0.0, %v7507
      %v7509 = vpop.f32.mrf.mxu0
      %v7510 = vadd.f32 0.0, %v7509
      %7511 = vdwg.mxu0
      %7512 = vmatprep.subr.mxu0 0.0
      %7513 = vmatpush1.msra.mxu0 0.0
      %7514 = vmatprep.subr.mxu0 0.0
      %7515 = vmatpush1.msra.mxu0 0.0
      %7516 = vmatprep.subr.mxu0 0.0
      %7517 = vmatpush1.msra.mxu0 0.0
      %7518 = vmatprep.subr.mxu0 0.0
      %7519 = vmatpush1.msra.mxu0 0.0
      %7520 = vmatprep.subr.mxu0 0.0
      %7521 = vmatpush1.msra.mxu0 0.0
      %7522 = vmatprep.subr.mxu0 0.0
      %7523 = vmatpush1.msra.mxu0 0.0
      %7524 = vmatprep.subr.mxu0 0.0
      %7525 = vmatpush1.msra.mxu0 0.0
      %7526 = vmatprep.subr.mxu0 0.0
      %7527 = vmatpush1.msra.mxu0 0.0
      %7528 = vmatprep.subr.mxu0 0.0
      %7529 = vmatpush1.msra.mxu0 0.0
      %7530 = vmatprep.subr.mxu0 0.0
      %7531 = vmatpush1.msra.mxu0 0.0
      %7532 = vmatprep.subr.mxu0 0.0
      %7533 = vmatpush1.msra.mxu0 0.0
      %7534 = vmatprep.subr.mxu0 0.0
      %7535 = vmatpush1.msra.mxu0 0.0
      %7536 = vmatprep.subr.mxu0 0.0
      %7537 = vmatpush1.msra.mxu0 0.0
      %7538 = vmatprep.subr.mxu0 0.0
      %7539 = vmatpush1.msra.mxu0 0.0
      %7540 = vmatprep.subr.mxu0 0.0
      %7541 = vmatpush1.msra.mxu0 %v7226
      %7542 = vmatprep.subr.mxu0 0.0
      %7543 = vmatpush1.msra.mxu0 %v7163
      %7544 = vmatprep.subr.mxu0 0.0
      %7545 = vmatpush2.msra.mxu0 0.0
      %7546 = vmatprep.subr.mxu0 0.0
      %7547 = vmatpush2.msra.mxu0 0.0
      %7548 = vmatprep.subr.mxu0 0.0
      %7549 = vmatpush2.msra.mxu0 0.0
      %7550 = vmatprep.subr.mxu0 0.0
      %7551 = vmatpush2.msra.mxu0 0.0
      %7552 = vmatprep.subr.mxu0 0.0
      %7553 = vmatpush2.msra.mxu0 0.0
      %7554 = vmatprep.subr.mxu0 0.0
      %7555 = vmatpush2.msra.mxu0 0.0
      %7556 = vmatprep.subr.mxu0 0.0
      %7557 = vmatpush2.msra.mxu0 0.0
      %7558 = vmatprep.subr.mxu0 0.0
      %7559 = vmatpush2.msra.mxu0 0.0
      %7560 = vmatprep.subr.mxu0 0.0
      %7561 = vmatpush2.msra.mxu0 0.0
      %7562 = vmatprep.subr.mxu0 0.0
      %7563 = vmatpush2.msra.mxu0 0.0
      %7564 = vmatprep.subr.mxu0 0.0
      %7565 = vmatpush2.msra.mxu0 0.0
      %7566 = vmatprep.subr.mxu0 0.0
      %7567 = vmatpush2.msra.mxu0 0.0
      %7568 = vmatprep.subr.mxu0 0.0
      %7569 = vmatpush2.msra.mxu0 0.0
      %7570 = vmatprep.subr.mxu0 0.0
      %7571 = vmatpush2.msra.mxu0 0.0
      %7572 = vmatprep.subr.mxu0 0.0
      %7573 = vmatpush2.msra.mxu0 0.0
      %7574 = vmatprep.subr.mxu0 0.0
      %7575 = vmatpush2.msra.mxu0 0.0
      %7576 = vmatprep.mubr.f32.mxu0 0.0
      %7577 = vmatmul.mubr.f32.gmra.mxu0 %v7208
      %v7578 = vpop.f32.mrf.mxu0
      %v7579 = vadd.f32 0.0, %v7578
      %v7580 = vpop.f32.mrf.mxu0
      %7581 = vdwg.mxu0
      %v7582 = vadd.f32 %v7135, %v7295
      %v7583 = vadd.f32 %v7136, %v7297
      %v7584 = vadd.f32 %v7137, %v7366
      %v7585 = vadd.f32 %v7138, %v7368
      %v7586 = vadd.f32 %v7139, %v7437
      %v7587 = vadd.f32 %v7140, %v7439
      %v7588 = vadd.f32 %v7141, %v7508
      %v7589 = vadd.f32 %v7142, %v7510
      %v7590 = vadd.f32 %v7143, %v7579
      %v7599 = vcombine.low %v7582, %v7583
      %v7600 = vcombine.low %v7584, %v7585
      %v7601 = vcombine.low %v7586, %v7587
      %v7602 = vcombine.low %v7588, %v7589
      %s7607 = scalar_lea.vmem %s170, 108
      %7608 = vst [vmem:[%s7607] sm:$0x77] %v7599
      %7609 = vst [vmem:[%s7607 + $0x8] sm:$0x77] %v7600
      %7610 = vst [vmem:[%s7607 + $0x10] sm:$0x77] %v7601
      %7611 = vst [vmem:[%s7607 + $0x18] sm:$0x77] %v7602
      %7612 = vst.msk [vmem:[%s7607 + $0x20] sm:$0x7] %vm1965, %v7590
      %p7613 = scmp.lt.s32.totalorder %s14, 1
      %s7614 = scalar_select %p7613, %s14, 1
      %s7615 = smul.addr %s7614, 36
      %s7616 = smul.addr %s7615, 4
      %s7617 = scalar_lea.vmem %s3, %s7616
      // Predicated region
      $region33: #{img_decoder_fwd.3} parent=31 // pred_check
        %p7618 = pneg %p100
      $region34: #{img_decoder_fwd.3} parent=31 // pred_check_branch
        %7620 = sbr.rel (%p7618) target = $region36
      $region35: #{img_decoder_fwd.3} parent=31 // pred_region
        _
      $region36: #{img_decoder_fwd.3} parent=31 // pred_fallthru
        _
    $region32: #{img_decoder_fwd.3} parent=5 // pred_fallthru
      _
    %p7621 = scmp.le.s32.totalorder 2, %s9
    // Predicated region
    $region37: #{img_decoder_fwd.3} parent=5 // pred_check
      %p7622 = pneg %p7621
    $region38: #{img_decoder_fwd.3} parent=5 // pred_check_branch
      %7624 = sbr.rel (%p7622) target = $region40
    $region39: #{img_decoder_fwd.3} parent=5 // pred_region
      %s7625 = ssub.s32 %s9, 2
      // Predicated region
      $region41: #{img_decoder_fwd.3} parent=39 // pred_check
        %p7626 = pneg %p106
      $region42: #{img_decoder_fwd.3} parent=39 // pred_check_branch
        %7628 = sbr.rel (%p7626) target = $region44
      $region43: #{img_decoder_fwd.3} parent=39 // pred_region
        %p7629 = scmp.lt.s32.totalorder %s15, 1
        %s7630 = scalar_select %p7629, %s15, 1
        %s7631 = smul.addr %s7630, 36
        %s7632 = smul.addr %s7631, 4
        %s7633 = scalar_lea.vmem %s3, %s7632
      $region44: #{img_decoder_fwd.3} parent=39 // pred_fallthru
        _
    $region40: #{img_decoder_fwd.3} parent=5 // pred_fallthru
      _
  $region6: #{img_decoder_fwd.3} parent=0 // loop_footer
    %s13 = sadd.s32 1, %s9
  $region7: #{img_decoder_fwd.3} parent=0 // loop_footer_branch
    %8 = sbr.rel target = $region3
  $region8: #{img_decoder_fwd.3} parent=0 // loop_exit
    _

</llo_original>
